<compile_context>
chip_gen: v7x
topology: tpu7x:2x2x1
jax: 0.10.0
libtpu: 0.0.40
codegen_flags: <defaults>
</compile_context>

<pallas_src>
import math

import numpy as np
import jax
import jax.numpy as jnp
from jax.experimental import pallas as pl
from jax.experimental.pallas import tpu as pltpu


_VMEM_LIMIT = 48 * 1024 * 1024


def _compiler_params():
    return pltpu.CompilerParams(
        dimension_semantics=("parallel",),      # batch tiles -> 2 TCs on v7x
        vmem_limit_bytes=_VMEM_LIMIT,
    )


def _round_up(x, m):
    return ((x + m - 1) // m) * m


# ----------------------------- Pallas kernels -------------------------------

def conv1_kernel(x_ref, w_ref, b_ref, o_ref):
    """Conv(1->32,3x3,p=1)+bias+ReLU+maxpool2 for a tile of B_TILE images.

    x_ref: (2, 14, BT, 90)  bf16  ky-folded im2row rows, split by row parity
    w_ref: (90, 1024)       bf16  merged Toeplitz weights [px0 | px1], W-padded
    b_ref: (1, 512)         f32   bias tiled over conv2's padded W (0 at pads)
    o_ref: (2, 8, BT, 512)  bf16  conv2's padded, parity-split input layout
    """
    bt = x_ref.shape[2]
    m = None
    for py in range(2):                                    # pooling row phase
        a = x_ref[py].reshape(14 * bt, 90)                 # free: bt % 8 == 0
        r = jnp.dot(a, w_ref[...], preferred_element_type=jnp.float32)
        cand = jnp.maximum(r[:, :512], r[:, 512:])         # pooling col max
        m = cand if m is None else jnp.maximum(m, cand)    # pooling row max
    out = jnp.maximum(m + b_ref[...], 0.0)                 # bias + ReLU (f32)
    out = out.reshape(7, 2, bt, 512)                       # [t//2, t%2, b, :]
    zrow = jnp.zeros((1, bt, 512), jnp.float32)
    # pooled row t lands at conv2 padded row t+1: parity (t+1)%2, slot (t+1)//2
    par0 = jnp.concatenate([zrow, out[:, 1]], axis=0)      # slot 0 is zero pad
    par1 = jnp.concatenate([out[:, 0], zrow], axis=0)      # slot 7 is zero pad
    o_ref[...] = jnp.stack([par0, par1], axis=0).astype(o_ref.dtype)


def conv2_kernel(x_ref, w_ref, b_ref, o_ref):
    """Conv(32->64,3x3,p=1)+bias+ReLU+maxpool2 for a tile of B_TILE images.

    x_ref: (2, 8, BT, 512)  bf16  padded, row-parity-split input (from conv1)
    w_ref: (3, 512, 1024)   bf16  merged Toeplitz weights per ky [px0 | px1]
    b_ref: (1, 512)         f32   bias tiled over pooled W (0 at the pad slot)
    o_ref: (7, BT, 512)     bf16  pooled output, lane-dense (last 64 lanes 0)
    """
    bt = x_ref.shape[2]
    m = None
    for py in range(2):                                    # pooling row phase
        acc = jnp.zeros((7 * bt, 1024), jnp.float32)
        for ky in range(3):                                # kernel row
            parity = (py + ky) % 2
            start = (py + ky) // 2
            a = x_ref[parity, pl.ds(start, 7)].reshape(7 * bt, 512)
            acc = acc + jnp.dot(a, w_ref[ky],
                                preferred_element_type=jnp.float32)
        cand = jnp.maximum(acc[:, :512], acc[:, 512:])     # pooling col max
        m = cand if m is None else jnp.maximum(m, cand)    # pooling row max
    out = jnp.maximum(m + b_ref[...], 0.0)                 # bias + ReLU (f32)
    o_ref[...] = out.reshape(7, bt, 512).astype(o_ref.dtype)


def fc_kernel(x_ref, w1_ref, b1_ref, w2_ref, b2_ref, z_ref, logits_ref):
    """z = flatten(x) @ w1 + b1 ; logits = z @ w2 + b2 (z never leaves VMEM).

    x_ref : (7, BT, 512)  bf16  conv2 output, consumed as 7 K-chunks of 512
    w1_ref: (7, 512, 128) bf16  fc1 weights, rows permuted to the conv2 layout
    w2_ref: (128, 128)    bf16  fc2 weights, output padded 10 -> 128
    """
    bt = x_ref.shape[1]
    acc = jnp.zeros((bt, 128), jnp.float32)
    for h in range(7):
        acc = acc + jnp.dot(x_ref[h], w1_ref[h],
                            preferred_element_type=jnp.float32)
    z = acc + b1_ref[...]
    z_ref[...] = z
    logits_ref[...] = (jnp.dot(z.astype(jnp.bfloat16), w2_ref[...],
                               preferred_element_type=jnp.float32)
                       + b2_ref[...])


# ----------------------------- weight prep ----------------------------------

def _conv1_merged_weights(w_pt, b):
    """(32,1,3,3) -> (90, 1024) bf16 merged Toeplitz slab + (1, 512) f32 bias.

    Row k = ky*30 + v (padded input column v of the ky-folded im2row).
    Col n = px*512 + jpad*32 + co, jpad = conv2's padded W index (0/15 = pad).
    """
    sel = np.zeros((2, 16, 3, 30), np.float32)          # [px, jpad, kx, v]
    for px in range(2):
        for jpad in range(1, 15):
            for kx in range(3):
                sel[px, jpad, kx, 2 * jpad - 2 + px + kx] = 1.0
    wt = jnp.transpose(w_pt[:, 0], (1, 2, 0))           # (3, 3, 32) [ky, kx, co]
    m = jnp.einsum("pjxv,yxo->yvpjo", jnp.asarray(sel), wt)   # (3,30,2,16,32)
    w_merged = m.reshape(90, 1024).astype(jnp.bfloat16)
    mask = np.zeros((16, 1), np.float32)
    mask[1:15] = 1.0
    b_row = (jnp.asarray(mask) * b.astype(jnp.float32)[None, :]).reshape(1, 512)
    return w_merged, b_row


def _conv2_merged_weights(w_pt, b):
    """(64,32,3,3) -> (3, 512, 1024) bf16 merged Toeplitz slabs + (1,512) bias.

    Row k = j*32 + ci (padded input column j, input channel ci).
    Col n = px*512 + wslot*64 + co, wslot 0..6 real, wslot 7 = lane pad.
    """
    sel = np.zeros((2, 8, 3, 16), np.float32)           # [px, wslot, kx, j]
    for px in range(2):
        for ws in range(7):
            for kx in range(3):
                sel[px, ws, kx, 2 * ws + px + kx] = 1.0
    wt = jnp.transpose(w_pt, (2, 3, 1, 0))              # (3,3,32,64) [ky,kx,ci,co]
    m = jnp.einsum("pwxj,yxio->yjipwo", jnp.asarray(sel), wt)  # (3,16,32,2,8,64)
    w_merged = m.reshape(3, 512, 1024).astype(jnp.bfloat16)
    mask = np.zeros((8, 1), np.float32)
    mask[:7] = 1.0
    b_row = (jnp.asarray(mask) * b.astype(jnp.float32)[None, :]).reshape(1, 512)
    return w_merged, b_row


def _fc_weights(w1, b1, w2, b2):
    """Permute fc1 rows to conv2's (h, wpad, c) layout; pad fc2 out 10 -> 128."""
    w1r = jnp.transpose(w1.reshape(64, 7, 7, 128), (1, 2, 0, 3))    # (h, w, c, n)
    w1p = jnp.pad(w1r, ((0, 0), (0, 1), (0, 0), (0, 0)))            # w: 7 -> 8
    w1p = w1p.reshape(7, 512, 128).astype(jnp.bfloat16)
    b1r = b1.astype(jnp.float32).reshape(1, 128)
    n2 = int(w2.shape[1])
    w2p = jnp.pad(w2.astype(jnp.bfloat16), ((0, 0), (0, 128 - n2)))
    b2p = jnp.pad(b2.astype(jnp.float32), (0, 128 - n2)).reshape(1, 128)
    return w1p, b1r, w2p, b2p


# ----------------------------- layer wrappers -------------------------------

def conv1_layer(im_p, w, b, *, btile):
    """im_p: (2, 14, Bp, 90) bf16 -> (2, 8, Bp, 512) bf16 (conv2 input layout)."""
    bp = im_p.shape[2]
    w_merged, b_row = _conv1_merged_weights(w, b)
    flops = bp * 2 * (14 * 90 * 1024 * 2)
    bytes_accessed = (im_p.size * 2 + w_merged.size * 2 + b_row.size * 4
                      + 2 * 8 * bp * 512 * 2)
    return pl.pallas_call(
        conv1_kernel,
        out_shape=jax.ShapeDtypeStruct((2, 8, bp, 512), jnp.bfloat16),
        grid=(bp // btile,),
        in_specs=[
            pl.BlockSpec((2, 14, btile, 90), lambda i: (0, 0, i, 0)),
            pl.BlockSpec((90, 1024), lambda i: (0, 0)),
            pl.BlockSpec((1, 512), lambda i: (0, 0)),
        ],
        out_specs=pl.BlockSpec((2, 8, btile, 512), lambda i: (0, 0, i, 0)),
        compiler_params=_compiler_params(),
        cost_estimate=pl.CostEstimate(flops=flops, transcendentals=0,
                                      bytes_accessed=bytes_accessed),
    )(im_p, w_merged, b_row)


def conv2_layer(q, w, b, *, btile):
    """q: (2, 8, Bp, 512) bf16 -> (7, Bp, 512) bf16 pooled features."""
    bp = q.shape[2]
    w_merged, b_row = _conv2_merged_weights(w, b)
    flops = bp * 2 * 3 * (7 * 512 * 1024 * 2)
    bytes_accessed = (q.size * 2 + w_merged.size * 2 + b_row.size * 4
                      + 7 * bp * 512 * 2)
    return pl.pallas_call(
        conv2_kernel,
        out_shape=jax.ShapeDtypeStruct((7, bp, 512), jnp.bfloat16),
        grid=(bp // btile,),
        in_specs=[
            pl.BlockSpec((2, 8, btile, 512), lambda i: (0, 0, i, 0)),
            pl.BlockSpec((3, 512, 1024), lambda i: (0, 0, 0)),
            pl.BlockSpec((1, 512), lambda i: (0, 0)),
        ],
        out_specs=pl.BlockSpec((7, btile, 512), lambda i: (0, i, 0)),
        compiler_params=_compiler_params(),
        cost_estimate=pl.CostEstimate(flops=flops, transcendentals=0,
                                      bytes_accessed=bytes_accessed),
    )(q, w_merged, b_row)


def fc_layer(feat, w1, b1, w2, b2, *, tile):
    """feat: (7, Bp, 512) bf16 -> (z (Bp,128) f32, padded logits (Bp,128) f32)."""
    bp = feat.shape[1]
    w1p, b1r, w2p, b2p = _fc_weights(w1, b1, w2, b2)
    flops = 2 * bp * (7 * 512 * 128 + 128 * 128)
    bytes_accessed = (feat.size * 2 + w1p.size * 2 + w2p.size * 2
                      + bp * 128 * 4 * 2)
    return pl.pallas_call(
        fc_kernel,
        out_shape=(jax.ShapeDtypeStruct((bp, 128), jnp.float32),
                   jax.ShapeDtypeStruct((bp, 128), jnp.float32)),
        grid=(bp // tile,),
        in_specs=[
            pl.BlockSpec((7, tile, 512), lambda i: (0, i, 0)),
            pl.BlockSpec((7, 512, 128), lambda i: (0, 0, 0)),
            pl.BlockSpec((1, 128), lambda i: (0, 0)),
            pl.BlockSpec((128, 128), lambda i: (0, 0)),
            pl.BlockSpec((1, 128), lambda i: (0, 0)),
        ],
        out_specs=(pl.BlockSpec((tile, 128), lambda i: (i, 0)),
                   pl.BlockSpec((tile, 128), lambda i: (i, 0))),
        compiler_params=_compiler_params(),
        cost_estimate=pl.CostEstimate(flops=flops, transcendentals=0,
                                      bytes_accessed=bytes_accessed),
    )(feat, w1p, b1r, w2p, b2p)


# ----------------------------- parameters -----------------------------------

def init_params(key):
    """Deterministic init mimicking PyTorch default U(-1/sqrt(fan_in), 1/sqrt(fan_in))."""
    ks = jax.random.split(key, 8)

    def u(k, shape, fan_in):
        bound = 1.0 / math.sqrt(fan_in)
        return jax.random.uniform(k, shape, jnp.float32, -bound, bound)

    p = {}
    p["conv1_w"] = u(ks[0], (32, 1, 3, 3), 1 * 9)
    p["conv1_b"] = u(ks[1], (32,), 1 * 9)
    p["conv2_w"] = u(ks[2], (64, 32, 3, 3), 32 * 9)
    p["conv2_b"] = u(ks[3], (64,), 32 * 9)
    p["fc1_w"] = u(ks[4], (64 * 7 * 7, 128), 64 * 7 * 7)   # stored (in, out)
    p["fc1_b"] = u(ks[5], (128,), 64 * 7 * 7)
    p["fc2_w"] = u(ks[6], (128, 10), 128)
    p["fc2_b"] = u(ks[7], (10,), 128)
    return p


# ----------------------------- forward --------------------------------------

def cnn_forward(params, x_nchw):
    """x_nchw: (B, 1, 28, 28) f32 -> (logits (B, 10), z (B, 128)); eval mode."""
    b = x_nchw.shape[0]
    bp = _round_up(b, 8)
    btile = max(d for d in (32, 16, 8) if bp % d == 0)
    fc_tile = bp if bp <= 1024 else max(
        d for d in (1024, 512, 256, 128, 64, 32, 16, 8) if bp % d == 0)

    # conv1 input prep: pad -> ky-folded im2row (K = 3*30 = 90) -> row-parity
    # split, batch as the minor M dim so the kernel's (rows, batch)->M collapse
    # is layout-free.  (Tiny raw input; the only XLA relayout in the network.)
    x = jnp.pad(x_nchw[:, 0].astype(jnp.bfloat16),
                ((0, bp - b), (1, 1), (1, 1)))                       # (bp,30,30)
    im = jnp.concatenate([x[:, 0:28], x[:, 1:29], x[:, 2:30]], axis=-1)  # (bp,28,90)
    im_p = jnp.transpose(jnp.stack([im[:, 0::2], im[:, 1::2]], axis=0),
                         (0, 2, 1, 3))                               # (2,14,bp,90)

    q = conv1_layer(im_p, params["conv1_w"], params["conv1_b"], btile=btile)
    feat = conv2_layer(q, params["conv2_w"], params["conv2_b"], btile=btile)
    z_p, logits_p = fc_layer(feat, params["fc1_w"], params["fc1_b"],
                             params["fc2_w"], params["fc2_b"], tile=fc_tile)
    return logits_p[:b, :10], z_p[:b]


# ----------------------------- reference (pure JAX) --------------------------

def cnn_reference(params, x_nchw):
    dn = ("NCHW", "OIHW", "NCHW")
    y = jax.lax.conv_general_dilated(x_nchw, params["conv1_w"], (1, 1),
                                     ((1, 1), (1, 1)), dimension_numbers=dn)
    y = jax.nn.relu(y + params["conv1_b"][None, :, None, None])
    b, c, h, w = y.shape
    y = y.reshape(b, c, h // 2, 2, w // 2, 2).max(axis=(3, 5))
    y = jax.lax.conv_general_dilated(y, params["conv2_w"], (1, 1),
                                     ((1, 1), (1, 1)), dimension_numbers=dn)
    y = jax.nn.relu(y + params["conv2_b"][None, :, None, None])
    b, c, h, w = y.shape
    y = y.reshape(b, c, h // 2, 2, w // 2, 2).max(axis=(3, 5))
    f = y.reshape(b, -1)
    z = f @ params["fc1_w"] + params["fc1_b"]
    logits = z @ params["fc2_w"] + params["fc2_b"]
    return logits, z


if __name__ == "__main__":
    key = jax.random.PRNGKey(0)
    k_param, k_x = jax.random.split(key)

    params = init_params(k_param)
    # MNIST-style input implied by Linear(64*7*7, ...): (B, 1, 28, 28)
    x = jax.random.normal(k_x, (2, 1, 28, 28), jnp.float32)

    logits, z = jax.jit(cnn_forward)(params, x)
    jax.block_until_ready((logits, z))

    assert logits.shape == (2, 10) and z.shape == (2, 128)
    assert logits.dtype == jnp.float32 and z.dtype == jnp.float32

    # Sanity check vs. pure-JAX reference (loose tolerance: bf16 MXU inputs).
    ref_logits, ref_z = jax.jit(cnn_reference)(params, x)
    for got, ref in ((logits, ref_logits), (z, ref_z)):
        err = float(jnp.max(jnp.abs(got - ref)))
        scale = float(jnp.max(jnp.abs(ref))) + 1.0
        assert err <= 0.05 * scale, f"numerical mismatch: err={err}, scale={scale}"

    print("KERNEL_OK")
</pallas_src>

<mosaic_0001>
module attributes {stable_mosaic.version = 11 : i64} {
  func.func @conv1_kernel(%arg0: i32, %arg1: memref<2x14x8x90xbf16, #tpu.memory_space<vmem>>, %arg2: memref<90x1024xbf16, #tpu.memory_space<vmem>>, %arg3: memref<1x512xf32, #tpu.memory_space<vmem>>, %arg4: memref<2x8x8x512xbf16, #tpu.memory_space<vmem>>) attributes {dimension_semantics = [#tpu.dimension_semantics<parallel>], iteration_bounds = array<i64: 1>, scalar_prefetch = 0 : i64, scratch_operands = 0 : i64, tpu.core_type = #tpu.core_type<tc>, window_params = [{transform_indices = @transform_0, window_bounds = array<i64: 2, 14, 8, 90>}, {pipeline_mode = #tpu.pipeline_mode<synchronous>, transform_indices = @transform_1, window_bounds = array<i64: 90, 1024>}, {pipeline_mode = #tpu.pipeline_mode<synchronous>, transform_indices = @transform_2, window_bounds = array<i64: 1, 512>}, {transform_indices = @transform_3, window_bounds = array<i64: 2, 8, 8, 512>}]} {
    %c0 = arith.constant 0 : index
    %c0_0 = arith.constant 0 : index
    %c0_1 = arith.constant 0 : index
    %c0_2 = arith.constant 0 : index
    %0 = vector.load %arg1[%c0, %c0_0, %c0_1, %c0_2] : memref<2x14x8x90xbf16, #tpu.memory_space<vmem>>, vector<1x14x8x90xbf16>
    %1 = vector.shape_cast %0 : vector<1x14x8x90xbf16> to vector<14x8x90xbf16>
    %2 = vector.shape_cast %1 : vector<14x8x90xbf16> to vector<112x90xbf16>
    %c0_3 = arith.constant 0 : index
    %c0_4 = arith.constant 0 : index
    %3 = vector.load %arg2[%c0_3, %c0_4] : memref<90x1024xbf16, #tpu.memory_space<vmem>>, vector<90x1024xbf16>
    %cst = arith.constant dense<0.000000e+00> : vector<112x1024xf32>
    %4 = tpu.matmul %2, %3, %cst {dimension_numbers = #tpu.dot_dimension_numbers<[1], [0], [0], [1], [0, 0, 1, 1], [], []>} : vector<112x90xbf16>, vector<90x1024xbf16>, vector<112x1024xf32> -> vector<112x1024xf32>
    %5 = vector.extract_strided_slice %4 {offsets = [0, 0], sizes = [112, 512], strides = [1, 1]} : vector<112x1024xf32> to vector<112x512xf32>
    %6 = vector.extract_strided_slice %4 {offsets = [0, 512], sizes = [112, 512], strides = [1, 1]} : vector<112x1024xf32> to vector<112x512xf32>
    %7 = arith.maximumf %5, %6 : vector<112x512xf32>
    %c1 = arith.constant 1 : index
    %c0_5 = arith.constant 0 : index
    %c0_6 = arith.constant 0 : index
    %c0_7 = arith.constant 0 : index
    %8 = vector.load %arg1[%c1, %c0_5, %c0_6, %c0_7] : memref<2x14x8x90xbf16, #tpu.memory_space<vmem>>, vector<1x14x8x90xbf16>
    %9 = vector.shape_cast %8 : vector<1x14x8x90xbf16> to vector<14x8x90xbf16>
    %10 = vector.shape_cast %9 : vector<14x8x90xbf16> to vector<112x90xbf16>
    %c0_8 = arith.constant 0 : index
    %c0_9 = arith.constant 0 : index
    %11 = vector.load %arg2[%c0_8, %c0_9] : memref<90x1024xbf16, #tpu.memory_space<vmem>>, vector<90x1024xbf16>
    %cst_10 = arith.constant dense<0.000000e+00> : vector<112x1024xf32>
    %12 = tpu.matmul %10, %11, %cst_10 {dimension_numbers = #tpu.dot_dimension_numbers<[1], [0], [0], [1], [0, 0, 1, 1], [], []>} : vector<112x90xbf16>, vector<90x1024xbf16>, vector<112x1024xf32> -> vector<112x1024xf32>
    %13 = vector.extract_strided_slice %12 {offsets = [0, 0], sizes = [112, 512], strides = [1, 1]} : vector<112x1024xf32> to vector<112x512xf32>
    %14 = vector.extract_strided_slice %12 {offsets = [0, 512], sizes = [112, 512], strides = [1, 1]} : vector<112x1024xf32> to vector<112x512xf32>
    %15 = arith.maximumf %13, %14 : vector<112x512xf32>
    %16 = arith.maximumf %7, %15 : vector<112x512xf32>
    %c0_11 = arith.constant 0 : index
    %c0_12 = arith.constant 0 : index
    %17 = vector.load %arg3[%c0_11, %c0_12] : memref<1x512xf32, #tpu.memory_space<vmem>>, vector<1x512xf32>
    %18 = vector.broadcast %17 : vector<1x512xf32> to vector<112x512xf32>
    %19 = arith.addf %16, %18 : vector<112x512xf32>
    %cst_13 = arith.constant 0.000000e+00 : f32
    %20 = vector.broadcast %cst_13 : f32 to vector<112x512xf32>
    %21 = arith.maximumf %19, %20 : vector<112x512xf32>
    %22 = vector.shape_cast %21 : vector<112x512xf32> to vector<7x2x8x512xf32>
    %cst_14 = arith.constant 0.000000e+00 : f32
    %23 = vector.broadcast %cst_14 : f32 to vector<1x8x512xf32>
    %24 = vector.extract_strided_slice %22 {offsets = [0, 1, 0, 0], sizes = [7, 1, 8, 512], strides = [1, 1, 1, 1]} : vector<7x2x8x512xf32> to vector<7x1x8x512xf32>
    %25 = vector.shape_cast %24 : vector<7x1x8x512xf32> to vector<7x8x512xf32>
    %26 = tpu.concatenate %23, %25 in 0 : vector<1x8x512xf32>, vector<7x8x512xf32> -> vector<8x8x512xf32>
    %27 = vector.extract_strided_slice %22 {offsets = [0, 0, 0, 0], sizes = [7, 1, 8, 512], strides = [1, 1, 1, 1]} : vector<7x2x8x512xf32> to vector<7x1x8x512xf32>
    %28 = vector.shape_cast %27 : vector<7x1x8x512xf32> to vector<7x8x512xf32>
    %29 = tpu.concatenate %28, %23 in 0 : vector<7x8x512xf32>, vector<1x8x512xf32> -> vector<8x8x512xf32>
    %30 = vector.shape_cast %26 : vector<8x8x512xf32> to vector<1x8x8x512xf32>
    %31 = vector.shape_cast %29 : vector<8x8x512xf32> to vector<1x8x8x512xf32>
    %32 = tpu.concatenate %30, %31 in 0 : vector<1x8x8x512xf32>, vector<1x8x8x512xf32> -> vector<2x8x8x512xf32>
    %33 = arith.truncf %32 : vector<2x8x8x512xf32> to vector<2x8x8x512xbf16>
    %c0_15 = arith.constant 0 : index
    %c0_16 = arith.constant 0 : index
    %c0_17 = arith.constant 0 : index
    %c0_18 = arith.constant 0 : index
    %34 = vector.load %arg4[%c0_15, %c0_16, %c0_17, %c0_18] : memref<2x8x8x512xbf16, #tpu.memory_space<vmem>>, vector<2x8x8x512xbf16>
    tpu.vector_store %arg4[%c0_15, %c0_16, %c0_17, %c0_18], %33 {strides = array<i32>} : memref<2x8x8x512xbf16, #tpu.memory_space<vmem>>, vector<2x8x8x512xbf16>,
    return
  }
  func.func @transform_0(%arg0: i32) -> (i32, i32, i32, i32) {
    %c0_i32 = arith.constant 0 : i32
    %c0_i32_0 = arith.constant 0 : i32
    %c0_i32_1 = arith.constant 0 : i32
    %c0_i32_2 = arith.constant 0 : i32
    return %c0_i32, %c0_i32_0, %arg0, %c0_i32_1 : i32, i32, i32, i32
  }
  func.func @transform_1(%arg0: i32) -> (i32, i32) {
    %c0_i32 = arith.constant 0 : i32
    %c0_i32_0 = arith.constant 0 : i32
    %c0_i32_1 = arith.constant 0 : i32
    return %c0_i32, %c0_i32_0 : i32, i32
  }
  func.func @transform_2(%arg0: i32) -> (i32, i32) {
    %c0_i32 = arith.constant 0 : i32
    %c0_i32_0 = arith.constant 0 : i32
    %c0_i32_1 = arith.constant 0 : i32
    return %c0_i32, %c0_i32_0 : i32, i32
  }
  func.func @transform_3(%arg0: i32) -> (i32, i32, i32, i32) {
    %c0_i32 = arith.constant 0 : i32
    %c0_i32_0 = arith.constant 0 : i32
    %c0_i32_1 = arith.constant 0 : i32
    %c0_i32_2 = arith.constant 0 : i32
    return %c0_i32, %c0_i32_0, %arg0, %c0_i32_1 : i32, i32, i32, i32
  }
}

module attributes {stable_mosaic.version = 11 : i64} {
  func.func @conv2_kernel(%arg0: i32, %arg1: memref<2x8x8x512xbf16, #tpu.memory_space<vmem>>, %arg2: memref<3x512x1024xbf16, #tpu.memory_space<vmem>>, %arg3: memref<1x512xf32, #tpu.memory_space<vmem>>, %arg4: memref<7x8x512xbf16, #tpu.memory_space<vmem>>) attributes {dimension_semantics = [#tpu.dimension_semantics<parallel>], iteration_bounds = array<i64: 1>, scalar_prefetch = 0 : i64, scratch_operands = 0 : i64, tpu.core_type = #tpu.core_type<tc>, window_params = [{transform_indices = @transform_0, window_bounds = array<i64: 2, 8, 8, 512>}, {pipeline_mode = #tpu.pipeline_mode<synchronous>, transform_indices = @transform_1, window_bounds = array<i64: 3, 512, 1024>}, {pipeline_mode = #tpu.pipeline_mode<synchronous>, transform_indices = @transform_2, window_bounds = array<i64: 1, 512>}, {transform_indices = @transform_3, window_bounds = array<i64: 7, 8, 512>}]} {
    %cst = arith.constant 0.000000e+00 : f32
    %0 = vector.broadcast %cst : f32 to vector<56x1024xf32>
    %c0 = arith.constant 0 : index
    %c0_0 = arith.constant 0 : index
    %c0_1 = arith.constant 0 : index
    %c0_2 = arith.constant 0 : index
    %1 = vector.load %arg1[%c0, %c0_0, %c0_1, %c0_2] : memref<2x8x8x512xbf16, #tpu.memory_space<vmem>>, vector<1x7x8x512xbf16>
    %2 = vector.shape_cast %1 : vector<1x7x8x512xbf16> to vector<7x8x512xbf16>
    %3 = vector.shape_cast %2 : vector<7x8x512xbf16> to vector<56x512xbf16>
    %c0_3 = arith.constant 0 : index
    %c0_4 = arith.constant 0 : index
    %c0_5 = arith.constant 0 : index
    %4 = vector.load %arg2[%c0_3, %c0_4, %c0_5] : memref<3x512x1024xbf16, #tpu.memory_space<vmem>>, vector<1x512x1024xbf16>
    %5 = vector.shape_cast %4 : vector<1x512x1024xbf16> to vector<512x1024xbf16>
    %cst_6 = arith.constant dense<0.000000e+00> : vector<56x1024xf32>
    %6 = tpu.matmul %3, %5, %cst_6 {dimension_numbers = #tpu.dot_dimension_numbers<[1], [0], [0], [1], [0, 0, 1, 1], [], []>} : vector<56x512xbf16>, vector<512x1024xbf16>, vector<56x1024xf32> -> vector<56x1024xf32>
    %7 = arith.addf %0, %6 : vector<56x1024xf32>
    %c1 = arith.constant 1 : index
    %c0_7 = arith.constant 0 : index
    %c0_8 = arith.constant 0 : index
    %c0_9 = arith.constant 0 : index
    %8 = vector.load %arg1[%c1, %c0_7, %c0_8, %c0_9] : memref<2x8x8x512xbf16, #tpu.memory_space<vmem>>, vector<1x7x8x512xbf16>
    %9 = vector.shape_cast %8 : vector<1x7x8x512xbf16> to vector<7x8x512xbf16>
    %10 = vector.shape_cast %9 : vector<7x8x512xbf16> to vector<56x512xbf16>
    %c1_10 = arith.constant 1 : index
    %c0_11 = arith.constant 0 : index
    %c0_12 = arith.constant 0 : index
    %11 = vector.load %arg2[%c1_10, %c0_11, %c0_12] : memref<3x512x1024xbf16, #tpu.memory_space<vmem>>, vector<1x512x1024xbf16>
    %12 = vector.shape_cast %11 : vector<1x512x1024xbf16> to vector<512x1024xbf16>
    %cst_13 = arith.constant dense<0.000000e+00> : vector<56x1024xf32>
    %13 = tpu.matmul %10, %12, %cst_13 {dimension_numbers = #tpu.dot_dimension_numbers<[1], [0], [0], [1], [0, 0, 1, 1], [], []>} : vector<56x512xbf16>, vector<512x1024xbf16>, vector<56x1024xf32> -> vector<56x1024xf32>
    %14 = arith.addf %7, %13 : vector<56x1024xf32>
    %c0_14 = arith.constant 0 : index
    %c1_15 = arith.constant 1 : index
    %c0_16 = arith.constant 0 : index
    %c0_17 = arith.constant 0 : index
    %15 = vector.load %arg1[%c0_14, %c1_15, %c0_16, %c0_17] : memref<2x8x8x512xbf16, #tpu.memory_space<vmem>>, vector<1x7x8x512xbf16>
    %16 = vector.shape_cast %15 : vector<1x7x8x512xbf16> to vector<7x8x512xbf16>
    %17 = vector.shape_cast %16 : vector<7x8x512xbf16> to vector<56x512xbf16>
    %c2 = arith.constant 2 : index
    %c0_18 = arith.constant 0 : index
    %c0_19 = arith.constant 0 : index
    %18 = vector.load %arg2[%c2, %c0_18, %c0_19] : memref<3x512x1024xbf16, #tpu.memory_space<vmem>>, vector<1x512x1024xbf16>
    %19 = vector.shape_cast %18 : vector<1x512x1024xbf16> to vector<512x1024xbf16>
    %cst_20 = arith.constant dense<0.000000e+00> : vector<56x1024xf32>
    %20 = tpu.matmul %17, %19, %cst_20 {dimension_numbers = #tpu.dot_dimension_numbers<[1], [0], [0], [1], [0, 0, 1, 1], [], []>} : vector<56x512xbf16>, vector<512x1024xbf16>, vector<56x1024xf32> -> vector<56x1024xf32>
    %21 = arith.addf %14, %20 : vector<56x1024xf32>
    %22 = vector.extract_strided_slice %21 {offsets = [0, 0], sizes = [56, 512], strides = [1, 1]} : vector<56x1024xf32> to vector<56x512xf32>
    %23 = vector.extract_strided_slice %21 {offsets = [0, 512], sizes = [56, 512], strides = [1, 1]} : vector<56x1024xf32> to vector<56x512xf32>
    %24 = arith.maximumf %22, %23 : vector<56x512xf32>
    %cst_21 = arith.constant 0.000000e+00 : f32
    %25 = vector.broadcast %cst_21 : f32 to vector<56x1024xf32>
    %c1_22 = arith.constant 1 : index
    %c0_23 = arith.constant 0 : index
    %c0_24 = arith.constant 0 : index
    %c0_25 = arith.constant 0 : index
    %26 = vector.load %arg1[%c1_22, %c0_23, %c0_24, %c0_25] : memref<2x8x8x512xbf16, #tpu.memory_space<vmem>>, vector<1x7x8x512xbf16>
    %27 = vector.shape_cast %26 : vector<1x7x8x512xbf16> to vector<7x8x512xbf16>
    %28 = vector.shape_cast %27 : vector<7x8x512xbf16> to vector<56x512xbf16>
    %c0_26 = arith.constant 0 : index
    %c0_27 = arith.constant 0 : index
    %c0_28 = arith.constant 0 : index
    %29 = vector.load %arg2[%c0_26, %c0_27, %c0_28] : memref<3x512x1024xbf16, #tpu.memory_space<vmem>>, vector<1x512x1024xbf16>
    %30 = vector.shape_cast %29 : vector<1x512x1024xbf16> to vector<512x1024xbf16>
    %cst_29 = arith.constant dense<0.000000e+00> : vector<56x1024xf32>
    %31 = tpu.matmul %28, %30, %cst_29 {dimension_numbers = #tpu.dot_dimension_numbers<[1], [0], [0], [1], [0, 0, 1, 1], [], []>} : vector<56x512xbf16>, vector<512x1024xbf16>, vector<56x1024xf32> -> vector<56x1024xf32>
    %32 = arith.addf %25, %31 : vector<56x1024xf32>
    %c0_30 = arith.constant 0 : index
    %c1_31 = arith.constant 1 : index
    %c0_32 = arith.constant 0 : index
    %c0_33 = arith.constant 0 : index
    %33 = vector.load %arg1[%c0_30, %c1_31, %c0_32, %c0_33] : memref<2x8x8x512xbf16, #tpu.memory_space<vmem>>, vector<1x7x8x512xbf16>
    %34 = vector.shape_cast %33 : vector<1x7x8x512xbf16> to vector<7x8x512xbf16>
    %35 = vector.shape_cast %34 : vector<7x8x512xbf16> to vector<56x512xbf16>
    %c1_34 = arith.constant 1 : index
    %c0_35 = arith.constant 0 : index
    %c0_36 = arith.constant 0 : index
    %36 = vector.load %arg2[%c1_34, %c0_35, %c0_36] : memref<3x512x1024xbf16, #tpu.memory_space<vmem>>, vector<1x512x1024xbf16>
    %37 = vector.shape_cast %36 : vector<1x512x1024xbf16> to vector<512x1024xbf16>
    %cst_37 = arith.constant dense<0.000000e+00> : vector<56x1024xf32>
    %38 = tpu.matmul %35, %37, %cst_37 {dimension_numbers = #tpu.dot_dimension_numbers<[1], [0], [0], [1], [0, 0, 1, 1], [], []>} : vector<56x512xbf16>, vector<512x1024xbf16>, vector<56x1024xf32> -> vector<56x1024xf32>
    %39 = arith.addf %32, %38 : vector<56x1024xf32>
    %c1_38 = arith.constant 1 : index
    %c1_39 = arith.constant 1 : index
    %c0_40 = arith.constant 0 : index
    %c0_41 = arith.constant 0 : index
    %40 = vector.load %arg1[%c1_38, %c1_39, %c0_40, %c0_41] : memref<2x8x8x512xbf16, #tpu.memory_space<vmem>>, vector<1x7x8x512xbf16>
    %41 = vector.shape_cast %40 : vector<1x7x8x512xbf16> to vector<7x8x512xbf16>
    %42 = vector.shape_cast %41 : vector<7x8x512xbf16> to vector<56x512xbf16>
    %c2_42 = arith.constant 2 : index
    %c0_43 = arith.constant 0 : index
    %c0_44 = arith.constant 0 : index
    %43 = vector.load %arg2[%c2_42, %c0_43, %c0_44] : memref<3x512x1024xbf16, #tpu.memory_space<vmem>>, vector<1x512x1024xbf16>
    %44 = vector.shape_cast %43 : vector<1x512x1024xbf16> to vector<512x1024xbf16>
    %cst_45 = arith.constant dense<0.000000e+00> : vector<56x1024xf32>
    %45 = tpu.matmul %42, %44, %cst_45 {dimension_numbers = #tpu.dot_dimension_numbers<[1], [0], [0], [1], [0, 0, 1, 1], [], []>} : vector<56x512xbf16>, vector<512x1024xbf16>, vector<56x1024xf32> -> vector<56x1024xf32>
    %46 = arith.addf %39, %45 : vector<56x1024xf32>
    %47 = vector.extract_strided_slice %46 {offsets = [0, 0], sizes = [56, 512], strides = [1, 1]} : vector<56x1024xf32> to vector<56x512xf32>
    %48 = vector.extract_strided_slice %46 {offsets = [0, 512], sizes = [56, 512], strides = [1, 1]} : vector<56x1024xf32> to vector<56x512xf32>
    %49 = arith.maximumf %47, %48 : vector<56x512xf32>
    %50 = arith.maximumf %24, %49 : vector<56x512xf32>
    %c0_46 = arith.constant 0 : index
    %c0_47 = arith.constant 0 : index
    %51 = vector.load %arg3[%c0_46, %c0_47] : memref<1x512xf32, #tpu.memory_space<vmem>>, vector<1x512xf32>
    %52 = vector.broadcast %51 : vector<1x512xf32> to vector<56x512xf32>
    %53 = arith.addf %50, %52 : vector<56x512xf32>
    %cst_48 = arith.constant 0.000000e+00 : f32
    %54 = vector.broadcast %cst_48 : f32 to vector<56x512xf32>
    %55 = arith.maximumf %53, %54 : vector<56x512xf32>
    %56 = vector.shape_cast %55 : vector<56x512xf32> to vector<7x8x512xf32>
    %57 = arith.truncf %56 : vector<7x8x512xf32> to vector<7x8x512xbf16>
    %c0_49 = arith.constant 0 : index
    %c0_50 = arith.constant 0 : index
    %c0_51 = arith.constant 0 : index
    %58 = vector.load %arg4[%c0_49, %c0_50, %c0_51] : memref<7x8x512xbf16, #tpu.memory_space<vmem>>, vector<7x8x512xbf16>
    tpu.vector_store %arg4[%c0_49, %c0_50, %c0_51], %57 {strides = array<i32>} : memref<7x8x512xbf16, #tpu.memory_space<vmem>>, vector<7x8x512xbf16>,
    return
  }
  func.func @transform_0(%arg0: i32) -> (i32, i32, i32, i32) {
    %c0_i32 = arith.constant 0 : i32
    %c0_i32_0 = arith.constant 0 : i32
    %c0_i32_1 = arith.constant 0 : i32
    %c0_i32_2 = arith.constant 0 : i32
    return %c0_i32, %c0_i32_0, %arg0, %c0_i32_1 : i32, i32, i32, i32
  }
  func.func @transform_1(%arg0: i32) -> (i32, i32, i32) {
    %c0_i32 = arith.constant 0 : i32
    %c0_i32_0 = arith.constant 0 : i32
    %c0_i32_1 = arith.constant 0 : i32
    %c0_i32_2 = arith.constant 0 : i32
    return %c0_i32, %c0_i32_0, %c0_i32_1 : i32, i32, i32
  }
  func.func @transform_2(%arg0: i32) -> (i32, i32) {
    %c0_i32 = arith.constant 0 : i32
    %c0_i32_0 = arith.constant 0 : i32
    %c0_i32_1 = arith.constant 0 : i32
    return %c0_i32, %c0_i32_0 : i32, i32
  }
  func.func @transform_3(%arg0: i32) -> (i32, i32, i32) {
    %c0_i32 = arith.constant 0 : i32
    %c0_i32_0 = arith.constant 0 : i32
    %c0_i32_1 = arith.constant 0 : i32
    return %c0_i32, %arg0, %c0_i32_0 : i32, i32, i32
  }
}

module attributes {stable_mosaic.version = 11 : i64} {
  func.func @fc_kernel(%arg0: i32, %arg1: memref<7x8x512xbf16, #tpu.memory_space<vmem>>, %arg2: memref<7x512x128xbf16, #tpu.memory_space<vmem>>, %arg3: memref<1x128xf32, #tpu.memory_space<vmem>>, %arg4: memref<128x128xbf16, #tpu.memory_space<vmem>>, %arg5: memref<1x128xf32, #tpu.memory_space<vmem>>, %arg6: memref<8x128xf32, #tpu.memory_space<vmem>>, %arg7: memref<8x128xf32, #tpu.memory_space<vmem>>) attributes {dimension_semantics = [#tpu.dimension_semantics<parallel>], iteration_bounds = array<i64: 1>, scalar_prefetch = 0 : i64, scratch_operands = 0 : i64, tpu.core_type = #tpu.core_type<tc>, window_params = [{transform_indices = @transform_0, window_bounds = array<i64: 7, 8, 512>}, {pipeline_mode = #tpu.pipeline_mode<synchronous>, transform_indices = @transform_1, window_bounds = array<i64: 7, 512, 128>}, {pipeline_mode = #tpu.pipeline_mode<synchronous>, transform_indices = @transform_2, window_bounds = array<i64: 1, 128>}, {pipeline_mode = #tpu.pipeline_mode<synchronous>, transform_indices = @transform_3, window_bounds = array<i64: 128, 128>}, {pipeline_mode = #tpu.pipeline_mode<synchronous>, transform_indices = @transform_4, window_bounds = array<i64: 1, 128>}, {transform_indices = @transform_5, window_bounds = array<i64: 8, 128>}, {transform_indices = @transform_6, window_bounds = array<i64: 8, 128>}]} {
    %cst = arith.constant 0.000000e+00 : f32
    %0 = vector.broadcast %cst : f32 to vector<8x128xf32>
    %c0 = arith.constant 0 : index
    %c0_0 = arith.constant 0 : index
    %c0_1 = arith.constant 0 : index
    %1 = vector.load %arg1[%c0, %c0_0, %c0_1] : memref<7x8x512xbf16, #tpu.memory_space<vmem>>, vector<1x8x512xbf16>
    %2 = vector.shape_cast %1 : vector<1x8x512xbf16> to vector<8x512xbf16>
    %c0_2 = arith.constant 0 : index
    %c0_3 = arith.constant 0 : index
    %c0_4 = arith.constant 0 : index
    %3 = vector.load %arg2[%c0_2, %c0_3, %c0_4] : memref<7x512x128xbf16, #tpu.memory_space<vmem>>, vector<1x512x128xbf16>
    %4 = vector.shape_cast %3 : vector<1x512x128xbf16> to vector<512x128xbf16>
    %cst_5 = arith.constant dense<0.000000e+00> : vector<8x128xf32>
    %5 = tpu.matmul %2, %4, %cst_5 {dimension_numbers = #tpu.dot_dimension_numbers<[1], [0], [0], [1], [0, 0, 1, 1], [], []>} : vector<8x512xbf16>, vector<512x128xbf16>, vector<8x128xf32> -> vector<8x128xf32>
    %6 = arith.addf %0, %5 : vector<8x128xf32>
    %c1 = arith.constant 1 : index
    %c0_6 = arith.constant 0 : index
    %c0_7 = arith.constant 0 : index
    %7 = vector.load %arg1[%c1, %c0_6, %c0_7] : memref<7x8x512xbf16, #tpu.memory_space<vmem>>, vector<1x8x512xbf16>
    %8 = vector.shape_cast %7 : vector<1x8x512xbf16> to vector<8x512xbf16>
    %c1_8 = arith.constant 1 : index
    %c0_9 = arith.constant 0 : index
    %c0_10 = arith.constant 0 : index
    %9 = vector.load %arg2[%c1_8, %c0_9, %c0_10] : memref<7x512x128xbf16, #tpu.memory_space<vmem>>, vector<1x512x128xbf16>
    %10 = vector.shape_cast %9 : vector<1x512x128xbf16> to vector<512x128xbf16>
    %cst_11 = arith.constant dense<0.000000e+00> : vector<8x128xf32>
    %11 = tpu.matmul %8, %10, %cst_11 {dimension_numbers = #tpu.dot_dimension_numbers<[1], [0], [0], [1], [0, 0, 1, 1], [], []>} : vector<8x512xbf16>, vector<512x128xbf16>, vector<8x128xf32> -> vector<8x128xf32>
    %12 = arith.addf %6, %11 : vector<8x128xf32>
    %c2 = arith.constant 2 : index
    %c0_12 = arith.constant 0 : index
    %c0_13 = arith.constant 0 : index
    %13 = vector.load %arg1[%c2, %c0_12, %c0_13] : memref<7x8x512xbf16, #tpu.memory_space<vmem>>, vector<1x8x512xbf16>
    %14 = vector.shape_cast %13 : vector<1x8x512xbf16> to vector<8x512xbf16>
    %c2_14 = arith.constant 2 : index
    %c0_15 = arith.constant 0 : index
    %c0_16 = arith.constant 0 : index
    %15 = vector.load %arg2[%c2_14, %c0_15, %c0_16] : memref<7x512x128xbf16, #tpu.memory_space<vmem>>, vector<1x512x128xbf16>
    %16 = vector.shape_cast %15 : vector<1x512x128xbf16> to vector<512x128xbf16>
    %cst_17 = arith.constant dense<0.000000e+00> : vector<8x128xf32>
    %17 = tpu.matmul %14, %16, %cst_17 {dimension_numbers = #tpu.dot_dimension_numbers<[1], [0], [0], [1], [0, 0, 1, 1], [], []>} : vector<8x512xbf16>, vector<512x128xbf16>, vector<8x128xf32> -> vector<8x128xf32>
    %18 = arith.addf %12, %17 : vector<8x128xf32>
    %c3 = arith.constant 3 : index
    %c0_18 = arith.constant 0 : index
    %c0_19 = arith.constant 0 : index
    %19 = vector.load %arg1[%c3, %c0_18, %c0_19] : memref<7x8x512xbf16, #tpu.memory_space<vmem>>, vector<1x8x512xbf16>
    %20 = vector.shape_cast %19 : vector<1x8x512xbf16> to vector<8x512xbf16>
    %c3_20 = arith.constant 3 : index
    %c0_21 = arith.constant 0 : index
    %c0_22 = arith.constant 0 : index
    %21 = vector.load %arg2[%c3_20, %c0_21, %c0_22] : memref<7x512x128xbf16, #tpu.memory_space<vmem>>, vector<1x512x128xbf16>
    %22 = vector.shape_cast %21 : vector<1x512x128xbf16> to vector<512x128xbf16>
    %cst_23 = arith.constant dense<0.000000e+00> : vector<8x128xf32>
    %23 = tpu.matmul %20, %22, %cst_23 {dimension_numbers = #tpu.dot_dimension_numbers<[1], [0], [0], [1], [0, 0, 1, 1], [], []>} : vector<8x512xbf16>, vector<512x128xbf16>, vector<8x128xf32> -> vector<8x128xf32>
    %24 = arith.addf %18, %23 : vector<8x128xf32>
    %c4 = arith.constant 4 : index
    %c0_24 = arith.constant 0 : index
    %c0_25 = arith.constant 0 : index
    %25 = vector.load %arg1[%c4, %c0_24, %c0_25] : memref<7x8x512xbf16, #tpu.memory_space<vmem>>, vector<1x8x512xbf16>
    %26 = vector.shape_cast %25 : vector<1x8x512xbf16> to vector<8x512xbf16>
    %c4_26 = arith.constant 4 : index
    %c0_27 = arith.constant 0 : index
    %c0_28 = arith.constant 0 : index
    %27 = vector.load %arg2[%c4_26, %c0_27, %c0_28] : memref<7x512x128xbf16, #tpu.memory_space<vmem>>, vector<1x512x128xbf16>
    %28 = vector.shape_cast %27 : vector<1x512x128xbf16> to vector<512x128xbf16>
    %cst_29 = arith.constant dense<0.000000e+00> : vector<8x128xf32>
    %29 = tpu.matmul %26, %28, %cst_29 {dimension_numbers = #tpu.dot_dimension_numbers<[1], [0], [0], [1], [0, 0, 1, 1], [], []>} : vector<8x512xbf16>, vector<512x128xbf16>, vector<8x128xf32> -> vector<8x128xf32>
    %30 = arith.addf %24, %29 : vector<8x128xf32>
    %c5 = arith.constant 5 : index
    %c0_30 = arith.constant 0 : index
    %c0_31 = arith.constant 0 : index
    %31 = vector.load %arg1[%c5, %c0_30, %c0_31] : memref<7x8x512xbf16, #tpu.memory_space<vmem>>, vector<1x8x512xbf16>
    %32 = vector.shape_cast %31 : vector<1x8x512xbf16> to vector<8x512xbf16>
    %c5_32 = arith.constant 5 : index
    %c0_33 = arith.constant 0 : index
    %c0_34 = arith.constant 0 : index
    %33 = vector.load %arg2[%c5_32, %c0_33, %c0_34] : memref<7x512x128xbf16, #tpu.memory_space<vmem>>, vector<1x512x128xbf16>
    %34 = vector.shape_cast %33 : vector<1x512x128xbf16> to vector<512x128xbf16>
    %cst_35 = arith.constant dense<0.000000e+00> : vector<8x128xf32>
    %35 = tpu.matmul %32, %34, %cst_35 {dimension_numbers = #tpu.dot_dimension_numbers<[1], [0], [0], [1], [0, 0, 1, 1], [], []>} : vector<8x512xbf16>, vector<512x128xbf16>, vector<8x128xf32> -> vector<8x128xf32>
    %36 = arith.addf %30, %35 : vector<8x128xf32>
    %c6 = arith.constant 6 : index
    %c0_36 = arith.constant 0 : index
    %c0_37 = arith.constant 0 : index
    %37 = vector.load %arg1[%c6, %c0_36, %c0_37] : memref<7x8x512xbf16, #tpu.memory_space<vmem>>, vector<1x8x512xbf16>
    %38 = vector.shape_cast %37 : vector<1x8x512xbf16> to vector<8x512xbf16>
    %c6_38 = arith.constant 6 : index
    %c0_39 = arith.constant 0 : index
    %c0_40 = arith.constant 0 : index
    %39 = vector.load %arg2[%c6_38, %c0_39, %c0_40] : memref<7x512x128xbf16, #tpu.memory_space<vmem>>, vector<1x512x128xbf16>
    %40 = vector.shape_cast %39 : vector<1x512x128xbf16> to vector<512x128xbf16>
    %cst_41 = arith.constant dense<0.000000e+00> : vector<8x128xf32>
    %41 = tpu.matmul %38, %40, %cst_41 {dimension_numbers = #tpu.dot_dimension_numbers<[1], [0], [0], [1], [0, 0, 1, 1], [], []>} : vector<8x512xbf16>, vector<512x128xbf16>, vector<8x128xf32> -> vector<8x128xf32>
    %42 = arith.addf %36, %41 : vector<8x128xf32>
    %c0_42 = arith.constant 0 : index
    %c0_43 = arith.constant 0 : index
    %43 = vector.load %arg3[%c0_42, %c0_43] : memref<1x128xf32, #tpu.memory_space<vmem>>, vector<1x128xf32>
    %44 = vector.broadcast %43 : vector<1x128xf32> to vector<8x128xf32>
    %45 = arith.addf %42, %44 : vector<8x128xf32>
    %c0_44 = arith.constant 0 : index
    %c0_45 = arith.constant 0 : index
    %46 = vector.load %arg6[%c0_44, %c0_45] : memref<8x128xf32, #tpu.memory_space<vmem>>, vector<8x128xf32>
    tpu.vector_store %arg6[%c0_44, %c0_45], %45 {strides = array<i32>} : memref<8x128xf32, #tpu.memory_space<vmem>>, vector<8x128xf32>,
    %47 = arith.truncf %45 : vector<8x128xf32> to vector<8x128xbf16>
    %c0_46 = arith.constant 0 : index
    %c0_47 = arith.constant 0 : index
    %48 = vector.load %arg4[%c0_46, %c0_47] : memref<128x128xbf16, #tpu.memory_space<vmem>>, vector<128x128xbf16>
    %cst_48 = arith.constant dense<0.000000e+00> : vector<8x128xf32>
    %49 = tpu.matmul %47, %48, %cst_48 {dimension_numbers = #tpu.dot_dimension_numbers<[1], [0], [0], [1], [0, 0, 1, 1], [], []>} : vector<8x128xbf16>, vector<128x128xbf16>, vector<8x128xf32> -> vector<8x128xf32>
    %c0_49 = arith.constant 0 : index
    %c0_50 = arith.constant 0 : index
    %50 = vector.load %arg5[%c0_49, %c0_50] : memref<1x128xf32, #tpu.memory_space<vmem>>, vector<1x128xf32>
    %51 = vector.broadcast %50 : vector<1x128xf32> to vector<8x128xf32>
    %52 = arith.addf %49, %51 : vector<8x128xf32>
    %c0_51 = arith.constant 0 : index
    %c0_52 = arith.constant 0 : index
    %53 = vector.load %arg7[%c0_51, %c0_52] : memref<8x128xf32, #tpu.memory_space<vmem>>, vector<8x128xf32>
    tpu.vector_store %arg7[%c0_51, %c0_52], %52 {strides = array<i32>} : memref<8x128xf32, #tpu.memory_space<vmem>>, vector<8x128xf32>,
    return
  }
  func.func @transform_0(%arg0: i32) -> (i32, i32, i32) {
    %c0_i32 = arith.constant 0 : i32
    %c0_i32_0 = arith.constant 0 : i32
    %c0_i32_1 = arith.constant 0 : i32
    return %c0_i32, %arg0, %c0_i32_0 : i32, i32, i32
  }
  func.func @transform_1(%arg0: i32) -> (i32, i32, i32) {
    %c0_i32 = arith.constant 0 : i32
    %c0_i32_0 = arith.constant 0 : i32
    %c0_i32_1 = arith.constant 0 : i32
    %c0_i32_2 = arith.constant 0 : i32
    return %c0_i32, %c0_i32_0, %c0_i32_1 : i32, i32, i32
  }
  func.func @transform_2(%arg0: i32) -> (i32, i32) {
    %c0_i32 = arith.constant 0 : i32
    %c0_i32_0 = arith.constant 0 : i32
    %c0_i32_1 = arith.constant 0 : i32
    return %c0_i32, %c0_i32_0 : i32, i32
  }
  func.func @transform_3(%arg0: i32) -> (i32, i32) {
    %c0_i32 = arith.constant 0 : i32
    %c0_i32_0 = arith.constant 0 : i32
    %c0_i32_1 = arith.constant 0 : i32
    return %c0_i32, %c0_i32_0 : i32, i32
  }
  func.func @transform_4(%arg0: i32) -> (i32, i32) {
    %c0_i32 = arith.constant 0 : i32
    %c0_i32_0 = arith.constant 0 : i32
    %c0_i32_1 = arith.constant 0 : i32
    return %c0_i32, %c0_i32_0 : i32, i32
  }
  func.func @transform_5(%arg0: i32) -> (i32, i32) {
    %c0_i32 = arith.constant 0 : i32
    %c0_i32_0 = arith.constant 0 : i32
    return %arg0, %c0_i32 : i32, i32
  }
  func.func @transform_6(%arg0: i32) -> (i32, i32) {
    %c0_i32 = arith.constant 0 : i32
    %c0_i32_0 = arith.constant 0 : i32
    return %arg0, %c0_i32 : i32, i32
  }
}

</mosaic_0001>

<llo_original>
// kernel: cnn_forward.3
$region0: #{cnn_forward.3}
  #allocation0 [shape = 'u32[]', space=smem, size = 0x4, offset = 0x4, fixed_abs, tag = 'smem constant byte address 0x4 - core index']
  #allocation1 [shape = 'u32[144,128]{1,0:T(1,128)}', space=vmem, size = 0x12000, scoped, tag = 'internal scratch']
  %s0 = inlined_call_operand.vmem [shape: bf16[2,14,8,90], index: 0, kind: input, shape index: {}]
  %s1 = inlined_call_operand.vmem [shape: bf16[90,1024], index: 1, kind: input, shape index: {}]
  %s2 = inlined_call_operand.vmem [shape: f32[1,512], index: 2, kind: input, shape index: {}]
  %s3 = inlined_call_operand.vmem [shape: bf16[2,8,8,512], index: 3, kind: output, shape index: {}]
  %s4 = sld [smem:[#allocation0]]
  $region22: #{cnn_forward.3} parent=0
    _
  %s6 = ssub.s32 1, %s4
  %s7 = scalar_select 0, %s6, %s4
  // Predicated region
  $region2: #{cnn_forward.3} parent=0 // pred_check
    _
  $region3: #{cnn_forward.3} parent=0 // pred_check_branch
    %9 = sbr.rel (0) target = $region5
  $region4: #{cnn_forward.3} parent=0 // pred_region
    _
  $region5: #{cnn_forward.3} parent=0 // pred_fallthru
    _
  // Predicated region
  $region6: #{cnn_forward.3} parent=0 // pred_check
    _
  $region7: #{cnn_forward.3} parent=0 // pred_check_branch
    %11 = sbr.rel (0) target = $region9
  $region8: #{cnn_forward.3} parent=0 // pred_region
    _
  $region9: #{cnn_forward.3} parent=0 // pred_fallthru
    _
  // Predicated region
  $region10: #{cnn_forward.3} parent=0 // pred_check
    _
  $region11: #{cnn_forward.3} parent=0 // pred_check_branch
    %13 = sbr.rel (0) target = $region13
  $region12: #{cnn_forward.3} parent=0 // pred_region
    _
  $region13: #{cnn_forward.3} parent=0 // pred_fallthru
    _
  %v15 = vld [vmem:[%s0] sm:$0xf]
  %v16 = vld [vmem:[%s0 + $0x4] sm:$0xf]
  %v17 = vld [vmem:[%s0 + $0x8] sm:$0xf]
  %v18 = vld [vmem:[%s0 + $0xc] sm:$0xf]
  %v19 = vld [vmem:[%s0 + $0x10] sm:$0xf]
  %v20 = vld [vmem:[%s0 + $0x14] sm:$0xf]
  %v21 = vld [vmem:[%s0 + $0x18] sm:$0xf]
  %v22 = vld [vmem:[%s0 + $0x1c] sm:$0xf]
  %v23 = vld [vmem:[%s0 + $0x20] sm:$0xf]
  %v24 = vld [vmem:[%s0 + $0x24] sm:$0xf]
  %v25 = vld [vmem:[%s0 + $0x28] sm:$0xf]
  %v26 = vld [vmem:[%s0 + $0x2c] sm:$0xf]
  %v27 = vld [vmem:[%s0 + $0x30] sm:$0xf]
  %v28 = vld [vmem:[%s0 + $0x34] sm:$0xf]
  %v29 = vld [vmem:[%s1] sm:$0xff]
  %v30 = vld [vmem:[%s1 + $0x8] sm:$0xff]
  %v31 = vld [vmem:[%s1 + $0x10] sm:$0xff]
  %v32 = vld [vmem:[%s1 + $0x18] sm:$0xff]
  %v33 = vld [vmem:[%s1 + $0x20] sm:$0xff]
  %v34 = vld [vmem:[%s1 + $0x28] sm:$0xff]
  %v35 = vld [vmem:[%s1 + $0x30] sm:$0xff]
  %v36 = vld [vmem:[%s1 + $0x38] sm:$0xff]
  %v37 = vld [vmem:[%s1 + $0x40] sm:$0xff]
  %v38 = vld [vmem:[%s1 + $0x48] sm:$0xff]
  %v39 = vld [vmem:[%s1 + $0x50] sm:$0xff]
  %v40 = vld [vmem:[%s1 + $0x58] sm:$0xff]
  %v41 = vld [vmem:[%s1 + $0x60] sm:$0xff]
  %v42 = vld [vmem:[%s1 + $0x68] sm:$0xff]
  %v43 = vld [vmem:[%s1 + $0x70] sm:$0xff]
  %v44 = vld [vmem:[%s1 + $0x78] sm:$0xff]
  %v45 = vld [vmem:[%s1 + $0x80] sm:$0xff]
  %v46 = vld [vmem:[%s1 + $0x88] sm:$0xff]
  %v47 = vld [vmem:[%s1 + $0x90] sm:$0xff]
  %v48 = vld [vmem:[%s1 + $0x98] sm:$0xff]
  %v49 = vld [vmem:[%s1 + $0xa0] sm:$0xff]
  %v50 = vld [vmem:[%s1 + $0xa8] sm:$0xff]
  %v51 = vld [vmem:[%s1 + $0xb0] sm:$0xff]
  %v52 = vld [vmem:[%s1 + $0xb8] sm:$0xff]
  %v53 = vld [vmem:[%s1 + $0xc0] sm:$0xff]
  %v54 = vld [vmem:[%s1 + $0xc8] sm:$0xff]
  %v55 = vld [vmem:[%s1 + $0xd0] sm:$0xff]
  %v56 = vld [vmem:[%s1 + $0xd8] sm:$0xff]
  %v57 = vld [vmem:[%s1 + $0xe0] sm:$0xff]
  %v58 = vld [vmem:[%s1 + $0xe8] sm:$0xff]
  %v59 = vld [vmem:[%s1 + $0xf0] sm:$0xff]
  %v60 = vld [vmem:[%s1 + $0xf8] sm:$0xff]
  %v61 = vld [vmem:[%s1 + $0x100] sm:$0xff]
  %v62 = vld [vmem:[%s1 + $0x108] sm:$0xff]
  %v63 = vld [vmem:[%s1 + $0x110] sm:$0xff]
  %v64 = vld [vmem:[%s1 + $0x118] sm:$0xff]
  %v65 = vld [vmem:[%s1 + $0x120] sm:$0xff]
  %v66 = vld [vmem:[%s1 + $0x128] sm:$0xff]
  %v67 = vld [vmem:[%s1 + $0x130] sm:$0xff]
  %v68 = vld [vmem:[%s1 + $0x138] sm:$0xff]
  %v69 = vld [vmem:[%s1 + $0x140] sm:$0xff]
  %v70 = vld [vmem:[%s1 + $0x148] sm:$0xff]
  %v71 = vld [vmem:[%s1 + $0x150] sm:$0xff]
  %v72 = vld [vmem:[%s1 + $0x158] sm:$0xff]
  %v73 = vld [vmem:[%s1 + $0x160] sm:$0x11]
  %v74 = vld [vmem:[%s1 + $0x168] sm:$0x11]
  %v75 = vld [vmem:[%s1 + $0x170] sm:$0x11]
  %v76 = vld [vmem:[%s1 + $0x178] sm:$0x11]
  %v91 = vunpack.c.l.b16 %v15
  %v92 = vunpack.c.l.b16 %v16
  %v93 = vunpack.c.l.b16 %v17
  %v94 = vunpack.c.l.b16 %v18
  %v95 = vunpack.c.l.b16 %v19
  %v96 = vunpack.c.l.b16 %v20
  %v97 = vunpack.c.l.b16 %v21
  %v98 = vunpack.c.l.b16 %v22
  %v99 = vunpack.c.l.b16 %v23
  %v100 = vunpack.c.l.b16 %v24
  %v101 = vunpack.c.l.b16 %v25
  %v102 = vunpack.c.l.b16 %v26
  %v103 = vunpack.c.l.b16 %v27
  %v104 = vunpack.c.l.b16 %v28
  %v105 = vpack.c.b16 %v92, %v91
  %v106 = vpack.c.b16 %v94, %v93
  %v107 = vpack.c.b16 %v96, %v95
  %v108 = vpack.c.b16 %v98, %v97
  %v109 = vpack.c.b16 %v100, %v99
  %v110 = vpack.c.b16 %v102, %v101
  %v111 = vpack.c.b16 %v104, %v103
  %v160 = vunpack.c.l.b16 %v29
  %v161 = vunpack.c.h.b16 %v29
  %v162 = vunpack.c.l.b16 %v30
  %v163 = vunpack.c.h.b16 %v30
  %v164 = vunpack.c.l.b16 %v31
  %v165 = vunpack.c.h.b16 %v31
  %v166 = vunpack.c.l.b16 %v32
  %v167 = vunpack.c.h.b16 %v32
  %v168 = vunpack.c.l.b16 %v33
  %v169 = vunpack.c.h.b16 %v33
  %v170 = vunpack.c.l.b16 %v34
  %v171 = vunpack.c.h.b16 %v34
  %v172 = vunpack.c.l.b16 %v35
  %v173 = vunpack.c.h.b16 %v35
  %v174 = vunpack.c.l.b16 %v36
  %v175 = vunpack.c.h.b16 %v36
  %v176 = vunpack.c.l.b16 %v37
  %v177 = vunpack.c.h.b16 %v37
  %v178 = vunpack.c.l.b16 %v38
  %v179 = vunpack.c.h.b16 %v38
  %v180 = vunpack.c.l.b16 %v39
  %v181 = vunpack.c.h.b16 %v39
  %v182 = vunpack.c.l.b16 %v40
  %v183 = vunpack.c.h.b16 %v40
  %v184 = vunpack.c.l.b16 %v41
  %v185 = vunpack.c.h.b16 %v41
  %v186 = vunpack.c.l.b16 %v42
  %v187 = vunpack.c.h.b16 %v42
  %v188 = vunpack.c.l.b16 %v43
  %v189 = vunpack.c.h.b16 %v43
  %v190 = vunpack.c.l.b16 %v44
  %v191 = vunpack.c.h.b16 %v44
  %v192 = vunpack.c.l.b16 %v45
  %v193 = vunpack.c.h.b16 %v45
  %v194 = vunpack.c.l.b16 %v46
  %v195 = vunpack.c.h.b16 %v46
  %v196 = vunpack.c.l.b16 %v47
  %v197 = vunpack.c.h.b16 %v47
  %v198 = vunpack.c.l.b16 %v48
  %v199 = vunpack.c.h.b16 %v48
  %v200 = vunpack.c.l.b16 %v49
  %v201 = vunpack.c.h.b16 %v49
  %v202 = vunpack.c.l.b16 %v50
  %v203 = vunpack.c.h.b16 %v50
  %v204 = vunpack.c.l.b16 %v51
  %v205 = vunpack.c.h.b16 %v51
  %v206 = vunpack.c.l.b16 %v52
  %v207 = vunpack.c.h.b16 %v52
  %v208 = vunpack.c.l.b16 %v53
  %v209 = vunpack.c.h.b16 %v53
  %v210 = vunpack.c.l.b16 %v54
  %v211 = vunpack.c.h.b16 %v54
  %v212 = vunpack.c.l.b16 %v55
  %v213 = vunpack.c.h.b16 %v55
  %v214 = vunpack.c.l.b16 %v56
  %v215 = vunpack.c.h.b16 %v56
  %v216 = vunpack.c.l.b16 %v57
  %v217 = vunpack.c.h.b16 %v57
  %v218 = vunpack.c.l.b16 %v58
  %v219 = vunpack.c.h.b16 %v58
  %v220 = vunpack.c.l.b16 %v59
  %v221 = vunpack.c.h.b16 %v59
  %v222 = vunpack.c.l.b16 %v60
  %v223 = vunpack.c.h.b16 %v60
  %v224 = vunpack.c.l.b16 %v61
  %v225 = vunpack.c.h.b16 %v61
  %v226 = vunpack.c.l.b16 %v62
  %v227 = vunpack.c.h.b16 %v62
  %v228 = vunpack.c.l.b16 %v63
  %v229 = vunpack.c.h.b16 %v63
  %v230 = vunpack.c.l.b16 %v64
  %v231 = vunpack.c.h.b16 %v64
  %v232 = vunpack.c.l.b16 %v65
  %v233 = vunpack.c.h.b16 %v65
  %v234 = vunpack.c.l.b16 %v66
  %v235 = vunpack.c.h.b16 %v66
  %v236 = vunpack.c.l.b16 %v67
  %v237 = vunpack.c.h.b16 %v67
  %v238 = vunpack.c.l.b16 %v68
  %v239 = vunpack.c.h.b16 %v68
  %v240 = vunpack.c.l.b16 %v69
  %v241 = vunpack.c.h.b16 %v69
  %v242 = vunpack.c.l.b16 %v70
  %v243 = vunpack.c.h.b16 %v70
  %v244 = vunpack.c.l.b16 %v71
  %v245 = vunpack.c.h.b16 %v71
  %v246 = vunpack.c.l.b16 %v72
  %v247 = vunpack.c.h.b16 %v72
  %v248 = vunpack.c.l.b16 %v73
  %v249 = vunpack.c.h.b16 %v73
  %v250 = vunpack.c.l.b16 %v74
  %v251 = vunpack.c.h.b16 %v74
  %v252 = vunpack.c.l.b16 %v75
  %v253 = vunpack.c.h.b16 %v75
  %v254 = vunpack.c.l.b16 %v76
  %v255 = vunpack.c.h.b16 %v76
  %v256 = vpack.c.b16 %v168, %v160
  %v257 = vpack.c.b16 %v169, %v161
  %v258 = vpack.c.b16 %v170, %v162
  %v259 = vpack.c.b16 %v171, %v163
  %v260 = vpack.c.b16 %v172, %v164
  %v261 = vpack.c.b16 %v173, %v165
  %v262 = vpack.c.b16 %v174, %v166
  %v263 = vpack.c.b16 %v175, %v167
  %v264 = vpack.c.b16 %v184, %v176
  %v265 = vpack.c.b16 %v185, %v177
  %v266 = vpack.c.b16 %v186, %v178
  %v267 = vpack.c.b16 %v187, %v179
  %v268 = vpack.c.b16 %v188, %v180
  %v269 = vpack.c.b16 %v189, %v181
  %v270 = vpack.c.b16 %v190, %v182
  %v271 = vpack.c.b16 %v191, %v183
  %v272 = vpack.c.b16 %v200, %v192
  %v273 = vpack.c.b16 %v201, %v193
  %v274 = vpack.c.b16 %v202, %v194
  %v275 = vpack.c.b16 %v203, %v195
  %v276 = vpack.c.b16 %v204, %v196
  %v277 = vpack.c.b16 %v205, %v197
  %v278 = vpack.c.b16 %v206, %v198
  %v279 = vpack.c.b16 %v207, %v199
  %v280 = vpack.c.b16 %v216, %v208
  %v281 = vpack.c.b16 %v217, %v209
  %v282 = vpack.c.b16 %v218, %v210
  %v283 = vpack.c.b16 %v219, %v211
  %v284 = vpack.c.b16 %v220, %v212
  %v285 = vpack.c.b16 %v221, %v213
  %v286 = vpack.c.b16 %v222, %v214
  %v287 = vpack.c.b16 %v223, %v215
  %v288 = vpack.c.b16 %v232, %v224
  %v289 = vpack.c.b16 %v233, %v225
  %v290 = vpack.c.b16 %v234, %v226
  %v291 = vpack.c.b16 %v235, %v227
  %v292 = vpack.c.b16 %v236, %v228
  %v293 = vpack.c.b16 %v237, %v229
  %v294 = vpack.c.b16 %v238, %v230
  %v295 = vpack.c.b16 %v239, %v231
  %v296 = vpack.c.b16 %v248, %v240
  %v297 = vpack.c.b16 %v249, %v241
  %v298 = vpack.c.b16 %v250, %v242
  %v299 = vpack.c.b16 %v251, %v243
  %v300 = vpack.c.b16 %v252, %v244
  %v301 = vpack.c.b16 %v253, %v245
  %v302 = vpack.c.b16 %v254, %v246
  %v303 = vpack.c.b16 %v255, %v247
  %vm344 = vcmask 736256
  %v346 = vsel %vm344, %v105, 0
  %v349 = vsel %vm344, %v106, 0
  %v352 = vsel %vm344, %v107, 0
  %v355 = vsel %vm344, %v108, 0
  %v358 = vsel %vm344, %v109, 0
  %v361 = vsel %vm344, %v110, 0
  %v364 = vsel %vm344, %v111, 0
  %vm366 = vcmask 1044480
  %v368 = vsel %vm366, %v296, 0
  %v371 = vsel %vm366, %v297, 0
  %v374 = vsel %vm366, %v298, 0
  %v377 = vsel %vm366, %v299, 0
  %v380 = vsel %vm366, %v300, 0
  %v383 = vsel %vm366, %v301, 0
  %v386 = vsel %vm366, %v302, 0
  %v389 = vsel %vm366, %v303, 0
  %391 = vmatprep.subr.bf16.mxu0 %v257
  %392 = vmatpush1.bf16.msra.mxu0 %v256
  %393 = vmatprep.subr.bf16.mxu0 %v265
  %394 = vmatpush1.bf16.msra.mxu0 %v264
  %395 = vmatprep.subr.bf16.mxu0 %v273
  %396 = vmatpush1.bf16.msra.mxu0 %v272
  %397 = vmatprep.subr.bf16.mxu0 %v281
  %398 = vmatpush1.bf16.msra.mxu0 %v280
  %399 = vmatprep.subr.bf16.mxu0 %v289
  %400 = vmatpush1.bf16.msra.mxu0 %v288
  %401 = vmatprep.subr.bf16.mxu0 %v371
  %402 = vmatpush1.bf16.msra.mxu0 %v368
  %403 = vmatprep.subr.bf16.mxu0 0
  %404 = vmatpush1.bf16.msra.mxu0 0
  %405 = vmatprep.subr.bf16.mxu0 0
  %406 = vmatpush1.bf16.msra.mxu0 0
  %407 = vmatprep.subr.bf16.mxu0 0
  %408 = vmatpush1.bf16.msra.mxu0 0
  %409 = vmatprep.subr.bf16.mxu0 0
  %410 = vmatpush1.bf16.msra.mxu0 0
  %411 = vmatprep.subr.bf16.mxu0 0
  %412 = vmatpush1.bf16.msra.mxu0 0
  %413 = vmatprep.subr.bf16.mxu0 0
  %414 = vmatpush1.bf16.msra.mxu0 0
  %415 = vmatprep.subr.bf16.mxu0 0
  %416 = vmatpush1.bf16.msra.mxu0 0
  %417 = vmatprep.subr.bf16.mxu0 0
  %418 = vmatpush1.bf16.msra.mxu0 0
  %419 = vmatprep.subr.bf16.mxu0 0
  %420 = vmatpush1.bf16.msra.mxu0 0
  %421 = vmatprep.subr.bf16.mxu0 0
  %422 = vmatpush1.bf16.msra.mxu0 0
  %423 = vmatprep.mubr.bf16.mxu0 0
  %424 = vmatmul.mubr.bf16.gmra.mrb[0].mxu0 %v346
  %v425 = vpop.f32.mrb[0].mxu0
  %v426 = vadd.f32 0.0, %v425
  %v427 = vpop.f32.mrb[0].mxu0
  %v428 = vadd.f32 0.0, %v427
  %v429 = vpop.f32.mrb[0].mxu0
  %v430 = vadd.f32 0.0, %v429
  %v431 = vpop.f32.mrb[0].mxu0
  %v432 = vadd.f32 0.0, %v431
  %433 = vmatprep.mubr.bf16.mxu0 0
  %434 = vmatmul.mubr.bf16.gmra.mrb[0].mxu0 %v349
  %v435 = vpop.f32.mrb[0].mxu0
  %v436 = vadd.f32 0.0, %v435
  %v437 = vpop.f32.mrb[0].mxu0
  %v438 = vadd.f32 0.0, %v437
  %v439 = vpop.f32.mrb[0].mxu0
  %v440 = vadd.f32 0.0, %v439
  %v441 = vpop.f32.mrb[0].mxu0
  %v442 = vadd.f32 0.0, %v441
  %443 = vmatprep.mubr.bf16.mxu0 0
  %444 = vmatmul.mubr.bf16.gmra.mrb[0].mxu0 %v352
  %v445 = vpop.f32.mrb[0].mxu0
  %v446 = vadd.f32 0.0, %v445
  %v447 = vpop.f32.mrb[0].mxu0
  %v448 = vadd.f32 0.0, %v447
  %v449 = vpop.f32.mrb[0].mxu0
  %v450 = vadd.f32 0.0, %v449
  %v451 = vpop.f32.mrb[0].mxu0
  %v452 = vadd.f32 0.0, %v451
  %453 = vmatprep.mubr.bf16.mxu0 0
  %454 = vmatmul.mubr.bf16.gmra.mrb[0].mxu0 %v355
  %v455 = vpop.f32.mrb[0].mxu0
  %v456 = vadd.f32 0.0, %v455
  %v457 = vpop.f32.mrb[0].mxu0
  %v458 = vadd.f32 0.0, %v457
  %v459 = vpop.f32.mrb[0].mxu0
  %v460 = vadd.f32 0.0, %v459
  %v461 = vpop.f32.mrb[0].mxu0
  %v462 = vadd.f32 0.0, %v461
  %463 = vmatprep.mubr.bf16.mxu0 0
  %464 = vmatmul.mubr.bf16.gmra.mrb[0].mxu0 %v358
  %v465 = vpop.f32.mrb[0].mxu0
  %v466 = vadd.f32 0.0, %v465
  %v467 = vpop.f32.mrb[0].mxu0
  %v468 = vadd.f32 0.0, %v467
  %v469 = vpop.f32.mrb[0].mxu0
  %v470 = vadd.f32 0.0, %v469
  %v471 = vpop.f32.mrb[0].mxu0
  %v472 = vadd.f32 0.0, %v471
  %473 = vmatprep.mubr.bf16.mxu0 0
  %474 = vmatmul.mubr.bf16.gmra.mrb[0].mxu0 %v361
  %v475 = vpop.f32.mrb[0].mxu0
  %v476 = vadd.f32 0.0, %v475
  %v477 = vpop.f32.mrb[0].mxu0
  %v478 = vadd.f32 0.0, %v477
  %v479 = vpop.f32.mrb[0].mxu0
  %v480 = vadd.f32 0.0, %v479
  %v481 = vpop.f32.mrb[0].mxu0
  %v482 = vadd.f32 0.0, %v481
  %483 = vmatprep.mubr.bf16.mxu0 0
  %484 = vmatmul.mubr.bf16.gmra.mrb[0].mxu0 %v364
  %v485 = vpop.f32.mrb[0].mxu0
  %v486 = vadd.f32 0.0, %v485
  %v487 = vpop.f32.mrb[0].mxu0
  %v488 = vadd.f32 0.0, %v487
  %v489 = vpop.f32.mrb[0].mxu0
  %v490 = vadd.f32 0.0, %v489
  %v491 = vpop.f32.mrb[0].mxu0
  %v492 = vadd.f32 0.0, %v491
  %493 = vdwg.mxu0
  %494 = vmatprep.subr.bf16.mxu0 %v259
  %495 = vmatpush1.bf16.msra.mxu0 %v258
  %496 = vmatprep.subr.bf16.mxu0 %v267
  %497 = vmatpush1.bf16.msra.mxu0 %v266
  %498 = vmatprep.subr.bf16.mxu0 %v275
  %499 = vmatpush1.bf16.msra.mxu0 %v274
  %500 = vmatprep.subr.bf16.mxu0 %v283
  %501 = vmatpush1.bf16.msra.mxu0 %v282
  %502 = vmatprep.subr.bf16.mxu0 %v291
  %503 = vmatpush1.bf16.msra.mxu0 %v290
  %504 = vmatprep.subr.bf16.mxu0 %v377
  %505 = vmatpush1.bf16.msra.mxu0 %v374
  %506 = vmatprep.subr.bf16.mxu0 0
  %507 = vmatpush1.bf16.msra.mxu0 0
  %508 = vmatprep.subr.bf16.mxu0 0
  %509 = vmatpush1.bf16.msra.mxu0 0
  %510 = vmatprep.subr.bf16.mxu0 0
  %511 = vmatpush1.bf16.msra.mxu0 0
  %512 = vmatprep.subr.bf16.mxu0 0
  %513 = vmatpush1.bf16.msra.mxu0 0
  %514 = vmatprep.subr.bf16.mxu0 0
  %515 = vmatpush1.bf16.msra.mxu0 0
  %516 = vmatprep.subr.bf16.mxu0 0
  %517 = vmatpush1.bf16.msra.mxu0 0
  %518 = vmatprep.subr.bf16.mxu0 0
  %519 = vmatpush1.bf16.msra.mxu0 0
  %520 = vmatprep.subr.bf16.mxu0 0
  %521 = vmatpush1.bf16.msra.mxu0 0
  %522 = vmatprep.subr.bf16.mxu0 0
  %523 = vmatpush1.bf16.msra.mxu0 0
  %524 = vmatprep.subr.bf16.mxu0 0
  %525 = vmatpush1.bf16.msra.mxu0 0
  %526 = vmatprep.mubr.bf16.mxu0 0
  %527 = vmatmul.mubr.bf16.gmra.mrb[0].mxu0 %v346
  %v528 = vpop.f32.mrb[0].mxu0
  %v529 = vadd.f32 0.0, %v528
  %v530 = vpop.f32.mrb[0].mxu0
  %v531 = vadd.f32 0.0, %v530
  %v532 = vpop.f32.mrb[0].mxu0
  %v533 = vadd.f32 0.0, %v532
  %v534 = vpop.f32.mrb[0].mxu0
  %v535 = vadd.f32 0.0, %v534
  %536 = vmatprep.mubr.bf16.mxu0 0
  %537 = vmatmul.mubr.bf16.gmra.mrb[0].mxu0 %v349
  %v538 = vpop.f32.mrb[0].mxu0
  %v539 = vadd.f32 0.0, %v538
  %v540 = vpop.f32.mrb[0].mxu0
  %v541 = vadd.f32 0.0, %v540
  %v542 = vpop.f32.mrb[0].mxu0
  %v543 = vadd.f32 0.0, %v542
  %v544 = vpop.f32.mrb[0].mxu0
  %v545 = vadd.f32 0.0, %v544
  %546 = vmatprep.mubr.bf16.mxu0 0
  %547 = vmatmul.mubr.bf16.gmra.mrb[0].mxu0 %v352
  %v548 = vpop.f32.mrb[0].mxu0
  %v549 = vadd.f32 0.0, %v548
  %v550 = vpop.f32.mrb[0].mxu0
  %v551 = vadd.f32 0.0, %v550
  %v552 = vpop.f32.mrb[0].mxu0
  %v553 = vadd.f32 0.0, %v552
  %v554 = vpop.f32.mrb[0].mxu0
  %v555 = vadd.f32 0.0, %v554
  %556 = vmatprep.mubr.bf16.mxu0 0
  %557 = vmatmul.mubr.bf16.gmra.mrb[0].mxu0 %v355
  %v558 = vpop.f32.mrb[0].mxu0
  %v559 = vadd.f32 0.0, %v558
  %v560 = vpop.f32.mrb[0].mxu0
  %v561 = vadd.f32 0.0, %v560
  %v562 = vpop.f32.mrb[0].mxu0
  %v563 = vadd.f32 0.0, %v562
  %v564 = vpop.f32.mrb[0].mxu0
  %v565 = vadd.f32 0.0, %v564
  %566 = vmatprep.mubr.bf16.mxu0 0
  %567 = vmatmul.mubr.bf16.gmra.mrb[0].mxu0 %v358
  %v568 = vpop.f32.mrb[0].mxu0
  %v569 = vadd.f32 0.0, %v568
  %v570 = vpop.f32.mrb[0].mxu0
  %v571 = vadd.f32 0.0, %v570
  %v572 = vpop.f32.mrb[0].mxu0
  %v573 = vadd.f32 0.0, %v572
  %v574 = vpop.f32.mrb[0].mxu0
  %v575 = vadd.f32 0.0, %v574
  %576 = vmatprep.mubr.bf16.mxu0 0
  %577 = vmatmul.mubr.bf16.gmra.mrb[0].mxu0 %v361
  %v578 = vpop.f32.mrb[0].mxu0
  %v579 = vadd.f32 0.0, %v578
  %v580 = vpop.f32.mrb[0].mxu0
  %v581 = vadd.f32 0.0, %v580
  %v582 = vpop.f32.mrb[0].mxu0
  %v583 = vadd.f32 0.0, %v582
  %v584 = vpop.f32.mrb[0].mxu0
  %v585 = vadd.f32 0.0, %v584
  %586 = vmatprep.mubr.bf16.mxu0 0
  %587 = vmatmul.mubr.bf16.gmra.mrb[0].mxu0 %v364
  %v588 = vpop.f32.mrb[0].mxu0
  %v589 = vadd.f32 0.0, %v588
  %v590 = vpop.f32.mrb[0].mxu0
  %v591 = vadd.f32 0.0, %v590
  %v592 = vpop.f32.mrb[0].mxu0
  %v593 = vadd.f32 0.0, %v592
  %v594 = vpop.f32.mrb[0].mxu0
  %v595 = vadd.f32 0.0, %v594
  %596 = vdwg.mxu0
  %597 = vmatprep.subr.bf16.mxu0 %v261
  %598 = vmatpush1.bf16.msra.mxu0 %v260
  %599 = vmatprep.subr.bf16.mxu0 %v269
  %600 = vmatpush1.bf16.msra.mxu0 %v268
  %601 = vmatprep.subr.bf16.mxu0 %v277
  %602 = vmatpush1.bf16.msra.mxu0 %v276
  %603 = vmatprep.subr.bf16.mxu0 %v285
  %604 = vmatpush1.bf16.msra.mxu0 %v284
  %605 = vmatprep.subr.bf16.mxu0 %v293
  %606 = vmatpush1.bf16.msra.mxu0 %v292
  %607 = vmatprep.subr.bf16.mxu0 %v383
  %608 = vmatpush1.bf16.msra.mxu0 %v380
  %609 = vmatprep.subr.bf16.mxu0 0
  %610 = vmatpush1.bf16.msra.mxu0 0
  %611 = vmatprep.subr.bf16.mxu0 0
  %612 = vmatpush1.bf16.msra.mxu0 0
  %613 = vmatprep.subr.bf16.mxu0 0
  %614 = vmatpush1.bf16.msra.mxu0 0
  %615 = vmatprep.subr.bf16.mxu0 0
  %616 = vmatpush1.bf16.msra.mxu0 0
  %617 = vmatprep.subr.bf16.mxu0 0
  %618 = vmatpush1.bf16.msra.mxu0 0
  %619 = vmatprep.subr.bf16.mxu0 0
  %620 = vmatpush1.bf16.msra.mxu0 0
  %621 = vmatprep.subr.bf16.mxu0 0
  %622 = vmatpush1.bf16.msra.mxu0 0
  %623 = vmatprep.subr.bf16.mxu0 0
  %624 = vmatpush1.bf16.msra.mxu0 0
  %625 = vmatprep.subr.bf16.mxu0 0
  %626 = vmatpush1.bf16.msra.mxu0 0
  %627 = vmatprep.subr.bf16.mxu0 0
  %628 = vmatpush1.bf16.msra.mxu0 0
  %629 = vmatprep.mubr.bf16.mxu0 0
  %630 = vmatmul.mubr.bf16.gmra.mrb[0].mxu0 %v346
  %v631 = vpop.f32.mrb[0].mxu0
  %v632 = vadd.f32 0.0, %v631
  %v633 = vpop.f32.mrb[0].mxu0
  %v634 = vadd.f32 0.0, %v633
  %v635 = vpop.f32.mrb[0].mxu0
  %v636 = vadd.f32 0.0, %v635
  %v637 = vpop.f32.mrb[0].mxu0
  %v638 = vadd.f32 0.0, %v637
  %639 = vmatprep.mubr.bf16.mxu0 0
  %640 = vmatmul.mubr.bf16.gmra.mrb[0].mxu0 %v349
  %v641 = vpop.f32.mrb[0].mxu0
  %v642 = vadd.f32 0.0, %v641
  %v643 = vpop.f32.mrb[0].mxu0
  %v644 = vadd.f32 0.0, %v643
  %v645 = vpop.f32.mrb[0].mxu0
  %v646 = vadd.f32 0.0, %v645
  %v647 = vpop.f32.mrb[0].mxu0
  %v648 = vadd.f32 0.0, %v647
  %649 = vmatprep.mubr.bf16.mxu0 0
  %650 = vmatmul.mubr.bf16.gmra.mrb[0].mxu0 %v352
  %v651 = vpop.f32.mrb[0].mxu0
  %v652 = vadd.f32 0.0, %v651
  %v653 = vpop.f32.mrb[0].mxu0
  %v654 = vadd.f32 0.0, %v653
  %v655 = vpop.f32.mrb[0].mxu0
  %v656 = vadd.f32 0.0, %v655
  %v657 = vpop.f32.mrb[0].mxu0
  %v658 = vadd.f32 0.0, %v657
  %659 = vmatprep.mubr.bf16.mxu0 0
  %660 = vmatmul.mubr.bf16.gmra.mrb[0].mxu0 %v355
  %v661 = vpop.f32.mrb[0].mxu0
  %v662 = vadd.f32 0.0, %v661
  %v663 = vpop.f32.mrb[0].mxu0
  %v664 = vadd.f32 0.0, %v663
  %v665 = vpop.f32.mrb[0].mxu0
  %v666 = vadd.f32 0.0, %v665
  %v667 = vpop.f32.mrb[0].mxu0
  %v668 = vadd.f32 0.0, %v667
  %669 = vmatprep.mubr.bf16.mxu0 0
  %670 = vmatmul.mubr.bf16.gmra.mrb[0].mxu0 %v358
  %v671 = vpop.f32.mrb[0].mxu0
  %v672 = vadd.f32 0.0, %v671
  %v673 = vpop.f32.mrb[0].mxu0
  %v674 = vadd.f32 0.0, %v673
  %v675 = vpop.f32.mrb[0].mxu0
  %v676 = vadd.f32 0.0, %v675
  %v677 = vpop.f32.mrb[0].mxu0
  %v678 = vadd.f32 0.0, %v677
  %679 = vmatprep.mubr.bf16.mxu0 0
  %680 = vmatmul.mubr.bf16.gmra.mrb[0].mxu0 %v361
  %v681 = vpop.f32.mrb[0].mxu0
  %v682 = vadd.f32 0.0, %v681
  %v683 = vpop.f32.mrb[0].mxu0
  %v684 = vadd.f32 0.0, %v683
  %v685 = vpop.f32.mrb[0].mxu0
  %v686 = vadd.f32 0.0, %v685
  %v687 = vpop.f32.mrb[0].mxu0
  %v688 = vadd.f32 0.0, %v687
  %689 = vmatprep.mubr.bf16.mxu0 0
  %690 = vmatmul.mubr.bf16.gmra.mrb[0].mxu0 %v364
  %v691 = vpop.f32.mrb[0].mxu0
  %v692 = vadd.f32 0.0, %v691
  %v693 = vpop.f32.mrb[0].mxu0
  %v694 = vadd.f32 0.0, %v693
  %v695 = vpop.f32.mrb[0].mxu0
  %v696 = vadd.f32 0.0, %v695
  %v697 = vpop.f32.mrb[0].mxu0
  %v698 = vadd.f32 0.0, %v697
  %699 = vdwg.mxu0
  %700 = vmatprep.subr.bf16.mxu0 %v263
  %701 = vmatpush1.bf16.msra.mxu0 %v262
  %702 = vmatprep.subr.bf16.mxu0 %v271
  %703 = vmatpush1.bf16.msra.mxu0 %v270
  %704 = vmatprep.subr.bf16.mxu0 %v279
  %705 = vmatpush1.bf16.msra.mxu0 %v278
  %706 = vmatprep.subr.bf16.mxu0 %v287
  %707 = vmatpush1.bf16.msra.mxu0 %v286
  %708 = vmatprep.subr.bf16.mxu0 %v295
  %709 = vmatpush1.bf16.msra.mxu0 %v294
  %710 = vmatprep.subr.bf16.mxu0 %v389
  %711 = vmatpush1.bf16.msra.mxu0 %v386
  %712 = vmatprep.subr.bf16.mxu0 0
  %713 = vmatpush1.bf16.msra.mxu0 0
  %714 = vmatprep.subr.bf16.mxu0 0
  %715 = vmatpush1.bf16.msra.mxu0 0
  %716 = vmatprep.subr.bf16.mxu0 0
  %717 = vmatpush1.bf16.msra.mxu0 0
  %718 = vmatprep.subr.bf16.mxu0 0
  %719 = vmatpush1.bf16.msra.mxu0 0
  %720 = vmatprep.subr.bf16.mxu0 0
  %721 = vmatpush1.bf16.msra.mxu0 0
  %722 = vmatprep.subr.bf16.mxu0 0
  %723 = vmatpush1.bf16.msra.mxu0 0
  %724 = vmatprep.subr.bf16.mxu0 0
  %725 = vmatpush1.bf16.msra.mxu0 0
  %726 = vmatprep.subr.bf16.mxu0 0
  %727 = vmatpush1.bf16.msra.mxu0 0
  %728 = vmatprep.subr.bf16.mxu0 0
  %729 = vmatpush1.bf16.msra.mxu0 0
  %730 = vmatprep.subr.bf16.mxu0 0
  %731 = vmatpush1.bf16.msra.mxu0 0
  %732 = vmatprep.mubr.bf16.mxu0 0
  %733 = vmatmul.mubr.bf16.gmra.mrb[0].mxu0 %v346
  %v734 = vpop.f32.mrb[0].mxu0
  %v735 = vadd.f32 0.0, %v734
  %v736 = vpop.f32.mrb[0].mxu0
  %v737 = vadd.f32 0.0, %v736
  %v738 = vpop.f32.mrb[0].mxu0
  %v739 = vadd.f32 0.0, %v738
  %v740 = vpop.f32.mrb[0].mxu0
  %v741 = vadd.f32 0.0, %v740
  %742 = vmatprep.mubr.bf16.mxu0 0
  %743 = vmatmul.mubr.bf16.gmra.mrb[0].mxu0 %v349
  %v744 = vpop.f32.mrb[0].mxu0
  %v745 = vadd.f32 0.0, %v744
  %v746 = vpop.f32.mrb[0].mxu0
  %v747 = vadd.f32 0.0, %v746
  %v748 = vpop.f32.mrb[0].mxu0
  %v749 = vadd.f32 0.0, %v748
  %v750 = vpop.f32.mrb[0].mxu0
  %v751 = vadd.f32 0.0, %v750
  %752 = vmatprep.mubr.bf16.mxu0 0
  %753 = vmatmul.mubr.bf16.gmra.mrb[0].mxu0 %v352
  %v754 = vpop.f32.mrb[0].mxu0
  %v755 = vadd.f32 0.0, %v754
  %v756 = vpop.f32.mrb[0].mxu0
  %v757 = vadd.f32 0.0, %v756
  %v758 = vpop.f32.mrb[0].mxu0
  %v759 = vadd.f32 0.0, %v758
  %v760 = vpop.f32.mrb[0].mxu0
  %v761 = vadd.f32 0.0, %v760
  %762 = vmatprep.mubr.bf16.mxu0 0
  %763 = vmatmul.mubr.bf16.gmra.mrb[0].mxu0 %v355
  %v764 = vpop.f32.mrb[0].mxu0
  %v765 = vadd.f32 0.0, %v764
  %v766 = vpop.f32.mrb[0].mxu0
  %v767 = vadd.f32 0.0, %v766
  %v768 = vpop.f32.mrb[0].mxu0
  %v769 = vadd.f32 0.0, %v768
  %v770 = vpop.f32.mrb[0].mxu0
  %v771 = vadd.f32 0.0, %v770
  %772 = vmatprep.mubr.bf16.mxu0 0
  %773 = vmatmul.mubr.bf16.gmra.mrb[0].mxu0 %v358
  %v774 = vpop.f32.mrb[0].mxu0
  %v775 = vadd.f32 0.0, %v774
  %v776 = vpop.f32.mrb[0].mxu0
  %v777 = vadd.f32 0.0, %v776
  %v778 = vpop.f32.mrb[0].mxu0
  %v779 = vadd.f32 0.0, %v778
  %v780 = vpop.f32.mrb[0].mxu0
  %v781 = vadd.f32 0.0, %v780
  %782 = vmatprep.mubr.bf16.mxu0 0
  %783 = vmatmul.mubr.bf16.gmra.mrb[0].mxu0 %v361
  %v784 = vpop.f32.mrb[0].mxu0
  %v785 = vadd.f32 0.0, %v784
  %v786 = vpop.f32.mrb[0].mxu0
  %v787 = vadd.f32 0.0, %v786
  %v788 = vpop.f32.mrb[0].mxu0
  %v789 = vadd.f32 0.0, %v788
  %v790 = vpop.f32.mrb[0].mxu0
  %v791 = vadd.f32 0.0, %v790
  %792 = vmatprep.mubr.bf16.mxu0 0
  %793 = vmatmul.mubr.bf16.gmra.mrb[0].mxu0 %v364
  %v794 = vpop.f32.mrb[0].mxu0
  %v795 = vadd.f32 0.0, %v794
  %v796 = vpop.f32.mrb[0].mxu0
  %v797 = vadd.f32 0.0, %v796
  %v798 = vpop.f32.mrb[0].mxu0
  %v799 = vadd.f32 0.0, %v798
  %v800 = vpop.f32.mrb[0].mxu0
  %v801 = vadd.f32 0.0, %v800
  %802 = vdwg.mxu0
  %v803 = vmax.f32 %v426, %v632
  %v804 = vmax.f32 %v428, %v634
  %v805 = vmax.f32 %v529, %v735
  %v806 = vmax.f32 %v531, %v737
  %v807 = vmax.f32 %v430, %v636
  %v808 = vmax.f32 %v432, %v638
  %v809 = vmax.f32 %v533, %v739
  %v810 = vmax.f32 %v535, %v741
  %v811 = vmax.f32 %v436, %v642
  %v812 = vmax.f32 %v438, %v644
  %v813 = vmax.f32 %v539, %v745
  %v814 = vmax.f32 %v541, %v747
  %v815 = vmax.f32 %v440, %v646
  %v816 = vmax.f32 %v442, %v648
  %v817 = vmax.f32 %v543, %v749
  %v818 = vmax.f32 %v545, %v751
  %v819 = vmax.f32 %v446, %v652
  %v820 = vmax.f32 %v448, %v654
  %v821 = vmax.f32 %v549, %v755
  %v822 = vmax.f32 %v551, %v757
  %v823 = vmax.f32 %v450, %v656
  %v824 = vmax.f32 %v452, %v658
  %v825 = vmax.f32 %v553, %v759
  %v826 = vmax.f32 %v555, %v761
  %v827 = vmax.f32 %v456, %v662
  %v828 = vmax.f32 %v458, %v664
  %v829 = vmax.f32 %v559, %v765
  %v830 = vmax.f32 %v561, %v767
  %v831 = vmax.f32 %v460, %v666
  %v832 = vmax.f32 %v462, %v668
  %v833 = vmax.f32 %v563, %v769
  %v834 = vmax.f32 %v565, %v771
  %v835 = vmax.f32 %v466, %v672
  %v836 = vmax.f32 %v468, %v674
  %v837 = vmax.f32 %v569, %v775
  %v838 = vmax.f32 %v571, %v777
  %v839 = vmax.f32 %v470, %v676
  %v840 = vmax.f32 %v472, %v678
  %v841 = vmax.f32 %v573, %v779
  %v842 = vmax.f32 %v575, %v781
  %v843 = vmax.f32 %v476, %v682
  %v844 = vmax.f32 %v478, %v684
  %v845 = vmax.f32 %v579, %v785
  %v846 = vmax.f32 %v581, %v787
  %v847 = vmax.f32 %v480, %v686
  %v848 = vmax.f32 %v482, %v688
  %v849 = vmax.f32 %v583, %v789
  %v850 = vmax.f32 %v585, %v791
  %v851 = vmax.f32 %v486, %v692
  %v852 = vmax.f32 %v488, %v694
  %v853 = vmax.f32 %v589, %v795
  %v854 = vmax.f32 %v591, %v797
  %v855 = vmax.f32 %v490, %v696
  %v856 = vmax.f32 %v492, %v698
  %v857 = vmax.f32 %v593, %v799
  %v858 = vmax.f32 %v595, %v801
  %s859 = scalar_lea.vmem %s0, 56
  %v860 = vld [vmem:[%s859] sm:$0xf]
  %v861 = vld [vmem:[%s859 + $0x4] sm:$0xf]
  %v862 = vld [vmem:[%s859 + $0x8] sm:$0xf]
  %v863 = vld [vmem:[%s859 + $0xc] sm:$0xf]
  %v864 = vld [vmem:[%s859 + $0x10] sm:$0xf]
  %v865 = vld [vmem:[%s859 + $0x14] sm:$0xf]
  %v866 = vld [vmem:[%s859 + $0x18] sm:$0xf]
  %v867 = vld [vmem:[%s859 + $0x1c] sm:$0xf]
  %v868 = vld [vmem:[%s859 + $0x20] sm:$0xf]
  %v869 = vld [vmem:[%s859 + $0x24] sm:$0xf]
  %v870 = vld [vmem:[%s859 + $0x28] sm:$0xf]
  %v871 = vld [vmem:[%s859 + $0x2c] sm:$0xf]
  %v872 = vld [vmem:[%s859 + $0x30] sm:$0xf]
  %v873 = vld [vmem:[%s859 + $0x34] sm:$0xf]
  %v888 = vunpack.c.l.b16 %v860
  %v889 = vunpack.c.l.b16 %v861
  %v890 = vunpack.c.l.b16 %v862
  %v891 = vunpack.c.l.b16 %v863
  %v892 = vunpack.c.l.b16 %v864
  %v893 = vunpack.c.l.b16 %v865
  %v894 = vunpack.c.l.b16 %v866
  %v895 = vunpack.c.l.b16 %v867
  %v896 = vunpack.c.l.b16 %v868
  %v897 = vunpack.c.l.b16 %v869
  %v898 = vunpack.c.l.b16 %v870
  %v899 = vunpack.c.l.b16 %v871
  %v900 = vunpack.c.l.b16 %v872
  %v901 = vunpack.c.l.b16 %v873
  %v902 = vpack.c.b16 %v889, %v888
  %v903 = vpack.c.b16 %v891, %v890
  %v904 = vpack.c.b16 %v893, %v892
  %v905 = vpack.c.b16 %v895, %v894
  %v906 = vpack.c.b16 %v897, %v896
  %v907 = vpack.c.b16 %v899, %v898
  %v908 = vpack.c.b16 %v901, %v900
  %v910 = vsel %vm344, %v902, 0
  %v913 = vsel %vm344, %v903, 0
  %v916 = vsel %vm344, %v904, 0
  %v919 = vsel %vm344, %v905, 0
  %v922 = vsel %vm344, %v906, 0
  %v925 = vsel %vm344, %v907, 0
  %v928 = vsel %vm344, %v908, 0
  %930 = vmatprep.subr.bf16.mxu0 %v257
  %931 = vmatpush1.bf16.msra.mxu0 %v256
  %932 = vmatprep.subr.bf16.mxu0 %v265
  %933 = vmatpush1.bf16.msra.mxu0 %v264
  %934 = vmatprep.subr.bf16.mxu0 %v273
  %935 = vmatpush1.bf16.msra.mxu0 %v272
  %936 = vmatprep.subr.bf16.mxu0 %v281
  %937 = vmatpush1.bf16.msra.mxu0 %v280
  %938 = vmatprep.subr.bf16.mxu0 %v289
  %939 = vmatpush1.bf16.msra.mxu0 %v288
  %940 = vmatprep.subr.bf16.mxu0 %v371
  %941 = vmatpush1.bf16.msra.mxu0 %v368
  %942 = vmatprep.subr.bf16.mxu0 0
  %943 = vmatpush1.bf16.msra.mxu0 0
  %944 = vmatprep.subr.bf16.mxu0 0
  %945 = vmatpush1.bf16.msra.mxu0 0
  %946 = vmatprep.subr.bf16.mxu0 0
  %947 = vmatpush1.bf16.msra.mxu0 0
  %948 = vmatprep.subr.bf16.mxu0 0
  %949 = vmatpush1.bf16.msra.mxu0 0
  %950 = vmatprep.subr.bf16.mxu0 0
  %951 = vmatpush1.bf16.msra.mxu0 0
  %952 = vmatprep.subr.bf16.mxu0 0
  %953 = vmatpush1.bf16.msra.mxu0 0
  %954 = vmatprep.subr.bf16.mxu0 0
  %955 = vmatpush1.bf16.msra.mxu0 0
  %956 = vmatprep.subr.bf16.mxu0 0
  %957 = vmatpush1.bf16.msra.mxu0 0
  %958 = vmatprep.subr.bf16.mxu0 0
  %959 = vmatpush1.bf16.msra.mxu0 0
  %960 = vmatprep.subr.bf16.mxu0 0
  %961 = vmatpush1.bf16.msra.mxu0 0
  %962 = vmatprep.mubr.bf16.mxu0 0
  %963 = vmatmul.mubr.bf16.gmra.mrb[0].mxu0 %v910
  %v964 = vpop.f32.mrb[0].mxu0
  %v965 = vadd.f32 0.0, %v964
  %v966 = vpop.f32.mrb[0].mxu0
  %v967 = vadd.f32 0.0, %v966
  %v968 = vpop.f32.mrb[0].mxu0
  %v969 = vadd.f32 0.0, %v968
  %v970 = vpop.f32.mrb[0].mxu0
  %v971 = vadd.f32 0.0, %v970
  %972 = vmatprep.mubr.bf16.mxu0 0
  %973 = vmatmul.mubr.bf16.gmra.mrb[0].mxu0 %v913
  %v974 = vpop.f32.mrb[0].mxu0
  %v975 = vadd.f32 0.0, %v974
  %v976 = vpop.f32.mrb[0].mxu0
  %v977 = vadd.f32 0.0, %v976
  %v978 = vpop.f32.mrb[0].mxu0
  %v979 = vadd.f32 0.0, %v978
  %v980 = vpop.f32.mrb[0].mxu0
  %v981 = vadd.f32 0.0, %v980
  %982 = vmatprep.mubr.bf16.mxu0 0
  %983 = vmatmul.mubr.bf16.gmra.mrb[0].mxu0 %v916
  %v984 = vpop.f32.mrb[0].mxu0
  %v985 = vadd.f32 0.0, %v984
  %v986 = vpop.f32.mrb[0].mxu0
  %v987 = vadd.f32 0.0, %v986
  %v988 = vpop.f32.mrb[0].mxu0
  %v989 = vadd.f32 0.0, %v988
  %v990 = vpop.f32.mrb[0].mxu0
  %v991 = vadd.f32 0.0, %v990
  %992 = vmatprep.mubr.bf16.mxu0 0
  %993 = vmatmul.mubr.bf16.gmra.mrb[0].mxu0 %v919
  %v994 = vpop.f32.mrb[0].mxu0
  %v995 = vadd.f32 0.0, %v994
  %v996 = vpop.f32.mrb[0].mxu0
  %v997 = vadd.f32 0.0, %v996
  %v998 = vpop.f32.mrb[0].mxu0
  %v999 = vadd.f32 0.0, %v998
  %v1000 = vpop.f32.mrb[0].mxu0
  %v1001 = vadd.f32 0.0, %v1000
  %1002 = vmatprep.mubr.bf16.mxu0 0
  %1003 = vmatmul.mubr.bf16.gmra.mrb[0].mxu0 %v922
  %v1004 = vpop.f32.mrb[0].mxu0
  %v1005 = vadd.f32 0.0, %v1004
  %v1006 = vpop.f32.mrb[0].mxu0
  %v1007 = vadd.f32 0.0, %v1006
  %v1008 = vpop.f32.mrb[0].mxu0
  %v1009 = vadd.f32 0.0, %v1008
  %v1010 = vpop.f32.mrb[0].mxu0
  %v1011 = vadd.f32 0.0, %v1010
  %1012 = vmatprep.mubr.bf16.mxu0 0
  %1013 = vmatmul.mubr.bf16.gmra.mrb[0].mxu0 %v925
  %v1014 = vpop.f32.mrb[0].mxu0
  %v1015 = vadd.f32 0.0, %v1014
  %v1016 = vpop.f32.mrb[0].mxu0
  %v1017 = vadd.f32 0.0, %v1016
  %v1018 = vpop.f32.mrb[0].mxu0
  %v1019 = vadd.f32 0.0, %v1018
  %v1020 = vpop.f32.mrb[0].mxu0
  %v1021 = vadd.f32 0.0, %v1020
  %1022 = vmatprep.mubr.bf16.mxu0 0
  %1023 = vmatmul.mubr.bf16.gmra.mrb[0].mxu0 %v928
  %v1024 = vpop.f32.mrb[0].mxu0
  %v1025 = vadd.f32 0.0, %v1024
  %v1026 = vpop.f32.mrb[0].mxu0
  %v1027 = vadd.f32 0.0, %v1026
  %v1028 = vpop.f32.mrb[0].mxu0
  %v1029 = vadd.f32 0.0, %v1028
  %v1030 = vpop.f32.mrb[0].mxu0
  %v1031 = vadd.f32 0.0, %v1030
  %1032 = vdwg.mxu0
  %1033 = vmatprep.subr.bf16.mxu0 %v259
  %1034 = vmatpush1.bf16.msra.mxu0 %v258
  %1035 = vmatprep.subr.bf16.mxu0 %v267
  %1036 = vmatpush1.bf16.msra.mxu0 %v266
  %1037 = vmatprep.subr.bf16.mxu0 %v275
  %1038 = vmatpush1.bf16.msra.mxu0 %v274
  %1039 = vmatprep.subr.bf16.mxu0 %v283
  %1040 = vmatpush1.bf16.msra.mxu0 %v282
  %1041 = vmatprep.subr.bf16.mxu0 %v291
  %1042 = vmatpush1.bf16.msra.mxu0 %v290
  %1043 = vmatprep.subr.bf16.mxu0 %v377
  %1044 = vmatpush1.bf16.msra.mxu0 %v374
  %1045 = vmatprep.subr.bf16.mxu0 0
  %1046 = vmatpush1.bf16.msra.mxu0 0
  %1047 = vmatprep.subr.bf16.mxu0 0
  %1048 = vmatpush1.bf16.msra.mxu0 0
  %1049 = vmatprep.subr.bf16.mxu0 0
  %1050 = vmatpush1.bf16.msra.mxu0 0
  %1051 = vmatprep.subr.bf16.mxu0 0
  %1052 = vmatpush1.bf16.msra.mxu0 0
  %1053 = vmatprep.subr.bf16.mxu0 0
  %1054 = vmatpush1.bf16.msra.mxu0 0
  %1055 = vmatprep.subr.bf16.mxu0 0
  %1056 = vmatpush1.bf16.msra.mxu0 0
  %1057 = vmatprep.subr.bf16.mxu0 0
  %1058 = vmatpush1.bf16.msra.mxu0 0
  %1059 = vmatprep.subr.bf16.mxu0 0
  %1060 = vmatpush1.bf16.msra.mxu0 0
  %1061 = vmatprep.subr.bf16.mxu0 0
  %1062 = vmatpush1.bf16.msra.mxu0 0
  %1063 = vmatprep.subr.bf16.mxu0 0
  %1064 = vmatpush1.bf16.msra.mxu0 0
  %1065 = vmatprep.mubr.bf16.mxu0 0
  %1066 = vmatmul.mubr.bf16.gmra.mrb[0].mxu0 %v910
  %v1067 = vpop.f32.mrb[0].mxu0
  %v1068 = vadd.f32 0.0, %v1067
  %v1069 = vpop.f32.mrb[0].mxu0
  %v1070 = vadd.f32 0.0, %v1069
  %v1071 = vpop.f32.mrb[0].mxu0
  %v1072 = vadd.f32 0.0, %v1071
  %v1073 = vpop.f32.mrb[0].mxu0
  %v1074 = vadd.f32 0.0, %v1073
  %1075 = vmatprep.mubr.bf16.mxu0 0
  %1076 = vmatmul.mubr.bf16.gmra.mrb[0].mxu0 %v913
  %v1077 = vpop.f32.mrb[0].mxu0
  %v1078 = vadd.f32 0.0, %v1077
  %v1079 = vpop.f32.mrb[0].mxu0
  %v1080 = vadd.f32 0.0, %v1079
  %v1081 = vpop.f32.mrb[0].mxu0
  %v1082 = vadd.f32 0.0, %v1081
  %v1083 = vpop.f32.mrb[0].mxu0
  %v1084 = vadd.f32 0.0, %v1083
  %1085 = vmatprep.mubr.bf16.mxu0 0
  %1086 = vmatmul.mubr.bf16.gmra.mrb[0].mxu0 %v916
  %v1087 = vpop.f32.mrb[0].mxu0
  %v1088 = vadd.f32 0.0, %v1087
  %v1089 = vpop.f32.mrb[0].mxu0
  %v1090 = vadd.f32 0.0, %v1089
  %v1091 = vpop.f32.mrb[0].mxu0
  %v1092 = vadd.f32 0.0, %v1091
  %v1093 = vpop.f32.mrb[0].mxu0
  %v1094 = vadd.f32 0.0, %v1093
  %1095 = vmatprep.mubr.bf16.mxu0 0
  %1096 = vmatmul.mubr.bf16.gmra.mrb[0].mxu0 %v919
  %v1097 = vpop.f32.mrb[0].mxu0
  %v1098 = vadd.f32 0.0, %v1097
  %v1099 = vpop.f32.mrb[0].mxu0
  %v1100 = vadd.f32 0.0, %v1099
  %v1101 = vpop.f32.mrb[0].mxu0
  %v1102 = vadd.f32 0.0, %v1101
  %v1103 = vpop.f32.mrb[0].mxu0
  %v1104 = vadd.f32 0.0, %v1103
  %1105 = vmatprep.mubr.bf16.mxu0 0
  %1106 = vmatmul.mubr.bf16.gmra.mrb[0].mxu0 %v922
  %v1107 = vpop.f32.mrb[0].mxu0
  %v1108 = vadd.f32 0.0, %v1107
  %v1109 = vpop.f32.mrb[0].mxu0
  %v1110 = vadd.f32 0.0, %v1109
  %v1111 = vpop.f32.mrb[0].mxu0
  %v1112 = vadd.f32 0.0, %v1111
  %v1113 = vpop.f32.mrb[0].mxu0
  %v1114 = vadd.f32 0.0, %v1113
  %1115 = vmatprep.mubr.bf16.mxu0 0
  %1116 = vmatmul.mubr.bf16.gmra.mrb[0].mxu0 %v925
  %v1117 = vpop.f32.mrb[0].mxu0
  %v1118 = vadd.f32 0.0, %v1117
  %v1119 = vpop.f32.mrb[0].mxu0
  %v1120 = vadd.f32 0.0, %v1119
  %v1121 = vpop.f32.mrb[0].mxu0
  %v1122 = vadd.f32 0.0, %v1121
  %v1123 = vpop.f32.mrb[0].mxu0
  %v1124 = vadd.f32 0.0, %v1123
  %1125 = vmatprep.mubr.bf16.mxu0 0
  %1126 = vmatmul.mubr.bf16.gmra.mrb[0].mxu0 %v928
  %v1127 = vpop.f32.mrb[0].mxu0
  %v1128 = vadd.f32 0.0, %v1127
  %v1129 = vpop.f32.mrb[0].mxu0
  %v1130 = vadd.f32 0.0, %v1129
  %v1131 = vpop.f32.mrb[0].mxu0
  %v1132 = vadd.f32 0.0, %v1131
  %v1133 = vpop.f32.mrb[0].mxu0
  %v1134 = vadd.f32 0.0, %v1133
  %1135 = vdwg.mxu0
  %1136 = vmatprep.subr.bf16.mxu0 %v261
  %1137 = vmatpush1.bf16.msra.mxu0 %v260
  %1138 = vmatprep.subr.bf16.mxu0 %v269
  %1139 = vmatpush1.bf16.msra.mxu0 %v268
  %1140 = vmatprep.subr.bf16.mxu0 %v277
  %1141 = vmatpush1.bf16.msra.mxu0 %v276
  %1142 = vmatprep.subr.bf16.mxu0 %v285
  %1143 = vmatpush1.bf16.msra.mxu0 %v284
  %1144 = vmatprep.subr.bf16.mxu0 %v293
  %1145 = vmatpush1.bf16.msra.mxu0 %v292
  %1146 = vmatprep.subr.bf16.mxu0 %v383
  %1147 = vmatpush1.bf16.msra.mxu0 %v380
  %1148 = vmatprep.subr.bf16.mxu0 0
  %1149 = vmatpush1.bf16.msra.mxu0 0
  %1150 = vmatprep.subr.bf16.mxu0 0
  %1151 = vmatpush1.bf16.msra.mxu0 0
  %1152 = vmatprep.subr.bf16.mxu0 0
  %1153 = vmatpush1.bf16.msra.mxu0 0
  %1154 = vmatprep.subr.bf16.mxu0 0
  %1155 = vmatpush1.bf16.msra.mxu0 0
  %1156 = vmatprep.subr.bf16.mxu0 0
  %1157 = vmatpush1.bf16.msra.mxu0 0
  %1158 = vmatprep.subr.bf16.mxu0 0
  %1159 = vmatpush1.bf16.msra.mxu0 0
  %1160 = vmatprep.subr.bf16.mxu0 0
  %1161 = vmatpush1.bf16.msra.mxu0 0
  %1162 = vmatprep.subr.bf16.mxu0 0
  %1163 = vmatpush1.bf16.msra.mxu0 0
  %1164 = vmatprep.subr.bf16.mxu0 0
  %1165 = vmatpush1.bf16.msra.mxu0 0
  %1166 = vmatprep.subr.bf16.mxu0 0
  %1167 = vmatpush1.bf16.msra.mxu0 0
  %1168 = vmatprep.mubr.bf16.mxu0 0
  %1169 = vmatmul.mubr.bf16.gmra.mrb[0].mxu0 %v910
  %v1170 = vpop.f32.mrb[0].mxu0
  %v1171 = vadd.f32 0.0, %v1170
  %v1172 = vpop.f32.mrb[0].mxu0
  %v1173 = vadd.f32 0.0, %v1172
  %v1174 = vpop.f32.mrb[0].mxu0
  %v1175 = vadd.f32 0.0, %v1174
  %v1176 = vpop.f32.mrb[0].mxu0
  %v1177 = vadd.f32 0.0, %v1176
  %1178 = vmatprep.mubr.bf16.mxu0 0
  %1179 = vmatmul.mubr.bf16.gmra.mrb[0].mxu0 %v913
  %v1180 = vpop.f32.mrb[0].mxu0
  %v1181 = vadd.f32 0.0, %v1180
  %v1182 = vpop.f32.mrb[0].mxu0
  %v1183 = vadd.f32 0.0, %v1182
  %v1184 = vpop.f32.mrb[0].mxu0
  %v1185 = vadd.f32 0.0, %v1184
  %v1186 = vpop.f32.mrb[0].mxu0
  %v1187 = vadd.f32 0.0, %v1186
  %1188 = vmatprep.mubr.bf16.mxu0 0
  %1189 = vmatmul.mubr.bf16.gmra.mrb[0].mxu0 %v916
  %v1190 = vpop.f32.mrb[0].mxu0
  %v1191 = vadd.f32 0.0, %v1190
  %v1192 = vpop.f32.mrb[0].mxu0
  %v1193 = vadd.f32 0.0, %v1192
  %v1194 = vpop.f32.mrb[0].mxu0
  %v1195 = vadd.f32 0.0, %v1194
  %v1196 = vpop.f32.mrb[0].mxu0
  %v1197 = vadd.f32 0.0, %v1196
  %1198 = vmatprep.mubr.bf16.mxu0 0
  %1199 = vmatmul.mubr.bf16.gmra.mrb[0].mxu0 %v919
  %v1200 = vpop.f32.mrb[0].mxu0
  %v1201 = vadd.f32 0.0, %v1200
  %v1202 = vpop.f32.mrb[0].mxu0
  %v1203 = vadd.f32 0.0, %v1202
  %v1204 = vpop.f32.mrb[0].mxu0
  %v1205 = vadd.f32 0.0, %v1204
  %v1206 = vpop.f32.mrb[0].mxu0
  %v1207 = vadd.f32 0.0, %v1206
  %1208 = vmatprep.mubr.bf16.mxu0 0
  %1209 = vmatmul.mubr.bf16.gmra.mrb[0].mxu0 %v922
  %v1210 = vpop.f32.mrb[0].mxu0
  %v1211 = vadd.f32 0.0, %v1210
  %v1212 = vpop.f32.mrb[0].mxu0
  %v1213 = vadd.f32 0.0, %v1212
  %v1214 = vpop.f32.mrb[0].mxu0
  %v1215 = vadd.f32 0.0, %v1214
  %v1216 = vpop.f32.mrb[0].mxu0
  %v1217 = vadd.f32 0.0, %v1216
  %1218 = vmatprep.mubr.bf16.mxu0 0
  %1219 = vmatmul.mubr.bf16.gmra.mrb[0].mxu0 %v925
  %v1220 = vpop.f32.mrb[0].mxu0
  %v1221 = vadd.f32 0.0, %v1220
  %v1222 = vpop.f32.mrb[0].mxu0
  %v1223 = vadd.f32 0.0, %v1222
  %v1224 = vpop.f32.mrb[0].mxu0
  %v1225 = vadd.f32 0.0, %v1224
  %v1226 = vpop.f32.mrb[0].mxu0
  %v1227 = vadd.f32 0.0, %v1226
  %1228 = vmatprep.mubr.bf16.mxu0 0
  %1229 = vmatmul.mubr.bf16.gmra.mrb[0].mxu0 %v928
  %v1230 = vpop.f32.mrb[0].mxu0
  %v1231 = vadd.f32 0.0, %v1230
  %v1232 = vpop.f32.mrb[0].mxu0
  %v1233 = vadd.f32 0.0, %v1232
  %v1234 = vpop.f32.mrb[0].mxu0
  %v1235 = vadd.f32 0.0, %v1234
  %v1236 = vpop.f32.mrb[0].mxu0
  %v1237 = vadd.f32 0.0, %v1236
  %1238 = vdwg.mxu0
  %1239 = vmatprep.subr.bf16.mxu0 %v263
  %1240 = vmatpush1.bf16.msra.mxu0 %v262
  %1241 = vmatprep.subr.bf16.mxu0 %v271
  %1242 = vmatpush1.bf16.msra.mxu0 %v270
  %1243 = vmatprep.subr.bf16.mxu0 %v279
  %1244 = vmatpush1.bf16.msra.mxu0 %v278
  %1245 = vmatprep.subr.bf16.mxu0 %v287
  %1246 = vmatpush1.bf16.msra.mxu0 %v286
  %1247 = vmatprep.subr.bf16.mxu0 %v295
  %1248 = vmatpush1.bf16.msra.mxu0 %v294
  %1249 = vmatprep.subr.bf16.mxu0 %v389
  %1250 = vmatpush1.bf16.msra.mxu0 %v386
  %1251 = vmatprep.subr.bf16.mxu0 0
  %1252 = vmatpush1.bf16.msra.mxu0 0
  %1253 = vmatprep.subr.bf16.mxu0 0
  %1254 = vmatpush1.bf16.msra.mxu0 0
  %1255 = vmatprep.subr.bf16.mxu0 0
  %1256 = vmatpush1.bf16.msra.mxu0 0
  %1257 = vmatprep.subr.bf16.mxu0 0
  %1258 = vmatpush1.bf16.msra.mxu0 0
  %1259 = vmatprep.subr.bf16.mxu0 0
  %1260 = vmatpush1.bf16.msra.mxu0 0
  %1261 = vmatprep.subr.bf16.mxu0 0
  %1262 = vmatpush1.bf16.msra.mxu0 0
  %1263 = vmatprep.subr.bf16.mxu0 0
  %1264 = vmatpush1.bf16.msra.mxu0 0
  %1265 = vmatprep.subr.bf16.mxu0 0
  %1266 = vmatpush1.bf16.msra.mxu0 0
  %1267 = vmatprep.subr.bf16.mxu0 0
  %1268 = vmatpush1.bf16.msra.mxu0 0
  %1269 = vmatprep.subr.bf16.mxu0 0
  %1270 = vmatpush1.bf16.msra.mxu0 0
  %1271 = vmatprep.mubr.bf16.mxu0 0
  %1272 = vmatmul.mubr.bf16.gmra.mrb[0].mxu0 %v910
  %v1273 = vpop.f32.mrb[0].mxu0
  %v1274 = vadd.f32 0.0, %v1273
  %v1275 = vpop.f32.mrb[0].mxu0
  %v1276 = vadd.f32 0.0, %v1275
  %v1277 = vpop.f32.mrb[0].mxu0
  %v1278 = vadd.f32 0.0, %v1277
  %v1279 = vpop.f32.mrb[0].mxu0
  %v1280 = vadd.f32 0.0, %v1279
  %1281 = vmatprep.mubr.bf16.mxu0 0
  %1282 = vmatmul.mubr.bf16.gmra.mrb[0].mxu0 %v913
  %v1283 = vpop.f32.mrb[0].mxu0
  %v1284 = vadd.f32 0.0, %v1283
  %v1285 = vpop.f32.mrb[0].mxu0
  %v1286 = vadd.f32 0.0, %v1285
  %v1287 = vpop.f32.mrb[0].mxu0
  %v1288 = vadd.f32 0.0, %v1287
  %v1289 = vpop.f32.mrb[0].mxu0
  %v1290 = vadd.f32 0.0, %v1289
  %1291 = vmatprep.mubr.bf16.mxu0 0
  %1292 = vmatmul.mubr.bf16.gmra.mrb[0].mxu0 %v916
  %v1293 = vpop.f32.mrb[0].mxu0
  %v1294 = vadd.f32 0.0, %v1293
  %v1295 = vpop.f32.mrb[0].mxu0
  %v1296 = vadd.f32 0.0, %v1295
  %v1297 = vpop.f32.mrb[0].mxu0
  %v1298 = vadd.f32 0.0, %v1297
  %v1299 = vpop.f32.mrb[0].mxu0
  %v1300 = vadd.f32 0.0, %v1299
  %1301 = vmatprep.mubr.bf16.mxu0 0
  %1302 = vmatmul.mubr.bf16.gmra.mrb[0].mxu0 %v919
  %v1303 = vpop.f32.mrb[0].mxu0
  %v1304 = vadd.f32 0.0, %v1303
  %v1305 = vpop.f32.mrb[0].mxu0
  %v1306 = vadd.f32 0.0, %v1305
  %v1307 = vpop.f32.mrb[0].mxu0
  %v1308 = vadd.f32 0.0, %v1307
  %v1309 = vpop.f32.mrb[0].mxu0
  %v1310 = vadd.f32 0.0, %v1309
  %1311 = vmatprep.mubr.bf16.mxu0 0
  %1312 = vmatmul.mubr.bf16.gmra.mrb[0].mxu0 %v922
  %v1313 = vpop.f32.mrb[0].mxu0
  %v1314 = vadd.f32 0.0, %v1313
  %v1315 = vpop.f32.mrb[0].mxu0
  %v1316 = vadd.f32 0.0, %v1315
  %v1317 = vpop.f32.mrb[0].mxu0
  %v1318 = vadd.f32 0.0, %v1317
  %v1319 = vpop.f32.mrb[0].mxu0
  %v1320 = vadd.f32 0.0, %v1319
  %1321 = vmatprep.mubr.bf16.mxu0 0
  %1322 = vmatmul.mubr.bf16.gmra.mrb[0].mxu0 %v925
  %v1323 = vpop.f32.mrb[0].mxu0
  %v1324 = vadd.f32 0.0, %v1323
  %v1325 = vpop.f32.mrb[0].mxu0
  %v1326 = vadd.f32 0.0, %v1325
  %v1327 = vpop.f32.mrb[0].mxu0
  %v1328 = vadd.f32 0.0, %v1327
  %v1329 = vpop.f32.mrb[0].mxu0
  %v1330 = vadd.f32 0.0, %v1329
  %1331 = vmatprep.mubr.bf16.mxu0 0
  %1332 = vmatmul.mubr.bf16.gmra.mrb[0].mxu0 %v928
  %v1333 = vpop.f32.mrb[0].mxu0
  %v1334 = vadd.f32 0.0, %v1333
  %v1335 = vpop.f32.mrb[0].mxu0
  %v1336 = vadd.f32 0.0, %v1335
  %v1337 = vpop.f32.mrb[0].mxu0
  %v1338 = vadd.f32 0.0, %v1337
  %v1339 = vpop.f32.mrb[0].mxu0
  %v1340 = vadd.f32 0.0, %v1339
  %1341 = vdwg.mxu0
  %v1342 = vmax.f32 %v965, %v1171
  %v1343 = vmax.f32 %v967, %v1173
  %v1344 = vmax.f32 %v1068, %v1274
  %v1345 = vmax.f32 %v1070, %v1276
  %v1346 = vmax.f32 %v969, %v1175
  %v1347 = vmax.f32 %v971, %v1177
  %v1348 = vmax.f32 %v1072, %v1278
  %v1349 = vmax.f32 %v1074, %v1280
  %v1350 = vmax.f32 %v975, %v1181
  %v1351 = vmax.f32 %v977, %v1183
  %v1352 = vmax.f32 %v1078, %v1284
  %v1353 = vmax.f32 %v1080, %v1286
  %v1354 = vmax.f32 %v979, %v1185
  %v1355 = vmax.f32 %v981, %v1187
  %v1356 = vmax.f32 %v1082, %v1288
  %v1357 = vmax.f32 %v1084, %v1290
  %v1358 = vmax.f32 %v985, %v1191
  %v1359 = vmax.f32 %v987, %v1193
  %v1360 = vmax.f32 %v1088, %v1294
  %v1361 = vmax.f32 %v1090, %v1296
  %v1362 = vmax.f32 %v989, %v1195
  %v1363 = vmax.f32 %v991, %v1197
  %v1364 = vmax.f32 %v1092, %v1298
  %v1365 = vmax.f32 %v1094, %v1300
  %v1366 = vmax.f32 %v995, %v1201
  %v1367 = vmax.f32 %v997, %v1203
  %v1368 = vmax.f32 %v1098, %v1304
  %v1369 = vmax.f32 %v1100, %v1306
  %v1370 = vmax.f32 %v999, %v1205
  %v1371 = vmax.f32 %v1001, %v1207
  %v1372 = vmax.f32 %v1102, %v1308
  %v1373 = vmax.f32 %v1104, %v1310
  %v1374 = vmax.f32 %v1005, %v1211
  %v1375 = vmax.f32 %v1007, %v1213
  %v1376 = vmax.f32 %v1108, %v1314
  %v1377 = vmax.f32 %v1110, %v1316
  %v1378 = vmax.f32 %v1009, %v1215
  %v1379 = vmax.f32 %v1011, %v1217
  %v1380 = vmax.f32 %v1112, %v1318
  %v1381 = vmax.f32 %v1114, %v1320
  %v1382 = vmax.f32 %v1015, %v1221
  %v1383 = vmax.f32 %v1017, %v1223
  %v1384 = vmax.f32 %v1118, %v1324
  %v1385 = vmax.f32 %v1120, %v1326
  %v1386 = vmax.f32 %v1019, %v1225
  %v1387 = vmax.f32 %v1021, %v1227
  %v1388 = vmax.f32 %v1122, %v1328
  %v1389 = vmax.f32 %v1124, %v1330
  %v1390 = vmax.f32 %v1025, %v1231
  %v1391 = vmax.f32 %v1027, %v1233
  %v1392 = vmax.f32 %v1128, %v1334
  %v1393 = vmax.f32 %v1130, %v1336
  %v1394 = vmax.f32 %v1029, %v1235
  %v1395 = vmax.f32 %v1031, %v1237
  %v1396 = vmax.f32 %v1132, %v1338
  %v1397 = vmax.f32 %v1134, %v1340
  %v1398 = vmax.f32 %v803, %v1342
  %v1399 = vmax.f32 %v804, %v1343
  %v1400 = vmax.f32 %v805, %v1344
  %v1401 = vmax.f32 %v806, %v1345
  %v1402 = vmax.f32 %v807, %v1346
  %v1403 = vmax.f32 %v808, %v1347
  %v1404 = vmax.f32 %v809, %v1348
  %v1405 = vmax.f32 %v810, %v1349
  %v1406 = vmax.f32 %v811, %v1350
  %v1407 = vmax.f32 %v812, %v1351
  %v1408 = vmax.f32 %v813, %v1352
  %v1409 = vmax.f32 %v814, %v1353
  %v1410 = vmax.f32 %v815, %v1354
  %v1411 = vmax.f32 %v816, %v1355
  %v1412 = vmax.f32 %v817, %v1356
  %v1413 = vmax.f32 %v818, %v1357
  %v1414 = vmax.f32 %v819, %v1358
  %v1415 = vmax.f32 %v820, %v1359
  %v1416 = vmax.f32 %v821, %v1360
  %v1417 = vmax.f32 %v822, %v1361
  %v1418 = vmax.f32 %v823, %v1362
  %v1419 = vmax.f32 %v824, %v1363
  %v1420 = vmax.f32 %v825, %v1364
  %v1421 = vmax.f32 %v826, %v1365
  %v1422 = vmax.f32 %v827, %v1366
  %v1423 = vmax.f32 %v828, %v1367
  %v1424 = vmax.f32 %v829, %v1368
  %v1425 = vmax.f32 %v830, %v1369
  %v1426 = vmax.f32 %v831, %v1370
  %v1427 = vmax.f32 %v832, %v1371
  %v1428 = vmax.f32 %v833, %v1372
  %v1429 = vmax.f32 %v834, %v1373
  %v1430 = vmax.f32 %v835, %v1374
  %v1431 = vmax.f32 %v836, %v1375
  %v1432 = vmax.f32 %v837, %v1376
  %v1433 = vmax.f32 %v838, %v1377
  %v1434 = vmax.f32 %v839, %v1378
  %v1435 = vmax.f32 %v840, %v1379
  %v1436 = vmax.f32 %v841, %v1380
  %v1437 = vmax.f32 %v842, %v1381
  %v1438 = vmax.f32 %v843, %v1382
  %v1439 = vmax.f32 %v844, %v1383
  %v1440 = vmax.f32 %v845, %v1384
  %v1441 = vmax.f32 %v846, %v1385
  %v1442 = vmax.f32 %v847, %v1386
  %v1443 = vmax.f32 %v848, %v1387
  %v1444 = vmax.f32 %v849, %v1388
  %v1445 = vmax.f32 %v850, %v1389
  %v1446 = vmax.f32 %v851, %v1390
  %v1447 = vmax.f32 %v852, %v1391
  %v1448 = vmax.f32 %v853, %v1392
  %v1449 = vmax.f32 %v854, %v1393
  %v1450 = vmax.f32 %v855, %v1394
  %v1451 = vmax.f32 %v856, %v1395
  %v1452 = vmax.f32 %v857, %v1396
  %v1453 = vmax.f32 %v858, %v1397
  %v1454 = vld [vmem:[%s2] sm:$0xf]
  %v1456 = vlaneseq
  %v1457 = vshrl.u32 %v1456, 7
  %v1458 = vsub.s32 0, %v1457
  %v1459 = vrot.slane %v1454, %v1458
  %v1460 = vlaneseq
  %v1461 = vshrl.u32 %v1460, 7
  %v1462 = vsub.s32 1, %v1461
  %v1463 = vrot.slane %v1454, %v1462
  %v1464 = vlaneseq
  %v1465 = vshrl.u32 %v1464, 7
  %v1466 = vsub.s32 2, %v1465
  %v1467 = vrot.slane %v1454, %v1466
  %v1468 = vlaneseq
  %v1469 = vshrl.u32 %v1468, 7
  %v1470 = vsub.s32 3, %v1469
  %v1471 = vrot.slane %v1454, %v1470
  %v1476 = vadd.f32 %v1398, %v1459
  %v1477 = vadd.f32 %v1399, %v1463
  %v1478 = vadd.f32 %v1400, %v1467
  %v1479 = vadd.f32 %v1401, %v1471
  %v1480 = vadd.f32 %v1402, %v1459
  %v1481 = vadd.f32 %v1403, %v1463
  %v1482 = vadd.f32 %v1404, %v1467
  %v1483 = vadd.f32 %v1405, %v1471
  %v1484 = vadd.f32 %v1406, %v1459
  %v1485 = vadd.f32 %v1407, %v1463
  %v1486 = vadd.f32 %v1408, %v1467
  %v1487 = vadd.f32 %v1409, %v1471
  %v1488 = vadd.f32 %v1410, %v1459
  %v1489 = vadd.f32 %v1411, %v1463
  %v1490 = vadd.f32 %v1412, %v1467
  %v1491 = vadd.f32 %v1413, %v1471
  %v1492 = vadd.f32 %v1414, %v1459
  %v1493 = vadd.f32 %v1415, %v1463
  %v1494 = vadd.f32 %v1416, %v1467
  %v1495 = vadd.f32 %v1417, %v1471
  %v1496 = vadd.f32 %v1418, %v1459
  %v1497 = vadd.f32 %v1419, %v1463
  %v1498 = vadd.f32 %v1420, %v1467
  %v1499 = vadd.f32 %v1421, %v1471
  %v1500 = vadd.f32 %v1422, %v1459
  %v1501 = vadd.f32 %v1423, %v1463
  %v1502 = vadd.f32 %v1424, %v1467
  %v1503 = vadd.f32 %v1425, %v1471
  %v1504 = vadd.f32 %v1426, %v1459
  %v1505 = vadd.f32 %v1427, %v1463
  %v1506 = vadd.f32 %v1428, %v1467
  %v1507 = vadd.f32 %v1429, %v1471
  %v1508 = vadd.f32 %v1430, %v1459
  %v1509 = vadd.f32 %v1431, %v1463
  %v1510 = vadd.f32 %v1432, %v1467
  %v1511 = vadd.f32 %v1433, %v1471
  %v1512 = vadd.f32 %v1434, %v1459
  %v1513 = vadd.f32 %v1435, %v1463
  %v1514 = vadd.f32 %v1436, %v1467
  %v1515 = vadd.f32 %v1437, %v1471
  %v1516 = vadd.f32 %v1438, %v1459
  %v1517 = vadd.f32 %v1439, %v1463
  %v1518 = vadd.f32 %v1440, %v1467
  %v1519 = vadd.f32 %v1441, %v1471
  %v1520 = vadd.f32 %v1442, %v1459
  %v1521 = vadd.f32 %v1443, %v1463
  %v1522 = vadd.f32 %v1444, %v1467
  %v1523 = vadd.f32 %v1445, %v1471
  %v1524 = vadd.f32 %v1446, %v1459
  %v1525 = vadd.f32 %v1447, %v1463
  %v1526 = vadd.f32 %v1448, %v1467
  %v1527 = vadd.f32 %v1449, %v1471
  %v1528 = vadd.f32 %v1450, %v1459
  %v1529 = vadd.f32 %v1451, %v1463
  %v1530 = vadd.f32 %v1452, %v1467
  %v1531 = vadd.f32 %v1453, %v1471
  %v1532 = vmax.f32 %v1476, 0.0
  %v1533 = vmax.f32 %v1477, 0.0
  %v1534 = vmax.f32 %v1478, 0.0
  %v1535 = vmax.f32 %v1479, 0.0
  %v1536 = vmax.f32 %v1480, 0.0
  %v1537 = vmax.f32 %v1481, 0.0
  %v1538 = vmax.f32 %v1482, 0.0
  %v1539 = vmax.f32 %v1483, 0.0
  %v1540 = vmax.f32 %v1484, 0.0
  %v1541 = vmax.f32 %v1485, 0.0
  %v1542 = vmax.f32 %v1486, 0.0
  %v1543 = vmax.f32 %v1487, 0.0
  %v1544 = vmax.f32 %v1488, 0.0
  %v1545 = vmax.f32 %v1489, 0.0
  %v1546 = vmax.f32 %v1490, 0.0
  %v1547 = vmax.f32 %v1491, 0.0
  %v1548 = vmax.f32 %v1492, 0.0
  %v1549 = vmax.f32 %v1493, 0.0
  %v1550 = vmax.f32 %v1494, 0.0
  %v1551 = vmax.f32 %v1495, 0.0
  %v1552 = vmax.f32 %v1496, 0.0
  %v1553 = vmax.f32 %v1497, 0.0
  %v1554 = vmax.f32 %v1498, 0.0
  %v1555 = vmax.f32 %v1499, 0.0
  %v1556 = vmax.f32 %v1500, 0.0
  %v1557 = vmax.f32 %v1501, 0.0
  %v1558 = vmax.f32 %v1502, 0.0
  %v1559 = vmax.f32 %v1503, 0.0
  %v1560 = vmax.f32 %v1504, 0.0
  %v1561 = vmax.f32 %v1505, 0.0
  %v1562 = vmax.f32 %v1506, 0.0
  %v1563 = vmax.f32 %v1507, 0.0
  %v1564 = vmax.f32 %v1508, 0.0
  %v1565 = vmax.f32 %v1509, 0.0
  %v1566 = vmax.f32 %v1510, 0.0
  %v1567 = vmax.f32 %v1511, 0.0
  %v1568 = vmax.f32 %v1512, 0.0
  %v1569 = vmax.f32 %v1513, 0.0
  %v1570 = vmax.f32 %v1514, 0.0
  %v1571 = vmax.f32 %v1515, 0.0
  %v1572 = vmax.f32 %v1516, 0.0
  %v1573 = vmax.f32 %v1517, 0.0
  %v1574 = vmax.f32 %v1518, 0.0
  %v1575 = vmax.f32 %v1519, 0.0
  %v1576 = vmax.f32 %v1520, 0.0
  %v1577 = vmax.f32 %v1521, 0.0
  %v1578 = vmax.f32 %v1522, 0.0
  %v1579 = vmax.f32 %v1523, 0.0
  %v1580 = vmax.f32 %v1524, 0.0
  %v1581 = vmax.f32 %v1525, 0.0
  %v1582 = vmax.f32 %v1526, 0.0
  %v1583 = vmax.f32 %v1527, 0.0
  %v1584 = vmax.f32 %v1528, 0.0
  %v1585 = vmax.f32 %v1529, 0.0
  %v1586 = vmax.f32 %v1530, 0.0
  %v1587 = vmax.f32 %v1531, 0.0
  %v1588 = vpack.c.bf16 0.0, 0.0
  %v1589 = vpack.c.bf16 %v1536, %v1536
  %v1590 = vpack.c.bf16 %v1537, %v1537
  %v1591 = vpack.c.bf16 %v1538, %v1538
  %v1592 = vpack.c.bf16 %v1539, %v1539
  %v1593 = vpack.c.bf16 %v1544, %v1544
  %v1594 = vpack.c.bf16 %v1545, %v1545
  %v1595 = vpack.c.bf16 %v1546, %v1546
  %v1596 = vpack.c.bf16 %v1547, %v1547
  %v1597 = vpack.c.bf16 %v1552, %v1552
  %v1598 = vpack.c.bf16 %v1553, %v1553
  %v1599 = vpack.c.bf16 %v1554, %v1554
  %v1600 = vpack.c.bf16 %v1555, %v1555
  %v1601 = vpack.c.bf16 %v1560, %v1560
  %v1602 = vpack.c.bf16 %v1561, %v1561
  %v1603 = vpack.c.bf16 %v1562, %v1562
  %v1604 = vpack.c.bf16 %v1563, %v1563
  %v1605 = vpack.c.bf16 %v1568, %v1568
  %v1606 = vpack.c.bf16 %v1569, %v1569
  %v1607 = vpack.c.bf16 %v1570, %v1570
  %v1608 = vpack.c.bf16 %v1571, %v1571
  %v1609 = vpack.c.bf16 %v1576, %v1576
  %v1610 = vpack.c.bf16 %v1577, %v1577
  %v1611 = vpack.c.bf16 %v1578, %v1578
  %v1612 = vpack.c.bf16 %v1579, %v1579
  %v1613 = vpack.c.bf16 %v1584, %v1584
  %v1614 = vpack.c.bf16 %v1585, %v1585
  %v1615 = vpack.c.bf16 %v1586, %v1586
  %v1616 = vpack.c.bf16 %v1587, %v1587
  %v1617 = vpack.c.bf16 %v1532, %v1532
  %v1618 = vpack.c.bf16 %v1533, %v1533
  %v1619 = vpack.c.bf16 %v1534, %v1534
  %v1620 = vpack.c.bf16 %v1535, %v1535
  %v1621 = vpack.c.bf16 %v1540, %v1540
  %v1622 = vpack.c.bf16 %v1541, %v1541
  %v1623 = vpack.c.bf16 %v1542, %v1542
  %v1624 = vpack.c.bf16 %v1543, %v1543
  %v1625 = vpack.c.bf16 %v1548, %v1548
  %v1626 = vpack.c.bf16 %v1549, %v1549
  %v1627 = vpack.c.bf16 %v1550, %v1550
  %v1628 = vpack.c.bf16 %v1551, %v1551
  %v1629 = vpack.c.bf16 %v1556, %v1556
  %v1630 = vpack.c.bf16 %v1557, %v1557
  %v1631 = vpack.c.bf16 %v1558, %v1558
  %v1632 = vpack.c.bf16 %v1559, %v1559
  %v1633 = vpack.c.bf16 %v1564, %v1564
  %v1634 = vpack.c.bf16 %v1565, %v1565
  %v1635 = vpack.c.bf16 %v1566, %v1566
  %v1636 = vpack.c.bf16 %v1567, %v1567
  %v1637 = vpack.c.bf16 %v1572, %v1572
  %v1638 = vpack.c.bf16 %v1573, %v1573
  %v1639 = vpack.c.bf16 %v1574, %v1574
  %v1640 = vpack.c.bf16 %v1575, %v1575
  %v1641 = vpack.c.bf16 %v1580, %v1580
  %v1642 = vpack.c.bf16 %v1581, %v1581
  %v1643 = vpack.c.bf16 %v1582, %v1582
  %v1644 = vpack.c.bf16 %v1583, %v1583
  %v1702 = vunpack.c.l.b16 %v1588
  %v1703 = vunpack.c.l.b16 %v1589
  %v1704 = vunpack.c.l.b16 %v1590
  %v1705 = vunpack.c.l.b16 %v1591
  %v1706 = vunpack.c.l.b16 %v1592
  %v1707 = vunpack.c.l.b16 %v1593
  %v1708 = vunpack.c.l.b16 %v1594
  %v1709 = vunpack.c.l.b16 %v1595
  %v1710 = vunpack.c.l.b16 %v1596
  %v1711 = vunpack.c.l.b16 %v1597
  %v1712 = vunpack.c.l.b16 %v1598
  %v1713 = vunpack.c.l.b16 %v1599
  %v1714 = vunpack.c.l.b16 %v1600
  %v1715 = vunpack.c.l.b16 %v1601
  %v1716 = vunpack.c.l.b16 %v1602
  %v1717 = vunpack.c.l.b16 %v1603
  %v1718 = vunpack.c.l.b16 %v1604
  %v1719 = vunpack.c.l.b16 %v1605
  %v1720 = vunpack.c.l.b16 %v1606
  %v1721 = vunpack.c.l.b16 %v1607
  %v1722 = vunpack.c.l.b16 %v1608
  %v1723 = vunpack.c.l.b16 %v1609
  %v1724 = vunpack.c.l.b16 %v1610
  %v1725 = vunpack.c.l.b16 %v1611
  %v1726 = vunpack.c.l.b16 %v1612
  %v1727 = vunpack.c.l.b16 %v1613
  %v1728 = vunpack.c.l.b16 %v1614
  %v1729 = vunpack.c.l.b16 %v1615
  %v1730 = vunpack.c.l.b16 %v1616
  %v1731 = vunpack.c.l.b16 %v1617
  %v1732 = vunpack.c.l.b16 %v1618
  %v1733 = vunpack.c.l.b16 %v1619
  %v1734 = vunpack.c.l.b16 %v1620
  %v1735 = vunpack.c.l.b16 %v1621
  %v1736 = vunpack.c.l.b16 %v1622
  %v1737 = vunpack.c.l.b16 %v1623
  %v1738 = vunpack.c.l.b16 %v1624
  %v1739 = vunpack.c.l.b16 %v1625
  %v1740 = vunpack.c.l.b16 %v1626
  %v1741 = vunpack.c.l.b16 %v1627
  %v1742 = vunpack.c.l.b16 %v1628
  %v1743 = vunpack.c.l.b16 %v1629
  %v1744 = vunpack.c.l.b16 %v1630
  %v1745 = vunpack.c.l.b16 %v1631
  %v1746 = vunpack.c.l.b16 %v1632
  %v1747 = vunpack.c.l.b16 %v1633
  %v1748 = vunpack.c.l.b16 %v1634
  %v1749 = vunpack.c.l.b16 %v1635
  %v1750 = vunpack.c.l.b16 %v1636
  %v1751 = vunpack.c.l.b16 %v1637
  %v1752 = vunpack.c.l.b16 %v1638
  %v1753 = vunpack.c.l.b16 %v1639
  %v1754 = vunpack.c.l.b16 %v1640
  %v1755 = vunpack.c.l.b16 %v1641
  %v1756 = vunpack.c.l.b16 %v1642
  %v1757 = vunpack.c.l.b16 %v1643
  %v1758 = vunpack.c.l.b16 %v1644
  %v1759 = vpack.c.b16 %v1702, %v1702
  %v1760 = vpack.c.b16 %v1704, %v1703
  %v1761 = vpack.c.b16 %v1706, %v1705
  %v1762 = vpack.c.b16 %v1708, %v1707
  %v1763 = vpack.c.b16 %v1710, %v1709
  %v1764 = vpack.c.b16 %v1712, %v1711
  %v1765 = vpack.c.b16 %v1714, %v1713
  %v1766 = vpack.c.b16 %v1716, %v1715
  %v1767 = vpack.c.b16 %v1718, %v1717
  %v1768 = vpack.c.b16 %v1720, %v1719
  %v1769 = vpack.c.b16 %v1722, %v1721
  %v1770 = vpack.c.b16 %v1724, %v1723
  %v1771 = vpack.c.b16 %v1726, %v1725
  %v1772 = vpack.c.b16 %v1728, %v1727
  %v1773 = vpack.c.b16 %v1730, %v1729
  %v1774 = vpack.c.b16 %v1732, %v1731
  %v1775 = vpack.c.b16 %v1734, %v1733
  %v1776 = vpack.c.b16 %v1736, %v1735
  %v1777 = vpack.c.b16 %v1738, %v1737
  %v1778 = vpack.c.b16 %v1740, %v1739
  %v1779 = vpack.c.b16 %v1742, %v1741
  %v1780 = vpack.c.b16 %v1744, %v1743
  %v1781 = vpack.c.b16 %v1746, %v1745
  %v1782 = vpack.c.b16 %v1748, %v1747
  %v1783 = vpack.c.b16 %v1750, %v1749
  %v1784 = vpack.c.b16 %v1752, %v1751
  %v1785 = vpack.c.b16 %v1754, %v1753
  %v1786 = vpack.c.b16 %v1756, %v1755
  %v1787 = vpack.c.b16 %v1758, %v1757
  %1817 = vst [vmem:[%s3] sm:$0xff] %v1759
  %1818 = vst [vmem:[%s3 + $0x8] sm:$0xff] %v1759
  %1819 = vst [vmem:[%s3 + $0x10] sm:$0xff] %v1760
  %1820 = vst [vmem:[%s3 + $0x18] sm:$0xff] %v1761
  %1821 = vst [vmem:[%s3 + $0x20] sm:$0xff] %v1762
  %1822 = vst [vmem:[%s3 + $0x28] sm:$0xff] %v1763
  %1823 = vst [vmem:[%s3 + $0x30] sm:$0xff] %v1764
  %1824 = vst [vmem:[%s3 + $0x38] sm:$0xff] %v1765
  %1825 = vst [vmem:[%s3 + $0x40] sm:$0xff] %v1766
  %1826 = vst [vmem:[%s3 + $0x48] sm:$0xff] %v1767
  %1827 = vst [vmem:[%s3 + $0x50] sm:$0xff] %v1768
  %1828 = vst [vmem:[%s3 + $0x58] sm:$0xff] %v1769
  %1829 = vst [vmem:[%s3 + $0x60] sm:$0xff] %v1770
  %1830 = vst [vmem:[%s3 + $0x68] sm:$0xff] %v1771
  %1831 = vst [vmem:[%s3 + $0x70] sm:$0xff] %v1772
  %1832 = vst [vmem:[%s3 + $0x78] sm:$0xff] %v1773
  %1833 = vst [vmem:[%s3 + $0x80] sm:$0xff] %v1774
  %1834 = vst [vmem:[%s3 + $0x88] sm:$0xff] %v1775
  %1835 = vst [vmem:[%s3 + $0x90] sm:$0xff] %v1776
  %1836 = vst [vmem:[%s3 + $0x98] sm:$0xff] %v1777
  %1837 = vst [vmem:[%s3 + $0xa0] sm:$0xff] %v1778
  %1838 = vst [vmem:[%s3 + $0xa8] sm:$0xff] %v1779
  %1839 = vst [vmem:[%s3 + $0xb0] sm:$0xff] %v1780
  %1840 = vst [vmem:[%s3 + $0xb8] sm:$0xff] %v1781
  %1841 = vst [vmem:[%s3 + $0xc0] sm:$0xff] %v1782
  %1842 = vst [vmem:[%s3 + $0xc8] sm:$0xff] %v1783
  %1843 = vst [vmem:[%s3 + $0xd0] sm:$0xff] %v1784
  %1844 = vst [vmem:[%s3 + $0xd8] sm:$0xff] %v1785
  %1845 = vst [vmem:[%s3 + $0xe0] sm:$0xff] %v1786
  %1846 = vst [vmem:[%s3 + $0xe8] sm:$0xff] %v1787
  %1847 = vst [vmem:[%s3 + $0xf0] sm:$0xff] %v1759
  %1848 = vst [vmem:[%s3 + $0xf8] sm:$0xff] %v1759
  // Predicated region
  $region14: #{cnn_forward.3} parent=0 // pred_check
    _
  $region15: #{cnn_forward.3} parent=0 // pred_check_branch
    %1850 = sbr.rel (0) target = $region17
  $region16: #{cnn_forward.3} parent=0 // pred_region
    _
  $region17: #{cnn_forward.3} parent=0 // pred_fallthru
    _
  // Predicated region
  $region18: #{cnn_forward.3} parent=0 // pred_check
    _
  $region19: #{cnn_forward.3} parent=0 // pred_check_branch
    %1852 = sbr.rel (0) target = $region21
  $region20: #{cnn_forward.3} parent=0 // pred_region
    _
  $region21: #{cnn_forward.3} parent=0 // pred_fallthru
    _

// kernel: cnn_forward.4
$region0: #{cnn_forward.4}
  #allocation0 [shape = 'u32[]', space=smem, size = 0x4, offset = 0x4, fixed_abs, tag = 'smem constant byte address 0x4 - core index']
  #allocation1 [shape = 'u32[144,128]{1,0:T(1,128)}', space=vmem, size = 0x12000, scoped, tag = 'internal scratch']
  %s0 = inlined_call_operand.vmem [shape: bf16[2,8,8,512], index: 0, kind: input, shape index: {}]
  %s1 = inlined_call_operand.vmem [shape: bf16[3,512,1024], index: 1, kind: input, shape index: {}]
  %s2 = inlined_call_operand.vmem [shape: f32[1,512], index: 2, kind: input, shape index: {}]
  %s3 = inlined_call_operand.vmem [shape: bf16[7,8,512], index: 3, kind: output, shape index: {}]
  %s4 = sld [smem:[#allocation0]]
  $region22: #{cnn_forward.4} parent=0
    _
  %s6 = ssub.s32 1, %s4
  %s7 = scalar_select 0, %s6, %s4
  // Predicated region
  $region2: #{cnn_forward.4} parent=0 // pred_check
    _
  $region3: #{cnn_forward.4} parent=0 // pred_check_branch
    %9 = sbr.rel (0) target = $region5
  $region4: #{cnn_forward.4} parent=0 // pred_region
    _
  $region5: #{cnn_forward.4} parent=0 // pred_fallthru
    _
  // Predicated region
  $region6: #{cnn_forward.4} parent=0 // pred_check
    _
  $region7: #{cnn_forward.4} parent=0 // pred_check_branch
    %11 = sbr.rel (0) target = $region9
  $region8: #{cnn_forward.4} parent=0 // pred_region
    _
  $region9: #{cnn_forward.4} parent=0 // pred_fallthru
    _
  // Predicated region
  $region10: #{cnn_forward.4} parent=0 // pred_check
    _
  $region11: #{cnn_forward.4} parent=0 // pred_check_branch
    %13 = sbr.rel (0) target = $region13
  $region12: #{cnn_forward.4} parent=0 // pred_region
    _
  $region13: #{cnn_forward.4} parent=0 // pred_fallthru
    _
  %v14 = vld [vmem:[%s0] sm:$0xff]
  %v15 = vld [vmem:[%s0 + $0x8] sm:$0xff]
  %v16 = vld [vmem:[%s0 + $0x10] sm:$0xff]
  %v17 = vld [vmem:[%s0 + $0x18] sm:$0xff]
  %v18 = vld [vmem:[%s0 + $0x20] sm:$0xff]
  %v19 = vld [vmem:[%s0 + $0x28] sm:$0xff]
  %v20 = vld [vmem:[%s0 + $0x30] sm:$0xff]
  %v21 = vld [vmem:[%s0 + $0x38] sm:$0xff]
  %v22 = vld [vmem:[%s0 + $0x40] sm:$0xff]
  %v23 = vld [vmem:[%s0 + $0x48] sm:$0xff]
  %v24 = vld [vmem:[%s0 + $0x50] sm:$0xff]
  %v25 = vld [vmem:[%s0 + $0x58] sm:$0xff]
  %v26 = vld [vmem:[%s0 + $0x60] sm:$0xff]
  %v27 = vld [vmem:[%s0 + $0x68] sm:$0xff]
  %v28 = vld [vmem:[%s1] sm:$0xff]
  %v29 = vld [vmem:[%s1 + $0x8] sm:$0xff]
  %v30 = vld [vmem:[%s1 + $0x10] sm:$0xff]
  %v31 = vld [vmem:[%s1 + $0x18] sm:$0xff]
  %v32 = vld [vmem:[%s1 + $0x20] sm:$0xff]
  %v33 = vld [vmem:[%s1 + $0x28] sm:$0xff]
  %v34 = vld [vmem:[%s1 + $0x30] sm:$0xff]
  %v35 = vld [vmem:[%s1 + $0x38] sm:$0xff]
  %v36 = vld [vmem:[%s1 + $0x40] sm:$0xff]
  %v37 = vld [vmem:[%s1 + $0x48] sm:$0xff]
  %v38 = vld [vmem:[%s1 + $0x50] sm:$0xff]
  %v39 = vld [vmem:[%s1 + $0x58] sm:$0xff]
  %v40 = vld [vmem:[%s1 + $0x60] sm:$0xff]
  %v41 = vld [vmem:[%s1 + $0x68] sm:$0xff]
  %v42 = vld [vmem:[%s1 + $0x70] sm:$0xff]
  %v43 = vld [vmem:[%s1 + $0x78] sm:$0xff]
  %v44 = vld [vmem:[%s1 + $0x80] sm:$0xff]
  %v45 = vld [vmem:[%s1 + $0x88] sm:$0xff]
  %v46 = vld [vmem:[%s1 + $0x90] sm:$0xff]
  %v47 = vld [vmem:[%s1 + $0x98] sm:$0xff]
  %v48 = vld [vmem:[%s1 + $0xa0] sm:$0xff]
  %v49 = vld [vmem:[%s1 + $0xa8] sm:$0xff]
  %v50 = vld [vmem:[%s1 + $0xb0] sm:$0xff]
  %v51 = vld [vmem:[%s1 + $0xb8] sm:$0xff]
  %v52 = vld [vmem:[%s1 + $0xc0] sm:$0xff]
  %v53 = vld [vmem:[%s1 + $0xc8] sm:$0xff]
  %v54 = vld [vmem:[%s1 + $0xd0] sm:$0xff]
  %v55 = vld [vmem:[%s1 + $0xd8] sm:$0xff]
  %v56 = vld [vmem:[%s1 + $0xe0] sm:$0xff]
  %v57 = vld [vmem:[%s1 + $0xe8] sm:$0xff]
  %v58 = vld [vmem:[%s1 + $0xf0] sm:$0xff]
  %v59 = vld [vmem:[%s1 + $0xf8] sm:$0xff]
  %v60 = vld [vmem:[%s1 + $0x100] sm:$0xff]
  %v61 = vld [vmem:[%s1 + $0x108] sm:$0xff]
  %v62 = vld [vmem:[%s1 + $0x110] sm:$0xff]
  %v63 = vld [vmem:[%s1 + $0x118] sm:$0xff]
  %v64 = vld [vmem:[%s1 + $0x120] sm:$0xff]
  %v65 = vld [vmem:[%s1 + $0x128] sm:$0xff]
  %v66 = vld [vmem:[%s1 + $0x130] sm:$0xff]
  %v67 = vld [vmem:[%s1 + $0x138] sm:$0xff]
  %v68 = vld [vmem:[%s1 + $0x140] sm:$0xff]
  %v69 = vld [vmem:[%s1 + $0x148] sm:$0xff]
  %v70 = vld [vmem:[%s1 + $0x150] sm:$0xff]
  %v71 = vld [vmem:[%s1 + $0x158] sm:$0xff]
  %v72 = vld [vmem:[%s1 + $0x160] sm:$0xff]
  %v73 = vld [vmem:[%s1 + $0x168] sm:$0xff]
  %v74 = vld [vmem:[%s1 + $0x170] sm:$0xff]
  %v75 = vld [vmem:[%s1 + $0x178] sm:$0xff]
  %v76 = vld [vmem:[%s1 + $0x180] sm:$0xff]
  %v77 = vld [vmem:[%s1 + $0x188] sm:$0xff]
  %v78 = vld [vmem:[%s1 + $0x190] sm:$0xff]
  %v79 = vld [vmem:[%s1 + $0x198] sm:$0xff]
  %v80 = vld [vmem:[%s1 + $0x1a0] sm:$0xff]
  %v81 = vld [vmem:[%s1 + $0x1a8] sm:$0xff]
  %v82 = vld [vmem:[%s1 + $0x1b0] sm:$0xff]
  %v83 = vld [vmem:[%s1 + $0x1b8] sm:$0xff]
  %v84 = vld [vmem:[%s1 + $0x1c0] sm:$0xff]
  %v85 = vld [vmem:[%s1 + $0x1c8] sm:$0xff]
  %v86 = vld [vmem:[%s1 + $0x1d0] sm:$0xff]
  %v87 = vld [vmem:[%s1 + $0x1d8] sm:$0xff]
  %v88 = vld [vmem:[%s1 + $0x1e0] sm:$0xff]
  %v89 = vld [vmem:[%s1 + $0x1e8] sm:$0xff]
  %v90 = vld [vmem:[%s1 + $0x1f0] sm:$0xff]
  %v91 = vld [vmem:[%s1 + $0x1f8] sm:$0xff]
  %v92 = vld [vmem:[%s1 + $0x200] sm:$0xff]
  %v93 = vld [vmem:[%s1 + $0x208] sm:$0xff]
  %v94 = vld [vmem:[%s1 + $0x210] sm:$0xff]
  %v95 = vld [vmem:[%s1 + $0x218] sm:$0xff]
  %v96 = vld [vmem:[%s1 + $0x220] sm:$0xff]
  %v97 = vld [vmem:[%s1 + $0x228] sm:$0xff]
  %v98 = vld [vmem:[%s1 + $0x230] sm:$0xff]
  %v99 = vld [vmem:[%s1 + $0x238] sm:$0xff]
  %v100 = vld [vmem:[%s1 + $0x240] sm:$0xff]
  %v101 = vld [vmem:[%s1 + $0x248] sm:$0xff]
  %v102 = vld [vmem:[%s1 + $0x250] sm:$0xff]
  %v103 = vld [vmem:[%s1 + $0x258] sm:$0xff]
  %v104 = vld [vmem:[%s1 + $0x260] sm:$0xff]
  %v105 = vld [vmem:[%s1 + $0x268] sm:$0xff]
  %v106 = vld [vmem:[%s1 + $0x270] sm:$0xff]
  %v107 = vld [vmem:[%s1 + $0x278] sm:$0xff]
  %v108 = vld [vmem:[%s1 + $0x280] sm:$0xff]
  %v109 = vld [vmem:[%s1 + $0x288] sm:$0xff]
  %v110 = vld [vmem:[%s1 + $0x290] sm:$0xff]
  %v111 = vld [vmem:[%s1 + $0x298] sm:$0xff]
  %v112 = vld [vmem:[%s1 + $0x2a0] sm:$0xff]
  %v113 = vld [vmem:[%s1 + $0x2a8] sm:$0xff]
  %v114 = vld [vmem:[%s1 + $0x2b0] sm:$0xff]
  %v115 = vld [vmem:[%s1 + $0x2b8] sm:$0xff]
  %v116 = vld [vmem:[%s1 + $0x2c0] sm:$0xff]
  %v117 = vld [vmem:[%s1 + $0x2c8] sm:$0xff]
  %v118 = vld [vmem:[%s1 + $0x2d0] sm:$0xff]
  %v119 = vld [vmem:[%s1 + $0x2d8] sm:$0xff]
  %v120 = vld [vmem:[%s1 + $0x2e0] sm:$0xff]
  %v121 = vld [vmem:[%s1 + $0x2e8] sm:$0xff]
  %v122 = vld [vmem:[%s1 + $0x2f0] sm:$0xff]
  %v123 = vld [vmem:[%s1 + $0x2f8] sm:$0xff]
  %v124 = vld [vmem:[%s1 + $0x300] sm:$0xff]
  %v125 = vld [vmem:[%s1 + $0x308] sm:$0xff]
  %v126 = vld [vmem:[%s1 + $0x310] sm:$0xff]
  %v127 = vld [vmem:[%s1 + $0x318] sm:$0xff]
  %v128 = vld [vmem:[%s1 + $0x320] sm:$0xff]
  %v129 = vld [vmem:[%s1 + $0x328] sm:$0xff]
  %v130 = vld [vmem:[%s1 + $0x330] sm:$0xff]
  %v131 = vld [vmem:[%s1 + $0x338] sm:$0xff]
  %v132 = vld [vmem:[%s1 + $0x340] sm:$0xff]
  %v133 = vld [vmem:[%s1 + $0x348] sm:$0xff]
  %v134 = vld [vmem:[%s1 + $0x350] sm:$0xff]
  %v135 = vld [vmem:[%s1 + $0x358] sm:$0xff]
  %v136 = vld [vmem:[%s1 + $0x360] sm:$0xff]
  %v137 = vld [vmem:[%s1 + $0x368] sm:$0xff]
  %v138 = vld [vmem:[%s1 + $0x370] sm:$0xff]
  %v139 = vld [vmem:[%s1 + $0x378] sm:$0xff]
  %v140 = vld [vmem:[%s1 + $0x380] sm:$0xff]
  %v141 = vld [vmem:[%s1 + $0x388] sm:$0xff]
  %v142 = vld [vmem:[%s1 + $0x390] sm:$0xff]
  %v143 = vld [vmem:[%s1 + $0x398] sm:$0xff]
  %v144 = vld [vmem:[%s1 + $0x3a0] sm:$0xff]
  %v145 = vld [vmem:[%s1 + $0x3a8] sm:$0xff]
  %v146 = vld [vmem:[%s1 + $0x3b0] sm:$0xff]
  %v147 = vld [vmem:[%s1 + $0x3b8] sm:$0xff]
  %v148 = vld [vmem:[%s1 + $0x3c0] sm:$0xff]
  %v149 = vld [vmem:[%s1 + $0x3c8] sm:$0xff]
  %v150 = vld [vmem:[%s1 + $0x3d0] sm:$0xff]
  %v151 = vld [vmem:[%s1 + $0x3d8] sm:$0xff]
  %v152 = vld [vmem:[%s1 + $0x3e0] sm:$0xff]
  %v153 = vld [vmem:[%s1 + $0x3e8] sm:$0xff]
  %v154 = vld [vmem:[%s1 + $0x3f0] sm:$0xff]
  %v155 = vld [vmem:[%s1 + $0x3f8] sm:$0xff]
  %v156 = vld [vmem:[%s1 + $0x400] sm:$0xff]
  %v157 = vld [vmem:[%s1 + $0x408] sm:$0xff]
  %v158 = vld [vmem:[%s1 + $0x410] sm:$0xff]
  %v159 = vld [vmem:[%s1 + $0x418] sm:$0xff]
  %v160 = vld [vmem:[%s1 + $0x420] sm:$0xff]
  %v161 = vld [vmem:[%s1 + $0x428] sm:$0xff]
  %v162 = vld [vmem:[%s1 + $0x430] sm:$0xff]
  %v163 = vld [vmem:[%s1 + $0x438] sm:$0xff]
  %v164 = vld [vmem:[%s1 + $0x440] sm:$0xff]
  %v165 = vld [vmem:[%s1 + $0x448] sm:$0xff]
  %v166 = vld [vmem:[%s1 + $0x450] sm:$0xff]
  %v167 = vld [vmem:[%s1 + $0x458] sm:$0xff]
  %v168 = vld [vmem:[%s1 + $0x460] sm:$0xff]
  %v169 = vld [vmem:[%s1 + $0x468] sm:$0xff]
  %v170 = vld [vmem:[%s1 + $0x470] sm:$0xff]
  %v171 = vld [vmem:[%s1 + $0x478] sm:$0xff]
  %v172 = vld [vmem:[%s1 + $0x480] sm:$0xff]
  %v173 = vld [vmem:[%s1 + $0x488] sm:$0xff]
  %v174 = vld [vmem:[%s1 + $0x490] sm:$0xff]
  %v175 = vld [vmem:[%s1 + $0x498] sm:$0xff]
  %v176 = vld [vmem:[%s1 + $0x4a0] sm:$0xff]
  %v177 = vld [vmem:[%s1 + $0x4a8] sm:$0xff]
  %v178 = vld [vmem:[%s1 + $0x4b0] sm:$0xff]
  %v179 = vld [vmem:[%s1 + $0x4b8] sm:$0xff]
  %v180 = vld [vmem:[%s1 + $0x4c0] sm:$0xff]
  %v181 = vld [vmem:[%s1 + $0x4c8] sm:$0xff]
  %v182 = vld [vmem:[%s1 + $0x4d0] sm:$0xff]
  %v183 = vld [vmem:[%s1 + $0x4d8] sm:$0xff]
  %v184 = vld [vmem:[%s1 + $0x4e0] sm:$0xff]
  %v185 = vld [vmem:[%s1 + $0x4e8] sm:$0xff]
  %v186 = vld [vmem:[%s1 + $0x4f0] sm:$0xff]
  %v187 = vld [vmem:[%s1 + $0x4f8] sm:$0xff]
  %v188 = vld [vmem:[%s1 + $0x500] sm:$0xff]
  %v189 = vld [vmem:[%s1 + $0x508] sm:$0xff]
  %v190 = vld [vmem:[%s1 + $0x510] sm:$0xff]
  %v191 = vld [vmem:[%s1 + $0x518] sm:$0xff]
  %v192 = vld [vmem:[%s1 + $0x520] sm:$0xff]
  %v193 = vld [vmem:[%s1 + $0x528] sm:$0xff]
  %v194 = vld [vmem:[%s1 + $0x530] sm:$0xff]
  %v195 = vld [vmem:[%s1 + $0x538] sm:$0xff]
  %v196 = vld [vmem:[%s1 + $0x540] sm:$0xff]
  %v197 = vld [vmem:[%s1 + $0x548] sm:$0xff]
  %v198 = vld [vmem:[%s1 + $0x550] sm:$0xff]
  %v199 = vld [vmem:[%s1 + $0x558] sm:$0xff]
  %v200 = vld [vmem:[%s1 + $0x560] sm:$0xff]
  %v201 = vld [vmem:[%s1 + $0x568] sm:$0xff]
  %v202 = vld [vmem:[%s1 + $0x570] sm:$0xff]
  %v203 = vld [vmem:[%s1 + $0x578] sm:$0xff]
  %v204 = vld [vmem:[%s1 + $0x580] sm:$0xff]
  %v205 = vld [vmem:[%s1 + $0x588] sm:$0xff]
  %v206 = vld [vmem:[%s1 + $0x590] sm:$0xff]
  %v207 = vld [vmem:[%s1 + $0x598] sm:$0xff]
  %v208 = vld [vmem:[%s1 + $0x5a0] sm:$0xff]
  %v209 = vld [vmem:[%s1 + $0x5a8] sm:$0xff]
  %v210 = vld [vmem:[%s1 + $0x5b0] sm:$0xff]
  %v211 = vld [vmem:[%s1 + $0x5b8] sm:$0xff]
  %v212 = vld [vmem:[%s1 + $0x5c0] sm:$0xff]
  %v213 = vld [vmem:[%s1 + $0x5c8] sm:$0xff]
  %v214 = vld [vmem:[%s1 + $0x5d0] sm:$0xff]
  %v215 = vld [vmem:[%s1 + $0x5d8] sm:$0xff]
  %v216 = vld [vmem:[%s1 + $0x5e0] sm:$0xff]
  %v217 = vld [vmem:[%s1 + $0x5e8] sm:$0xff]
  %v218 = vld [vmem:[%s1 + $0x5f0] sm:$0xff]
  %v219 = vld [vmem:[%s1 + $0x5f8] sm:$0xff]
  %v220 = vld [vmem:[%s1 + $0x600] sm:$0xff]
  %v221 = vld [vmem:[%s1 + $0x608] sm:$0xff]
  %v222 = vld [vmem:[%s1 + $0x610] sm:$0xff]
  %v223 = vld [vmem:[%s1 + $0x618] sm:$0xff]
  %v224 = vld [vmem:[%s1 + $0x620] sm:$0xff]
  %v225 = vld [vmem:[%s1 + $0x628] sm:$0xff]
  %v226 = vld [vmem:[%s1 + $0x630] sm:$0xff]
  %v227 = vld [vmem:[%s1 + $0x638] sm:$0xff]
  %v228 = vld [vmem:[%s1 + $0x640] sm:$0xff]
  %v229 = vld [vmem:[%s1 + $0x648] sm:$0xff]
  %v230 = vld [vmem:[%s1 + $0x650] sm:$0xff]
  %v231 = vld [vmem:[%s1 + $0x658] sm:$0xff]
  %v232 = vld [vmem:[%s1 + $0x660] sm:$0xff]
  %v233 = vld [vmem:[%s1 + $0x668] sm:$0xff]
  %v234 = vld [vmem:[%s1 + $0x670] sm:$0xff]
  %v235 = vld [vmem:[%s1 + $0x678] sm:$0xff]
  %v236 = vld [vmem:[%s1 + $0x680] sm:$0xff]
  %v237 = vld [vmem:[%s1 + $0x688] sm:$0xff]
  %v238 = vld [vmem:[%s1 + $0x690] sm:$0xff]
  %v239 = vld [vmem:[%s1 + $0x698] sm:$0xff]
  %v240 = vld [vmem:[%s1 + $0x6a0] sm:$0xff]
  %v241 = vld [vmem:[%s1 + $0x6a8] sm:$0xff]
  %v242 = vld [vmem:[%s1 + $0x6b0] sm:$0xff]
  %v243 = vld [vmem:[%s1 + $0x6b8] sm:$0xff]
  %v244 = vld [vmem:[%s1 + $0x6c0] sm:$0xff]
  %v245 = vld [vmem:[%s1 + $0x6c8] sm:$0xff]
  %v246 = vld [vmem:[%s1 + $0x6d0] sm:$0xff]
  %v247 = vld [vmem:[%s1 + $0x6d8] sm:$0xff]
  %v248 = vld [vmem:[%s1 + $0x6e0] sm:$0xff]
  %v249 = vld [vmem:[%s1 + $0x6e8] sm:$0xff]
  %v250 = vld [vmem:[%s1 + $0x6f0] sm:$0xff]
  %v251 = vld [vmem:[%s1 + $0x6f8] sm:$0xff]
  %v252 = vld [vmem:[%s1 + $0x700] sm:$0xff]
  %v253 = vld [vmem:[%s1 + $0x708] sm:$0xff]
  %v254 = vld [vmem:[%s1 + $0x710] sm:$0xff]
  %v255 = vld [vmem:[%s1 + $0x718] sm:$0xff]
  %v256 = vld [vmem:[%s1 + $0x720] sm:$0xff]
  %v257 = vld [vmem:[%s1 + $0x728] sm:$0xff]
  %v258 = vld [vmem:[%s1 + $0x730] sm:$0xff]
  %v259 = vld [vmem:[%s1 + $0x738] sm:$0xff]
  %v260 = vld [vmem:[%s1 + $0x740] sm:$0xff]
  %v261 = vld [vmem:[%s1 + $0x748] sm:$0xff]
  %v262 = vld [vmem:[%s1 + $0x750] sm:$0xff]
  %v263 = vld [vmem:[%s1 + $0x758] sm:$0xff]
  %v264 = vld [vmem:[%s1 + $0x760] sm:$0xff]
  %v265 = vld [vmem:[%s1 + $0x768] sm:$0xff]
  %v266 = vld [vmem:[%s1 + $0x770] sm:$0xff]
  %v267 = vld [vmem:[%s1 + $0x778] sm:$0xff]
  %v268 = vld [vmem:[%s1 + $0x780] sm:$0xff]
  %v269 = vld [vmem:[%s1 + $0x788] sm:$0xff]
  %v270 = vld [vmem:[%s1 + $0x790] sm:$0xff]
  %v271 = vld [vmem:[%s1 + $0x798] sm:$0xff]
  %v272 = vld [vmem:[%s1 + $0x7a0] sm:$0xff]
  %v273 = vld [vmem:[%s1 + $0x7a8] sm:$0xff]
  %v274 = vld [vmem:[%s1 + $0x7b0] sm:$0xff]
  %v275 = vld [vmem:[%s1 + $0x7b8] sm:$0xff]
  %v276 = vld [vmem:[%s1 + $0x7c0] sm:$0xff]
  %v277 = vld [vmem:[%s1 + $0x7c8] sm:$0xff]
  %v278 = vld [vmem:[%s1 + $0x7d0] sm:$0xff]
  %v279 = vld [vmem:[%s1 + $0x7d8] sm:$0xff]
  %v280 = vld [vmem:[%s1 + $0x7e0] sm:$0xff]
  %v281 = vld [vmem:[%s1 + $0x7e8] sm:$0xff]
  %v282 = vld [vmem:[%s1 + $0x7f0] sm:$0xff]
  %v283 = vld [vmem:[%s1 + $0x7f8] sm:$0xff]
  %s284 = scalar_lea.vmem %s0, 128
  %v285 = vld [vmem:[%s284] sm:$0xff]
  %v286 = vld [vmem:[%s284 + $0x8] sm:$0xff]
  %v287 = vld [vmem:[%s284 + $0x10] sm:$0xff]
  %v288 = vld [vmem:[%s284 + $0x18] sm:$0xff]
  %v289 = vld [vmem:[%s284 + $0x20] sm:$0xff]
  %v290 = vld [vmem:[%s284 + $0x28] sm:$0xff]
  %v291 = vld [vmem:[%s284 + $0x30] sm:$0xff]
  %v292 = vld [vmem:[%s284 + $0x38] sm:$0xff]
  %v293 = vld [vmem:[%s284 + $0x40] sm:$0xff]
  %v294 = vld [vmem:[%s284 + $0x48] sm:$0xff]
  %v295 = vld [vmem:[%s284 + $0x50] sm:$0xff]
  %v296 = vld [vmem:[%s284 + $0x58] sm:$0xff]
  %v297 = vld [vmem:[%s284 + $0x60] sm:$0xff]
  %v298 = vld [vmem:[%s284 + $0x68] sm:$0xff]
  %s299 = scalar_lea.vmem %s1, 2048
  %v300 = vld [vmem:[%s299] sm:$0xff]
  %v301 = vld [vmem:[%s299 + $0x8] sm:$0xff]
  %v302 = vld [vmem:[%s299 + $0x10] sm:$0xff]
  %v303 = vld [vmem:[%s299 + $0x18] sm:$0xff]
  %v304 = vld [vmem:[%s299 + $0x20] sm:$0xff]
  %v305 = vld [vmem:[%s299 + $0x28] sm:$0xff]
  %v306 = vld [vmem:[%s299 + $0x30] sm:$0xff]
  %v307 = vld [vmem:[%s299 + $0x38] sm:$0xff]
  %v308 = vld [vmem:[%s299 + $0x40] sm:$0xff]
  %v309 = vld [vmem:[%s299 + $0x48] sm:$0xff]
  %v310 = vld [vmem:[%s299 + $0x50] sm:$0xff]
  %v311 = vld [vmem:[%s299 + $0x58] sm:$0xff]
  %v312 = vld [vmem:[%s299 + $0x60] sm:$0xff]
  %v313 = vld [vmem:[%s299 + $0x68] sm:$0xff]
  %v314 = vld [vmem:[%s299 + $0x70] sm:$0xff]
  %v315 = vld [vmem:[%s299 + $0x78] sm:$0xff]
  %v316 = vld [vmem:[%s299 + $0x80] sm:$0xff]
  %v317 = vld [vmem:[%s299 + $0x88] sm:$0xff]
  %v318 = vld [vmem:[%s299 + $0x90] sm:$0xff]
  %v319 = vld [vmem:[%s299 + $0x98] sm:$0xff]
  %v320 = vld [vmem:[%s299 + $0xa0] sm:$0xff]
  %v321 = vld [vmem:[%s299 + $0xa8] sm:$0xff]
  %v322 = vld [vmem:[%s299 + $0xb0] sm:$0xff]
  %v323 = vld [vmem:[%s299 + $0xb8] sm:$0xff]
  %v324 = vld [vmem:[%s299 + $0xc0] sm:$0xff]
  %v325 = vld [vmem:[%s299 + $0xc8] sm:$0xff]
  %v326 = vld [vmem:[%s299 + $0xd0] sm:$0xff]
  %v327 = vld [vmem:[%s299 + $0xd8] sm:$0xff]
  %v328 = vld [vmem:[%s299 + $0xe0] sm:$0xff]
  %v329 = vld [vmem:[%s299 + $0xe8] sm:$0xff]
  %v330 = vld [vmem:[%s299 + $0xf0] sm:$0xff]
  %v331 = vld [vmem:[%s299 + $0xf8] sm:$0xff]
  %v332 = vld [vmem:[%s299 + $0x100] sm:$0xff]
  %v333 = vld [vmem:[%s299 + $0x108] sm:$0xff]
  %v334 = vld [vmem:[%s299 + $0x110] sm:$0xff]
  %v335 = vld [vmem:[%s299 + $0x118] sm:$0xff]
  %v336 = vld [vmem:[%s299 + $0x120] sm:$0xff]
  %v337 = vld [vmem:[%s299 + $0x128] sm:$0xff]
  %v338 = vld [vmem:[%s299 + $0x130] sm:$0xff]
  %v339 = vld [vmem:[%s299 + $0x138] sm:$0xff]
  %v340 = vld [vmem:[%s299 + $0x140] sm:$0xff]
  %v341 = vld [vmem:[%s299 + $0x148] sm:$0xff]
  %v342 = vld [vmem:[%s299 + $0x150] sm:$0xff]
  %v343 = vld [vmem:[%s299 + $0x158] sm:$0xff]
  %v344 = vld [vmem:[%s299 + $0x160] sm:$0xff]
  %v345 = vld [vmem:[%s299 + $0x168] sm:$0xff]
  %v346 = vld [vmem:[%s299 + $0x170] sm:$0xff]
  %v347 = vld [vmem:[%s299 + $0x178] sm:$0xff]
  %v348 = vld [vmem:[%s299 + $0x180] sm:$0xff]
  %v349 = vld [vmem:[%s299 + $0x188] sm:$0xff]
  %v350 = vld [vmem:[%s299 + $0x190] sm:$0xff]
  %v351 = vld [vmem:[%s299 + $0x198] sm:$0xff]
  %v352 = vld [vmem:[%s299 + $0x1a0] sm:$0xff]
  %v353 = vld [vmem:[%s299 + $0x1a8] sm:$0xff]
  %v354 = vld [vmem:[%s299 + $0x1b0] sm:$0xff]
  %v355 = vld [vmem:[%s299 + $0x1b8] sm:$0xff]
  %v356 = vld [vmem:[%s299 + $0x1c0] sm:$0xff]
  %v357 = vld [vmem:[%s299 + $0x1c8] sm:$0xff]
  %v358 = vld [vmem:[%s299 + $0x1d0] sm:$0xff]
  %v359 = vld [vmem:[%s299 + $0x1d8] sm:$0xff]
  %v360 = vld [vmem:[%s299 + $0x1e0] sm:$0xff]
  %v361 = vld [vmem:[%s299 + $0x1e8] sm:$0xff]
  %v362 = vld [vmem:[%s299 + $0x1f0] sm:$0xff]
  %v363 = vld [vmem:[%s299 + $0x1f8] sm:$0xff]
  %v364 = vld [vmem:[%s299 + $0x200] sm:$0xff]
  %v365 = vld [vmem:[%s299 + $0x208] sm:$0xff]
  %v366 = vld [vmem:[%s299 + $0x210] sm:$0xff]
  %v367 = vld [vmem:[%s299 + $0x218] sm:$0xff]
  %v368 = vld [vmem:[%s299 + $0x220] sm:$0xff]
  %v369 = vld [vmem:[%s299 + $0x228] sm:$0xff]
  %v370 = vld [vmem:[%s299 + $0x230] sm:$0xff]
  %v371 = vld [vmem:[%s299 + $0x238] sm:$0xff]
  %v372 = vld [vmem:[%s299 + $0x240] sm:$0xff]
  %v373 = vld [vmem:[%s299 + $0x248] sm:$0xff]
  %v374 = vld [vmem:[%s299 + $0x250] sm:$0xff]
  %v375 = vld [vmem:[%s299 + $0x258] sm:$0xff]
  %v376 = vld [vmem:[%s299 + $0x260] sm:$0xff]
  %v377 = vld [vmem:[%s299 + $0x268] sm:$0xff]
  %v378 = vld [vmem:[%s299 + $0x270] sm:$0xff]
  %v379 = vld [vmem:[%s299 + $0x278] sm:$0xff]
  %v380 = vld [vmem:[%s299 + $0x280] sm:$0xff]
  %v381 = vld [vmem:[%s299 + $0x288] sm:$0xff]
  %v382 = vld [vmem:[%s299 + $0x290] sm:$0xff]
  %v383 = vld [vmem:[%s299 + $0x298] sm:$0xff]
  %v384 = vld [vmem:[%s299 + $0x2a0] sm:$0xff]
  %v385 = vld [vmem:[%s299 + $0x2a8] sm:$0xff]
  %v386 = vld [vmem:[%s299 + $0x2b0] sm:$0xff]
  %v387 = vld [vmem:[%s299 + $0x2b8] sm:$0xff]
  %v388 = vld [vmem:[%s299 + $0x2c0] sm:$0xff]
  %v389 = vld [vmem:[%s299 + $0x2c8] sm:$0xff]
  %v390 = vld [vmem:[%s299 + $0x2d0] sm:$0xff]
  %v391 = vld [vmem:[%s299 + $0x2d8] sm:$0xff]
  %v392 = vld [vmem:[%s299 + $0x2e0] sm:$0xff]
  %v393 = vld [vmem:[%s299 + $0x2e8] sm:$0xff]
  %v394 = vld [vmem:[%s299 + $0x2f0] sm:$0xff]
  %v395 = vld [vmem:[%s299 + $0x2f8] sm:$0xff]
  %v396 = vld [vmem:[%s299 + $0x300] sm:$0xff]
  %v397 = vld [vmem:[%s299 + $0x308] sm:$0xff]
  %v398 = vld [vmem:[%s299 + $0x310] sm:$0xff]
  %v399 = vld [vmem:[%s299 + $0x318] sm:$0xff]
  %v400 = vld [vmem:[%s299 + $0x320] sm:$0xff]
  %v401 = vld [vmem:[%s299 + $0x328] sm:$0xff]
  %v402 = vld [vmem:[%s299 + $0x330] sm:$0xff]
  %v403 = vld [vmem:[%s299 + $0x338] sm:$0xff]
  %v404 = vld [vmem:[%s299 + $0x340] sm:$0xff]
  %v405 = vld [vmem:[%s299 + $0x348] sm:$0xff]
  %v406 = vld [vmem:[%s299 + $0x350] sm:$0xff]
  %v407 = vld [vmem:[%s299 + $0x358] sm:$0xff]
  %v408 = vld [vmem:[%s299 + $0x360] sm:$0xff]
  %v409 = vld [vmem:[%s299 + $0x368] sm:$0xff]
  %v410 = vld [vmem:[%s299 + $0x370] sm:$0xff]
  %v411 = vld [vmem:[%s299 + $0x378] sm:$0xff]
  %v412 = vld [vmem:[%s299 + $0x380] sm:$0xff]
  %v413 = vld [vmem:[%s299 + $0x388] sm:$0xff]
  %v414 = vld [vmem:[%s299 + $0x390] sm:$0xff]
  %v415 = vld [vmem:[%s299 + $0x398] sm:$0xff]
  %v416 = vld [vmem:[%s299 + $0x3a0] sm:$0xff]
  %v417 = vld [vmem:[%s299 + $0x3a8] sm:$0xff]
  %v418 = vld [vmem:[%s299 + $0x3b0] sm:$0xff]
  %v419 = vld [vmem:[%s299 + $0x3b8] sm:$0xff]
  %v420 = vld [vmem:[%s299 + $0x3c0] sm:$0xff]
  %v421 = vld [vmem:[%s299 + $0x3c8] sm:$0xff]
  %v422 = vld [vmem:[%s299 + $0x3d0] sm:$0xff]
  %v423 = vld [vmem:[%s299 + $0x3d8] sm:$0xff]
  %v424 = vld [vmem:[%s299 + $0x3e0] sm:$0xff]
  %v425 = vld [vmem:[%s299 + $0x3e8] sm:$0xff]
  %v426 = vld [vmem:[%s299 + $0x3f0] sm:$0xff]
  %v427 = vld [vmem:[%s299 + $0x3f8] sm:$0xff]
  %v428 = vld [vmem:[%s299 + $0x400] sm:$0xff]
  %v429 = vld [vmem:[%s299 + $0x408] sm:$0xff]
  %v430 = vld [vmem:[%s299 + $0x410] sm:$0xff]
  %v431 = vld [vmem:[%s299 + $0x418] sm:$0xff]
  %v432 = vld [vmem:[%s299 + $0x420] sm:$0xff]
  %v433 = vld [vmem:[%s299 + $0x428] sm:$0xff]
  %v434 = vld [vmem:[%s299 + $0x430] sm:$0xff]
  %v435 = vld [vmem:[%s299 + $0x438] sm:$0xff]
  %v436 = vld [vmem:[%s299 + $0x440] sm:$0xff]
  %v437 = vld [vmem:[%s299 + $0x448] sm:$0xff]
  %v438 = vld [vmem:[%s299 + $0x450] sm:$0xff]
  %v439 = vld [vmem:[%s299 + $0x458] sm:$0xff]
  %v440 = vld [vmem:[%s299 + $0x460] sm:$0xff]
  %v441 = vld [vmem:[%s299 + $0x468] sm:$0xff]
  %v442 = vld [vmem:[%s299 + $0x470] sm:$0xff]
  %v443 = vld [vmem:[%s299 + $0x478] sm:$0xff]
  %v444 = vld [vmem:[%s299 + $0x480] sm:$0xff]
  %v445 = vld [vmem:[%s299 + $0x488] sm:$0xff]
  %v446 = vld [vmem:[%s299 + $0x490] sm:$0xff]
  %v447 = vld [vmem:[%s299 + $0x498] sm:$0xff]
  %v448 = vld [vmem:[%s299 + $0x4a0] sm:$0xff]
  %v449 = vld [vmem:[%s299 + $0x4a8] sm:$0xff]
  %v450 = vld [vmem:[%s299 + $0x4b0] sm:$0xff]
  %v451 = vld [vmem:[%s299 + $0x4b8] sm:$0xff]
  %v452 = vld [vmem:[%s299 + $0x4c0] sm:$0xff]
  %v453 = vld [vmem:[%s299 + $0x4c8] sm:$0xff]
  %v454 = vld [vmem:[%s299 + $0x4d0] sm:$0xff]
  %v455 = vld [vmem:[%s299 + $0x4d8] sm:$0xff]
  %v456 = vld [vmem:[%s299 + $0x4e0] sm:$0xff]
  %v457 = vld [vmem:[%s299 + $0x4e8] sm:$0xff]
  %v458 = vld [vmem:[%s299 + $0x4f0] sm:$0xff]
  %v459 = vld [vmem:[%s299 + $0x4f8] sm:$0xff]
  %v460 = vld [vmem:[%s299 + $0x500] sm:$0xff]
  %v461 = vld [vmem:[%s299 + $0x508] sm:$0xff]
  %v462 = vld [vmem:[%s299 + $0x510] sm:$0xff]
  %v463 = vld [vmem:[%s299 + $0x518] sm:$0xff]
  %v464 = vld [vmem:[%s299 + $0x520] sm:$0xff]
  %v465 = vld [vmem:[%s299 + $0x528] sm:$0xff]
  %v466 = vld [vmem:[%s299 + $0x530] sm:$0xff]
  %v467 = vld [vmem:[%s299 + $0x538] sm:$0xff]
  %v468 = vld [vmem:[%s299 + $0x540] sm:$0xff]
  %v469 = vld [vmem:[%s299 + $0x548] sm:$0xff]
  %v470 = vld [vmem:[%s299 + $0x550] sm:$0xff]
  %v471 = vld [vmem:[%s299 + $0x558] sm:$0xff]
  %v472 = vld [vmem:[%s299 + $0x560] sm:$0xff]
  %v473 = vld [vmem:[%s299 + $0x568] sm:$0xff]
  %v474 = vld [vmem:[%s299 + $0x570] sm:$0xff]
  %v475 = vld [vmem:[%s299 + $0x578] sm:$0xff]
  %v476 = vld [vmem:[%s299 + $0x580] sm:$0xff]
  %v477 = vld [vmem:[%s299 + $0x588] sm:$0xff]
  %v478 = vld [vmem:[%s299 + $0x590] sm:$0xff]
  %v479 = vld [vmem:[%s299 + $0x598] sm:$0xff]
  %v480 = vld [vmem:[%s299 + $0x5a0] sm:$0xff]
  %v481 = vld [vmem:[%s299 + $0x5a8] sm:$0xff]
  %v482 = vld [vmem:[%s299 + $0x5b0] sm:$0xff]
  %v483 = vld [vmem:[%s299 + $0x5b8] sm:$0xff]
  %v484 = vld [vmem:[%s299 + $0x5c0] sm:$0xff]
  %v485 = vld [vmem:[%s299 + $0x5c8] sm:$0xff]
  %v486 = vld [vmem:[%s299 + $0x5d0] sm:$0xff]
  %v487 = vld [vmem:[%s299 + $0x5d8] sm:$0xff]
  %v488 = vld [vmem:[%s299 + $0x5e0] sm:$0xff]
  %v489 = vld [vmem:[%s299 + $0x5e8] sm:$0xff]
  %v490 = vld [vmem:[%s299 + $0x5f0] sm:$0xff]
  %v491 = vld [vmem:[%s299 + $0x5f8] sm:$0xff]
  %v492 = vld [vmem:[%s299 + $0x600] sm:$0xff]
  %v493 = vld [vmem:[%s299 + $0x608] sm:$0xff]
  %v494 = vld [vmem:[%s299 + $0x610] sm:$0xff]
  %v495 = vld [vmem:[%s299 + $0x618] sm:$0xff]
  %v496 = vld [vmem:[%s299 + $0x620] sm:$0xff]
  %v497 = vld [vmem:[%s299 + $0x628] sm:$0xff]
  %v498 = vld [vmem:[%s299 + $0x630] sm:$0xff]
  %v499 = vld [vmem:[%s299 + $0x638] sm:$0xff]
  %v500 = vld [vmem:[%s299 + $0x640] sm:$0xff]
  %v501 = vld [vmem:[%s299 + $0x648] sm:$0xff]
  %v502 = vld [vmem:[%s299 + $0x650] sm:$0xff]
  %v503 = vld [vmem:[%s299 + $0x658] sm:$0xff]
  %v504 = vld [vmem:[%s299 + $0x660] sm:$0xff]
  %v505 = vld [vmem:[%s299 + $0x668] sm:$0xff]
  %v506 = vld [vmem:[%s299 + $0x670] sm:$0xff]
  %v507 = vld [vmem:[%s299 + $0x678] sm:$0xff]
  %v508 = vld [vmem:[%s299 + $0x680] sm:$0xff]
  %v509 = vld [vmem:[%s299 + $0x688] sm:$0xff]
  %v510 = vld [vmem:[%s299 + $0x690] sm:$0xff]
  %v511 = vld [vmem:[%s299 + $0x698] sm:$0xff]
  %v512 = vld [vmem:[%s299 + $0x6a0] sm:$0xff]
  %v513 = vld [vmem:[%s299 + $0x6a8] sm:$0xff]
  %v514 = vld [vmem:[%s299 + $0x6b0] sm:$0xff]
  %v515 = vld [vmem:[%s299 + $0x6b8] sm:$0xff]
  %v516 = vld [vmem:[%s299 + $0x6c0] sm:$0xff]
  %v517 = vld [vmem:[%s299 + $0x6c8] sm:$0xff]
  %v518 = vld [vmem:[%s299 + $0x6d0] sm:$0xff]
  %v519 = vld [vmem:[%s299 + $0x6d8] sm:$0xff]
  %v520 = vld [vmem:[%s299 + $0x6e0] sm:$0xff]
  %v521 = vld [vmem:[%s299 + $0x6e8] sm:$0xff]
  %v522 = vld [vmem:[%s299 + $0x6f0] sm:$0xff]
  %v523 = vld [vmem:[%s299 + $0x6f8] sm:$0xff]
  %v524 = vld [vmem:[%s299 + $0x700] sm:$0xff]
  %v525 = vld [vmem:[%s299 + $0x708] sm:$0xff]
  %v526 = vld [vmem:[%s299 + $0x710] sm:$0xff]
  %v527 = vld [vmem:[%s299 + $0x718] sm:$0xff]
  %v528 = vld [vmem:[%s299 + $0x720] sm:$0xff]
  %v529 = vld [vmem:[%s299 + $0x728] sm:$0xff]
  %v530 = vld [vmem:[%s299 + $0x730] sm:$0xff]
  %v531 = vld [vmem:[%s299 + $0x738] sm:$0xff]
  %v532 = vld [vmem:[%s299 + $0x740] sm:$0xff]
  %v533 = vld [vmem:[%s299 + $0x748] sm:$0xff]
  %v534 = vld [vmem:[%s299 + $0x750] sm:$0xff]
  %v535 = vld [vmem:[%s299 + $0x758] sm:$0xff]
  %v536 = vld [vmem:[%s299 + $0x760] sm:$0xff]
  %v537 = vld [vmem:[%s299 + $0x768] sm:$0xff]
  %v538 = vld [vmem:[%s299 + $0x770] sm:$0xff]
  %v539 = vld [vmem:[%s299 + $0x778] sm:$0xff]
  %v540 = vld [vmem:[%s299 + $0x780] sm:$0xff]
  %v541 = vld [vmem:[%s299 + $0x788] sm:$0xff]
  %v542 = vld [vmem:[%s299 + $0x790] sm:$0xff]
  %v543 = vld [vmem:[%s299 + $0x798] sm:$0xff]
  %v544 = vld [vmem:[%s299 + $0x7a0] sm:$0xff]
  %v545 = vld [vmem:[%s299 + $0x7a8] sm:$0xff]
  %v546 = vld [vmem:[%s299 + $0x7b0] sm:$0xff]
  %v547 = vld [vmem:[%s299 + $0x7b8] sm:$0xff]
  %v548 = vld [vmem:[%s299 + $0x7c0] sm:$0xff]
  %v549 = vld [vmem:[%s299 + $0x7c8] sm:$0xff]
  %v550 = vld [vmem:[%s299 + $0x7d0] sm:$0xff]
  %v551 = vld [vmem:[%s299 + $0x7d8] sm:$0xff]
  %v552 = vld [vmem:[%s299 + $0x7e0] sm:$0xff]
  %v553 = vld [vmem:[%s299 + $0x7e8] sm:$0xff]
  %v554 = vld [vmem:[%s299 + $0x7f0] sm:$0xff]
  %v555 = vld [vmem:[%s299 + $0x7f8] sm:$0xff]
  %v570 = vunpack.c.l.b16 %v285
  %v571 = vunpack.c.h.b16 %v285
  %v572 = vunpack.c.l.b16 %v286
  %v573 = vunpack.c.h.b16 %v286
  %v574 = vunpack.c.l.b16 %v287
  %v575 = vunpack.c.h.b16 %v287
  %v576 = vunpack.c.l.b16 %v288
  %v577 = vunpack.c.h.b16 %v288
  %v578 = vunpack.c.l.b16 %v289
  %v579 = vunpack.c.h.b16 %v289
  %v580 = vunpack.c.l.b16 %v290
  %v581 = vunpack.c.h.b16 %v290
  %v582 = vunpack.c.l.b16 %v291
  %v583 = vunpack.c.h.b16 %v291
  %v584 = vunpack.c.l.b16 %v292
  %v585 = vunpack.c.h.b16 %v292
  %v586 = vunpack.c.l.b16 %v293
  %v587 = vunpack.c.h.b16 %v293
  %v588 = vunpack.c.l.b16 %v294
  %v589 = vunpack.c.h.b16 %v294
  %v590 = vunpack.c.l.b16 %v295
  %v591 = vunpack.c.h.b16 %v295
  %v592 = vunpack.c.l.b16 %v296
  %v593 = vunpack.c.h.b16 %v296
  %v594 = vunpack.c.l.b16 %v297
  %v595 = vunpack.c.h.b16 %v297
  %v596 = vunpack.c.l.b16 %v298
  %v597 = vunpack.c.h.b16 %v298
  %v598 = vpack.c.b16 %v574, %v570
  %v599 = vpack.c.b16 %v575, %v571
  %v600 = vpack.c.b16 %v576, %v572
  %v601 = vpack.c.b16 %v577, %v573
  %v602 = vpack.c.b16 %v582, %v578
  %v603 = vpack.c.b16 %v583, %v579
  %v604 = vpack.c.b16 %v584, %v580
  %v605 = vpack.c.b16 %v585, %v581
  %v606 = vpack.c.b16 %v590, %v586
  %v607 = vpack.c.b16 %v591, %v587
  %v608 = vpack.c.b16 %v592, %v588
  %v609 = vpack.c.b16 %v593, %v589
  %v610 = vpack.c.b16 %v594, %v594
  %v611 = vpack.c.b16 %v595, %v595
  %v612 = vpack.c.b16 %v596, %v596
  %v613 = vpack.c.b16 %v597, %v597
  %v886 = vunpack.c.l.b16 %v300
  %v887 = vunpack.c.h.b16 %v300
  %v888 = vunpack.c.l.b16 %v301
  %v889 = vunpack.c.h.b16 %v301
  %v890 = vunpack.c.l.b16 %v302
  %v891 = vunpack.c.h.b16 %v302
  %v892 = vunpack.c.l.b16 %v303
  %v893 = vunpack.c.h.b16 %v303
  %v894 = vunpack.c.l.b16 %v304
  %v895 = vunpack.c.h.b16 %v304
  %v896 = vunpack.c.l.b16 %v305
  %v897 = vunpack.c.h.b16 %v305
  %v898 = vunpack.c.l.b16 %v306
  %v899 = vunpack.c.h.b16 %v306
  %v900 = vunpack.c.l.b16 %v307
  %v901 = vunpack.c.h.b16 %v307
  %v902 = vunpack.c.l.b16 %v308
  %v903 = vunpack.c.h.b16 %v308
  %v904 = vunpack.c.l.b16 %v309
  %v905 = vunpack.c.h.b16 %v309
  %v906 = vunpack.c.l.b16 %v310
  %v907 = vunpack.c.h.b16 %v310
  %v908 = vunpack.c.l.b16 %v311
  %v909 = vunpack.c.h.b16 %v311
  %v910 = vunpack.c.l.b16 %v312
  %v911 = vunpack.c.h.b16 %v312
  %v912 = vunpack.c.l.b16 %v313
  %v913 = vunpack.c.h.b16 %v313
  %v914 = vunpack.c.l.b16 %v314
  %v915 = vunpack.c.h.b16 %v314
  %v916 = vunpack.c.l.b16 %v315
  %v917 = vunpack.c.h.b16 %v315
  %v918 = vunpack.c.l.b16 %v316
  %v919 = vunpack.c.h.b16 %v316
  %v920 = vunpack.c.l.b16 %v317
  %v921 = vunpack.c.h.b16 %v317
  %v922 = vunpack.c.l.b16 %v318
  %v923 = vunpack.c.h.b16 %v318
  %v924 = vunpack.c.l.b16 %v319
  %v925 = vunpack.c.h.b16 %v319
  %v926 = vunpack.c.l.b16 %v320
  %v927 = vunpack.c.h.b16 %v320
  %v928 = vunpack.c.l.b16 %v321
  %v929 = vunpack.c.h.b16 %v321
  %v930 = vunpack.c.l.b16 %v322
  %v931 = vunpack.c.h.b16 %v322
  %v932 = vunpack.c.l.b16 %v323
  %v933 = vunpack.c.h.b16 %v323
  %v934 = vunpack.c.l.b16 %v324
  %v935 = vunpack.c.h.b16 %v324
  %v936 = vunpack.c.l.b16 %v325
  %v937 = vunpack.c.h.b16 %v325
  %v938 = vunpack.c.l.b16 %v326
  %v939 = vunpack.c.h.b16 %v326
  %v940 = vunpack.c.l.b16 %v327
  %v941 = vunpack.c.h.b16 %v327
  %v942 = vunpack.c.l.b16 %v328
  %v943 = vunpack.c.h.b16 %v328
  %v944 = vunpack.c.l.b16 %v329
  %v945 = vunpack.c.h.b16 %v329
  %v946 = vunpack.c.l.b16 %v330
  %v947 = vunpack.c.h.b16 %v330
  %v948 = vunpack.c.l.b16 %v331
  %v949 = vunpack.c.h.b16 %v331
  %v950 = vunpack.c.l.b16 %v332
  %v951 = vunpack.c.h.b16 %v332
  %v952 = vunpack.c.l.b16 %v333
  %v953 = vunpack.c.h.b16 %v333
  %v954 = vunpack.c.l.b16 %v334
  %v955 = vunpack.c.h.b16 %v334
  %v956 = vunpack.c.l.b16 %v335
  %v957 = vunpack.c.h.b16 %v335
  %v958 = vunpack.c.l.b16 %v336
  %v959 = vunpack.c.h.b16 %v336
  %v960 = vunpack.c.l.b16 %v337
  %v961 = vunpack.c.h.b16 %v337
  %v962 = vunpack.c.l.b16 %v338
  %v963 = vunpack.c.h.b16 %v338
  %v964 = vunpack.c.l.b16 %v339
  %v965 = vunpack.c.h.b16 %v339
  %v966 = vunpack.c.l.b16 %v340
  %v967 = vunpack.c.h.b16 %v340
  %v968 = vunpack.c.l.b16 %v341
  %v969 = vunpack.c.h.b16 %v341
  %v970 = vunpack.c.l.b16 %v342
  %v971 = vunpack.c.h.b16 %v342
  %v972 = vunpack.c.l.b16 %v343
  %v973 = vunpack.c.h.b16 %v343
  %v974 = vunpack.c.l.b16 %v344
  %v975 = vunpack.c.h.b16 %v344
  %v976 = vunpack.c.l.b16 %v345
  %v977 = vunpack.c.h.b16 %v345
  %v978 = vunpack.c.l.b16 %v346
  %v979 = vunpack.c.h.b16 %v346
  %v980 = vunpack.c.l.b16 %v347
  %v981 = vunpack.c.h.b16 %v347
  %v982 = vunpack.c.l.b16 %v348
  %v983 = vunpack.c.h.b16 %v348
  %v984 = vunpack.c.l.b16 %v349
  %v985 = vunpack.c.h.b16 %v349
  %v986 = vunpack.c.l.b16 %v350
  %v987 = vunpack.c.h.b16 %v350
  %v988 = vunpack.c.l.b16 %v351
  %v989 = vunpack.c.h.b16 %v351
  %v990 = vunpack.c.l.b16 %v352
  %v991 = vunpack.c.h.b16 %v352
  %v992 = vunpack.c.l.b16 %v353
  %v993 = vunpack.c.h.b16 %v353
  %v994 = vunpack.c.l.b16 %v354
  %v995 = vunpack.c.h.b16 %v354
  %v996 = vunpack.c.l.b16 %v355
  %v997 = vunpack.c.h.b16 %v355
  %v998 = vunpack.c.l.b16 %v356
  %v999 = vunpack.c.h.b16 %v356
  %v1000 = vunpack.c.l.b16 %v357
  %v1001 = vunpack.c.h.b16 %v357
  %v1002 = vunpack.c.l.b16 %v358
  %v1003 = vunpack.c.h.b16 %v358
  %v1004 = vunpack.c.l.b16 %v359
  %v1005 = vunpack.c.h.b16 %v359
  %v1006 = vunpack.c.l.b16 %v360
  %v1007 = vunpack.c.h.b16 %v360
  %v1008 = vunpack.c.l.b16 %v361
  %v1009 = vunpack.c.h.b16 %v361
  %v1010 = vunpack.c.l.b16 %v362
  %v1011 = vunpack.c.h.b16 %v362
  %v1012 = vunpack.c.l.b16 %v363
  %v1013 = vunpack.c.h.b16 %v363
  %v1014 = vunpack.c.l.b16 %v364
  %v1015 = vunpack.c.h.b16 %v364
  %v1016 = vunpack.c.l.b16 %v365
  %v1017 = vunpack.c.h.b16 %v365
  %v1018 = vunpack.c.l.b16 %v366
  %v1019 = vunpack.c.h.b16 %v366
  %v1020 = vunpack.c.l.b16 %v367
  %v1021 = vunpack.c.h.b16 %v367
  %v1022 = vunpack.c.l.b16 %v368
  %v1023 = vunpack.c.h.b16 %v368
  %v1024 = vunpack.c.l.b16 %v369
  %v1025 = vunpack.c.h.b16 %v369
  %v1026 = vunpack.c.l.b16 %v370
  %v1027 = vunpack.c.h.b16 %v370
  %v1028 = vunpack.c.l.b16 %v371
  %v1029 = vunpack.c.h.b16 %v371
  %v1030 = vunpack.c.l.b16 %v372
  %v1031 = vunpack.c.h.b16 %v372
  %v1032 = vunpack.c.l.b16 %v373
  %v1033 = vunpack.c.h.b16 %v373
  %v1034 = vunpack.c.l.b16 %v374
  %v1035 = vunpack.c.h.b16 %v374
  %v1036 = vunpack.c.l.b16 %v375
  %v1037 = vunpack.c.h.b16 %v375
  %v1038 = vunpack.c.l.b16 %v376
  %v1039 = vunpack.c.h.b16 %v376
  %v1040 = vunpack.c.l.b16 %v377
  %v1041 = vunpack.c.h.b16 %v377
  %v1042 = vunpack.c.l.b16 %v378
  %v1043 = vunpack.c.h.b16 %v378
  %v1044 = vunpack.c.l.b16 %v379
  %v1045 = vunpack.c.h.b16 %v379
  %v1046 = vunpack.c.l.b16 %v380
  %v1047 = vunpack.c.h.b16 %v380
  %v1048 = vunpack.c.l.b16 %v381
  %v1049 = vunpack.c.h.b16 %v381
  %v1050 = vunpack.c.l.b16 %v382
  %v1051 = vunpack.c.h.b16 %v382
  %v1052 = vunpack.c.l.b16 %v383
  %v1053 = vunpack.c.h.b16 %v383
  %v1054 = vunpack.c.l.b16 %v384
  %v1055 = vunpack.c.h.b16 %v384
  %v1056 = vunpack.c.l.b16 %v385
  %v1057 = vunpack.c.h.b16 %v385
  %v1058 = vunpack.c.l.b16 %v386
  %v1059 = vunpack.c.h.b16 %v386
  %v1060 = vunpack.c.l.b16 %v387
  %v1061 = vunpack.c.h.b16 %v387
  %v1062 = vunpack.c.l.b16 %v388
  %v1063 = vunpack.c.h.b16 %v388
  %v1064 = vunpack.c.l.b16 %v389
  %v1065 = vunpack.c.h.b16 %v389
  %v1066 = vunpack.c.l.b16 %v390
  %v1067 = vunpack.c.h.b16 %v390
  %v1068 = vunpack.c.l.b16 %v391
  %v1069 = vunpack.c.h.b16 %v391
  %v1070 = vunpack.c.l.b16 %v392
  %v1071 = vunpack.c.h.b16 %v392
  %v1072 = vunpack.c.l.b16 %v393
  %v1073 = vunpack.c.h.b16 %v393
  %v1074 = vunpack.c.l.b16 %v394
  %v1075 = vunpack.c.h.b16 %v394
  %v1076 = vunpack.c.l.b16 %v395
  %v1077 = vunpack.c.h.b16 %v395
  %v1078 = vunpack.c.l.b16 %v396
  %v1079 = vunpack.c.h.b16 %v396
  %v1080 = vunpack.c.l.b16 %v397
  %v1081 = vunpack.c.h.b16 %v397
  %v1082 = vunpack.c.l.b16 %v398
  %v1083 = vunpack.c.h.b16 %v398
  %v1084 = vunpack.c.l.b16 %v399
  %v1085 = vunpack.c.h.b16 %v399
  %v1086 = vunpack.c.l.b16 %v400
  %v1087 = vunpack.c.h.b16 %v400
  %v1088 = vunpack.c.l.b16 %v401
  %v1089 = vunpack.c.h.b16 %v401
  %v1090 = vunpack.c.l.b16 %v402
  %v1091 = vunpack.c.h.b16 %v402
  %v1092 = vunpack.c.l.b16 %v403
  %v1093 = vunpack.c.h.b16 %v403
  %v1094 = vunpack.c.l.b16 %v404
  %v1095 = vunpack.c.h.b16 %v404
  %v1096 = vunpack.c.l.b16 %v405
  %v1097 = vunpack.c.h.b16 %v405
  %v1098 = vunpack.c.l.b16 %v406
  %v1099 = vunpack.c.h.b16 %v406
  %v1100 = vunpack.c.l.b16 %v407
  %v1101 = vunpack.c.h.b16 %v407
  %v1102 = vunpack.c.l.b16 %v408
  %v1103 = vunpack.c.h.b16 %v408
  %v1104 = vunpack.c.l.b16 %v409
  %v1105 = vunpack.c.h.b16 %v409
  %v1106 = vunpack.c.l.b16 %v410
  %v1107 = vunpack.c.h.b16 %v410
  %v1108 = vunpack.c.l.b16 %v411
  %v1109 = vunpack.c.h.b16 %v411
  %v1110 = vunpack.c.l.b16 %v412
  %v1111 = vunpack.c.h.b16 %v412
  %v1112 = vunpack.c.l.b16 %v413
  %v1113 = vunpack.c.h.b16 %v413
  %v1114 = vunpack.c.l.b16 %v414
  %v1115 = vunpack.c.h.b16 %v414
  %v1116 = vunpack.c.l.b16 %v415
  %v1117 = vunpack.c.h.b16 %v415
  %v1118 = vunpack.c.l.b16 %v416
  %v1119 = vunpack.c.h.b16 %v416
  %v1120 = vunpack.c.l.b16 %v417
  %v1121 = vunpack.c.h.b16 %v417
  %v1122 = vunpack.c.l.b16 %v418
  %v1123 = vunpack.c.h.b16 %v418
  %v1124 = vunpack.c.l.b16 %v419
  %v1125 = vunpack.c.h.b16 %v419
  %v1126 = vunpack.c.l.b16 %v420
  %v1127 = vunpack.c.h.b16 %v420
  %v1128 = vunpack.c.l.b16 %v421
  %v1129 = vunpack.c.h.b16 %v421
  %v1130 = vunpack.c.l.b16 %v422
  %v1131 = vunpack.c.h.b16 %v422
  %v1132 = vunpack.c.l.b16 %v423
  %v1133 = vunpack.c.h.b16 %v423
  %v1134 = vunpack.c.l.b16 %v424
  %v1135 = vunpack.c.h.b16 %v424
  %v1136 = vunpack.c.l.b16 %v425
  %v1137 = vunpack.c.h.b16 %v425
  %v1138 = vunpack.c.l.b16 %v426
  %v1139 = vunpack.c.h.b16 %v426
  %v1140 = vunpack.c.l.b16 %v427
  %v1141 = vunpack.c.h.b16 %v427
  %v1142 = vunpack.c.l.b16 %v428
  %v1143 = vunpack.c.h.b16 %v428
  %v1144 = vunpack.c.l.b16 %v429
  %v1145 = vunpack.c.h.b16 %v429
  %v1146 = vunpack.c.l.b16 %v430
  %v1147 = vunpack.c.h.b16 %v430
  %v1148 = vunpack.c.l.b16 %v431
  %v1149 = vunpack.c.h.b16 %v431
  %v1150 = vunpack.c.l.b16 %v432
  %v1151 = vunpack.c.h.b16 %v432
  %v1152 = vunpack.c.l.b16 %v433
  %v1153 = vunpack.c.h.b16 %v433
  %v1154 = vunpack.c.l.b16 %v434
  %v1155 = vunpack.c.h.b16 %v434
  %v1156 = vunpack.c.l.b16 %v435
  %v1157 = vunpack.c.h.b16 %v435
  %v1158 = vunpack.c.l.b16 %v436
  %v1159 = vunpack.c.h.b16 %v436
  %v1160 = vunpack.c.l.b16 %v437
  %v1161 = vunpack.c.h.b16 %v437
  %v1162 = vunpack.c.l.b16 %v438
  %v1163 = vunpack.c.h.b16 %v438
  %v1164 = vunpack.c.l.b16 %v439
  %v1165 = vunpack.c.h.b16 %v439
  %v1166 = vunpack.c.l.b16 %v440
  %v1167 = vunpack.c.h.b16 %v440
  %v1168 = vunpack.c.l.b16 %v441
  %v1169 = vunpack.c.h.b16 %v441
  %v1170 = vunpack.c.l.b16 %v442
  %v1171 = vunpack.c.h.b16 %v442
  %v1172 = vunpack.c.l.b16 %v443
  %v1173 = vunpack.c.h.b16 %v443
  %v1174 = vunpack.c.l.b16 %v444
  %v1175 = vunpack.c.h.b16 %v444
  %v1176 = vunpack.c.l.b16 %v445
  %v1177 = vunpack.c.h.b16 %v445
  %v1178 = vunpack.c.l.b16 %v446
  %v1179 = vunpack.c.h.b16 %v446
  %v1180 = vunpack.c.l.b16 %v447
  %v1181 = vunpack.c.h.b16 %v447
  %v1182 = vunpack.c.l.b16 %v448
  %v1183 = vunpack.c.h.b16 %v448
  %v1184 = vunpack.c.l.b16 %v449
  %v1185 = vunpack.c.h.b16 %v449
  %v1186 = vunpack.c.l.b16 %v450
  %v1187 = vunpack.c.h.b16 %v450
  %v1188 = vunpack.c.l.b16 %v451
  %v1189 = vunpack.c.h.b16 %v451
  %v1190 = vunpack.c.l.b16 %v452
  %v1191 = vunpack.c.h.b16 %v452
  %v1192 = vunpack.c.l.b16 %v453
  %v1193 = vunpack.c.h.b16 %v453
  %v1194 = vunpack.c.l.b16 %v454
  %v1195 = vunpack.c.h.b16 %v454
  %v1196 = vunpack.c.l.b16 %v455
  %v1197 = vunpack.c.h.b16 %v455
  %v1198 = vunpack.c.l.b16 %v456
  %v1199 = vunpack.c.h.b16 %v456
  %v1200 = vunpack.c.l.b16 %v457
  %v1201 = vunpack.c.h.b16 %v457
  %v1202 = vunpack.c.l.b16 %v458
  %v1203 = vunpack.c.h.b16 %v458
  %v1204 = vunpack.c.l.b16 %v459
  %v1205 = vunpack.c.h.b16 %v459
  %v1206 = vunpack.c.l.b16 %v460
  %v1207 = vunpack.c.h.b16 %v460
  %v1208 = vunpack.c.l.b16 %v461
  %v1209 = vunpack.c.h.b16 %v461
  %v1210 = vunpack.c.l.b16 %v462
  %v1211 = vunpack.c.h.b16 %v462
  %v1212 = vunpack.c.l.b16 %v463
  %v1213 = vunpack.c.h.b16 %v463
  %v1214 = vunpack.c.l.b16 %v464
  %v1215 = vunpack.c.h.b16 %v464
  %v1216 = vunpack.c.l.b16 %v465
  %v1217 = vunpack.c.h.b16 %v465
  %v1218 = vunpack.c.l.b16 %v466
  %v1219 = vunpack.c.h.b16 %v466
  %v1220 = vunpack.c.l.b16 %v467
  %v1221 = vunpack.c.h.b16 %v467
  %v1222 = vunpack.c.l.b16 %v468
  %v1223 = vunpack.c.h.b16 %v468
  %v1224 = vunpack.c.l.b16 %v469
  %v1225 = vunpack.c.h.b16 %v469
  %v1226 = vunpack.c.l.b16 %v470
  %v1227 = vunpack.c.h.b16 %v470
  %v1228 = vunpack.c.l.b16 %v471
  %v1229 = vunpack.c.h.b16 %v471
  %v1230 = vunpack.c.l.b16 %v472
  %v1231 = vunpack.c.h.b16 %v472
  %v1232 = vunpack.c.l.b16 %v473
  %v1233 = vunpack.c.h.b16 %v473
  %v1234 = vunpack.c.l.b16 %v474
  %v1235 = vunpack.c.h.b16 %v474
  %v1236 = vunpack.c.l.b16 %v475
  %v1237 = vunpack.c.h.b16 %v475
  %v1238 = vunpack.c.l.b16 %v476
  %v1239 = vunpack.c.h.b16 %v476
  %v1240 = vunpack.c.l.b16 %v477
  %v1241 = vunpack.c.h.b16 %v477
  %v1242 = vunpack.c.l.b16 %v478
  %v1243 = vunpack.c.h.b16 %v478
  %v1244 = vunpack.c.l.b16 %v479
  %v1245 = vunpack.c.h.b16 %v479
  %v1246 = vunpack.c.l.b16 %v480
  %v1247 = vunpack.c.h.b16 %v480
  %v1248 = vunpack.c.l.b16 %v481
  %v1249 = vunpack.c.h.b16 %v481
  %v1250 = vunpack.c.l.b16 %v482
  %v1251 = vunpack.c.h.b16 %v482
  %v1252 = vunpack.c.l.b16 %v483
  %v1253 = vunpack.c.h.b16 %v483
  %v1254 = vunpack.c.l.b16 %v484
  %v1255 = vunpack.c.h.b16 %v484
  %v1256 = vunpack.c.l.b16 %v485
  %v1257 = vunpack.c.h.b16 %v485
  %v1258 = vunpack.c.l.b16 %v486
  %v1259 = vunpack.c.h.b16 %v486
  %v1260 = vunpack.c.l.b16 %v487
  %v1261 = vunpack.c.h.b16 %v487
  %v1262 = vunpack.c.l.b16 %v488
  %v1263 = vunpack.c.h.b16 %v488
  %v1264 = vunpack.c.l.b16 %v489
  %v1265 = vunpack.c.h.b16 %v489
  %v1266 = vunpack.c.l.b16 %v490
  %v1267 = vunpack.c.h.b16 %v490
  %v1268 = vunpack.c.l.b16 %v491
  %v1269 = vunpack.c.h.b16 %v491
  %v1270 = vunpack.c.l.b16 %v492
  %v1271 = vunpack.c.h.b16 %v492
  %v1272 = vunpack.c.l.b16 %v493
  %v1273 = vunpack.c.h.b16 %v493
  %v1274 = vunpack.c.l.b16 %v494
  %v1275 = vunpack.c.h.b16 %v494
  %v1276 = vunpack.c.l.b16 %v495
  %v1277 = vunpack.c.h.b16 %v495
  %v1278 = vunpack.c.l.b16 %v496
  %v1279 = vunpack.c.h.b16 %v496
  %v1280 = vunpack.c.l.b16 %v497
  %v1281 = vunpack.c.h.b16 %v497
  %v1282 = vunpack.c.l.b16 %v498
  %v1283 = vunpack.c.h.b16 %v498
  %v1284 = vunpack.c.l.b16 %v499
  %v1285 = vunpack.c.h.b16 %v499
  %v1286 = vunpack.c.l.b16 %v500
  %v1287 = vunpack.c.h.b16 %v500
  %v1288 = vunpack.c.l.b16 %v501
  %v1289 = vunpack.c.h.b16 %v501
  %v1290 = vunpack.c.l.b16 %v502
  %v1291 = vunpack.c.h.b16 %v502
  %v1292 = vunpack.c.l.b16 %v503
  %v1293 = vunpack.c.h.b16 %v503
  %v1294 = vunpack.c.l.b16 %v504
  %v1295 = vunpack.c.h.b16 %v504
  %v1296 = vunpack.c.l.b16 %v505
  %v1297 = vunpack.c.h.b16 %v505
  %v1298 = vunpack.c.l.b16 %v506
  %v1299 = vunpack.c.h.b16 %v506
  %v1300 = vunpack.c.l.b16 %v507
  %v1301 = vunpack.c.h.b16 %v507
  %v1302 = vunpack.c.l.b16 %v508
  %v1303 = vunpack.c.h.b16 %v508
  %v1304 = vunpack.c.l.b16 %v509
  %v1305 = vunpack.c.h.b16 %v509
  %v1306 = vunpack.c.l.b16 %v510
  %v1307 = vunpack.c.h.b16 %v510
  %v1308 = vunpack.c.l.b16 %v511
  %v1309 = vunpack.c.h.b16 %v511
  %v1310 = vunpack.c.l.b16 %v512
  %v1311 = vunpack.c.h.b16 %v512
  %v1312 = vunpack.c.l.b16 %v513
  %v1313 = vunpack.c.h.b16 %v513
  %v1314 = vunpack.c.l.b16 %v514
  %v1315 = vunpack.c.h.b16 %v514
  %v1316 = vunpack.c.l.b16 %v515
  %v1317 = vunpack.c.h.b16 %v515
  %v1318 = vunpack.c.l.b16 %v516
  %v1319 = vunpack.c.h.b16 %v516
  %v1320 = vunpack.c.l.b16 %v517
  %v1321 = vunpack.c.h.b16 %v517
  %v1322 = vunpack.c.l.b16 %v518
  %v1323 = vunpack.c.h.b16 %v518
  %v1324 = vunpack.c.l.b16 %v519
  %v1325 = vunpack.c.h.b16 %v519
  %v1326 = vunpack.c.l.b16 %v520
  %v1327 = vunpack.c.h.b16 %v520
  %v1328 = vunpack.c.l.b16 %v521
  %v1329 = vunpack.c.h.b16 %v521
  %v1330 = vunpack.c.l.b16 %v522
  %v1331 = vunpack.c.h.b16 %v522
  %v1332 = vunpack.c.l.b16 %v523
  %v1333 = vunpack.c.h.b16 %v523
  %v1334 = vunpack.c.l.b16 %v524
  %v1335 = vunpack.c.h.b16 %v524
  %v1336 = vunpack.c.l.b16 %v525
  %v1337 = vunpack.c.h.b16 %v525
  %v1338 = vunpack.c.l.b16 %v526
  %v1339 = vunpack.c.h.b16 %v526
  %v1340 = vunpack.c.l.b16 %v527
  %v1341 = vunpack.c.h.b16 %v527
  %v1342 = vunpack.c.l.b16 %v528
  %v1343 = vunpack.c.h.b16 %v528
  %v1344 = vunpack.c.l.b16 %v529
  %v1345 = vunpack.c.h.b16 %v529
  %v1346 = vunpack.c.l.b16 %v530
  %v1347 = vunpack.c.h.b16 %v530
  %v1348 = vunpack.c.l.b16 %v531
  %v1349 = vunpack.c.h.b16 %v531
  %v1350 = vunpack.c.l.b16 %v532
  %v1351 = vunpack.c.h.b16 %v532
  %v1352 = vunpack.c.l.b16 %v533
  %v1353 = vunpack.c.h.b16 %v533
  %v1354 = vunpack.c.l.b16 %v534
  %v1355 = vunpack.c.h.b16 %v534
  %v1356 = vunpack.c.l.b16 %v535
  %v1357 = vunpack.c.h.b16 %v535
  %v1358 = vunpack.c.l.b16 %v536
  %v1359 = vunpack.c.h.b16 %v536
  %v1360 = vunpack.c.l.b16 %v537
  %v1361 = vunpack.c.h.b16 %v537
  %v1362 = vunpack.c.l.b16 %v538
  %v1363 = vunpack.c.h.b16 %v538
  %v1364 = vunpack.c.l.b16 %v539
  %v1365 = vunpack.c.h.b16 %v539
  %v1366 = vunpack.c.l.b16 %v540
  %v1367 = vunpack.c.h.b16 %v540
  %v1368 = vunpack.c.l.b16 %v541
  %v1369 = vunpack.c.h.b16 %v541
  %v1370 = vunpack.c.l.b16 %v542
  %v1371 = vunpack.c.h.b16 %v542
  %v1372 = vunpack.c.l.b16 %v543
  %v1373 = vunpack.c.h.b16 %v543
  %v1374 = vunpack.c.l.b16 %v544
  %v1375 = vunpack.c.h.b16 %v544
  %v1376 = vunpack.c.l.b16 %v545
  %v1377 = vunpack.c.h.b16 %v545
  %v1378 = vunpack.c.l.b16 %v546
  %v1379 = vunpack.c.h.b16 %v546
  %v1380 = vunpack.c.l.b16 %v547
  %v1381 = vunpack.c.h.b16 %v547
  %v1382 = vunpack.c.l.b16 %v548
  %v1383 = vunpack.c.h.b16 %v548
  %v1384 = vunpack.c.l.b16 %v549
  %v1385 = vunpack.c.h.b16 %v549
  %v1386 = vunpack.c.l.b16 %v550
  %v1387 = vunpack.c.h.b16 %v550
  %v1388 = vunpack.c.l.b16 %v551
  %v1389 = vunpack.c.h.b16 %v551
  %v1390 = vunpack.c.l.b16 %v552
  %v1391 = vunpack.c.h.b16 %v552
  %v1392 = vunpack.c.l.b16 %v553
  %v1393 = vunpack.c.h.b16 %v553
  %v1394 = vunpack.c.l.b16 %v554
  %v1395 = vunpack.c.h.b16 %v554
  %v1396 = vunpack.c.l.b16 %v555
  %v1397 = vunpack.c.h.b16 %v555
  %v1398 = vpack.c.b16 %v894, %v886
  %v1399 = vpack.c.b16 %v895, %v887
  %v1400 = vpack.c.b16 %v896, %v888
  %v1401 = vpack.c.b16 %v897, %v889
  %v1402 = vpack.c.b16 %v898, %v890
  %v1403 = vpack.c.b16 %v899, %v891
  %v1404 = vpack.c.b16 %v900, %v892
  %v1405 = vpack.c.b16 %v901, %v893
  %v1406 = vpack.c.b16 %v910, %v902
  %v1407 = vpack.c.b16 %v911, %v903
  %v1408 = vpack.c.b16 %v912, %v904
  %v1409 = vpack.c.b16 %v913, %v905
  %v1410 = vpack.c.b16 %v914, %v906
  %v1411 = vpack.c.b16 %v915, %v907
  %v1412 = vpack.c.b16 %v916, %v908
  %v1413 = vpack.c.b16 %v917, %v909
  %v1414 = vpack.c.b16 %v926, %v918
  %v1415 = vpack.c.b16 %v927, %v919
  %v1416 = vpack.c.b16 %v928, %v920
  %v1417 = vpack.c.b16 %v929, %v921
  %v1418 = vpack.c.b16 %v930, %v922
  %v1419 = vpack.c.b16 %v931, %v923
  %v1420 = vpack.c.b16 %v932, %v924
  %v1421 = vpack.c.b16 %v933, %v925
  %v1422 = vpack.c.b16 %v942, %v934
  %v1423 = vpack.c.b16 %v943, %v935
  %v1424 = vpack.c.b16 %v944, %v936
  %v1425 = vpack.c.b16 %v945, %v937
  %v1426 = vpack.c.b16 %v946, %v938
  %v1427 = vpack.c.b16 %v947, %v939
  %v1428 = vpack.c.b16 %v948, %v940
  %v1429 = vpack.c.b16 %v949, %v941
  %v1430 = vpack.c.b16 %v958, %v950
  %v1431 = vpack.c.b16 %v959, %v951
  %v1432 = vpack.c.b16 %v960, %v952
  %v1433 = vpack.c.b16 %v961, %v953
  %v1434 = vpack.c.b16 %v962, %v954
  %v1435 = vpack.c.b16 %v963, %v955
  %v1436 = vpack.c.b16 %v964, %v956
  %v1437 = vpack.c.b16 %v965, %v957
  %v1438 = vpack.c.b16 %v974, %v966
  %v1439 = vpack.c.b16 %v975, %v967
  %v1440 = vpack.c.b16 %v976, %v968
  %v1441 = vpack.c.b16 %v977, %v969
  %v1442 = vpack.c.b16 %v978, %v970
  %v1443 = vpack.c.b16 %v979, %v971
  %v1444 = vpack.c.b16 %v980, %v972
  %v1445 = vpack.c.b16 %v981, %v973
  %v1446 = vpack.c.b16 %v990, %v982
  %v1447 = vpack.c.b16 %v991, %v983
  %v1448 = vpack.c.b16 %v992, %v984
  %v1449 = vpack.c.b16 %v993, %v985
  %v1450 = vpack.c.b16 %v994, %v986
  %v1451 = vpack.c.b16 %v995, %v987
  %v1452 = vpack.c.b16 %v996, %v988
  %v1453 = vpack.c.b16 %v997, %v989
  %v1454 = vpack.c.b16 %v1006, %v998
  %v1455 = vpack.c.b16 %v1007, %v999
  %v1456 = vpack.c.b16 %v1008, %v1000
  %v1457 = vpack.c.b16 %v1009, %v1001
  %v1458 = vpack.c.b16 %v1010, %v1002
  %v1459 = vpack.c.b16 %v1011, %v1003
  %v1460 = vpack.c.b16 %v1012, %v1004
  %v1461 = vpack.c.b16 %v1013, %v1005
  %v1462 = vpack.c.b16 %v1022, %v1014
  %v1463 = vpack.c.b16 %v1023, %v1015
  %v1464 = vpack.c.b16 %v1024, %v1016
  %v1465 = vpack.c.b16 %v1025, %v1017
  %v1466 = vpack.c.b16 %v1026, %v1018
  %v1467 = vpack.c.b16 %v1027, %v1019
  %v1468 = vpack.c.b16 %v1028, %v1020
  %v1469 = vpack.c.b16 %v1029, %v1021
  %v1470 = vpack.c.b16 %v1038, %v1030
  %v1471 = vpack.c.b16 %v1039, %v1031
  %v1472 = vpack.c.b16 %v1040, %v1032
  %v1473 = vpack.c.b16 %v1041, %v1033
  %v1474 = vpack.c.b16 %v1042, %v1034
  %v1475 = vpack.c.b16 %v1043, %v1035
  %v1476 = vpack.c.b16 %v1044, %v1036
  %v1477 = vpack.c.b16 %v1045, %v1037
  %v1478 = vpack.c.b16 %v1054, %v1046
  %v1479 = vpack.c.b16 %v1055, %v1047
  %v1480 = vpack.c.b16 %v1056, %v1048
  %v1481 = vpack.c.b16 %v1057, %v1049
  %v1482 = vpack.c.b16 %v1058, %v1050
  %v1483 = vpack.c.b16 %v1059, %v1051
  %v1484 = vpack.c.b16 %v1060, %v1052
  %v1485 = vpack.c.b16 %v1061, %v1053
  %v1486 = vpack.c.b16 %v1070, %v1062
  %v1487 = vpack.c.b16 %v1071, %v1063
  %v1488 = vpack.c.b16 %v1072, %v1064
  %v1489 = vpack.c.b16 %v1073, %v1065
  %v1490 = vpack.c.b16 %v1074, %v1066
  %v1491 = vpack.c.b16 %v1075, %v1067
  %v1492 = vpack.c.b16 %v1076, %v1068
  %v1493 = vpack.c.b16 %v1077, %v1069
  %v1494 = vpack.c.b16 %v1086, %v1078
  %v1495 = vpack.c.b16 %v1087, %v1079
  %v1496 = vpack.c.b16 %v1088, %v1080
  %v1497 = vpack.c.b16 %v1089, %v1081
  %v1498 = vpack.c.b16 %v1090, %v1082
  %v1499 = vpack.c.b16 %v1091, %v1083
  %v1500 = vpack.c.b16 %v1092, %v1084
  %v1501 = vpack.c.b16 %v1093, %v1085
  %v1502 = vpack.c.b16 %v1102, %v1094
  %v1503 = vpack.c.b16 %v1103, %v1095
  %v1504 = vpack.c.b16 %v1104, %v1096
  %v1505 = vpack.c.b16 %v1105, %v1097
  %v1506 = vpack.c.b16 %v1106, %v1098
  %v1507 = vpack.c.b16 %v1107, %v1099
  %v1508 = vpack.c.b16 %v1108, %v1100
  %v1509 = vpack.c.b16 %v1109, %v1101
  %v1510 = vpack.c.b16 %v1118, %v1110
  %v1511 = vpack.c.b16 %v1119, %v1111
  %v1512 = vpack.c.b16 %v1120, %v1112
  %v1513 = vpack.c.b16 %v1121, %v1113
  %v1514 = vpack.c.b16 %v1122, %v1114
  %v1515 = vpack.c.b16 %v1123, %v1115
  %v1516 = vpack.c.b16 %v1124, %v1116
  %v1517 = vpack.c.b16 %v1125, %v1117
  %v1518 = vpack.c.b16 %v1134, %v1126
  %v1519 = vpack.c.b16 %v1135, %v1127
  %v1520 = vpack.c.b16 %v1136, %v1128
  %v1521 = vpack.c.b16 %v1137, %v1129
  %v1522 = vpack.c.b16 %v1138, %v1130
  %v1523 = vpack.c.b16 %v1139, %v1131
  %v1524 = vpack.c.b16 %v1140, %v1132
  %v1525 = vpack.c.b16 %v1141, %v1133
  %v1526 = vpack.c.b16 %v1150, %v1142
  %v1527 = vpack.c.b16 %v1151, %v1143
  %v1528 = vpack.c.b16 %v1152, %v1144
  %v1529 = vpack.c.b16 %v1153, %v1145
  %v1530 = vpack.c.b16 %v1154, %v1146
  %v1531 = vpack.c.b16 %v1155, %v1147
  %v1532 = vpack.c.b16 %v1156, %v1148
  %v1533 = vpack.c.b16 %v1157, %v1149
  %v1534 = vpack.c.b16 %v1166, %v1158
  %v1535 = vpack.c.b16 %v1167, %v1159
  %v1536 = vpack.c.b16 %v1168, %v1160
  %v1537 = vpack.c.b16 %v1169, %v1161
  %v1538 = vpack.c.b16 %v1170, %v1162
  %v1539 = vpack.c.b16 %v1171, %v1163
  %v1540 = vpack.c.b16 %v1172, %v1164
  %v1541 = vpack.c.b16 %v1173, %v1165
  %v1542 = vpack.c.b16 %v1182, %v1174
  %v1543 = vpack.c.b16 %v1183, %v1175
  %v1544 = vpack.c.b16 %v1184, %v1176
  %v1545 = vpack.c.b16 %v1185, %v1177
  %v1546 = vpack.c.b16 %v1186, %v1178
  %v1547 = vpack.c.b16 %v1187, %v1179
  %v1548 = vpack.c.b16 %v1188, %v1180
  %v1549 = vpack.c.b16 %v1189, %v1181
  %v1550 = vpack.c.b16 %v1198, %v1190
  %v1551 = vpack.c.b16 %v1199, %v1191
  %v1552 = vpack.c.b16 %v1200, %v1192
  %v1553 = vpack.c.b16 %v1201, %v1193
  %v1554 = vpack.c.b16 %v1202, %v1194
  %v1555 = vpack.c.b16 %v1203, %v1195
  %v1556 = vpack.c.b16 %v1204, %v1196
  %v1557 = vpack.c.b16 %v1205, %v1197
  %v1558 = vpack.c.b16 %v1214, %v1206
  %v1559 = vpack.c.b16 %v1215, %v1207
  %v1560 = vpack.c.b16 %v1216, %v1208
  %v1561 = vpack.c.b16 %v1217, %v1209
  %v1562 = vpack.c.b16 %v1218, %v1210
  %v1563 = vpack.c.b16 %v1219, %v1211
  %v1564 = vpack.c.b16 %v1220, %v1212
  %v1565 = vpack.c.b16 %v1221, %v1213
  %v1566 = vpack.c.b16 %v1230, %v1222
  %v1567 = vpack.c.b16 %v1231, %v1223
  %v1568 = vpack.c.b16 %v1232, %v1224
  %v1569 = vpack.c.b16 %v1233, %v1225
  %v1570 = vpack.c.b16 %v1234, %v1226
  %v1571 = vpack.c.b16 %v1235, %v1227
  %v1572 = vpack.c.b16 %v1236, %v1228
  %v1573 = vpack.c.b16 %v1237, %v1229
  %v1574 = vpack.c.b16 %v1246, %v1238
  %v1575 = vpack.c.b16 %v1247, %v1239
  %v1576 = vpack.c.b16 %v1248, %v1240
  %v1577 = vpack.c.b16 %v1249, %v1241
  %v1578 = vpack.c.b16 %v1250, %v1242
  %v1579 = vpack.c.b16 %v1251, %v1243
  %v1580 = vpack.c.b16 %v1252, %v1244
  %v1581 = vpack.c.b16 %v1253, %v1245
  %v1582 = vpack.c.b16 %v1262, %v1254
  %v1583 = vpack.c.b16 %v1263, %v1255
  %v1584 = vpack.c.b16 %v1264, %v1256
  %v1585 = vpack.c.b16 %v1265, %v1257
  %v1586 = vpack.c.b16 %v1266, %v1258
  %v1587 = vpack.c.b16 %v1267, %v1259
  %v1588 = vpack.c.b16 %v1268, %v1260
  %v1589 = vpack.c.b16 %v1269, %v1261
  %v1590 = vpack.c.b16 %v1278, %v1270
  %v1591 = vpack.c.b16 %v1279, %v1271
  %v1592 = vpack.c.b16 %v1280, %v1272
  %v1593 = vpack.c.b16 %v1281, %v1273
  %v1594 = vpack.c.b16 %v1282, %v1274
  %v1595 = vpack.c.b16 %v1283, %v1275
  %v1596 = vpack.c.b16 %v1284, %v1276
  %v1597 = vpack.c.b16 %v1285, %v1277
  %v1598 = vpack.c.b16 %v1294, %v1286
  %v1599 = vpack.c.b16 %v1295, %v1287
  %v1600 = vpack.c.b16 %v1296, %v1288
  %v1601 = vpack.c.b16 %v1297, %v1289
  %v1602 = vpack.c.b16 %v1298, %v1290
  %v1603 = vpack.c.b16 %v1299, %v1291
  %v1604 = vpack.c.b16 %v1300, %v1292
  %v1605 = vpack.c.b16 %v1301, %v1293
  %v1606 = vpack.c.b16 %v1310, %v1302
  %v1607 = vpack.c.b16 %v1311, %v1303
  %v1608 = vpack.c.b16 %v1312, %v1304
  %v1609 = vpack.c.b16 %v1313, %v1305
  %v1610 = vpack.c.b16 %v1314, %v1306
  %v1611 = vpack.c.b16 %v1315, %v1307
  %v1612 = vpack.c.b16 %v1316, %v1308
  %v1613 = vpack.c.b16 %v1317, %v1309
  %v1614 = vpack.c.b16 %v1326, %v1318
  %v1615 = vpack.c.b16 %v1327, %v1319
  %v1616 = vpack.c.b16 %v1328, %v1320
  %v1617 = vpack.c.b16 %v1329, %v1321
  %v1618 = vpack.c.b16 %v1330, %v1322
  %v1619 = vpack.c.b16 %v1331, %v1323
  %v1620 = vpack.c.b16 %v1332, %v1324
  %v1621 = vpack.c.b16 %v1333, %v1325
  %v1622 = vpack.c.b16 %v1342, %v1334
  %v1623 = vpack.c.b16 %v1343, %v1335
  %v1624 = vpack.c.b16 %v1344, %v1336
  %v1625 = vpack.c.b16 %v1345, %v1337
  %v1626 = vpack.c.b16 %v1346, %v1338
  %v1627 = vpack.c.b16 %v1347, %v1339
  %v1628 = vpack.c.b16 %v1348, %v1340
  %v1629 = vpack.c.b16 %v1349, %v1341
  %v1630 = vpack.c.b16 %v1358, %v1350
  %v1631 = vpack.c.b16 %v1359, %v1351
  %v1632 = vpack.c.b16 %v1360, %v1352
  %v1633 = vpack.c.b16 %v1361, %v1353
  %v1634 = vpack.c.b16 %v1362, %v1354
  %v1635 = vpack.c.b16 %v1363, %v1355
  %v1636 = vpack.c.b16 %v1364, %v1356
  %v1637 = vpack.c.b16 %v1365, %v1357
  %v1638 = vpack.c.b16 %v1374, %v1366
  %v1639 = vpack.c.b16 %v1375, %v1367
  %v1640 = vpack.c.b16 %v1376, %v1368
  %v1641 = vpack.c.b16 %v1377, %v1369
  %v1642 = vpack.c.b16 %v1378, %v1370
  %v1643 = vpack.c.b16 %v1379, %v1371
  %v1644 = vpack.c.b16 %v1380, %v1372
  %v1645 = vpack.c.b16 %v1381, %v1373
  %v1646 = vpack.c.b16 %v1390, %v1382
  %v1647 = vpack.c.b16 %v1391, %v1383
  %v1648 = vpack.c.b16 %v1392, %v1384
  %v1649 = vpack.c.b16 %v1393, %v1385
  %v1650 = vpack.c.b16 %v1394, %v1386
  %v1651 = vpack.c.b16 %v1395, %v1387
  %v1652 = vpack.c.b16 %v1396, %v1388
  %v1653 = vpack.c.b16 %v1397, %v1389
  %1910 = vmatprep.subr.bf16.mxu0 %v1399
  %1911 = vmatpush1.bf16.msra.mxu0 %v1398
  %1912 = vmatprep.subr.bf16.mxu0 %v1407
  %1913 = vmatpush1.bf16.msra.mxu0 %v1406
  %1914 = vmatprep.subr.bf16.mxu0 %v1415
  %1915 = vmatpush1.bf16.msra.mxu0 %v1414
  %1916 = vmatprep.subr.bf16.mxu0 %v1423
  %1917 = vmatpush1.bf16.msra.mxu0 %v1422
  %1918 = vmatprep.subr.bf16.mxu0 %v1431
  %1919 = vmatpush1.bf16.msra.mxu0 %v1430
  %1920 = vmatprep.subr.bf16.mxu0 %v1439
  %1921 = vmatpush1.bf16.msra.mxu0 %v1438
  %1922 = vmatprep.subr.bf16.mxu0 %v1447
  %1923 = vmatpush1.bf16.msra.mxu0 %v1446
  %1924 = vmatprep.subr.bf16.mxu0 %v1455
  %1925 = vmatpush1.bf16.msra.mxu0 %v1454
  %1926 = vmatprep.subr.bf16.mxu0 %v1463
  %1927 = vmatpush1.bf16.msra.mxu0 %v1462
  %1928 = vmatprep.subr.bf16.mxu0 %v1471
  %1929 = vmatpush1.bf16.msra.mxu0 %v1470
  %1930 = vmatprep.subr.bf16.mxu0 %v1479
  %1931 = vmatpush1.bf16.msra.mxu0 %v1478
  %1932 = vmatprep.subr.bf16.mxu0 %v1487
  %1933 = vmatpush1.bf16.msra.mxu0 %v1486
  %1934 = vmatprep.subr.bf16.mxu0 %v1495
  %1935 = vmatpush1.bf16.msra.mxu0 %v1494
  %1936 = vmatprep.subr.bf16.mxu0 %v1503
  %1937 = vmatpush1.bf16.msra.mxu0 %v1502
  %1938 = vmatprep.subr.bf16.mxu0 %v1511
  %1939 = vmatpush1.bf16.msra.mxu0 %v1510
  %1940 = vmatprep.subr.bf16.mxu0 %v1519
  %1941 = vmatpush1.bf16.msra.mxu0 %v1518
  %1942 = vmatprep.mubr.bf16.mxu0 %v599
  %1943 = vmatmul.mubr.bf16.gmra.mrb[0].mxu0 %v598
  %v1944 = vpop.f32.mrb[0].mxu0
  %v1945 = vadd.f32 0.0, %v1944
  %v1946 = vpop.f32.mrb[0].mxu0
  %v1947 = vadd.f32 0.0, %v1946
  %v1948 = vpop.f32.mrb[0].mxu0
  %v1949 = vadd.f32 0.0, %v1948
  %v1950 = vpop.f32.mrb[0].mxu0
  %v1951 = vadd.f32 0.0, %v1950
  %1952 = vmatprep.mubr.bf16.mxu0 %v603
  %1953 = vmatmul.mubr.bf16.gmra.mrb[0].mxu0 %v602
  %v1954 = vpop.f32.mrb[0].mxu0
  %v1955 = vadd.f32 0.0, %v1954
  %v1956 = vpop.f32.mrb[0].mxu0
  %v1957 = vadd.f32 0.0, %v1956
  %v1958 = vpop.f32.mrb[0].mxu0
  %v1959 = vadd.f32 0.0, %v1958
  %v1960 = vpop.f32.mrb[0].mxu0
  %v1961 = vadd.f32 0.0, %v1960
  %1962 = vmatprep.mubr.bf16.mxu0 %v607
  %1963 = vmatmul.mubr.bf16.gmra.mrb[0].mxu0 %v606
  %v1964 = vpop.f32.mrb[0].mxu0
  %v1965 = vadd.f32 0.0, %v1964
  %v1966 = vpop.f32.mrb[0].mxu0
  %v1967 = vadd.f32 0.0, %v1966
  %v1968 = vpop.f32.mrb[0].mxu0
  %v1969 = vadd.f32 0.0, %v1968
  %v1970 = vpop.f32.mrb[0].mxu0
  %v1971 = vadd.f32 0.0, %v1970
  %1972 = vmatprep.mubr.bf16.mxu0 %v611
  %1973 = vmatmul.mubr.bf16.gmra.mrb[0].mxu0 %v610
  %v1974 = vpop.f32.mrb[0].mxu0
  %v1975 = vadd.f32 0.0, %v1974
  %v1976 = vpop.f32.mrb[0].mxu0
  %v1977 = vadd.f32 0.0, %v1976
  %v1978 = vpop.f32.mrb[0].mxu0
  %v1979 = vpop.f32.mrb[0].mxu0
  %1980 = vdwg.mxu0
  %1981 = vmatprep.subr.bf16.mxu0 %v1527
  %1982 = vmatpush1.bf16.msra.mxu0 %v1526
  %1983 = vmatprep.subr.bf16.mxu0 %v1535
  %1984 = vmatpush1.bf16.msra.mxu0 %v1534
  %1985 = vmatprep.subr.bf16.mxu0 %v1543
  %1986 = vmatpush1.bf16.msra.mxu0 %v1542
  %1987 = vmatprep.subr.bf16.mxu0 %v1551
  %1988 = vmatpush1.bf16.msra.mxu0 %v1550
  %1989 = vmatprep.subr.bf16.mxu0 %v1559
  %1990 = vmatpush1.bf16.msra.mxu0 %v1558
  %1991 = vmatprep.subr.bf16.mxu0 %v1567
  %1992 = vmatpush1.bf16.msra.mxu0 %v1566
  %1993 = vmatprep.subr.bf16.mxu0 %v1575
  %1994 = vmatpush1.bf16.msra.mxu0 %v1574
  %1995 = vmatprep.subr.bf16.mxu0 %v1583
  %1996 = vmatpush1.bf16.msra.mxu0 %v1582
  %1997 = vmatprep.subr.bf16.mxu0 %v1591
  %1998 = vmatpush1.bf16.msra.mxu0 %v1590
  %1999 = vmatprep.subr.bf16.mxu0 %v1599
  %2000 = vmatpush1.bf16.msra.mxu0 %v1598
  %2001 = vmatprep.subr.bf16.mxu0 %v1607
  %2002 = vmatpush1.bf16.msra.mxu0 %v1606
  %2003 = vmatprep.subr.bf16.mxu0 %v1615
  %2004 = vmatpush1.bf16.msra.mxu0 %v1614
  %2005 = vmatprep.subr.bf16.mxu0 %v1623
  %2006 = vmatpush1.bf16.msra.mxu0 %v1622
  %2007 = vmatprep.subr.bf16.mxu0 %v1631
  %2008 = vmatpush1.bf16.msra.mxu0 %v1630
  %2009 = vmatprep.subr.bf16.mxu0 %v1639
  %2010 = vmatpush1.bf16.msra.mxu0 %v1638
  %2011 = vmatprep.subr.bf16.mxu0 %v1647
  %2012 = vmatpush1.bf16.msra.mxu0 %v1646
  %2013 = vmatprep.mubr.bf16.mxu0 %v601
  %2014 = vmatmul.mubr.bf16.gmra.mrb[0].mxu0 %v600
  %v2015 = vpop.f32.mrb[0].mxu0
  %v2016 = vadd.f32 %v1945, %v2015
  %v2017 = vpop.f32.mrb[0].mxu0
  %v2018 = vadd.f32 %v1947, %v2017
  %v2019 = vpop.f32.mrb[0].mxu0
  %v2020 = vadd.f32 %v1949, %v2019
  %v2021 = vpop.f32.mrb[0].mxu0
  %v2022 = vadd.f32 %v1951, %v2021
  %2023 = vmatprep.mubr.bf16.mxu0 %v605
  %2024 = vmatmul.mubr.bf16.gmra.mrb[0].mxu0 %v604
  %v2025 = vpop.f32.mrb[0].mxu0
  %v2026 = vadd.f32 %v1955, %v2025
  %v2027 = vpop.f32.mrb[0].mxu0
  %v2028 = vadd.f32 %v1957, %v2027
  %v2029 = vpop.f32.mrb[0].mxu0
  %v2030 = vadd.f32 %v1959, %v2029
  %v2031 = vpop.f32.mrb[0].mxu0
  %v2032 = vadd.f32 %v1961, %v2031
  %2033 = vmatprep.mubr.bf16.mxu0 %v609
  %2034 = vmatmul.mubr.bf16.gmra.mrb[0].mxu0 %v608
  %v2035 = vpop.f32.mrb[0].mxu0
  %v2036 = vadd.f32 %v1965, %v2035
  %v2037 = vpop.f32.mrb[0].mxu0
  %v2038 = vadd.f32 %v1967, %v2037
  %v2039 = vpop.f32.mrb[0].mxu0
  %v2040 = vadd.f32 %v1969, %v2039
  %v2041 = vpop.f32.mrb[0].mxu0
  %v2042 = vadd.f32 %v1971, %v2041
  %2043 = vmatprep.mubr.bf16.mxu0 %v613
  %2044 = vmatmul.mubr.bf16.gmra.mrb[0].mxu0 %v612
  %v2045 = vpop.f32.mrb[0].mxu0
  %v2046 = vadd.f32 %v1975, %v2045
  %v2047 = vpop.f32.mrb[0].mxu0
  %v2048 = vadd.f32 %v1977, %v2047
  %v2049 = vpop.f32.mrb[0].mxu0
  %v2050 = vpop.f32.mrb[0].mxu0
  %2051 = vdwg.mxu0
  %2052 = vmatprep.subr.bf16.mxu0 %v1401
  %2053 = vmatpush1.bf16.msra.mxu0 %v1400
  %2054 = vmatprep.subr.bf16.mxu0 %v1409
  %2055 = vmatpush1.bf16.msra.mxu0 %v1408
  %2056 = vmatprep.subr.bf16.mxu0 %v1417
  %2057 = vmatpush1.bf16.msra.mxu0 %v1416
  %2058 = vmatprep.subr.bf16.mxu0 %v1425
  %2059 = vmatpush1.bf16.msra.mxu0 %v1424
  %2060 = vmatprep.subr.bf16.mxu0 %v1433
  %2061 = vmatpush1.bf16.msra.mxu0 %v1432
  %2062 = vmatprep.subr.bf16.mxu0 %v1441
  %2063 = vmatpush1.bf16.msra.mxu0 %v1440
  %2064 = vmatprep.subr.bf16.mxu0 %v1449
  %2065 = vmatpush1.bf16.msra.mxu0 %v1448
  %2066 = vmatprep.subr.bf16.mxu0 %v1457
  %2067 = vmatpush1.bf16.msra.mxu0 %v1456
  %2068 = vmatprep.subr.bf16.mxu0 %v1465
  %2069 = vmatpush1.bf16.msra.mxu0 %v1464
  %2070 = vmatprep.subr.bf16.mxu0 %v1473
  %2071 = vmatpush1.bf16.msra.mxu0 %v1472
  %2072 = vmatprep.subr.bf16.mxu0 %v1481
  %2073 = vmatpush1.bf16.msra.mxu0 %v1480
  %2074 = vmatprep.subr.bf16.mxu0 %v1489
  %2075 = vmatpush1.bf16.msra.mxu0 %v1488
  %2076 = vmatprep.subr.bf16.mxu0 %v1497
  %2077 = vmatpush1.bf16.msra.mxu0 %v1496
  %2078 = vmatprep.subr.bf16.mxu0 %v1505
  %2079 = vmatpush1.bf16.msra.mxu0 %v1504
  %2080 = vmatprep.subr.bf16.mxu0 %v1513
  %2081 = vmatpush1.bf16.msra.mxu0 %v1512
  %2082 = vmatprep.subr.bf16.mxu0 %v1521
  %2083 = vmatpush1.bf16.msra.mxu0 %v1520
  %2084 = vmatprep.mubr.bf16.mxu0 %v599
  %2085 = vmatmul.mubr.bf16.gmra.mrb[0].mxu0 %v598
  %v2086 = vpop.f32.mrb[0].mxu0
  %v2087 = vadd.f32 0.0, %v2086
  %v2088 = vpop.f32.mrb[0].mxu0
  %v2089 = vadd.f32 0.0, %v2088
  %v2090 = vpop.f32.mrb[0].mxu0
  %v2091 = vadd.f32 0.0, %v2090
  %v2092 = vpop.f32.mrb[0].mxu0
  %v2093 = vadd.f32 0.0, %v2092
  %2094 = vmatprep.mubr.bf16.mxu0 %v603
  %2095 = vmatmul.mubr.bf16.gmra.mrb[0].mxu0 %v602
  %v2096 = vpop.f32.mrb[0].mxu0
  %v2097 = vadd.f32 0.0, %v2096
  %v2098 = vpop.f32.mrb[0].mxu0
  %v2099 = vadd.f32 0.0, %v2098
  %v2100 = vpop.f32.mrb[0].mxu0
  %v2101 = vadd.f32 0.0, %v2100
  %v2102 = vpop.f32.mrb[0].mxu0
  %v2103 = vadd.f32 0.0, %v2102
  %2104 = vmatprep.mubr.bf16.mxu0 %v607
  %2105 = vmatmul.mubr.bf16.gmra.mrb[0].mxu0 %v606
  %v2106 = vpop.f32.mrb[0].mxu0
  %v2107 = vadd.f32 0.0, %v2106
  %v2108 = vpop.f32.mrb[0].mxu0
  %v2109 = vadd.f32 0.0, %v2108
  %v2110 = vpop.f32.mrb[0].mxu0
  %v2111 = vadd.f32 0.0, %v2110
  %v2112 = vpop.f32.mrb[0].mxu0
  %v2113 = vadd.f32 0.0, %v2112
  %2114 = vmatprep.mubr.bf16.mxu0 %v611
  %2115 = vmatmul.mubr.bf16.gmra.mrb[0].mxu0 %v610
  %v2116 = vpop.f32.mrb[0].mxu0
  %v2117 = vadd.f32 0.0, %v2116
  %v2118 = vpop.f32.mrb[0].mxu0
  %v2119 = vadd.f32 0.0, %v2118
  %v2120 = vpop.f32.mrb[0].mxu0
  %v2121 = vpop.f32.mrb[0].mxu0
  %2122 = vdwg.mxu0
  %2123 = vmatprep.subr.bf16.mxu0 %v1529
  %2124 = vmatpush1.bf16.msra.mxu0 %v1528
  %2125 = vmatprep.subr.bf16.mxu0 %v1537
  %2126 = vmatpush1.bf16.msra.mxu0 %v1536
  %2127 = vmatprep.subr.bf16.mxu0 %v1545
  %2128 = vmatpush1.bf16.msra.mxu0 %v1544
  %2129 = vmatprep.subr.bf16.mxu0 %v1553
  %2130 = vmatpush1.bf16.msra.mxu0 %v1552
  %2131 = vmatprep.subr.bf16.mxu0 %v1561
  %2132 = vmatpush1.bf16.msra.mxu0 %v1560
  %2133 = vmatprep.subr.bf16.mxu0 %v1569
  %2134 = vmatpush1.bf16.msra.mxu0 %v1568
  %2135 = vmatprep.subr.bf16.mxu0 %v1577
  %2136 = vmatpush1.bf16.msra.mxu0 %v1576
  %2137 = vmatprep.subr.bf16.mxu0 %v1585
  %2138 = vmatpush1.bf16.msra.mxu0 %v1584
  %2139 = vmatprep.subr.bf16.mxu0 %v1593
  %2140 = vmatpush1.bf16.msra.mxu0 %v1592
  %2141 = vmatprep.subr.bf16.mxu0 %v1601
  %2142 = vmatpush1.bf16.msra.mxu0 %v1600
  %2143 = vmatprep.subr.bf16.mxu0 %v1609
  %2144 = vmatpush1.bf16.msra.mxu0 %v1608
  %2145 = vmatprep.subr.bf16.mxu0 %v1617
  %2146 = vmatpush1.bf16.msra.mxu0 %v1616
  %2147 = vmatprep.subr.bf16.mxu0 %v1625
  %2148 = vmatpush1.bf16.msra.mxu0 %v1624
  %2149 = vmatprep.subr.bf16.mxu0 %v1633
  %2150 = vmatpush1.bf16.msra.mxu0 %v1632
  %2151 = vmatprep.subr.bf16.mxu0 %v1641
  %2152 = vmatpush1.bf16.msra.mxu0 %v1640
  %2153 = vmatprep.subr.bf16.mxu0 %v1649
  %2154 = vmatpush1.bf16.msra.mxu0 %v1648
  %2155 = vmatprep.mubr.bf16.mxu0 %v601
  %2156 = vmatmul.mubr.bf16.gmra.mrb[0].mxu0 %v600
  %v2157 = vpop.f32.mrb[0].mxu0
  %v2158 = vadd.f32 %v2087, %v2157
  %v2159 = vpop.f32.mrb[0].mxu0
  %v2160 = vadd.f32 %v2089, %v2159
  %v2161 = vpop.f32.mrb[0].mxu0
  %v2162 = vadd.f32 %v2091, %v2161
  %v2163 = vpop.f32.mrb[0].mxu0
  %v2164 = vadd.f32 %v2093, %v2163
  %2165 = vmatprep.mubr.bf16.mxu0 %v605
  %2166 = vmatmul.mubr.bf16.gmra.mrb[0].mxu0 %v604
  %v2167 = vpop.f32.mrb[0].mxu0
  %v2168 = vadd.f32 %v2097, %v2167
  %v2169 = vpop.f32.mrb[0].mxu0
  %v2170 = vadd.f32 %v2099, %v2169
  %v2171 = vpop.f32.mrb[0].mxu0
  %v2172 = vadd.f32 %v2101, %v2171
  %v2173 = vpop.f32.mrb[0].mxu0
  %v2174 = vadd.f32 %v2103, %v2173
  %2175 = vmatprep.mubr.bf16.mxu0 %v609
  %2176 = vmatmul.mubr.bf16.gmra.mrb[0].mxu0 %v608
  %v2177 = vpop.f32.mrb[0].mxu0
  %v2178 = vadd.f32 %v2107, %v2177
  %v2179 = vpop.f32.mrb[0].mxu0
  %v2180 = vadd.f32 %v2109, %v2179
  %v2181 = vpop.f32.mrb[0].mxu0
  %v2182 = vadd.f32 %v2111, %v2181
  %v2183 = vpop.f32.mrb[0].mxu0
  %v2184 = vadd.f32 %v2113, %v2183
  %2185 = vmatprep.mubr.bf16.mxu0 %v613
  %2186 = vmatmul.mubr.bf16.gmra.mrb[0].mxu0 %v612
  %v2187 = vpop.f32.mrb[0].mxu0
  %v2188 = vadd.f32 %v2117, %v2187
  %v2189 = vpop.f32.mrb[0].mxu0
  %v2190 = vadd.f32 %v2119, %v2189
  %v2191 = vpop.f32.mrb[0].mxu0
  %v2192 = vpop.f32.mrb[0].mxu0
  %2193 = vdwg.mxu0
  %2194 = vmatprep.subr.bf16.mxu0 %v1403
  %2195 = vmatpush1.bf16.msra.mxu0 %v1402
  %2196 = vmatprep.subr.bf16.mxu0 %v1411
  %2197 = vmatpush1.bf16.msra.mxu0 %v1410
  %2198 = vmatprep.subr.bf16.mxu0 %v1419
  %2199 = vmatpush1.bf16.msra.mxu0 %v1418
  %2200 = vmatprep.subr.bf16.mxu0 %v1427
  %2201 = vmatpush1.bf16.msra.mxu0 %v1426
  %2202 = vmatprep.subr.bf16.mxu0 %v1435
  %2203 = vmatpush1.bf16.msra.mxu0 %v1434
  %2204 = vmatprep.subr.bf16.mxu0 %v1443
  %2205 = vmatpush1.bf16.msra.mxu0 %v1442
  %2206 = vmatprep.subr.bf16.mxu0 %v1451
  %2207 = vmatpush1.bf16.msra.mxu0 %v1450
  %2208 = vmatprep.subr.bf16.mxu0 %v1459
  %2209 = vmatpush1.bf16.msra.mxu0 %v1458
  %2210 = vmatprep.subr.bf16.mxu0 %v1467
  %2211 = vmatpush1.bf16.msra.mxu0 %v1466
  %2212 = vmatprep.subr.bf16.mxu0 %v1475
  %2213 = vmatpush1.bf16.msra.mxu0 %v1474
  %2214 = vmatprep.subr.bf16.mxu0 %v1483
  %2215 = vmatpush1.bf16.msra.mxu0 %v1482
  %2216 = vmatprep.subr.bf16.mxu0 %v1491
  %2217 = vmatpush1.bf16.msra.mxu0 %v1490
  %2218 = vmatprep.subr.bf16.mxu0 %v1499
  %2219 = vmatpush1.bf16.msra.mxu0 %v1498
  %2220 = vmatprep.subr.bf16.mxu0 %v1507
  %2221 = vmatpush1.bf16.msra.mxu0 %v1506
  %2222 = vmatprep.subr.bf16.mxu0 %v1515
  %2223 = vmatpush1.bf16.msra.mxu0 %v1514
  %2224 = vmatprep.subr.bf16.mxu0 %v1523
  %2225 = vmatpush1.bf16.msra.mxu0 %v1522
  %2226 = vmatprep.mubr.bf16.mxu0 %v599
  %2227 = vmatmul.mubr.bf16.gmra.mrb[0].mxu0 %v598
  %v2228 = vpop.f32.mrb[0].mxu0
  %v2229 = vadd.f32 0.0, %v2228
  %v2230 = vpop.f32.mrb[0].mxu0
  %v2231 = vadd.f32 0.0, %v2230
  %v2232 = vpop.f32.mrb[0].mxu0
  %v2233 = vadd.f32 0.0, %v2232
  %v2234 = vpop.f32.mrb[0].mxu0
  %v2235 = vadd.f32 0.0, %v2234
  %2236 = vmatprep.mubr.bf16.mxu0 %v603
  %2237 = vmatmul.mubr.bf16.gmra.mrb[0].mxu0 %v602
  %v2238 = vpop.f32.mrb[0].mxu0
  %v2239 = vadd.f32 0.0, %v2238
  %v2240 = vpop.f32.mrb[0].mxu0
  %v2241 = vadd.f32 0.0, %v2240
  %v2242 = vpop.f32.mrb[0].mxu0
  %v2243 = vadd.f32 0.0, %v2242
  %v2244 = vpop.f32.mrb[0].mxu0
  %v2245 = vadd.f32 0.0, %v2244
  %2246 = vmatprep.mubr.bf16.mxu0 %v607
  %2247 = vmatmul.mubr.bf16.gmra.mrb[0].mxu0 %v606
  %v2248 = vpop.f32.mrb[0].mxu0
  %v2249 = vadd.f32 0.0, %v2248
  %v2250 = vpop.f32.mrb[0].mxu0
  %v2251 = vadd.f32 0.0, %v2250
  %v2252 = vpop.f32.mrb[0].mxu0
  %v2253 = vadd.f32 0.0, %v2252
  %v2254 = vpop.f32.mrb[0].mxu0
  %v2255 = vadd.f32 0.0, %v2254
  %2256 = vmatprep.mubr.bf16.mxu0 %v611
  %2257 = vmatmul.mubr.bf16.gmra.mrb[0].mxu0 %v610
  %v2258 = vpop.f32.mrb[0].mxu0
  %v2259 = vadd.f32 0.0, %v2258
  %v2260 = vpop.f32.mrb[0].mxu0
  %v2261 = vadd.f32 0.0, %v2260
  %v2262 = vpop.f32.mrb[0].mxu0
  %v2263 = vpop.f32.mrb[0].mxu0
  %2264 = vdwg.mxu0
  %2265 = vmatprep.subr.bf16.mxu0 %v1531
  %2266 = vmatpush1.bf16.msra.mxu0 %v1530
  %2267 = vmatprep.subr.bf16.mxu0 %v1539
  %2268 = vmatpush1.bf16.msra.mxu0 %v1538
  %2269 = vmatprep.subr.bf16.mxu0 %v1547
  %2270 = vmatpush1.bf16.msra.mxu0 %v1546
  %2271 = vmatprep.subr.bf16.mxu0 %v1555
  %2272 = vmatpush1.bf16.msra.mxu0 %v1554
  %2273 = vmatprep.subr.bf16.mxu0 %v1563
  %2274 = vmatpush1.bf16.msra.mxu0 %v1562
  %2275 = vmatprep.subr.bf16.mxu0 %v1571
  %2276 = vmatpush1.bf16.msra.mxu0 %v1570
  %2277 = vmatprep.subr.bf16.mxu0 %v1579
  %2278 = vmatpush1.bf16.msra.mxu0 %v1578
  %2279 = vmatprep.subr.bf16.mxu0 %v1587
  %2280 = vmatpush1.bf16.msra.mxu0 %v1586
  %2281 = vmatprep.subr.bf16.mxu0 %v1595
  %2282 = vmatpush1.bf16.msra.mxu0 %v1594
  %2283 = vmatprep.subr.bf16.mxu0 %v1603
  %2284 = vmatpush1.bf16.msra.mxu0 %v1602
  %2285 = vmatprep.subr.bf16.mxu0 %v1611
  %2286 = vmatpush1.bf16.msra.mxu0 %v1610
  %2287 = vmatprep.subr.bf16.mxu0 %v1619
  %2288 = vmatpush1.bf16.msra.mxu0 %v1618
  %2289 = vmatprep.subr.bf16.mxu0 %v1627
  %2290 = vmatpush1.bf16.msra.mxu0 %v1626
  %2291 = vmatprep.subr.bf16.mxu0 %v1635
  %2292 = vmatpush1.bf16.msra.mxu0 %v1634
  %2293 = vmatprep.subr.bf16.mxu0 %v1643
  %2294 = vmatpush1.bf16.msra.mxu0 %v1642
  %2295 = vmatprep.subr.bf16.mxu0 %v1651
  %2296 = vmatpush1.bf16.msra.mxu0 %v1650
  %2297 = vmatprep.mubr.bf16.mxu0 %v601
  %2298 = vmatmul.mubr.bf16.gmra.mrb[0].mxu0 %v600
  %v2299 = vpop.f32.mrb[0].mxu0
  %v2300 = vadd.f32 %v2229, %v2299
  %v2301 = vpop.f32.mrb[0].mxu0
  %v2302 = vadd.f32 %v2231, %v2301
  %v2303 = vpop.f32.mrb[0].mxu0
  %v2304 = vadd.f32 %v2233, %v2303
  %v2305 = vpop.f32.mrb[0].mxu0
  %v2306 = vadd.f32 %v2235, %v2305
  %2307 = vmatprep.mubr.bf16.mxu0 %v605
  %2308 = vmatmul.mubr.bf16.gmra.mrb[0].mxu0 %v604
  %v2309 = vpop.f32.mrb[0].mxu0
  %v2310 = vadd.f32 %v2239, %v2309
  %v2311 = vpop.f32.mrb[0].mxu0
  %v2312 = vadd.f32 %v2241, %v2311
  %v2313 = vpop.f32.mrb[0].mxu0
  %v2314 = vadd.f32 %v2243, %v2313
  %v2315 = vpop.f32.mrb[0].mxu0
  %v2316 = vadd.f32 %v2245, %v2315
  %2317 = vmatprep.mubr.bf16.mxu0 %v609
  %2318 = vmatmul.mubr.bf16.gmra.mrb[0].mxu0 %v608
  %v2319 = vpop.f32.mrb[0].mxu0
  %v2320 = vadd.f32 %v2249, %v2319
  %v2321 = vpop.f32.mrb[0].mxu0
  %v2322 = vadd.f32 %v2251, %v2321
  %v2323 = vpop.f32.mrb[0].mxu0
  %v2324 = vadd.f32 %v2253, %v2323
  %v2325 = vpop.f32.mrb[0].mxu0
  %v2326 = vadd.f32 %v2255, %v2325
  %2327 = vmatprep.mubr.bf16.mxu0 %v613
  %2328 = vmatmul.mubr.bf16.gmra.mrb[0].mxu0 %v612
  %v2329 = vpop.f32.mrb[0].mxu0
  %v2330 = vadd.f32 %v2259, %v2329
  %v2331 = vpop.f32.mrb[0].mxu0
  %v2332 = vadd.f32 %v2261, %v2331
  %v2333 = vpop.f32.mrb[0].mxu0
  %v2334 = vpop.f32.mrb[0].mxu0
  %2335 = vdwg.mxu0
  %2336 = vmatprep.subr.bf16.mxu0 %v1405
  %2337 = vmatpush1.bf16.msra.mxu0 %v1404
  %2338 = vmatprep.subr.bf16.mxu0 %v1413
  %2339 = vmatpush1.bf16.msra.mxu0 %v1412
  %2340 = vmatprep.subr.bf16.mxu0 %v1421
  %2341 = vmatpush1.bf16.msra.mxu0 %v1420
  %2342 = vmatprep.subr.bf16.mxu0 %v1429
  %2343 = vmatpush1.bf16.msra.mxu0 %v1428
  %2344 = vmatprep.subr.bf16.mxu0 %v1437
  %2345 = vmatpush1.bf16.msra.mxu0 %v1436
  %2346 = vmatprep.subr.bf16.mxu0 %v1445
  %2347 = vmatpush1.bf16.msra.mxu0 %v1444
  %2348 = vmatprep.subr.bf16.mxu0 %v1453
  %2349 = vmatpush1.bf16.msra.mxu0 %v1452
  %2350 = vmatprep.subr.bf16.mxu0 %v1461
  %2351 = vmatpush1.bf16.msra.mxu0 %v1460
  %2352 = vmatprep.subr.bf16.mxu0 %v1469
  %2353 = vmatpush1.bf16.msra.mxu0 %v1468
  %2354 = vmatprep.subr.bf16.mxu0 %v1477
  %2355 = vmatpush1.bf16.msra.mxu0 %v1476
  %2356 = vmatprep.subr.bf16.mxu0 %v1485
  %2357 = vmatpush1.bf16.msra.mxu0 %v1484
  %2358 = vmatprep.subr.bf16.mxu0 %v1493
  %2359 = vmatpush1.bf16.msra.mxu0 %v1492
  %2360 = vmatprep.subr.bf16.mxu0 %v1501
  %2361 = vmatpush1.bf16.msra.mxu0 %v1500
  %2362 = vmatprep.subr.bf16.mxu0 %v1509
  %2363 = vmatpush1.bf16.msra.mxu0 %v1508
  %2364 = vmatprep.subr.bf16.mxu0 %v1517
  %2365 = vmatpush1.bf16.msra.mxu0 %v1516
  %2366 = vmatprep.subr.bf16.mxu0 %v1525
  %2367 = vmatpush1.bf16.msra.mxu0 %v1524
  %2368 = vmatprep.mubr.bf16.mxu0 %v599
  %2369 = vmatmul.mubr.bf16.gmra.mrb[0].mxu0 %v598
  %v2370 = vpop.f32.mrb[0].mxu0
  %v2371 = vadd.f32 0.0, %v2370
  %v2372 = vpop.f32.mrb[0].mxu0
  %v2373 = vadd.f32 0.0, %v2372
  %v2374 = vpop.f32.mrb[0].mxu0
  %v2375 = vadd.f32 0.0, %v2374
  %v2376 = vpop.f32.mrb[0].mxu0
  %v2377 = vadd.f32 0.0, %v2376
  %2378 = vmatprep.mubr.bf16.mxu0 %v603
  %2379 = vmatmul.mubr.bf16.gmra.mrb[0].mxu0 %v602
  %v2380 = vpop.f32.mrb[0].mxu0
  %v2381 = vadd.f32 0.0, %v2380
  %v2382 = vpop.f32.mrb[0].mxu0
  %v2383 = vadd.f32 0.0, %v2382
  %v2384 = vpop.f32.mrb[0].mxu0
  %v2385 = vadd.f32 0.0, %v2384
  %v2386 = vpop.f32.mrb[0].mxu0
  %v2387 = vadd.f32 0.0, %v2386
  %2388 = vmatprep.mubr.bf16.mxu0 %v607
  %2389 = vmatmul.mubr.bf16.gmra.mrb[0].mxu0 %v606
  %v2390 = vpop.f32.mrb[0].mxu0
  %v2391 = vadd.f32 0.0, %v2390
  %v2392 = vpop.f32.mrb[0].mxu0
  %v2393 = vadd.f32 0.0, %v2392
  %v2394 = vpop.f32.mrb[0].mxu0
  %v2395 = vadd.f32 0.0, %v2394
  %v2396 = vpop.f32.mrb[0].mxu0
  %v2397 = vadd.f32 0.0, %v2396
  %2398 = vmatprep.mubr.bf16.mxu0 %v611
  %2399 = vmatmul.mubr.bf16.gmra.mrb[0].mxu0 %v610
  %v2400 = vpop.f32.mrb[0].mxu0
  %v2401 = vadd.f32 0.0, %v2400
  %v2402 = vpop.f32.mrb[0].mxu0
  %v2403 = vadd.f32 0.0, %v2402
  %v2404 = vpop.f32.mrb[0].mxu0
  %v2405 = vpop.f32.mrb[0].mxu0
  %2406 = vdwg.mxu0
  %2407 = vmatprep.subr.bf16.mxu0 %v1533
  %2408 = vmatpush1.bf16.msra.mxu0 %v1532
  %2409 = vmatprep.subr.bf16.mxu0 %v1541
  %2410 = vmatpush1.bf16.msra.mxu0 %v1540
  %2411 = vmatprep.subr.bf16.mxu0 %v1549
  %2412 = vmatpush1.bf16.msra.mxu0 %v1548
  %2413 = vmatprep.subr.bf16.mxu0 %v1557
  %2414 = vmatpush1.bf16.msra.mxu0 %v1556
  %2415 = vmatprep.subr.bf16.mxu0 %v1565
  %2416 = vmatpush1.bf16.msra.mxu0 %v1564
  %2417 = vmatprep.subr.bf16.mxu0 %v1573
  %2418 = vmatpush1.bf16.msra.mxu0 %v1572
  %2419 = vmatprep.subr.bf16.mxu0 %v1581
  %2420 = vmatpush1.bf16.msra.mxu0 %v1580
  %2421 = vmatprep.subr.bf16.mxu0 %v1589
  %2422 = vmatpush1.bf16.msra.mxu0 %v1588
  %2423 = vmatprep.subr.bf16.mxu0 %v1597
  %2424 = vmatpush1.bf16.msra.mxu0 %v1596
  %2425 = vmatprep.subr.bf16.mxu0 %v1605
  %2426 = vmatpush1.bf16.msra.mxu0 %v1604
  %2427 = vmatprep.subr.bf16.mxu0 %v1613
  %2428 = vmatpush1.bf16.msra.mxu0 %v1612
  %2429 = vmatprep.subr.bf16.mxu0 %v1621
  %2430 = vmatpush1.bf16.msra.mxu0 %v1620
  %2431 = vmatprep.subr.bf16.mxu0 %v1629
  %2432 = vmatpush1.bf16.msra.mxu0 %v1628
  %2433 = vmatprep.subr.bf16.mxu0 %v1637
  %2434 = vmatpush1.bf16.msra.mxu0 %v1636
  %2435 = vmatprep.subr.bf16.mxu0 %v1645
  %2436 = vmatpush1.bf16.msra.mxu0 %v1644
  %2437 = vmatprep.subr.bf16.mxu0 %v1653
  %2438 = vmatpush1.bf16.msra.mxu0 %v1652
  %2439 = vmatprep.mubr.bf16.mxu0 %v601
  %2440 = vmatmul.mubr.bf16.gmra.mrb[0].mxu0 %v600
  %v2441 = vpop.f32.mrb[0].mxu0
  %v2442 = vadd.f32 %v2371, %v2441
  %v2443 = vpop.f32.mrb[0].mxu0
  %v2444 = vadd.f32 %v2373, %v2443
  %v2445 = vpop.f32.mrb[0].mxu0
  %v2446 = vadd.f32 %v2375, %v2445
  %v2447 = vpop.f32.mrb[0].mxu0
  %v2448 = vadd.f32 %v2377, %v2447
  %2449 = vmatprep.mubr.bf16.mxu0 %v605
  %2450 = vmatmul.mubr.bf16.gmra.mrb[0].mxu0 %v604
  %v2451 = vpop.f32.mrb[0].mxu0
  %v2452 = vadd.f32 %v2381, %v2451
  %v2453 = vpop.f32.mrb[0].mxu0
  %v2454 = vadd.f32 %v2383, %v2453
  %v2455 = vpop.f32.mrb[0].mxu0
  %v2456 = vadd.f32 %v2385, %v2455
  %v2457 = vpop.f32.mrb[0].mxu0
  %v2458 = vadd.f32 %v2387, %v2457
  %2459 = vmatprep.mubr.bf16.mxu0 %v609
  %2460 = vmatmul.mubr.bf16.gmra.mrb[0].mxu0 %v608
  %v2461 = vpop.f32.mrb[0].mxu0
  %v2462 = vadd.f32 %v2391, %v2461
  %v2463 = vpop.f32.mrb[0].mxu0
  %v2464 = vadd.f32 %v2393, %v2463
  %v2465 = vpop.f32.mrb[0].mxu0
  %v2466 = vadd.f32 %v2395, %v2465
  %v2467 = vpop.f32.mrb[0].mxu0
  %v2468 = vadd.f32 %v2397, %v2467
  %2469 = vmatprep.mubr.bf16.mxu0 %v613
  %2470 = vmatmul.mubr.bf16.gmra.mrb[0].mxu0 %v612
  %v2471 = vpop.f32.mrb[0].mxu0
  %v2472 = vadd.f32 %v2401, %v2471
  %v2473 = vpop.f32.mrb[0].mxu0
  %v2474 = vadd.f32 %v2403, %v2473
  %v2475 = vpop.f32.mrb[0].mxu0
  %v2476 = vpop.f32.mrb[0].mxu0
  %2477 = vdwg.mxu0
  %v2492 = vunpack.c.l.b16 %v14
  %v2493 = vunpack.c.h.b16 %v14
  %v2494 = vunpack.c.l.b16 %v15
  %v2495 = vunpack.c.h.b16 %v15
  %v2496 = vunpack.c.l.b16 %v16
  %v2497 = vunpack.c.h.b16 %v16
  %v2498 = vunpack.c.l.b16 %v17
  %v2499 = vunpack.c.h.b16 %v17
  %v2500 = vunpack.c.l.b16 %v18
  %v2501 = vunpack.c.h.b16 %v18
  %v2502 = vunpack.c.l.b16 %v19
  %v2503 = vunpack.c.h.b16 %v19
  %v2504 = vunpack.c.l.b16 %v20
  %v2505 = vunpack.c.h.b16 %v20
  %v2506 = vunpack.c.l.b16 %v21
  %v2507 = vunpack.c.h.b16 %v21
  %v2508 = vunpack.c.l.b16 %v22
  %v2509 = vunpack.c.h.b16 %v22
  %v2510 = vunpack.c.l.b16 %v23
  %v2511 = vunpack.c.h.b16 %v23
  %v2512 = vunpack.c.l.b16 %v24
  %v2513 = vunpack.c.h.b16 %v24
  %v2514 = vunpack.c.l.b16 %v25
  %v2515 = vunpack.c.h.b16 %v25
  %v2516 = vunpack.c.l.b16 %v26
  %v2517 = vunpack.c.h.b16 %v26
  %v2518 = vunpack.c.l.b16 %v27
  %v2519 = vunpack.c.h.b16 %v27
  %v2520 = vpack.c.b16 %v2496, %v2492
  %v2521 = vpack.c.b16 %v2497, %v2493
  %v2522 = vpack.c.b16 %v2498, %v2494
  %v2523 = vpack.c.b16 %v2499, %v2495
  %v2524 = vpack.c.b16 %v2504, %v2500
  %v2525 = vpack.c.b16 %v2505, %v2501
  %v2526 = vpack.c.b16 %v2506, %v2502
  %v2527 = vpack.c.b16 %v2507, %v2503
  %v2528 = vpack.c.b16 %v2512, %v2508
  %v2529 = vpack.c.b16 %v2513, %v2509
  %v2530 = vpack.c.b16 %v2514, %v2510
  %v2531 = vpack.c.b16 %v2515, %v2511
  %v2532 = vpack.c.b16 %v2516, %v2516
  %v2533 = vpack.c.b16 %v2517, %v2517
  %v2534 = vpack.c.b16 %v2518, %v2518
  %v2535 = vpack.c.b16 %v2519, %v2519
  %v2808 = vunpack.c.l.b16 %v28
  %v2809 = vunpack.c.h.b16 %v28
  %v2810 = vunpack.c.l.b16 %v29
  %v2811 = vunpack.c.h.b16 %v29
  %v2812 = vunpack.c.l.b16 %v30
  %v2813 = vunpack.c.h.b16 %v30
  %v2814 = vunpack.c.l.b16 %v31
  %v2815 = vunpack.c.h.b16 %v31
  %v2816 = vunpack.c.l.b16 %v32
  %v2817 = vunpack.c.h.b16 %v32
  %v2818 = vunpack.c.l.b16 %v33
  %v2819 = vunpack.c.h.b16 %v33
  %v2820 = vunpack.c.l.b16 %v34
  %v2821 = vunpack.c.h.b16 %v34
  %v2822 = vunpack.c.l.b16 %v35
  %v2823 = vunpack.c.h.b16 %v35
  %v2824 = vunpack.c.l.b16 %v36
  %v2825 = vunpack.c.h.b16 %v36
  %v2826 = vunpack.c.l.b16 %v37
  %v2827 = vunpack.c.h.b16 %v37
  %v2828 = vunpack.c.l.b16 %v38
  %v2829 = vunpack.c.h.b16 %v38
  %v2830 = vunpack.c.l.b16 %v39
  %v2831 = vunpack.c.h.b16 %v39
  %v2832 = vunpack.c.l.b16 %v40
  %v2833 = vunpack.c.h.b16 %v40
  %v2834 = vunpack.c.l.b16 %v41
  %v2835 = vunpack.c.h.b16 %v41
  %v2836 = vunpack.c.l.b16 %v42
  %v2837 = vunpack.c.h.b16 %v42
  %v2838 = vunpack.c.l.b16 %v43
  %v2839 = vunpack.c.h.b16 %v43
  %v2840 = vunpack.c.l.b16 %v44
  %v2841 = vunpack.c.h.b16 %v44
  %v2842 = vunpack.c.l.b16 %v45
  %v2843 = vunpack.c.h.b16 %v45
  %v2844 = vunpack.c.l.b16 %v46
  %v2845 = vunpack.c.h.b16 %v46
  %v2846 = vunpack.c.l.b16 %v47
  %v2847 = vunpack.c.h.b16 %v47
  %v2848 = vunpack.c.l.b16 %v48
  %v2849 = vunpack.c.h.b16 %v48
  %v2850 = vunpack.c.l.b16 %v49
  %v2851 = vunpack.c.h.b16 %v49
  %v2852 = vunpack.c.l.b16 %v50
  %v2853 = vunpack.c.h.b16 %v50
  %v2854 = vunpack.c.l.b16 %v51
  %v2855 = vunpack.c.h.b16 %v51
  %v2856 = vunpack.c.l.b16 %v52
  %v2857 = vunpack.c.h.b16 %v52
  %v2858 = vunpack.c.l.b16 %v53
  %v2859 = vunpack.c.h.b16 %v53
  %v2860 = vunpack.c.l.b16 %v54
  %v2861 = vunpack.c.h.b16 %v54
  %v2862 = vunpack.c.l.b16 %v55
  %v2863 = vunpack.c.h.b16 %v55
  %v2864 = vunpack.c.l.b16 %v56
  %v2865 = vunpack.c.h.b16 %v56
  %v2866 = vunpack.c.l.b16 %v57
  %v2867 = vunpack.c.h.b16 %v57
  %v2868 = vunpack.c.l.b16 %v58
  %v2869 = vunpack.c.h.b16 %v58
  %v2870 = vunpack.c.l.b16 %v59
  %v2871 = vunpack.c.h.b16 %v59
  %v2872 = vunpack.c.l.b16 %v60
  %v2873 = vunpack.c.h.b16 %v60
  %v2874 = vunpack.c.l.b16 %v61
  %v2875 = vunpack.c.h.b16 %v61
  %v2876 = vunpack.c.l.b16 %v62
  %v2877 = vunpack.c.h.b16 %v62
  %v2878 = vunpack.c.l.b16 %v63
  %v2879 = vunpack.c.h.b16 %v63
  %v2880 = vunpack.c.l.b16 %v64
  %v2881 = vunpack.c.h.b16 %v64
  %v2882 = vunpack.c.l.b16 %v65
  %v2883 = vunpack.c.h.b16 %v65
  %v2884 = vunpack.c.l.b16 %v66
  %v2885 = vunpack.c.h.b16 %v66
  %v2886 = vunpack.c.l.b16 %v67
  %v2887 = vunpack.c.h.b16 %v67
  %v2888 = vunpack.c.l.b16 %v68
  %v2889 = vunpack.c.h.b16 %v68
  %v2890 = vunpack.c.l.b16 %v69
  %v2891 = vunpack.c.h.b16 %v69
  %v2892 = vunpack.c.l.b16 %v70
  %v2893 = vunpack.c.h.b16 %v70
  %v2894 = vunpack.c.l.b16 %v71
  %v2895 = vunpack.c.h.b16 %v71
  %v2896 = vunpack.c.l.b16 %v72
  %v2897 = vunpack.c.h.b16 %v72
  %v2898 = vunpack.c.l.b16 %v73
  %v2899 = vunpack.c.h.b16 %v73
  %v2900 = vunpack.c.l.b16 %v74
  %v2901 = vunpack.c.h.b16 %v74
  %v2902 = vunpack.c.l.b16 %v75
  %v2903 = vunpack.c.h.b16 %v75
  %v2904 = vunpack.c.l.b16 %v76
  %v2905 = vunpack.c.h.b16 %v76
  %v2906 = vunpack.c.l.b16 %v77
  %v2907 = vunpack.c.h.b16 %v77
  %v2908 = vunpack.c.l.b16 %v78
  %v2909 = vunpack.c.h.b16 %v78
  %v2910 = vunpack.c.l.b16 %v79
  %v2911 = vunpack.c.h.b16 %v79
  %v2912 = vunpack.c.l.b16 %v80
  %v2913 = vunpack.c.h.b16 %v80
  %v2914 = vunpack.c.l.b16 %v81
  %v2915 = vunpack.c.h.b16 %v81
  %v2916 = vunpack.c.l.b16 %v82
  %v2917 = vunpack.c.h.b16 %v82
  %v2918 = vunpack.c.l.b16 %v83
  %v2919 = vunpack.c.h.b16 %v83
  %v2920 = vunpack.c.l.b16 %v84
  %v2921 = vunpack.c.h.b16 %v84
  %v2922 = vunpack.c.l.b16 %v85
  %v2923 = vunpack.c.h.b16 %v85
  %v2924 = vunpack.c.l.b16 %v86
  %v2925 = vunpack.c.h.b16 %v86
  %v2926 = vunpack.c.l.b16 %v87
  %v2927 = vunpack.c.h.b16 %v87
  %v2928 = vunpack.c.l.b16 %v88
  %v2929 = vunpack.c.h.b16 %v88
  %v2930 = vunpack.c.l.b16 %v89
  %v2931 = vunpack.c.h.b16 %v89
  %v2932 = vunpack.c.l.b16 %v90
  %v2933 = vunpack.c.h.b16 %v90
  %v2934 = vunpack.c.l.b16 %v91
  %v2935 = vunpack.c.h.b16 %v91
  %v2936 = vunpack.c.l.b16 %v92
  %v2937 = vunpack.c.h.b16 %v92
  %v2938 = vunpack.c.l.b16 %v93
  %v2939 = vunpack.c.h.b16 %v93
  %v2940 = vunpack.c.l.b16 %v94
  %v2941 = vunpack.c.h.b16 %v94
  %v2942 = vunpack.c.l.b16 %v95
  %v2943 = vunpack.c.h.b16 %v95
  %v2944 = vunpack.c.l.b16 %v96
  %v2945 = vunpack.c.h.b16 %v96
  %v2946 = vunpack.c.l.b16 %v97
  %v2947 = vunpack.c.h.b16 %v97
  %v2948 = vunpack.c.l.b16 %v98
  %v2949 = vunpack.c.h.b16 %v98
  %v2950 = vunpack.c.l.b16 %v99
  %v2951 = vunpack.c.h.b16 %v99
  %v2952 = vunpack.c.l.b16 %v100
  %v2953 = vunpack.c.h.b16 %v100
  %v2954 = vunpack.c.l.b16 %v101
  %v2955 = vunpack.c.h.b16 %v101
  %v2956 = vunpack.c.l.b16 %v102
  %v2957 = vunpack.c.h.b16 %v102
  %v2958 = vunpack.c.l.b16 %v103
  %v2959 = vunpack.c.h.b16 %v103
  %v2960 = vunpack.c.l.b16 %v104
  %v2961 = vunpack.c.h.b16 %v104
  %v2962 = vunpack.c.l.b16 %v105
  %v2963 = vunpack.c.h.b16 %v105
  %v2964 = vunpack.c.l.b16 %v106
  %v2965 = vunpack.c.h.b16 %v106
  %v2966 = vunpack.c.l.b16 %v107
  %v2967 = vunpack.c.h.b16 %v107
  %v2968 = vunpack.c.l.b16 %v108
  %v2969 = vunpack.c.h.b16 %v108
  %v2970 = vunpack.c.l.b16 %v109
  %v2971 = vunpack.c.h.b16 %v109
  %v2972 = vunpack.c.l.b16 %v110
  %v2973 = vunpack.c.h.b16 %v110
  %v2974 = vunpack.c.l.b16 %v111
  %v2975 = vunpack.c.h.b16 %v111
  %v2976 = vunpack.c.l.b16 %v112
  %v2977 = vunpack.c.h.b16 %v112
  %v2978 = vunpack.c.l.b16 %v113
  %v2979 = vunpack.c.h.b16 %v113
  %v2980 = vunpack.c.l.b16 %v114
  %v2981 = vunpack.c.h.b16 %v114
  %v2982 = vunpack.c.l.b16 %v115
  %v2983 = vunpack.c.h.b16 %v115
  %v2984 = vunpack.c.l.b16 %v116
  %v2985 = vunpack.c.h.b16 %v116
  %v2986 = vunpack.c.l.b16 %v117
  %v2987 = vunpack.c.h.b16 %v117
  %v2988 = vunpack.c.l.b16 %v118
  %v2989 = vunpack.c.h.b16 %v118
  %v2990 = vunpack.c.l.b16 %v119
  %v2991 = vunpack.c.h.b16 %v119
  %v2992 = vunpack.c.l.b16 %v120
  %v2993 = vunpack.c.h.b16 %v120
  %v2994 = vunpack.c.l.b16 %v121
  %v2995 = vunpack.c.h.b16 %v121
  %v2996 = vunpack.c.l.b16 %v122
  %v2997 = vunpack.c.h.b16 %v122
  %v2998 = vunpack.c.l.b16 %v123
  %v2999 = vunpack.c.h.b16 %v123
  %v3000 = vunpack.c.l.b16 %v124
  %v3001 = vunpack.c.h.b16 %v124
  %v3002 = vunpack.c.l.b16 %v125
  %v3003 = vunpack.c.h.b16 %v125
  %v3004 = vunpack.c.l.b16 %v126
  %v3005 = vunpack.c.h.b16 %v126
  %v3006 = vunpack.c.l.b16 %v127
  %v3007 = vunpack.c.h.b16 %v127
  %v3008 = vunpack.c.l.b16 %v128
  %v3009 = vunpack.c.h.b16 %v128
  %v3010 = vunpack.c.l.b16 %v129
  %v3011 = vunpack.c.h.b16 %v129
  %v3012 = vunpack.c.l.b16 %v130
  %v3013 = vunpack.c.h.b16 %v130
  %v3014 = vunpack.c.l.b16 %v131
  %v3015 = vunpack.c.h.b16 %v131
  %v3016 = vunpack.c.l.b16 %v132
  %v3017 = vunpack.c.h.b16 %v132
  %v3018 = vunpack.c.l.b16 %v133
  %v3019 = vunpack.c.h.b16 %v133
  %v3020 = vunpack.c.l.b16 %v134
  %v3021 = vunpack.c.h.b16 %v134
  %v3022 = vunpack.c.l.b16 %v135
  %v3023 = vunpack.c.h.b16 %v135
  %v3024 = vunpack.c.l.b16 %v136
  %v3025 = vunpack.c.h.b16 %v136
  %v3026 = vunpack.c.l.b16 %v137
  %v3027 = vunpack.c.h.b16 %v137
  %v3028 = vunpack.c.l.b16 %v138
  %v3029 = vunpack.c.h.b16 %v138
  %v3030 = vunpack.c.l.b16 %v139
  %v3031 = vunpack.c.h.b16 %v139
  %v3032 = vunpack.c.l.b16 %v140
  %v3033 = vunpack.c.h.b16 %v140
  %v3034 = vunpack.c.l.b16 %v141
  %v3035 = vunpack.c.h.b16 %v141
  %v3036 = vunpack.c.l.b16 %v142
  %v3037 = vunpack.c.h.b16 %v142
  %v3038 = vunpack.c.l.b16 %v143
  %v3039 = vunpack.c.h.b16 %v143
  %v3040 = vunpack.c.l.b16 %v144
  %v3041 = vunpack.c.h.b16 %v144
  %v3042 = vunpack.c.l.b16 %v145
  %v3043 = vunpack.c.h.b16 %v145
  %v3044 = vunpack.c.l.b16 %v146
  %v3045 = vunpack.c.h.b16 %v146
  %v3046 = vunpack.c.l.b16 %v147
  %v3047 = vunpack.c.h.b16 %v147
  %v3048 = vunpack.c.l.b16 %v148
  %v3049 = vunpack.c.h.b16 %v148
  %v3050 = vunpack.c.l.b16 %v149
  %v3051 = vunpack.c.h.b16 %v149
  %v3052 = vunpack.c.l.b16 %v150
  %v3053 = vunpack.c.h.b16 %v150
  %v3054 = vunpack.c.l.b16 %v151
  %v3055 = vunpack.c.h.b16 %v151
  %v3056 = vunpack.c.l.b16 %v152
  %v3057 = vunpack.c.h.b16 %v152
  %v3058 = vunpack.c.l.b16 %v153
  %v3059 = vunpack.c.h.b16 %v153
  %v3060 = vunpack.c.l.b16 %v154
  %v3061 = vunpack.c.h.b16 %v154
  %v3062 = vunpack.c.l.b16 %v155
  %v3063 = vunpack.c.h.b16 %v155
  %v3064 = vunpack.c.l.b16 %v156
  %v3065 = vunpack.c.h.b16 %v156
  %v3066 = vunpack.c.l.b16 %v157
  %v3067 = vunpack.c.h.b16 %v157
  %v3068 = vunpack.c.l.b16 %v158
  %v3069 = vunpack.c.h.b16 %v158
  %v3070 = vunpack.c.l.b16 %v159
  %v3071 = vunpack.c.h.b16 %v159
  %v3072 = vunpack.c.l.b16 %v160
  %v3073 = vunpack.c.h.b16 %v160
  %v3074 = vunpack.c.l.b16 %v161
  %v3075 = vunpack.c.h.b16 %v161
  %v3076 = vunpack.c.l.b16 %v162
  %v3077 = vunpack.c.h.b16 %v162
  %v3078 = vunpack.c.l.b16 %v163
  %v3079 = vunpack.c.h.b16 %v163
  %v3080 = vunpack.c.l.b16 %v164
  %v3081 = vunpack.c.h.b16 %v164
  %v3082 = vunpack.c.l.b16 %v165
  %v3083 = vunpack.c.h.b16 %v165
  %v3084 = vunpack.c.l.b16 %v166
  %v3085 = vunpack.c.h.b16 %v166
  %v3086 = vunpack.c.l.b16 %v167
  %v3087 = vunpack.c.h.b16 %v167
  %v3088 = vunpack.c.l.b16 %v168
  %v3089 = vunpack.c.h.b16 %v168
  %v3090 = vunpack.c.l.b16 %v169
  %v3091 = vunpack.c.h.b16 %v169
  %v3092 = vunpack.c.l.b16 %v170
  %v3093 = vunpack.c.h.b16 %v170
  %v3094 = vunpack.c.l.b16 %v171
  %v3095 = vunpack.c.h.b16 %v171
  %v3096 = vunpack.c.l.b16 %v172
  %v3097 = vunpack.c.h.b16 %v172
  %v3098 = vunpack.c.l.b16 %v173
  %v3099 = vunpack.c.h.b16 %v173
  %v3100 = vunpack.c.l.b16 %v174
  %v3101 = vunpack.c.h.b16 %v174
  %v3102 = vunpack.c.l.b16 %v175
  %v3103 = vunpack.c.h.b16 %v175
  %v3104 = vunpack.c.l.b16 %v176
  %v3105 = vunpack.c.h.b16 %v176
  %v3106 = vunpack.c.l.b16 %v177
  %v3107 = vunpack.c.h.b16 %v177
  %v3108 = vunpack.c.l.b16 %v178
  %v3109 = vunpack.c.h.b16 %v178
  %v3110 = vunpack.c.l.b16 %v179
  %v3111 = vunpack.c.h.b16 %v179
  %v3112 = vunpack.c.l.b16 %v180
  %v3113 = vunpack.c.h.b16 %v180
  %v3114 = vunpack.c.l.b16 %v181
  %v3115 = vunpack.c.h.b16 %v181
  %v3116 = vunpack.c.l.b16 %v182
  %v3117 = vunpack.c.h.b16 %v182
  %v3118 = vunpack.c.l.b16 %v183
  %v3119 = vunpack.c.h.b16 %v183
  %v3120 = vunpack.c.l.b16 %v184
  %v3121 = vunpack.c.h.b16 %v184
  %v3122 = vunpack.c.l.b16 %v185
  %v3123 = vunpack.c.h.b16 %v185
  %v3124 = vunpack.c.l.b16 %v186
  %v3125 = vunpack.c.h.b16 %v186
  %v3126 = vunpack.c.l.b16 %v187
  %v3127 = vunpack.c.h.b16 %v187
  %v3128 = vunpack.c.l.b16 %v188
  %v3129 = vunpack.c.h.b16 %v188
  %v3130 = vunpack.c.l.b16 %v189
  %v3131 = vunpack.c.h.b16 %v189
  %v3132 = vunpack.c.l.b16 %v190
  %v3133 = vunpack.c.h.b16 %v190
  %v3134 = vunpack.c.l.b16 %v191
  %v3135 = vunpack.c.h.b16 %v191
  %v3136 = vunpack.c.l.b16 %v192
  %v3137 = vunpack.c.h.b16 %v192
  %v3138 = vunpack.c.l.b16 %v193
  %v3139 = vunpack.c.h.b16 %v193
  %v3140 = vunpack.c.l.b16 %v194
  %v3141 = vunpack.c.h.b16 %v194
  %v3142 = vunpack.c.l.b16 %v195
  %v3143 = vunpack.c.h.b16 %v195
  %v3144 = vunpack.c.l.b16 %v196
  %v3145 = vunpack.c.h.b16 %v196
  %v3146 = vunpack.c.l.b16 %v197
  %v3147 = vunpack.c.h.b16 %v197
  %v3148 = vunpack.c.l.b16 %v198
  %v3149 = vunpack.c.h.b16 %v198
  %v3150 = vunpack.c.l.b16 %v199
  %v3151 = vunpack.c.h.b16 %v199
  %v3152 = vunpack.c.l.b16 %v200
  %v3153 = vunpack.c.h.b16 %v200
  %v3154 = vunpack.c.l.b16 %v201
  %v3155 = vunpack.c.h.b16 %v201
  %v3156 = vunpack.c.l.b16 %v202
  %v3157 = vunpack.c.h.b16 %v202
  %v3158 = vunpack.c.l.b16 %v203
  %v3159 = vunpack.c.h.b16 %v203
  %v3160 = vunpack.c.l.b16 %v204
  %v3161 = vunpack.c.h.b16 %v204
  %v3162 = vunpack.c.l.b16 %v205
  %v3163 = vunpack.c.h.b16 %v205
  %v3164 = vunpack.c.l.b16 %v206
  %v3165 = vunpack.c.h.b16 %v206
  %v3166 = vunpack.c.l.b16 %v207
  %v3167 = vunpack.c.h.b16 %v207
  %v3168 = vunpack.c.l.b16 %v208
  %v3169 = vunpack.c.h.b16 %v208
  %v3170 = vunpack.c.l.b16 %v209
  %v3171 = vunpack.c.h.b16 %v209
  %v3172 = vunpack.c.l.b16 %v210
  %v3173 = vunpack.c.h.b16 %v210
  %v3174 = vunpack.c.l.b16 %v211
  %v3175 = vunpack.c.h.b16 %v211
  %v3176 = vunpack.c.l.b16 %v212
  %v3177 = vunpack.c.h.b16 %v212
  %v3178 = vunpack.c.l.b16 %v213
  %v3179 = vunpack.c.h.b16 %v213
  %v3180 = vunpack.c.l.b16 %v214
  %v3181 = vunpack.c.h.b16 %v214
  %v3182 = vunpack.c.l.b16 %v215
  %v3183 = vunpack.c.h.b16 %v215
  %v3184 = vunpack.c.l.b16 %v216
  %v3185 = vunpack.c.h.b16 %v216
  %v3186 = vunpack.c.l.b16 %v217
  %v3187 = vunpack.c.h.b16 %v217
  %v3188 = vunpack.c.l.b16 %v218
  %v3189 = vunpack.c.h.b16 %v218
  %v3190 = vunpack.c.l.b16 %v219
  %v3191 = vunpack.c.h.b16 %v219
  %v3192 = vunpack.c.l.b16 %v220
  %v3193 = vunpack.c.h.b16 %v220
  %v3194 = vunpack.c.l.b16 %v221
  %v3195 = vunpack.c.h.b16 %v221
  %v3196 = vunpack.c.l.b16 %v222
  %v3197 = vunpack.c.h.b16 %v222
  %v3198 = vunpack.c.l.b16 %v223
  %v3199 = vunpack.c.h.b16 %v223
  %v3200 = vunpack.c.l.b16 %v224
  %v3201 = vunpack.c.h.b16 %v224
  %v3202 = vunpack.c.l.b16 %v225
  %v3203 = vunpack.c.h.b16 %v225
  %v3204 = vunpack.c.l.b16 %v226
  %v3205 = vunpack.c.h.b16 %v226
  %v3206 = vunpack.c.l.b16 %v227
  %v3207 = vunpack.c.h.b16 %v227
  %v3208 = vunpack.c.l.b16 %v228
  %v3209 = vunpack.c.h.b16 %v228
  %v3210 = vunpack.c.l.b16 %v229
  %v3211 = vunpack.c.h.b16 %v229
  %v3212 = vunpack.c.l.b16 %v230
  %v3213 = vunpack.c.h.b16 %v230
  %v3214 = vunpack.c.l.b16 %v231
  %v3215 = vunpack.c.h.b16 %v231
  %v3216 = vunpack.c.l.b16 %v232
  %v3217 = vunpack.c.h.b16 %v232
  %v3218 = vunpack.c.l.b16 %v233
  %v3219 = vunpack.c.h.b16 %v233
  %v3220 = vunpack.c.l.b16 %v234
  %v3221 = vunpack.c.h.b16 %v234
  %v3222 = vunpack.c.l.b16 %v235
  %v3223 = vunpack.c.h.b16 %v235
  %v3224 = vunpack.c.l.b16 %v236
  %v3225 = vunpack.c.h.b16 %v236
  %v3226 = vunpack.c.l.b16 %v237
  %v3227 = vunpack.c.h.b16 %v237
  %v3228 = vunpack.c.l.b16 %v238
  %v3229 = vunpack.c.h.b16 %v238
  %v3230 = vunpack.c.l.b16 %v239
  %v3231 = vunpack.c.h.b16 %v239
  %v3232 = vunpack.c.l.b16 %v240
  %v3233 = vunpack.c.h.b16 %v240
  %v3234 = vunpack.c.l.b16 %v241
  %v3235 = vunpack.c.h.b16 %v241
  %v3236 = vunpack.c.l.b16 %v242
  %v3237 = vunpack.c.h.b16 %v242
  %v3238 = vunpack.c.l.b16 %v243
  %v3239 = vunpack.c.h.b16 %v243
  %v3240 = vunpack.c.l.b16 %v244
  %v3241 = vunpack.c.h.b16 %v244
  %v3242 = vunpack.c.l.b16 %v245
  %v3243 = vunpack.c.h.b16 %v245
  %v3244 = vunpack.c.l.b16 %v246
  %v3245 = vunpack.c.h.b16 %v246
  %v3246 = vunpack.c.l.b16 %v247
  %v3247 = vunpack.c.h.b16 %v247
  %v3248 = vunpack.c.l.b16 %v248
  %v3249 = vunpack.c.h.b16 %v248
  %v3250 = vunpack.c.l.b16 %v249
  %v3251 = vunpack.c.h.b16 %v249
  %v3252 = vunpack.c.l.b16 %v250
  %v3253 = vunpack.c.h.b16 %v250
  %v3254 = vunpack.c.l.b16 %v251
  %v3255 = vunpack.c.h.b16 %v251
  %v3256 = vunpack.c.l.b16 %v252
  %v3257 = vunpack.c.h.b16 %v252
  %v3258 = vunpack.c.l.b16 %v253
  %v3259 = vunpack.c.h.b16 %v253
  %v3260 = vunpack.c.l.b16 %v254
  %v3261 = vunpack.c.h.b16 %v254
  %v3262 = vunpack.c.l.b16 %v255
  %v3263 = vunpack.c.h.b16 %v255
  %v3264 = vunpack.c.l.b16 %v256
  %v3265 = vunpack.c.h.b16 %v256
  %v3266 = vunpack.c.l.b16 %v257
  %v3267 = vunpack.c.h.b16 %v257
  %v3268 = vunpack.c.l.b16 %v258
  %v3269 = vunpack.c.h.b16 %v258
  %v3270 = vunpack.c.l.b16 %v259
  %v3271 = vunpack.c.h.b16 %v259
  %v3272 = vunpack.c.l.b16 %v260
  %v3273 = vunpack.c.h.b16 %v260
  %v3274 = vunpack.c.l.b16 %v261
  %v3275 = vunpack.c.h.b16 %v261
  %v3276 = vunpack.c.l.b16 %v262
  %v3277 = vunpack.c.h.b16 %v262
  %v3278 = vunpack.c.l.b16 %v263
  %v3279 = vunpack.c.h.b16 %v263
  %v3280 = vunpack.c.l.b16 %v264
  %v3281 = vunpack.c.h.b16 %v264
  %v3282 = vunpack.c.l.b16 %v265
  %v3283 = vunpack.c.h.b16 %v265
  %v3284 = vunpack.c.l.b16 %v266
  %v3285 = vunpack.c.h.b16 %v266
  %v3286 = vunpack.c.l.b16 %v267
  %v3287 = vunpack.c.h.b16 %v267
  %v3288 = vunpack.c.l.b16 %v268
  %v3289 = vunpack.c.h.b16 %v268
  %v3290 = vunpack.c.l.b16 %v269
  %v3291 = vunpack.c.h.b16 %v269
  %v3292 = vunpack.c.l.b16 %v270
  %v3293 = vunpack.c.h.b16 %v270
  %v3294 = vunpack.c.l.b16 %v271
  %v3295 = vunpack.c.h.b16 %v271
  %v3296 = vunpack.c.l.b16 %v272
  %v3297 = vunpack.c.h.b16 %v272
  %v3298 = vunpack.c.l.b16 %v273
  %v3299 = vunpack.c.h.b16 %v273
  %v3300 = vunpack.c.l.b16 %v274
  %v3301 = vunpack.c.h.b16 %v274
  %v3302 = vunpack.c.l.b16 %v275
  %v3303 = vunpack.c.h.b16 %v275
  %v3304 = vunpack.c.l.b16 %v276
  %v3305 = vunpack.c.h.b16 %v276
  %v3306 = vunpack.c.l.b16 %v277
  %v3307 = vunpack.c.h.b16 %v277
  %v3308 = vunpack.c.l.b16 %v278
  %v3309 = vunpack.c.h.b16 %v278
  %v3310 = vunpack.c.l.b16 %v279
  %v3311 = vunpack.c.h.b16 %v279
  %v3312 = vunpack.c.l.b16 %v280
  %v3313 = vunpack.c.h.b16 %v280
  %v3314 = vunpack.c.l.b16 %v281
  %v3315 = vunpack.c.h.b16 %v281
  %v3316 = vunpack.c.l.b16 %v282
  %v3317 = vunpack.c.h.b16 %v282
  %v3318 = vunpack.c.l.b16 %v283
  %v3319 = vunpack.c.h.b16 %v283
  %v3320 = vpack.c.b16 %v2816, %v2808
  %v3321 = vpack.c.b16 %v2817, %v2809
  %v3322 = vpack.c.b16 %v2818, %v2810
  %v3323 = vpack.c.b16 %v2819, %v2811
  %v3324 = vpack.c.b16 %v2820, %v2812
  %v3325 = vpack.c.b16 %v2821, %v2813
  %v3326 = vpack.c.b16 %v2822, %v2814
  %v3327 = vpack.c.b16 %v2823, %v2815
  %v3328 = vpack.c.b16 %v2832, %v2824
  %v3329 = vpack.c.b16 %v2833, %v2825
  %v3330 = vpack.c.b16 %v2834, %v2826
  %v3331 = vpack.c.b16 %v2835, %v2827
  %v3332 = vpack.c.b16 %v2836, %v2828
  %v3333 = vpack.c.b16 %v2837, %v2829
  %v3334 = vpack.c.b16 %v2838, %v2830
  %v3335 = vpack.c.b16 %v2839, %v2831
  %v3336 = vpack.c.b16 %v2848, %v2840
  %v3337 = vpack.c.b16 %v2849, %v2841
  %v3338 = vpack.c.b16 %v2850, %v2842
  %v3339 = vpack.c.b16 %v2851, %v2843
  %v3340 = vpack.c.b16 %v2852, %v2844
  %v3341 = vpack.c.b16 %v2853, %v2845
  %v3342 = vpack.c.b16 %v2854, %v2846
  %v3343 = vpack.c.b16 %v2855, %v2847
  %v3344 = vpack.c.b16 %v2864, %v2856
  %v3345 = vpack.c.b16 %v2865, %v2857
  %v3346 = vpack.c.b16 %v2866, %v2858
  %v3347 = vpack.c.b16 %v2867, %v2859
  %v3348 = vpack.c.b16 %v2868, %v2860
  %v3349 = vpack.c.b16 %v2869, %v2861
  %v3350 = vpack.c.b16 %v2870, %v2862
  %v3351 = vpack.c.b16 %v2871, %v2863
  %v3352 = vpack.c.b16 %v2880, %v2872
  %v3353 = vpack.c.b16 %v2881, %v2873
  %v3354 = vpack.c.b16 %v2882, %v2874
  %v3355 = vpack.c.b16 %v2883, %v2875
  %v3356 = vpack.c.b16 %v2884, %v2876
  %v3357 = vpack.c.b16 %v2885, %v2877
  %v3358 = vpack.c.b16 %v2886, %v2878
  %v3359 = vpack.c.b16 %v2887, %v2879
  %v3360 = vpack.c.b16 %v2896, %v2888
  %v3361 = vpack.c.b16 %v2897, %v2889
  %v3362 = vpack.c.b16 %v2898, %v2890
  %v3363 = vpack.c.b16 %v2899, %v2891
  %v3364 = vpack.c.b16 %v2900, %v2892
  %v3365 = vpack.c.b16 %v2901, %v2893
  %v3366 = vpack.c.b16 %v2902, %v2894
  %v3367 = vpack.c.b16 %v2903, %v2895
  %v3368 = vpack.c.b16 %v2912, %v2904
  %v3369 = vpack.c.b16 %v2913, %v2905
  %v3370 = vpack.c.b16 %v2914, %v2906
  %v3371 = vpack.c.b16 %v2915, %v2907
  %v3372 = vpack.c.b16 %v2916, %v2908
  %v3373 = vpack.c.b16 %v2917, %v2909
  %v3374 = vpack.c.b16 %v2918, %v2910
  %v3375 = vpack.c.b16 %v2919, %v2911
  %v3376 = vpack.c.b16 %v2928, %v2920
  %v3377 = vpack.c.b16 %v2929, %v2921
  %v3378 = vpack.c.b16 %v2930, %v2922
  %v3379 = vpack.c.b16 %v2931, %v2923
  %v3380 = vpack.c.b16 %v2932, %v2924
  %v3381 = vpack.c.b16 %v2933, %v2925
  %v3382 = vpack.c.b16 %v2934, %v2926
  %v3383 = vpack.c.b16 %v2935, %v2927
  %v3384 = vpack.c.b16 %v2944, %v2936
  %v3385 = vpack.c.b16 %v2945, %v2937
  %v3386 = vpack.c.b16 %v2946, %v2938
  %v3387 = vpack.c.b16 %v2947, %v2939
  %v3388 = vpack.c.b16 %v2948, %v2940
  %v3389 = vpack.c.b16 %v2949, %v2941
  %v3390 = vpack.c.b16 %v2950, %v2942
  %v3391 = vpack.c.b16 %v2951, %v2943
  %v3392 = vpack.c.b16 %v2960, %v2952
  %v3393 = vpack.c.b16 %v2961, %v2953
  %v3394 = vpack.c.b16 %v2962, %v2954
  %v3395 = vpack.c.b16 %v2963, %v2955
  %v3396 = vpack.c.b16 %v2964, %v2956
  %v3397 = vpack.c.b16 %v2965, %v2957
  %v3398 = vpack.c.b16 %v2966, %v2958
  %v3399 = vpack.c.b16 %v2967, %v2959
  %v3400 = vpack.c.b16 %v2976, %v2968
  %v3401 = vpack.c.b16 %v2977, %v2969
  %v3402 = vpack.c.b16 %v2978, %v2970
  %v3403 = vpack.c.b16 %v2979, %v2971
  %v3404 = vpack.c.b16 %v2980, %v2972
  %v3405 = vpack.c.b16 %v2981, %v2973
  %v3406 = vpack.c.b16 %v2982, %v2974
  %v3407 = vpack.c.b16 %v2983, %v2975
  %v3408 = vpack.c.b16 %v2992, %v2984
  %v3409 = vpack.c.b16 %v2993, %v2985
  %v3410 = vpack.c.b16 %v2994, %v2986
  %v3411 = vpack.c.b16 %v2995, %v2987
  %v3412 = vpack.c.b16 %v2996, %v2988
  %v3413 = vpack.c.b16 %v2997, %v2989
  %v3414 = vpack.c.b16 %v2998, %v2990
  %v3415 = vpack.c.b16 %v2999, %v2991
  %v3416 = vpack.c.b16 %v3008, %v3000
  %v3417 = vpack.c.b16 %v3009, %v3001
  %v3418 = vpack.c.b16 %v3010, %v3002
  %v3419 = vpack.c.b16 %v3011, %v3003
  %v3420 = vpack.c.b16 %v3012, %v3004
  %v3421 = vpack.c.b16 %v3013, %v3005
  %v3422 = vpack.c.b16 %v3014, %v3006
  %v3423 = vpack.c.b16 %v3015, %v3007
  %v3424 = vpack.c.b16 %v3024, %v3016
  %v3425 = vpack.c.b16 %v3025, %v3017
  %v3426 = vpack.c.b16 %v3026, %v3018
  %v3427 = vpack.c.b16 %v3027, %v3019
  %v3428 = vpack.c.b16 %v3028, %v3020
  %v3429 = vpack.c.b16 %v3029, %v3021
  %v3430 = vpack.c.b16 %v3030, %v3022
  %v3431 = vpack.c.b16 %v3031, %v3023
  %v3432 = vpack.c.b16 %v3040, %v3032
  %v3433 = vpack.c.b16 %v3041, %v3033
  %v3434 = vpack.c.b16 %v3042, %v3034
  %v3435 = vpack.c.b16 %v3043, %v3035
  %v3436 = vpack.c.b16 %v3044, %v3036
  %v3437 = vpack.c.b16 %v3045, %v3037
  %v3438 = vpack.c.b16 %v3046, %v3038
  %v3439 = vpack.c.b16 %v3047, %v3039
  %v3440 = vpack.c.b16 %v3056, %v3048
  %v3441 = vpack.c.b16 %v3057, %v3049
  %v3442 = vpack.c.b16 %v3058, %v3050
  %v3443 = vpack.c.b16 %v3059, %v3051
  %v3444 = vpack.c.b16 %v3060, %v3052
  %v3445 = vpack.c.b16 %v3061, %v3053
  %v3446 = vpack.c.b16 %v3062, %v3054
  %v3447 = vpack.c.b16 %v3063, %v3055
  %v3448 = vpack.c.b16 %v3072, %v3064
  %v3449 = vpack.c.b16 %v3073, %v3065
  %v3450 = vpack.c.b16 %v3074, %v3066
  %v3451 = vpack.c.b16 %v3075, %v3067
  %v3452 = vpack.c.b16 %v3076, %v3068
  %v3453 = vpack.c.b16 %v3077, %v3069
  %v3454 = vpack.c.b16 %v3078, %v3070
  %v3455 = vpack.c.b16 %v3079, %v3071
  %v3456 = vpack.c.b16 %v3088, %v3080
  %v3457 = vpack.c.b16 %v3089, %v3081
  %v3458 = vpack.c.b16 %v3090, %v3082
  %v3459 = vpack.c.b16 %v3091, %v3083
  %v3460 = vpack.c.b16 %v3092, %v3084
  %v3461 = vpack.c.b16 %v3093, %v3085
  %v3462 = vpack.c.b16 %v3094, %v3086
  %v3463 = vpack.c.b16 %v3095, %v3087
  %v3464 = vpack.c.b16 %v3104, %v3096
  %v3465 = vpack.c.b16 %v3105, %v3097
  %v3466 = vpack.c.b16 %v3106, %v3098
  %v3467 = vpack.c.b16 %v3107, %v3099
  %v3468 = vpack.c.b16 %v3108, %v3100
  %v3469 = vpack.c.b16 %v3109, %v3101
  %v3470 = vpack.c.b16 %v3110, %v3102
  %v3471 = vpack.c.b16 %v3111, %v3103
  %v3472 = vpack.c.b16 %v3120, %v3112
  %v3473 = vpack.c.b16 %v3121, %v3113
  %v3474 = vpack.c.b16 %v3122, %v3114
  %v3475 = vpack.c.b16 %v3123, %v3115
  %v3476 = vpack.c.b16 %v3124, %v3116
  %v3477 = vpack.c.b16 %v3125, %v3117
  %v3478 = vpack.c.b16 %v3126, %v3118
  %v3479 = vpack.c.b16 %v3127, %v3119
  %v3480 = vpack.c.b16 %v3136, %v3128
  %v3481 = vpack.c.b16 %v3137, %v3129
  %v3482 = vpack.c.b16 %v3138, %v3130
  %v3483 = vpack.c.b16 %v3139, %v3131
  %v3484 = vpack.c.b16 %v3140, %v3132
  %v3485 = vpack.c.b16 %v3141, %v3133
  %v3486 = vpack.c.b16 %v3142, %v3134
  %v3487 = vpack.c.b16 %v3143, %v3135
  %v3488 = vpack.c.b16 %v3152, %v3144
  %v3489 = vpack.c.b16 %v3153, %v3145
  %v3490 = vpack.c.b16 %v3154, %v3146
  %v3491 = vpack.c.b16 %v3155, %v3147
  %v3492 = vpack.c.b16 %v3156, %v3148
  %v3493 = vpack.c.b16 %v3157, %v3149
  %v3494 = vpack.c.b16 %v3158, %v3150
  %v3495 = vpack.c.b16 %v3159, %v3151
  %v3496 = vpack.c.b16 %v3168, %v3160
  %v3497 = vpack.c.b16 %v3169, %v3161
  %v3498 = vpack.c.b16 %v3170, %v3162
  %v3499 = vpack.c.b16 %v3171, %v3163
  %v3500 = vpack.c.b16 %v3172, %v3164
  %v3501 = vpack.c.b16 %v3173, %v3165
  %v3502 = vpack.c.b16 %v3174, %v3166
  %v3503 = vpack.c.b16 %v3175, %v3167
  %v3504 = vpack.c.b16 %v3184, %v3176
  %v3505 = vpack.c.b16 %v3185, %v3177
  %v3506 = vpack.c.b16 %v3186, %v3178
  %v3507 = vpack.c.b16 %v3187, %v3179
  %v3508 = vpack.c.b16 %v3188, %v3180
  %v3509 = vpack.c.b16 %v3189, %v3181
  %v3510 = vpack.c.b16 %v3190, %v3182
  %v3511 = vpack.c.b16 %v3191, %v3183
  %v3512 = vpack.c.b16 %v3200, %v3192
  %v3513 = vpack.c.b16 %v3201, %v3193
  %v3514 = vpack.c.b16 %v3202, %v3194
  %v3515 = vpack.c.b16 %v3203, %v3195
  %v3516 = vpack.c.b16 %v3204, %v3196
  %v3517 = vpack.c.b16 %v3205, %v3197
  %v3518 = vpack.c.b16 %v3206, %v3198
  %v3519 = vpack.c.b16 %v3207, %v3199
  %v3520 = vpack.c.b16 %v3216, %v3208
  %v3521 = vpack.c.b16 %v3217, %v3209
  %v3522 = vpack.c.b16 %v3218, %v3210
  %v3523 = vpack.c.b16 %v3219, %v3211
  %v3524 = vpack.c.b16 %v3220, %v3212
  %v3525 = vpack.c.b16 %v3221, %v3213
  %v3526 = vpack.c.b16 %v3222, %v3214
  %v3527 = vpack.c.b16 %v3223, %v3215
  %v3528 = vpack.c.b16 %v3232, %v3224
  %v3529 = vpack.c.b16 %v3233, %v3225
  %v3530 = vpack.c.b16 %v3234, %v3226
  %v3531 = vpack.c.b16 %v3235, %v3227
  %v3532 = vpack.c.b16 %v3236, %v3228
  %v3533 = vpack.c.b16 %v3237, %v3229
  %v3534 = vpack.c.b16 %v3238, %v3230
  %v3535 = vpack.c.b16 %v3239, %v3231
  %v3536 = vpack.c.b16 %v3248, %v3240
  %v3537 = vpack.c.b16 %v3249, %v3241
  %v3538 = vpack.c.b16 %v3250, %v3242
  %v3539 = vpack.c.b16 %v3251, %v3243
  %v3540 = vpack.c.b16 %v3252, %v3244
  %v3541 = vpack.c.b16 %v3253, %v3245
  %v3542 = vpack.c.b16 %v3254, %v3246
  %v3543 = vpack.c.b16 %v3255, %v3247
  %v3544 = vpack.c.b16 %v3264, %v3256
  %v3545 = vpack.c.b16 %v3265, %v3257
  %v3546 = vpack.c.b16 %v3266, %v3258
  %v3547 = vpack.c.b16 %v3267, %v3259
  %v3548 = vpack.c.b16 %v3268, %v3260
  %v3549 = vpack.c.b16 %v3269, %v3261
  %v3550 = vpack.c.b16 %v3270, %v3262
  %v3551 = vpack.c.b16 %v3271, %v3263
  %v3552 = vpack.c.b16 %v3280, %v3272
  %v3553 = vpack.c.b16 %v3281, %v3273
  %v3554 = vpack.c.b16 %v3282, %v3274
  %v3555 = vpack.c.b16 %v3283, %v3275
  %v3556 = vpack.c.b16 %v3284, %v3276
  %v3557 = vpack.c.b16 %v3285, %v3277
  %v3558 = vpack.c.b16 %v3286, %v3278
  %v3559 = vpack.c.b16 %v3287, %v3279
  %v3560 = vpack.c.b16 %v3296, %v3288
  %v3561 = vpack.c.b16 %v3297, %v3289
  %v3562 = vpack.c.b16 %v3298, %v3290
  %v3563 = vpack.c.b16 %v3299, %v3291
  %v3564 = vpack.c.b16 %v3300, %v3292
  %v3565 = vpack.c.b16 %v3301, %v3293
  %v3566 = vpack.c.b16 %v3302, %v3294
  %v3567 = vpack.c.b16 %v3303, %v3295
  %v3568 = vpack.c.b16 %v3312, %v3304
  %v3569 = vpack.c.b16 %v3313, %v3305
  %v3570 = vpack.c.b16 %v3314, %v3306
  %v3571 = vpack.c.b16 %v3315, %v3307
  %v3572 = vpack.c.b16 %v3316, %v3308
  %v3573 = vpack.c.b16 %v3317, %v3309
  %v3574 = vpack.c.b16 %v3318, %v3310
  %v3575 = vpack.c.b16 %v3319, %v3311
  %3832 = vmatprep.subr.bf16.mxu0 %v3321
  %3833 = vmatpush1.bf16.msra.mxu0 %v3320
  %3834 = vmatprep.subr.bf16.mxu0 %v3329
  %3835 = vmatpush1.bf16.msra.mxu0 %v3328
  %3836 = vmatprep.subr.bf16.mxu0 %v3337
  %3837 = vmatpush1.bf16.msra.mxu0 %v3336
  %3838 = vmatprep.subr.bf16.mxu0 %v3345
  %3839 = vmatpush1.bf16.msra.mxu0 %v3344
  %3840 = vmatprep.subr.bf16.mxu0 %v3353
  %3841 = vmatpush1.bf16.msra.mxu0 %v3352
  %3842 = vmatprep.subr.bf16.mxu0 %v3361
  %3843 = vmatpush1.bf16.msra.mxu0 %v3360
  %3844 = vmatprep.subr.bf16.mxu0 %v3369
  %3845 = vmatpush1.bf16.msra.mxu0 %v3368
  %3846 = vmatprep.subr.bf16.mxu0 %v3377
  %3847 = vmatpush1.bf16.msra.mxu0 %v3376
  %3848 = vmatprep.subr.bf16.mxu0 %v3385
  %3849 = vmatpush1.bf16.msra.mxu0 %v3384
  %3850 = vmatprep.subr.bf16.mxu0 %v3393
  %3851 = vmatpush1.bf16.msra.mxu0 %v3392
  %3852 = vmatprep.subr.bf16.mxu0 %v3401
  %3853 = vmatpush1.bf16.msra.mxu0 %v3400
  %3854 = vmatprep.subr.bf16.mxu0 %v3409
  %3855 = vmatpush1.bf16.msra.mxu0 %v3408
  %3856 = vmatprep.subr.bf16.mxu0 %v3417
  %3857 = vmatpush1.bf16.msra.mxu0 %v3416
  %3858 = vmatprep.subr.bf16.mxu0 %v3425
  %3859 = vmatpush1.bf16.msra.mxu0 %v3424
  %3860 = vmatprep.subr.bf16.mxu0 %v3433
  %3861 = vmatpush1.bf16.msra.mxu0 %v3432
  %3862 = vmatprep.subr.bf16.mxu0 %v3441
  %3863 = vmatpush1.bf16.msra.mxu0 %v3440
  %3864 = vmatprep.mubr.bf16.mxu0 %v2521
  %3865 = vmatmul.mubr.bf16.gmra.mrb[0].mxu0 %v2520
  %v3866 = vpop.f32.mrb[0].mxu0
  %v3867 = vadd.f32 %v2016, %v3866
  %v3868 = vpop.f32.mrb[0].mxu0
  %v3869 = vadd.f32 %v2018, %v3868
  %v3870 = vpop.f32.mrb[0].mxu0
  %v3871 = vadd.f32 %v2020, %v3870
  %v3872 = vpop.f32.mrb[0].mxu0
  %v3873 = vadd.f32 %v2022, %v3872
  %3874 = vmatprep.mubr.bf16.mxu0 %v2525
  %3875 = vmatmul.mubr.bf16.gmra.mrb[0].mxu0 %v2524
  %v3876 = vpop.f32.mrb[0].mxu0
  %v3877 = vadd.f32 %v2026, %v3876
  %v3878 = vpop.f32.mrb[0].mxu0
  %v3879 = vadd.f32 %v2028, %v3878
  %v3880 = vpop.f32.mrb[0].mxu0
  %v3881 = vadd.f32 %v2030, %v3880
  %v3882 = vpop.f32.mrb[0].mxu0
  %v3883 = vadd.f32 %v2032, %v3882
  %3884 = vmatprep.mubr.bf16.mxu0 %v2529
  %3885 = vmatmul.mubr.bf16.gmra.mrb[0].mxu0 %v2528
  %v3886 = vpop.f32.mrb[0].mxu0
  %v3887 = vadd.f32 %v2036, %v3886
  %v3888 = vpop.f32.mrb[0].mxu0
  %v3889 = vadd.f32 %v2038, %v3888
  %v3890 = vpop.f32.mrb[0].mxu0
  %v3891 = vadd.f32 %v2040, %v3890
  %v3892 = vpop.f32.mrb[0].mxu0
  %v3893 = vadd.f32 %v2042, %v3892
  %3894 = vmatprep.mubr.bf16.mxu0 %v2533
  %3895 = vmatmul.mubr.bf16.gmra.mrb[0].mxu0 %v2532
  %v3896 = vpop.f32.mrb[0].mxu0
  %v3897 = vadd.f32 %v2046, %v3896
  %v3898 = vpop.f32.mrb[0].mxu0
  %v3899 = vadd.f32 %v2048, %v3898
  %v3900 = vpop.f32.mrb[0].mxu0
  %v3901 = vpop.f32.mrb[0].mxu0
  %3902 = vdwg.mxu0
  %3903 = vmatprep.subr.bf16.mxu0 %v3449
  %3904 = vmatpush1.bf16.msra.mxu0 %v3448
  %3905 = vmatprep.subr.bf16.mxu0 %v3457
  %3906 = vmatpush1.bf16.msra.mxu0 %v3456
  %3907 = vmatprep.subr.bf16.mxu0 %v3465
  %3908 = vmatpush1.bf16.msra.mxu0 %v3464
  %3909 = vmatprep.subr.bf16.mxu0 %v3473
  %3910 = vmatpush1.bf16.msra.mxu0 %v3472
  %3911 = vmatprep.subr.bf16.mxu0 %v3481
  %3912 = vmatpush1.bf16.msra.mxu0 %v3480
  %3913 = vmatprep.subr.bf16.mxu0 %v3489
  %3914 = vmatpush1.bf16.msra.mxu0 %v3488
  %3915 = vmatprep.subr.bf16.mxu0 %v3497
  %3916 = vmatpush1.bf16.msra.mxu0 %v3496
  %3917 = vmatprep.subr.bf16.mxu0 %v3505
  %3918 = vmatpush1.bf16.msra.mxu0 %v3504
  %3919 = vmatprep.subr.bf16.mxu0 %v3513
  %3920 = vmatpush1.bf16.msra.mxu0 %v3512
  %3921 = vmatprep.subr.bf16.mxu0 %v3521
  %3922 = vmatpush1.bf16.msra.mxu0 %v3520
  %3923 = vmatprep.subr.bf16.mxu0 %v3529
  %3924 = vmatpush1.bf16.msra.mxu0 %v3528
  %3925 = vmatprep.subr.bf16.mxu0 %v3537
  %3926 = vmatpush1.bf16.msra.mxu0 %v3536
  %3927 = vmatprep.subr.bf16.mxu0 %v3545
  %3928 = vmatpush1.bf16.msra.mxu0 %v3544
  %3929 = vmatprep.subr.bf16.mxu0 %v3553
  %3930 = vmatpush1.bf16.msra.mxu0 %v3552
  %3931 = vmatprep.subr.bf16.mxu0 %v3561
  %3932 = vmatpush1.bf16.msra.mxu0 %v3560
  %3933 = vmatprep.subr.bf16.mxu0 %v3569
  %3934 = vmatpush1.bf16.msra.mxu0 %v3568
  %3935 = vmatprep.mubr.bf16.mxu0 %v2523
  %3936 = vmatmul.mubr.bf16.gmra.mrb[0].mxu0 %v2522
  %v3937 = vpop.f32.mrb[0].mxu0
  %v3938 = vadd.f32 %v3867, %v3937
  %v3939 = vpop.f32.mrb[0].mxu0
  %v3940 = vadd.f32 %v3869, %v3939
  %v3941 = vpop.f32.mrb[0].mxu0
  %v3942 = vadd.f32 %v3871, %v3941
  %v3943 = vpop.f32.mrb[0].mxu0
  %v3944 = vadd.f32 %v3873, %v3943
  %3945 = vmatprep.mubr.bf16.mxu0 %v2527
  %3946 = vmatmul.mubr.bf16.gmra.mrb[0].mxu0 %v2526
  %v3947 = vpop.f32.mrb[0].mxu0
  %v3948 = vadd.f32 %v3877, %v3947
  %v3949 = vpop.f32.mrb[0].mxu0
  %v3950 = vadd.f32 %v3879, %v3949
  %v3951 = vpop.f32.mrb[0].mxu0
  %v3952 = vadd.f32 %v3881, %v3951
  %v3953 = vpop.f32.mrb[0].mxu0
  %v3954 = vadd.f32 %v3883, %v3953
  %3955 = vmatprep.mubr.bf16.mxu0 %v2531
  %3956 = vmatmul.mubr.bf16.gmra.mrb[0].mxu0 %v2530
  %v3957 = vpop.f32.mrb[0].mxu0
  %v3958 = vadd.f32 %v3887, %v3957
  %v3959 = vpop.f32.mrb[0].mxu0
  %v3960 = vadd.f32 %v3889, %v3959
  %v3961 = vpop.f32.mrb[0].mxu0
  %v3962 = vadd.f32 %v3891, %v3961
  %v3963 = vpop.f32.mrb[0].mxu0
  %v3964 = vadd.f32 %v3893, %v3963
  %3965 = vmatprep.mubr.bf16.mxu0 %v2535
  %3966 = vmatmul.mubr.bf16.gmra.mrb[0].mxu0 %v2534
  %v3967 = vpop.f32.mrb[0].mxu0
  %v3968 = vadd.f32 %v3897, %v3967
  %v3969 = vpop.f32.mrb[0].mxu0
  %v3970 = vadd.f32 %v3899, %v3969
  %v3971 = vpop.f32.mrb[0].mxu0
  %v3972 = vpop.f32.mrb[0].mxu0
  %3973 = vdwg.mxu0
  %3974 = vmatprep.subr.bf16.mxu0 %v3323
  %3975 = vmatpush1.bf16.msra.mxu0 %v3322
  %3976 = vmatprep.subr.bf16.mxu0 %v3331
  %3977 = vmatpush1.bf16.msra.mxu0 %v3330
  %3978 = vmatprep.subr.bf16.mxu0 %v3339
  %3979 = vmatpush1.bf16.msra.mxu0 %v3338
  %3980 = vmatprep.subr.bf16.mxu0 %v3347
  %3981 = vmatpush1.bf16.msra.mxu0 %v3346
  %3982 = vmatprep.subr.bf16.mxu0 %v3355
  %3983 = vmatpush1.bf16.msra.mxu0 %v3354
  %3984 = vmatprep.subr.bf16.mxu0 %v3363
  %3985 = vmatpush1.bf16.msra.mxu0 %v3362
  %3986 = vmatprep.subr.bf16.mxu0 %v3371
  %3987 = vmatpush1.bf16.msra.mxu0 %v3370
  %3988 = vmatprep.subr.bf16.mxu0 %v3379
  %3989 = vmatpush1.bf16.msra.mxu0 %v3378
  %3990 = vmatprep.subr.bf16.mxu0 %v3387
  %3991 = vmatpush1.bf16.msra.mxu0 %v3386
  %3992 = vmatprep.subr.bf16.mxu0 %v3395
  %3993 = vmatpush1.bf16.msra.mxu0 %v3394
  %3994 = vmatprep.subr.bf16.mxu0 %v3403
  %3995 = vmatpush1.bf16.msra.mxu0 %v3402
  %3996 = vmatprep.subr.bf16.mxu0 %v3411
  %3997 = vmatpush1.bf16.msra.mxu0 %v3410
  %3998 = vmatprep.subr.bf16.mxu0 %v3419
  %3999 = vmatpush1.bf16.msra.mxu0 %v3418
  %4000 = vmatprep.subr.bf16.mxu0 %v3427
  %4001 = vmatpush1.bf16.msra.mxu0 %v3426
  %4002 = vmatprep.subr.bf16.mxu0 %v3435
  %4003 = vmatpush1.bf16.msra.mxu0 %v3434
  %4004 = vmatprep.subr.bf16.mxu0 %v3443
  %4005 = vmatpush1.bf16.msra.mxu0 %v3442
  %4006 = vmatprep.mubr.bf16.mxu0 %v2521
  %4007 = vmatmul.mubr.bf16.gmra.mrb[0].mxu0 %v2520
  %v4008 = vpop.f32.mrb[0].mxu0
  %v4009 = vadd.f32 %v2158, %v4008
  %v4010 = vpop.f32.mrb[0].mxu0
  %v4011 = vadd.f32 %v2160, %v4010
  %v4012 = vpop.f32.mrb[0].mxu0
  %v4013 = vadd.f32 %v2162, %v4012
  %v4014 = vpop.f32.mrb[0].mxu0
  %v4015 = vadd.f32 %v2164, %v4014
  %4016 = vmatprep.mubr.bf16.mxu0 %v2525
  %4017 = vmatmul.mubr.bf16.gmra.mrb[0].mxu0 %v2524
  %v4018 = vpop.f32.mrb[0].mxu0
  %v4019 = vadd.f32 %v2168, %v4018
  %v4020 = vpop.f32.mrb[0].mxu0
  %v4021 = vadd.f32 %v2170, %v4020
  %v4022 = vpop.f32.mrb[0].mxu0
  %v4023 = vadd.f32 %v2172, %v4022
  %v4024 = vpop.f32.mrb[0].mxu0
  %v4025 = vadd.f32 %v2174, %v4024
  %4026 = vmatprep.mubr.bf16.mxu0 %v2529
  %4027 = vmatmul.mubr.bf16.gmra.mrb[0].mxu0 %v2528
  %v4028 = vpop.f32.mrb[0].mxu0
  %v4029 = vadd.f32 %v2178, %v4028
  %v4030 = vpop.f32.mrb[0].mxu0
  %v4031 = vadd.f32 %v2180, %v4030
  %v4032 = vpop.f32.mrb[0].mxu0
  %v4033 = vadd.f32 %v2182, %v4032
  %v4034 = vpop.f32.mrb[0].mxu0
  %v4035 = vadd.f32 %v2184, %v4034
  %4036 = vmatprep.mubr.bf16.mxu0 %v2533
  %4037 = vmatmul.mubr.bf16.gmra.mrb[0].mxu0 %v2532
  %v4038 = vpop.f32.mrb[0].mxu0
  %v4039 = vadd.f32 %v2188, %v4038
  %v4040 = vpop.f32.mrb[0].mxu0
  %v4041 = vadd.f32 %v2190, %v4040
  %v4042 = vpop.f32.mrb[0].mxu0
  %v4043 = vpop.f32.mrb[0].mxu0
  %4044 = vdwg.mxu0
  %4045 = vmatprep.subr.bf16.mxu0 %v3451
  %4046 = vmatpush1.bf16.msra.mxu0 %v3450
  %4047 = vmatprep.subr.bf16.mxu0 %v3459
  %4048 = vmatpush1.bf16.msra.mxu0 %v3458
  %4049 = vmatprep.subr.bf16.mxu0 %v3467
  %4050 = vmatpush1.bf16.msra.mxu0 %v3466
  %4051 = vmatprep.subr.bf16.mxu0 %v3475
  %4052 = vmatpush1.bf16.msra.mxu0 %v3474
  %4053 = vmatprep.subr.bf16.mxu0 %v3483
  %4054 = vmatpush1.bf16.msra.mxu0 %v3482
  %4055 = vmatprep.subr.bf16.mxu0 %v3491
  %4056 = vmatpush1.bf16.msra.mxu0 %v3490
  %4057 = vmatprep.subr.bf16.mxu0 %v3499
  %4058 = vmatpush1.bf16.msra.mxu0 %v3498
  %4059 = vmatprep.subr.bf16.mxu0 %v3507
  %4060 = vmatpush1.bf16.msra.mxu0 %v3506
  %4061 = vmatprep.subr.bf16.mxu0 %v3515
  %4062 = vmatpush1.bf16.msra.mxu0 %v3514
  %4063 = vmatprep.subr.bf16.mxu0 %v3523
  %4064 = vmatpush1.bf16.msra.mxu0 %v3522
  %4065 = vmatprep.subr.bf16.mxu0 %v3531
  %4066 = vmatpush1.bf16.msra.mxu0 %v3530
  %4067 = vmatprep.subr.bf16.mxu0 %v3539
  %4068 = vmatpush1.bf16.msra.mxu0 %v3538
  %4069 = vmatprep.subr.bf16.mxu0 %v3547
  %4070 = vmatpush1.bf16.msra.mxu0 %v3546
  %4071 = vmatprep.subr.bf16.mxu0 %v3555
  %4072 = vmatpush1.bf16.msra.mxu0 %v3554
  %4073 = vmatprep.subr.bf16.mxu0 %v3563
  %4074 = vmatpush1.bf16.msra.mxu0 %v3562
  %4075 = vmatprep.subr.bf16.mxu0 %v3571
  %4076 = vmatpush1.bf16.msra.mxu0 %v3570
  %4077 = vmatprep.mubr.bf16.mxu0 %v2523
  %4078 = vmatmul.mubr.bf16.gmra.mrb[0].mxu0 %v2522
  %v4079 = vpop.f32.mrb[0].mxu0
  %v4080 = vadd.f32 %v4009, %v4079
  %v4081 = vpop.f32.mrb[0].mxu0
  %v4082 = vadd.f32 %v4011, %v4081
  %v4083 = vpop.f32.mrb[0].mxu0
  %v4084 = vadd.f32 %v4013, %v4083
  %v4085 = vpop.f32.mrb[0].mxu0
  %v4086 = vadd.f32 %v4015, %v4085
  %4087 = vmatprep.mubr.bf16.mxu0 %v2527
  %4088 = vmatmul.mubr.bf16.gmra.mrb[0].mxu0 %v2526
  %v4089 = vpop.f32.mrb[0].mxu0
  %v4090 = vadd.f32 %v4019, %v4089
  %v4091 = vpop.f32.mrb[0].mxu0
  %v4092 = vadd.f32 %v4021, %v4091
  %v4093 = vpop.f32.mrb[0].mxu0
  %v4094 = vadd.f32 %v4023, %v4093
  %v4095 = vpop.f32.mrb[0].mxu0
  %v4096 = vadd.f32 %v4025, %v4095
  %4097 = vmatprep.mubr.bf16.mxu0 %v2531
  %4098 = vmatmul.mubr.bf16.gmra.mrb[0].mxu0 %v2530
  %v4099 = vpop.f32.mrb[0].mxu0
  %v4100 = vadd.f32 %v4029, %v4099
  %v4101 = vpop.f32.mrb[0].mxu0
  %v4102 = vadd.f32 %v4031, %v4101
  %v4103 = vpop.f32.mrb[0].mxu0
  %v4104 = vadd.f32 %v4033, %v4103
  %v4105 = vpop.f32.mrb[0].mxu0
  %v4106 = vadd.f32 %v4035, %v4105
  %4107 = vmatprep.mubr.bf16.mxu0 %v2535
  %4108 = vmatmul.mubr.bf16.gmra.mrb[0].mxu0 %v2534
  %v4109 = vpop.f32.mrb[0].mxu0
  %v4110 = vadd.f32 %v4039, %v4109
  %v4111 = vpop.f32.mrb[0].mxu0
  %v4112 = vadd.f32 %v4041, %v4111
  %v4113 = vpop.f32.mrb[0].mxu0
  %v4114 = vpop.f32.mrb[0].mxu0
  %4115 = vdwg.mxu0
  %4116 = vmatprep.subr.bf16.mxu0 %v3325
  %4117 = vmatpush1.bf16.msra.mxu0 %v3324
  %4118 = vmatprep.subr.bf16.mxu0 %v3333
  %4119 = vmatpush1.bf16.msra.mxu0 %v3332
  %4120 = vmatprep.subr.bf16.mxu0 %v3341
  %4121 = vmatpush1.bf16.msra.mxu0 %v3340
  %4122 = vmatprep.subr.bf16.mxu0 %v3349
  %4123 = vmatpush1.bf16.msra.mxu0 %v3348
  %4124 = vmatprep.subr.bf16.mxu0 %v3357
  %4125 = vmatpush1.bf16.msra.mxu0 %v3356
  %4126 = vmatprep.subr.bf16.mxu0 %v3365
  %4127 = vmatpush1.bf16.msra.mxu0 %v3364
  %4128 = vmatprep.subr.bf16.mxu0 %v3373
  %4129 = vmatpush1.bf16.msra.mxu0 %v3372
  %4130 = vmatprep.subr.bf16.mxu0 %v3381
  %4131 = vmatpush1.bf16.msra.mxu0 %v3380
  %4132 = vmatprep.subr.bf16.mxu0 %v3389
  %4133 = vmatpush1.bf16.msra.mxu0 %v3388
  %4134 = vmatprep.subr.bf16.mxu0 %v3397
  %4135 = vmatpush1.bf16.msra.mxu0 %v3396
  %4136 = vmatprep.subr.bf16.mxu0 %v3405
  %4137 = vmatpush1.bf16.msra.mxu0 %v3404
  %4138 = vmatprep.subr.bf16.mxu0 %v3413
  %4139 = vmatpush1.bf16.msra.mxu0 %v3412
  %4140 = vmatprep.subr.bf16.mxu0 %v3421
  %4141 = vmatpush1.bf16.msra.mxu0 %v3420
  %4142 = vmatprep.subr.bf16.mxu0 %v3429
  %4143 = vmatpush1.bf16.msra.mxu0 %v3428
  %4144 = vmatprep.subr.bf16.mxu0 %v3437
  %4145 = vmatpush1.bf16.msra.mxu0 %v3436
  %4146 = vmatprep.subr.bf16.mxu0 %v3445
  %4147 = vmatpush1.bf16.msra.mxu0 %v3444
  %4148 = vmatprep.mubr.bf16.mxu0 %v2521
  %4149 = vmatmul.mubr.bf16.gmra.mrb[0].mxu0 %v2520
  %v4150 = vpop.f32.mrb[0].mxu0
  %v4151 = vadd.f32 %v2300, %v4150
  %v4152 = vpop.f32.mrb[0].mxu0
  %v4153 = vadd.f32 %v2302, %v4152
  %v4154 = vpop.f32.mrb[0].mxu0
  %v4155 = vadd.f32 %v2304, %v4154
  %v4156 = vpop.f32.mrb[0].mxu0
  %v4157 = vadd.f32 %v2306, %v4156
  %4158 = vmatprep.mubr.bf16.mxu0 %v2525
  %4159 = vmatmul.mubr.bf16.gmra.mrb[0].mxu0 %v2524
  %v4160 = vpop.f32.mrb[0].mxu0
  %v4161 = vadd.f32 %v2310, %v4160
  %v4162 = vpop.f32.mrb[0].mxu0
  %v4163 = vadd.f32 %v2312, %v4162
  %v4164 = vpop.f32.mrb[0].mxu0
  %v4165 = vadd.f32 %v2314, %v4164
  %v4166 = vpop.f32.mrb[0].mxu0
  %v4167 = vadd.f32 %v2316, %v4166
  %4168 = vmatprep.mubr.bf16.mxu0 %v2529
  %4169 = vmatmul.mubr.bf16.gmra.mrb[0].mxu0 %v2528
  %v4170 = vpop.f32.mrb[0].mxu0
  %v4171 = vadd.f32 %v2320, %v4170
  %v4172 = vpop.f32.mrb[0].mxu0
  %v4173 = vadd.f32 %v2322, %v4172
  %v4174 = vpop.f32.mrb[0].mxu0
  %v4175 = vadd.f32 %v2324, %v4174
  %v4176 = vpop.f32.mrb[0].mxu0
  %v4177 = vadd.f32 %v2326, %v4176
  %4178 = vmatprep.mubr.bf16.mxu0 %v2533
  %4179 = vmatmul.mubr.bf16.gmra.mrb[0].mxu0 %v2532
  %v4180 = vpop.f32.mrb[0].mxu0
  %v4181 = vadd.f32 %v2330, %v4180
  %v4182 = vpop.f32.mrb[0].mxu0
  %v4183 = vadd.f32 %v2332, %v4182
  %v4184 = vpop.f32.mrb[0].mxu0
  %v4185 = vpop.f32.mrb[0].mxu0
  %4186 = vdwg.mxu0
  %4187 = vmatprep.subr.bf16.mxu0 %v3453
  %4188 = vmatpush1.bf16.msra.mxu0 %v3452
  %4189 = vmatprep.subr.bf16.mxu0 %v3461
  %4190 = vmatpush1.bf16.msra.mxu0 %v3460
  %4191 = vmatprep.subr.bf16.mxu0 %v3469
  %4192 = vmatpush1.bf16.msra.mxu0 %v3468
  %4193 = vmatprep.subr.bf16.mxu0 %v3477
  %4194 = vmatpush1.bf16.msra.mxu0 %v3476
  %4195 = vmatprep.subr.bf16.mxu0 %v3485
  %4196 = vmatpush1.bf16.msra.mxu0 %v3484
  %4197 = vmatprep.subr.bf16.mxu0 %v3493
  %4198 = vmatpush1.bf16.msra.mxu0 %v3492
  %4199 = vmatprep.subr.bf16.mxu0 %v3501
  %4200 = vmatpush1.bf16.msra.mxu0 %v3500
  %4201 = vmatprep.subr.bf16.mxu0 %v3509
  %4202 = vmatpush1.bf16.msra.mxu0 %v3508
  %4203 = vmatprep.subr.bf16.mxu0 %v3517
  %4204 = vmatpush1.bf16.msra.mxu0 %v3516
  %4205 = vmatprep.subr.bf16.mxu0 %v3525
  %4206 = vmatpush1.bf16.msra.mxu0 %v3524
  %4207 = vmatprep.subr.bf16.mxu0 %v3533
  %4208 = vmatpush1.bf16.msra.mxu0 %v3532
  %4209 = vmatprep.subr.bf16.mxu0 %v3541
  %4210 = vmatpush1.bf16.msra.mxu0 %v3540
  %4211 = vmatprep.subr.bf16.mxu0 %v3549
  %4212 = vmatpush1.bf16.msra.mxu0 %v3548
  %4213 = vmatprep.subr.bf16.mxu0 %v3557
  %4214 = vmatpush1.bf16.msra.mxu0 %v3556
  %4215 = vmatprep.subr.bf16.mxu0 %v3565
  %4216 = vmatpush1.bf16.msra.mxu0 %v3564
  %4217 = vmatprep.subr.bf16.mxu0 %v3573
  %4218 = vmatpush1.bf16.msra.mxu0 %v3572
  %4219 = vmatprep.mubr.bf16.mxu0 %v2523
  %4220 = vmatmul.mubr.bf16.gmra.mrb[0].mxu0 %v2522
  %v4221 = vpop.f32.mrb[0].mxu0
  %v4222 = vadd.f32 %v4151, %v4221
  %v4223 = vpop.f32.mrb[0].mxu0
  %v4224 = vadd.f32 %v4153, %v4223
  %v4225 = vpop.f32.mrb[0].mxu0
  %v4226 = vadd.f32 %v4155, %v4225
  %v4227 = vpop.f32.mrb[0].mxu0
  %v4228 = vadd.f32 %v4157, %v4227
  %4229 = vmatprep.mubr.bf16.mxu0 %v2527
  %4230 = vmatmul.mubr.bf16.gmra.mrb[0].mxu0 %v2526
  %v4231 = vpop.f32.mrb[0].mxu0
  %v4232 = vadd.f32 %v4161, %v4231
  %v4233 = vpop.f32.mrb[0].mxu0
  %v4234 = vadd.f32 %v4163, %v4233
  %v4235 = vpop.f32.mrb[0].mxu0
  %v4236 = vadd.f32 %v4165, %v4235
  %v4237 = vpop.f32.mrb[0].mxu0
  %v4238 = vadd.f32 %v4167, %v4237
  %4239 = vmatprep.mubr.bf16.mxu0 %v2531
  %4240 = vmatmul.mubr.bf16.gmra.mrb[0].mxu0 %v2530
  %v4241 = vpop.f32.mrb[0].mxu0
  %v4242 = vadd.f32 %v4171, %v4241
  %v4243 = vpop.f32.mrb[0].mxu0
  %v4244 = vadd.f32 %v4173, %v4243
  %v4245 = vpop.f32.mrb[0].mxu0
  %v4246 = vadd.f32 %v4175, %v4245
  %v4247 = vpop.f32.mrb[0].mxu0
  %v4248 = vadd.f32 %v4177, %v4247
  %4249 = vmatprep.mubr.bf16.mxu0 %v2535
  %4250 = vmatmul.mubr.bf16.gmra.mrb[0].mxu0 %v2534
  %v4251 = vpop.f32.mrb[0].mxu0
  %v4252 = vadd.f32 %v4181, %v4251
  %v4253 = vpop.f32.mrb[0].mxu0
  %v4254 = vadd.f32 %v4183, %v4253
  %v4255 = vpop.f32.mrb[0].mxu0
  %v4256 = vpop.f32.mrb[0].mxu0
  %4257 = vdwg.mxu0
  %4258 = vmatprep.subr.bf16.mxu0 %v3327
  %4259 = vmatpush1.bf16.msra.mxu0 %v3326
  %4260 = vmatprep.subr.bf16.mxu0 %v3335
  %4261 = vmatpush1.bf16.msra.mxu0 %v3334
  %4262 = vmatprep.subr.bf16.mxu0 %v3343
  %4263 = vmatpush1.bf16.msra.mxu0 %v3342
  %4264 = vmatprep.subr.bf16.mxu0 %v3351
  %4265 = vmatpush1.bf16.msra.mxu0 %v3350
  %4266 = vmatprep.subr.bf16.mxu0 %v3359
  %4267 = vmatpush1.bf16.msra.mxu0 %v3358
  %4268 = vmatprep.subr.bf16.mxu0 %v3367
  %4269 = vmatpush1.bf16.msra.mxu0 %v3366
  %4270 = vmatprep.subr.bf16.mxu0 %v3375
  %4271 = vmatpush1.bf16.msra.mxu0 %v3374
  %4272 = vmatprep.subr.bf16.mxu0 %v3383
  %4273 = vmatpush1.bf16.msra.mxu0 %v3382
  %4274 = vmatprep.subr.bf16.mxu0 %v3391
  %4275 = vmatpush1.bf16.msra.mxu0 %v3390
  %4276 = vmatprep.subr.bf16.mxu0 %v3399
  %4277 = vmatpush1.bf16.msra.mxu0 %v3398
  %4278 = vmatprep.subr.bf16.mxu0 %v3407
  %4279 = vmatpush1.bf16.msra.mxu0 %v3406
  %4280 = vmatprep.subr.bf16.mxu0 %v3415
  %4281 = vmatpush1.bf16.msra.mxu0 %v3414
  %4282 = vmatprep.subr.bf16.mxu0 %v3423
  %4283 = vmatpush1.bf16.msra.mxu0 %v3422
  %4284 = vmatprep.subr.bf16.mxu0 %v3431
  %4285 = vmatpush1.bf16.msra.mxu0 %v3430
  %4286 = vmatprep.subr.bf16.mxu0 %v3439
  %4287 = vmatpush1.bf16.msra.mxu0 %v3438
  %4288 = vmatprep.subr.bf16.mxu0 %v3447
  %4289 = vmatpush1.bf16.msra.mxu0 %v3446
  %4290 = vmatprep.mubr.bf16.mxu0 %v2521
  %4291 = vmatmul.mubr.bf16.gmra.mrb[0].mxu0 %v2520
  %v4292 = vpop.f32.mrb[0].mxu0
  %v4293 = vadd.f32 %v2442, %v4292
  %v4294 = vpop.f32.mrb[0].mxu0
  %v4295 = vadd.f32 %v2444, %v4294
  %v4296 = vpop.f32.mrb[0].mxu0
  %v4297 = vadd.f32 %v2446, %v4296
  %v4298 = vpop.f32.mrb[0].mxu0
  %v4299 = vadd.f32 %v2448, %v4298
  %4300 = vmatprep.mubr.bf16.mxu0 %v2525
  %4301 = vmatmul.mubr.bf16.gmra.mrb[0].mxu0 %v2524
  %v4302 = vpop.f32.mrb[0].mxu0
  %v4303 = vadd.f32 %v2452, %v4302
  %v4304 = vpop.f32.mrb[0].mxu0
  %v4305 = vadd.f32 %v2454, %v4304
  %v4306 = vpop.f32.mrb[0].mxu0
  %v4307 = vadd.f32 %v2456, %v4306
  %v4308 = vpop.f32.mrb[0].mxu0
  %v4309 = vadd.f32 %v2458, %v4308
  %4310 = vmatprep.mubr.bf16.mxu0 %v2529
  %4311 = vmatmul.mubr.bf16.gmra.mrb[0].mxu0 %v2528
  %v4312 = vpop.f32.mrb[0].mxu0
  %v4313 = vadd.f32 %v2462, %v4312
  %v4314 = vpop.f32.mrb[0].mxu0
  %v4315 = vadd.f32 %v2464, %v4314
  %v4316 = vpop.f32.mrb[0].mxu0
  %v4317 = vadd.f32 %v2466, %v4316
  %v4318 = vpop.f32.mrb[0].mxu0
  %v4319 = vadd.f32 %v2468, %v4318
  %4320 = vmatprep.mubr.bf16.mxu0 %v2533
  %4321 = vmatmul.mubr.bf16.gmra.mrb[0].mxu0 %v2532
  %v4322 = vpop.f32.mrb[0].mxu0
  %v4323 = vadd.f32 %v2472, %v4322
  %v4324 = vpop.f32.mrb[0].mxu0
  %v4325 = vadd.f32 %v2474, %v4324
  %v4326 = vpop.f32.mrb[0].mxu0
  %v4327 = vpop.f32.mrb[0].mxu0
  %4328 = vdwg.mxu0
  %4329 = vmatprep.subr.bf16.mxu0 %v3455
  %4330 = vmatpush1.bf16.msra.mxu0 %v3454
  %4331 = vmatprep.subr.bf16.mxu0 %v3463
  %4332 = vmatpush1.bf16.msra.mxu0 %v3462
  %4333 = vmatprep.subr.bf16.mxu0 %v3471
  %4334 = vmatpush1.bf16.msra.mxu0 %v3470
  %4335 = vmatprep.subr.bf16.mxu0 %v3479
  %4336 = vmatpush1.bf16.msra.mxu0 %v3478
  %4337 = vmatprep.subr.bf16.mxu0 %v3487
  %4338 = vmatpush1.bf16.msra.mxu0 %v3486
  %4339 = vmatprep.subr.bf16.mxu0 %v3495
  %4340 = vmatpush1.bf16.msra.mxu0 %v3494
  %4341 = vmatprep.subr.bf16.mxu0 %v3503
  %4342 = vmatpush1.bf16.msra.mxu0 %v3502
  %4343 = vmatprep.subr.bf16.mxu0 %v3511
  %4344 = vmatpush1.bf16.msra.mxu0 %v3510
  %4345 = vmatprep.subr.bf16.mxu0 %v3519
  %4346 = vmatpush1.bf16.msra.mxu0 %v3518
  %4347 = vmatprep.subr.bf16.mxu0 %v3527
  %4348 = vmatpush1.bf16.msra.mxu0 %v3526
  %4349 = vmatprep.subr.bf16.mxu0 %v3535
  %4350 = vmatpush1.bf16.msra.mxu0 %v3534
  %4351 = vmatprep.subr.bf16.mxu0 %v3543
  %4352 = vmatpush1.bf16.msra.mxu0 %v3542
  %4353 = vmatprep.subr.bf16.mxu0 %v3551
  %4354 = vmatpush1.bf16.msra.mxu0 %v3550
  %4355 = vmatprep.subr.bf16.mxu0 %v3559
  %4356 = vmatpush1.bf16.msra.mxu0 %v3558
  %4357 = vmatprep.subr.bf16.mxu0 %v3567
  %4358 = vmatpush1.bf16.msra.mxu0 %v3566
  %4359 = vmatprep.subr.bf16.mxu0 %v3575
  %4360 = vmatpush1.bf16.msra.mxu0 %v3574
  %4361 = vmatprep.mubr.bf16.mxu0 %v2523
  %4362 = vmatmul.mubr.bf16.gmra.mrb[0].mxu0 %v2522
  %v4363 = vpop.f32.mrb[0].mxu0
  %v4364 = vadd.f32 %v4293, %v4363
  %v4365 = vpop.f32.mrb[0].mxu0
  %v4366 = vadd.f32 %v4295, %v4365
  %v4367 = vpop.f32.mrb[0].mxu0
  %v4368 = vadd.f32 %v4297, %v4367
  %v4369 = vpop.f32.mrb[0].mxu0
  %v4370 = vadd.f32 %v4299, %v4369
  %4371 = vmatprep.mubr.bf16.mxu0 %v2527
  %4372 = vmatmul.mubr.bf16.gmra.mrb[0].mxu0 %v2526
  %v4373 = vpop.f32.mrb[0].mxu0
  %v4374 = vadd.f32 %v4303, %v4373
  %v4375 = vpop.f32.mrb[0].mxu0
  %v4376 = vadd.f32 %v4305, %v4375
  %v4377 = vpop.f32.mrb[0].mxu0
  %v4378 = vadd.f32 %v4307, %v4377
  %v4379 = vpop.f32.mrb[0].mxu0
  %v4380 = vadd.f32 %v4309, %v4379
  %4381 = vmatprep.mubr.bf16.mxu0 %v2531
  %4382 = vmatmul.mubr.bf16.gmra.mrb[0].mxu0 %v2530
  %v4383 = vpop.f32.mrb[0].mxu0
  %v4384 = vadd.f32 %v4313, %v4383
  %v4385 = vpop.f32.mrb[0].mxu0
  %v4386 = vadd.f32 %v4315, %v4385
  %v4387 = vpop.f32.mrb[0].mxu0
  %v4388 = vadd.f32 %v4317, %v4387
  %v4389 = vpop.f32.mrb[0].mxu0
  %v4390 = vadd.f32 %v4319, %v4389
  %4391 = vmatprep.mubr.bf16.mxu0 %v2535
  %4392 = vmatmul.mubr.bf16.gmra.mrb[0].mxu0 %v2534
  %v4393 = vpop.f32.mrb[0].mxu0
  %v4394 = vadd.f32 %v4323, %v4393
  %v4395 = vpop.f32.mrb[0].mxu0
  %v4396 = vadd.f32 %v4325, %v4395
  %v4397 = vpop.f32.mrb[0].mxu0
  %v4398 = vpop.f32.mrb[0].mxu0
  %4399 = vdwg.mxu0
  %s4400 = scalar_lea.vmem %s0, 16
  %v4401 = vld [vmem:[%s4400] sm:$0xff]
  %v4402 = vld [vmem:[%s4400 + $0x8] sm:$0xff]
  %v4403 = vld [vmem:[%s4400 + $0x10] sm:$0xff]
  %v4404 = vld [vmem:[%s4400 + $0x18] sm:$0xff]
  %v4405 = vld [vmem:[%s4400 + $0x20] sm:$0xff]
  %v4406 = vld [vmem:[%s4400 + $0x28] sm:$0xff]
  %v4407 = vld [vmem:[%s4400 + $0x30] sm:$0xff]
  %v4408 = vld [vmem:[%s4400 + $0x38] sm:$0xff]
  %v4409 = vld [vmem:[%s4400 + $0x40] sm:$0xff]
  %v4410 = vld [vmem:[%s4400 + $0x48] sm:$0xff]
  %v4411 = vld [vmem:[%s4400 + $0x50] sm:$0xff]
  %v4412 = vld [vmem:[%s4400 + $0x58] sm:$0xff]
  %v4413 = vld [vmem:[%s4400 + $0x60] sm:$0xff]
  %v4414 = vld [vmem:[%s4400 + $0x68] sm:$0xff]
  %s4415 = scalar_lea.vmem %s1, 4096
  %v4416 = vld [vmem:[%s4415] sm:$0xff]
  %v4417 = vld [vmem:[%s4415 + $0x8] sm:$0xff]
  %v4418 = vld [vmem:[%s4415 + $0x10] sm:$0xff]
  %v4419 = vld [vmem:[%s4415 + $0x18] sm:$0xff]
  %v4420 = vld [vmem:[%s4415 + $0x20] sm:$0xff]
  %v4421 = vld [vmem:[%s4415 + $0x28] sm:$0xff]
  %v4422 = vld [vmem:[%s4415 + $0x30] sm:$0xff]
  %v4423 = vld [vmem:[%s4415 + $0x38] sm:$0xff]
  %v4424 = vld [vmem:[%s4415 + $0x40] sm:$0xff]
  %v4425 = vld [vmem:[%s4415 + $0x48] sm:$0xff]
  %v4426 = vld [vmem:[%s4415 + $0x50] sm:$0xff]
  %v4427 = vld [vmem:[%s4415 + $0x58] sm:$0xff]
  %v4428 = vld [vmem:[%s4415 + $0x60] sm:$0xff]
  %v4429 = vld [vmem:[%s4415 + $0x68] sm:$0xff]
  %v4430 = vld [vmem:[%s4415 + $0x70] sm:$0xff]
  %v4431 = vld [vmem:[%s4415 + $0x78] sm:$0xff]
  %v4432 = vld [vmem:[%s4415 + $0x80] sm:$0xff]
  %v4433 = vld [vmem:[%s4415 + $0x88] sm:$0xff]
  %v4434 = vld [vmem:[%s4415 + $0x90] sm:$0xff]
  %v4435 = vld [vmem:[%s4415 + $0x98] sm:$0xff]
  %v4436 = vld [vmem:[%s4415 + $0xa0] sm:$0xff]
  %v4437 = vld [vmem:[%s4415 + $0xa8] sm:$0xff]
  %v4438 = vld [vmem:[%s4415 + $0xb0] sm:$0xff]
  %v4439 = vld [vmem:[%s4415 + $0xb8] sm:$0xff]
  %v4440 = vld [vmem:[%s4415 + $0xc0] sm:$0xff]
  %v4441 = vld [vmem:[%s4415 + $0xc8] sm:$0xff]
  %v4442 = vld [vmem:[%s4415 + $0xd0] sm:$0xff]
  %v4443 = vld [vmem:[%s4415 + $0xd8] sm:$0xff]
  %v4444 = vld [vmem:[%s4415 + $0xe0] sm:$0xff]
  %v4445 = vld [vmem:[%s4415 + $0xe8] sm:$0xff]
  %v4446 = vld [vmem:[%s4415 + $0xf0] sm:$0xff]
  %v4447 = vld [vmem:[%s4415 + $0xf8] sm:$0xff]
  %v4448 = vld [vmem:[%s4415 + $0x100] sm:$0xff]
  %v4449 = vld [vmem:[%s4415 + $0x108] sm:$0xff]
  %v4450 = vld [vmem:[%s4415 + $0x110] sm:$0xff]
  %v4451 = vld [vmem:[%s4415 + $0x118] sm:$0xff]
  %v4452 = vld [vmem:[%s4415 + $0x120] sm:$0xff]
  %v4453 = vld [vmem:[%s4415 + $0x128] sm:$0xff]
  %v4454 = vld [vmem:[%s4415 + $0x130] sm:$0xff]
  %v4455 = vld [vmem:[%s4415 + $0x138] sm:$0xff]
  %v4456 = vld [vmem:[%s4415 + $0x140] sm:$0xff]
  %v4457 = vld [vmem:[%s4415 + $0x148] sm:$0xff]
  %v4458 = vld [vmem:[%s4415 + $0x150] sm:$0xff]
  %v4459 = vld [vmem:[%s4415 + $0x158] sm:$0xff]
  %v4460 = vld [vmem:[%s4415 + $0x160] sm:$0xff]
  %v4461 = vld [vmem:[%s4415 + $0x168] sm:$0xff]
  %v4462 = vld [vmem:[%s4415 + $0x170] sm:$0xff]
  %v4463 = vld [vmem:[%s4415 + $0x178] sm:$0xff]
  %v4464 = vld [vmem:[%s4415 + $0x180] sm:$0xff]
  %v4465 = vld [vmem:[%s4415 + $0x188] sm:$0xff]
  %v4466 = vld [vmem:[%s4415 + $0x190] sm:$0xff]
  %v4467 = vld [vmem:[%s4415 + $0x198] sm:$0xff]
  %v4468 = vld [vmem:[%s4415 + $0x1a0] sm:$0xff]
  %v4469 = vld [vmem:[%s4415 + $0x1a8] sm:$0xff]
  %v4470 = vld [vmem:[%s4415 + $0x1b0] sm:$0xff]
  %v4471 = vld [vmem:[%s4415 + $0x1b8] sm:$0xff]
  %v4472 = vld [vmem:[%s4415 + $0x1c0] sm:$0xff]
  %v4473 = vld [vmem:[%s4415 + $0x1c8] sm:$0xff]
  %v4474 = vld [vmem:[%s4415 + $0x1d0] sm:$0xff]
  %v4475 = vld [vmem:[%s4415 + $0x1d8] sm:$0xff]
  %v4476 = vld [vmem:[%s4415 + $0x1e0] sm:$0xff]
  %v4477 = vld [vmem:[%s4415 + $0x1e8] sm:$0xff]
  %v4478 = vld [vmem:[%s4415 + $0x1f0] sm:$0xff]
  %v4479 = vld [vmem:[%s4415 + $0x1f8] sm:$0xff]
  %v4480 = vld [vmem:[%s4415 + $0x200] sm:$0xff]
  %v4481 = vld [vmem:[%s4415 + $0x208] sm:$0xff]
  %v4482 = vld [vmem:[%s4415 + $0x210] sm:$0xff]
  %v4483 = vld [vmem:[%s4415 + $0x218] sm:$0xff]
  %v4484 = vld [vmem:[%s4415 + $0x220] sm:$0xff]
  %v4485 = vld [vmem:[%s4415 + $0x228] sm:$0xff]
  %v4486 = vld [vmem:[%s4415 + $0x230] sm:$0xff]
  %v4487 = vld [vmem:[%s4415 + $0x238] sm:$0xff]
  %v4488 = vld [vmem:[%s4415 + $0x240] sm:$0xff]
  %v4489 = vld [vmem:[%s4415 + $0x248] sm:$0xff]
  %v4490 = vld [vmem:[%s4415 + $0x250] sm:$0xff]
  %v4491 = vld [vmem:[%s4415 + $0x258] sm:$0xff]
  %v4492 = vld [vmem:[%s4415 + $0x260] sm:$0xff]
  %v4493 = vld [vmem:[%s4415 + $0x268] sm:$0xff]
  %v4494 = vld [vmem:[%s4415 + $0x270] sm:$0xff]
  %v4495 = vld [vmem:[%s4415 + $0x278] sm:$0xff]
  %v4496 = vld [vmem:[%s4415 + $0x280] sm:$0xff]
  %v4497 = vld [vmem:[%s4415 + $0x288] sm:$0xff]
  %v4498 = vld [vmem:[%s4415 + $0x290] sm:$0xff]
  %v4499 = vld [vmem:[%s4415 + $0x298] sm:$0xff]
  %v4500 = vld [vmem:[%s4415 + $0x2a0] sm:$0xff]
  %v4501 = vld [vmem:[%s4415 + $0x2a8] sm:$0xff]
  %v4502 = vld [vmem:[%s4415 + $0x2b0] sm:$0xff]
  %v4503 = vld [vmem:[%s4415 + $0x2b8] sm:$0xff]
  %v4504 = vld [vmem:[%s4415 + $0x2c0] sm:$0xff]
  %v4505 = vld [vmem:[%s4415 + $0x2c8] sm:$0xff]
  %v4506 = vld [vmem:[%s4415 + $0x2d0] sm:$0xff]
  %v4507 = vld [vmem:[%s4415 + $0x2d8] sm:$0xff]
  %v4508 = vld [vmem:[%s4415 + $0x2e0] sm:$0xff]
  %v4509 = vld [vmem:[%s4415 + $0x2e8] sm:$0xff]
  %v4510 = vld [vmem:[%s4415 + $0x2f0] sm:$0xff]
  %v4511 = vld [vmem:[%s4415 + $0x2f8] sm:$0xff]
  %v4512 = vld [vmem:[%s4415 + $0x300] sm:$0xff]
  %v4513 = vld [vmem:[%s4415 + $0x308] sm:$0xff]
  %v4514 = vld [vmem:[%s4415 + $0x310] sm:$0xff]
  %v4515 = vld [vmem:[%s4415 + $0x318] sm:$0xff]
  %v4516 = vld [vmem:[%s4415 + $0x320] sm:$0xff]
  %v4517 = vld [vmem:[%s4415 + $0x328] sm:$0xff]
  %v4518 = vld [vmem:[%s4415 + $0x330] sm:$0xff]
  %v4519 = vld [vmem:[%s4415 + $0x338] sm:$0xff]
  %v4520 = vld [vmem:[%s4415 + $0x340] sm:$0xff]
  %v4521 = vld [vmem:[%s4415 + $0x348] sm:$0xff]
  %v4522 = vld [vmem:[%s4415 + $0x350] sm:$0xff]
  %v4523 = vld [vmem:[%s4415 + $0x358] sm:$0xff]
  %v4524 = vld [vmem:[%s4415 + $0x360] sm:$0xff]
  %v4525 = vld [vmem:[%s4415 + $0x368] sm:$0xff]
  %v4526 = vld [vmem:[%s4415 + $0x370] sm:$0xff]
  %v4527 = vld [vmem:[%s4415 + $0x378] sm:$0xff]
  %v4528 = vld [vmem:[%s4415 + $0x380] sm:$0xff]
  %v4529 = vld [vmem:[%s4415 + $0x388] sm:$0xff]
  %v4530 = vld [vmem:[%s4415 + $0x390] sm:$0xff]
  %v4531 = vld [vmem:[%s4415 + $0x398] sm:$0xff]
  %v4532 = vld [vmem:[%s4415 + $0x3a0] sm:$0xff]
  %v4533 = vld [vmem:[%s4415 + $0x3a8] sm:$0xff]
  %v4534 = vld [vmem:[%s4415 + $0x3b0] sm:$0xff]
  %v4535 = vld [vmem:[%s4415 + $0x3b8] sm:$0xff]
  %v4536 = vld [vmem:[%s4415 + $0x3c0] sm:$0xff]
  %v4537 = vld [vmem:[%s4415 + $0x3c8] sm:$0xff]
  %v4538 = vld [vmem:[%s4415 + $0x3d0] sm:$0xff]
  %v4539 = vld [vmem:[%s4415 + $0x3d8] sm:$0xff]
  %v4540 = vld [vmem:[%s4415 + $0x3e0] sm:$0xff]
  %v4541 = vld [vmem:[%s4415 + $0x3e8] sm:$0xff]
  %v4542 = vld [vmem:[%s4415 + $0x3f0] sm:$0xff]
  %v4543 = vld [vmem:[%s4415 + $0x3f8] sm:$0xff]
  %v4544 = vld [vmem:[%s4415 + $0x400] sm:$0xff]
  %v4545 = vld [vmem:[%s4415 + $0x408] sm:$0xff]
  %v4546 = vld [vmem:[%s4415 + $0x410] sm:$0xff]
  %v4547 = vld [vmem:[%s4415 + $0x418] sm:$0xff]
  %v4548 = vld [vmem:[%s4415 + $0x420] sm:$0xff]
  %v4549 = vld [vmem:[%s4415 + $0x428] sm:$0xff]
  %v4550 = vld [vmem:[%s4415 + $0x430] sm:$0xff]
  %v4551 = vld [vmem:[%s4415 + $0x438] sm:$0xff]
  %v4552 = vld [vmem:[%s4415 + $0x440] sm:$0xff]
  %v4553 = vld [vmem:[%s4415 + $0x448] sm:$0xff]
  %v4554 = vld [vmem:[%s4415 + $0x450] sm:$0xff]
  %v4555 = vld [vmem:[%s4415 + $0x458] sm:$0xff]
  %v4556 = vld [vmem:[%s4415 + $0x460] sm:$0xff]
  %v4557 = vld [vmem:[%s4415 + $0x468] sm:$0xff]
  %v4558 = vld [vmem:[%s4415 + $0x470] sm:$0xff]
  %v4559 = vld [vmem:[%s4415 + $0x478] sm:$0xff]
  %v4560 = vld [vmem:[%s4415 + $0x480] sm:$0xff]
  %v4561 = vld [vmem:[%s4415 + $0x488] sm:$0xff]
  %v4562 = vld [vmem:[%s4415 + $0x490] sm:$0xff]
  %v4563 = vld [vmem:[%s4415 + $0x498] sm:$0xff]
  %v4564 = vld [vmem:[%s4415 + $0x4a0] sm:$0xff]
  %v4565 = vld [vmem:[%s4415 + $0x4a8] sm:$0xff]
  %v4566 = vld [vmem:[%s4415 + $0x4b0] sm:$0xff]
  %v4567 = vld [vmem:[%s4415 + $0x4b8] sm:$0xff]
  %v4568 = vld [vmem:[%s4415 + $0x4c0] sm:$0xff]
  %v4569 = vld [vmem:[%s4415 + $0x4c8] sm:$0xff]
  %v4570 = vld [vmem:[%s4415 + $0x4d0] sm:$0xff]
  %v4571 = vld [vmem:[%s4415 + $0x4d8] sm:$0xff]
  %v4572 = vld [vmem:[%s4415 + $0x4e0] sm:$0xff]
  %v4573 = vld [vmem:[%s4415 + $0x4e8] sm:$0xff]
  %v4574 = vld [vmem:[%s4415 + $0x4f0] sm:$0xff]
  %v4575 = vld [vmem:[%s4415 + $0x4f8] sm:$0xff]
  %v4576 = vld [vmem:[%s4415 + $0x500] sm:$0xff]
  %v4577 = vld [vmem:[%s4415 + $0x508] sm:$0xff]
  %v4578 = vld [vmem:[%s4415 + $0x510] sm:$0xff]
  %v4579 = vld [vmem:[%s4415 + $0x518] sm:$0xff]
  %v4580 = vld [vmem:[%s4415 + $0x520] sm:$0xff]
  %v4581 = vld [vmem:[%s4415 + $0x528] sm:$0xff]
  %v4582 = vld [vmem:[%s4415 + $0x530] sm:$0xff]
  %v4583 = vld [vmem:[%s4415 + $0x538] sm:$0xff]
  %v4584 = vld [vmem:[%s4415 + $0x540] sm:$0xff]
  %v4585 = vld [vmem:[%s4415 + $0x548] sm:$0xff]
  %v4586 = vld [vmem:[%s4415 + $0x550] sm:$0xff]
  %v4587 = vld [vmem:[%s4415 + $0x558] sm:$0xff]
  %v4588 = vld [vmem:[%s4415 + $0x560] sm:$0xff]
  %v4589 = vld [vmem:[%s4415 + $0x568] sm:$0xff]
  %v4590 = vld [vmem:[%s4415 + $0x570] sm:$0xff]
  %v4591 = vld [vmem:[%s4415 + $0x578] sm:$0xff]
  %v4592 = vld [vmem:[%s4415 + $0x580] sm:$0xff]
  %v4593 = vld [vmem:[%s4415 + $0x588] sm:$0xff]
  %v4594 = vld [vmem:[%s4415 + $0x590] sm:$0xff]
  %v4595 = vld [vmem:[%s4415 + $0x598] sm:$0xff]
  %v4596 = vld [vmem:[%s4415 + $0x5a0] sm:$0xff]
  %v4597 = vld [vmem:[%s4415 + $0x5a8] sm:$0xff]
  %v4598 = vld [vmem:[%s4415 + $0x5b0] sm:$0xff]
  %v4599 = vld [vmem:[%s4415 + $0x5b8] sm:$0xff]
  %v4600 = vld [vmem:[%s4415 + $0x5c0] sm:$0xff]
  %v4601 = vld [vmem:[%s4415 + $0x5c8] sm:$0xff]
  %v4602 = vld [vmem:[%s4415 + $0x5d0] sm:$0xff]
  %v4603 = vld [vmem:[%s4415 + $0x5d8] sm:$0xff]
  %v4604 = vld [vmem:[%s4415 + $0x5e0] sm:$0xff]
  %v4605 = vld [vmem:[%s4415 + $0x5e8] sm:$0xff]
  %v4606 = vld [vmem:[%s4415 + $0x5f0] sm:$0xff]
  %v4607 = vld [vmem:[%s4415 + $0x5f8] sm:$0xff]
  %v4608 = vld [vmem:[%s4415 + $0x600] sm:$0xff]
  %v4609 = vld [vmem:[%s4415 + $0x608] sm:$0xff]
  %v4610 = vld [vmem:[%s4415 + $0x610] sm:$0xff]
  %v4611 = vld [vmem:[%s4415 + $0x618] sm:$0xff]
  %v4612 = vld [vmem:[%s4415 + $0x620] sm:$0xff]
  %v4613 = vld [vmem:[%s4415 + $0x628] sm:$0xff]
  %v4614 = vld [vmem:[%s4415 + $0x630] sm:$0xff]
  %v4615 = vld [vmem:[%s4415 + $0x638] sm:$0xff]
  %v4616 = vld [vmem:[%s4415 + $0x640] sm:$0xff]
  %v4617 = vld [vmem:[%s4415 + $0x648] sm:$0xff]
  %v4618 = vld [vmem:[%s4415 + $0x650] sm:$0xff]
  %v4619 = vld [vmem:[%s4415 + $0x658] sm:$0xff]
  %v4620 = vld [vmem:[%s4415 + $0x660] sm:$0xff]
  %v4621 = vld [vmem:[%s4415 + $0x668] sm:$0xff]
  %v4622 = vld [vmem:[%s4415 + $0x670] sm:$0xff]
  %v4623 = vld [vmem:[%s4415 + $0x678] sm:$0xff]
  %v4624 = vld [vmem:[%s4415 + $0x680] sm:$0xff]
  %v4625 = vld [vmem:[%s4415 + $0x688] sm:$0xff]
  %v4626 = vld [vmem:[%s4415 + $0x690] sm:$0xff]
  %v4627 = vld [vmem:[%s4415 + $0x698] sm:$0xff]
  %v4628 = vld [vmem:[%s4415 + $0x6a0] sm:$0xff]
  %v4629 = vld [vmem:[%s4415 + $0x6a8] sm:$0xff]
  %v4630 = vld [vmem:[%s4415 + $0x6b0] sm:$0xff]
  %v4631 = vld [vmem:[%s4415 + $0x6b8] sm:$0xff]
  %v4632 = vld [vmem:[%s4415 + $0x6c0] sm:$0xff]
  %v4633 = vld [vmem:[%s4415 + $0x6c8] sm:$0xff]
  %v4634 = vld [vmem:[%s4415 + $0x6d0] sm:$0xff]
  %v4635 = vld [vmem:[%s4415 + $0x6d8] sm:$0xff]
  %v4636 = vld [vmem:[%s4415 + $0x6e0] sm:$0xff]
  %v4637 = vld [vmem:[%s4415 + $0x6e8] sm:$0xff]
  %v4638 = vld [vmem:[%s4415 + $0x6f0] sm:$0xff]
  %v4639 = vld [vmem:[%s4415 + $0x6f8] sm:$0xff]
  %v4640 = vld [vmem:[%s4415 + $0x700] sm:$0xff]
  %v4641 = vld [vmem:[%s4415 + $0x708] sm:$0xff]
  %v4642 = vld [vmem:[%s4415 + $0x710] sm:$0xff]
  %v4643 = vld [vmem:[%s4415 + $0x718] sm:$0xff]
  %v4644 = vld [vmem:[%s4415 + $0x720] sm:$0xff]
  %v4645 = vld [vmem:[%s4415 + $0x728] sm:$0xff]
  %v4646 = vld [vmem:[%s4415 + $0x730] sm:$0xff]
  %v4647 = vld [vmem:[%s4415 + $0x738] sm:$0xff]
  %v4648 = vld [vmem:[%s4415 + $0x740] sm:$0xff]
  %v4649 = vld [vmem:[%s4415 + $0x748] sm:$0xff]
  %v4650 = vld [vmem:[%s4415 + $0x750] sm:$0xff]
  %v4651 = vld [vmem:[%s4415 + $0x758] sm:$0xff]
  %v4652 = vld [vmem:[%s4415 + $0x760] sm:$0xff]
  %v4653 = vld [vmem:[%s4415 + $0x768] sm:$0xff]
  %v4654 = vld [vmem:[%s4415 + $0x770] sm:$0xff]
  %v4655 = vld [vmem:[%s4415 + $0x778] sm:$0xff]
  %v4656 = vld [vmem:[%s4415 + $0x780] sm:$0xff]
  %v4657 = vld [vmem:[%s4415 + $0x788] sm:$0xff]
  %v4658 = vld [vmem:[%s4415 + $0x790] sm:$0xff]
  %v4659 = vld [vmem:[%s4415 + $0x798] sm:$0xff]
  %v4660 = vld [vmem:[%s4415 + $0x7a0] sm:$0xff]
  %v4661 = vld [vmem:[%s4415 + $0x7a8] sm:$0xff]
  %v4662 = vld [vmem:[%s4415 + $0x7b0] sm:$0xff]
  %v4663 = vld [vmem:[%s4415 + $0x7b8] sm:$0xff]
  %v4664 = vld [vmem:[%s4415 + $0x7c0] sm:$0xff]
  %v4665 = vld [vmem:[%s4415 + $0x7c8] sm:$0xff]
  %v4666 = vld [vmem:[%s4415 + $0x7d0] sm:$0xff]
  %v4667 = vld [vmem:[%s4415 + $0x7d8] sm:$0xff]
  %v4668 = vld [vmem:[%s4415 + $0x7e0] sm:$0xff]
  %v4669 = vld [vmem:[%s4415 + $0x7e8] sm:$0xff]
  %v4670 = vld [vmem:[%s4415 + $0x7f0] sm:$0xff]
  %v4671 = vld [vmem:[%s4415 + $0x7f8] sm:$0xff]
  %v4686 = vunpack.c.l.b16 %v4401
  %v4687 = vunpack.c.h.b16 %v4401
  %v4688 = vunpack.c.l.b16 %v4402
  %v4689 = vunpack.c.h.b16 %v4402
  %v4690 = vunpack.c.l.b16 %v4403
  %v4691 = vunpack.c.h.b16 %v4403
  %v4692 = vunpack.c.l.b16 %v4404
  %v4693 = vunpack.c.h.b16 %v4404
  %v4694 = vunpack.c.l.b16 %v4405
  %v4695 = vunpack.c.h.b16 %v4405
  %v4696 = vunpack.c.l.b16 %v4406
  %v4697 = vunpack.c.h.b16 %v4406
  %v4698 = vunpack.c.l.b16 %v4407
  %v4699 = vunpack.c.h.b16 %v4407
  %v4700 = vunpack.c.l.b16 %v4408
  %v4701 = vunpack.c.h.b16 %v4408
  %v4702 = vunpack.c.l.b16 %v4409
  %v4703 = vunpack.c.h.b16 %v4409
  %v4704 = vunpack.c.l.b16 %v4410
  %v4705 = vunpack.c.h.b16 %v4410
  %v4706 = vunpack.c.l.b16 %v4411
  %v4707 = vunpack.c.h.b16 %v4411
  %v4708 = vunpack.c.l.b16 %v4412
  %v4709 = vunpack.c.h.b16 %v4412
  %v4710 = vunpack.c.l.b16 %v4413
  %v4711 = vunpack.c.h.b16 %v4413
  %v4712 = vunpack.c.l.b16 %v4414
  %v4713 = vunpack.c.h.b16 %v4414
  %v4714 = vpack.c.b16 %v4690, %v4686
  %v4715 = vpack.c.b16 %v4691, %v4687
  %v4716 = vpack.c.b16 %v4692, %v4688
  %v4717 = vpack.c.b16 %v4693, %v4689
  %v4718 = vpack.c.b16 %v4698, %v4694
  %v4719 = vpack.c.b16 %v4699, %v4695
  %v4720 = vpack.c.b16 %v4700, %v4696
  %v4721 = vpack.c.b16 %v4701, %v4697
  %v4722 = vpack.c.b16 %v4706, %v4702
  %v4723 = vpack.c.b16 %v4707, %v4703
  %v4724 = vpack.c.b16 %v4708, %v4704
  %v4725 = vpack.c.b16 %v4709, %v4705
  %v4726 = vpack.c.b16 %v4710, %v4710
  %v4727 = vpack.c.b16 %v4711, %v4711
  %v4728 = vpack.c.b16 %v4712, %v4712
  %v4729 = vpack.c.b16 %v4713, %v4713
  %v5002 = vunpack.c.l.b16 %v4416
  %v5003 = vunpack.c.h.b16 %v4416
  %v5004 = vunpack.c.l.b16 %v4417
  %v5005 = vunpack.c.h.b16 %v4417
  %v5006 = vunpack.c.l.b16 %v4418
  %v5007 = vunpack.c.h.b16 %v4418
  %v5008 = vunpack.c.l.b16 %v4419
  %v5009 = vunpack.c.h.b16 %v4419
  %v5010 = vunpack.c.l.b16 %v4420
  %v5011 = vunpack.c.h.b16 %v4420
  %v5012 = vunpack.c.l.b16 %v4421
  %v5013 = vunpack.c.h.b16 %v4421
  %v5014 = vunpack.c.l.b16 %v4422
  %v5015 = vunpack.c.h.b16 %v4422
  %v5016 = vunpack.c.l.b16 %v4423
  %v5017 = vunpack.c.h.b16 %v4423
  %v5018 = vunpack.c.l.b16 %v4424
  %v5019 = vunpack.c.h.b16 %v4424
  %v5020 = vunpack.c.l.b16 %v4425
  %v5021 = vunpack.c.h.b16 %v4425
  %v5022 = vunpack.c.l.b16 %v4426
  %v5023 = vunpack.c.h.b16 %v4426
  %v5024 = vunpack.c.l.b16 %v4427
  %v5025 = vunpack.c.h.b16 %v4427
  %v5026 = vunpack.c.l.b16 %v4428
  %v5027 = vunpack.c.h.b16 %v4428
  %v5028 = vunpack.c.l.b16 %v4429
  %v5029 = vunpack.c.h.b16 %v4429
  %v5030 = vunpack.c.l.b16 %v4430
  %v5031 = vunpack.c.h.b16 %v4430
  %v5032 = vunpack.c.l.b16 %v4431
  %v5033 = vunpack.c.h.b16 %v4431
  %v5034 = vunpack.c.l.b16 %v4432
  %v5035 = vunpack.c.h.b16 %v4432
  %v5036 = vunpack.c.l.b16 %v4433
  %v5037 = vunpack.c.h.b16 %v4433
  %v5038 = vunpack.c.l.b16 %v4434
  %v5039 = vunpack.c.h.b16 %v4434
  %v5040 = vunpack.c.l.b16 %v4435
  %v5041 = vunpack.c.h.b16 %v4435
  %v5042 = vunpack.c.l.b16 %v4436
  %v5043 = vunpack.c.h.b16 %v4436
  %v5044 = vunpack.c.l.b16 %v4437
  %v5045 = vunpack.c.h.b16 %v4437
  %v5046 = vunpack.c.l.b16 %v4438
  %v5047 = vunpack.c.h.b16 %v4438
  %v5048 = vunpack.c.l.b16 %v4439
  %v5049 = vunpack.c.h.b16 %v4439
  %v5050 = vunpack.c.l.b16 %v4440
  %v5051 = vunpack.c.h.b16 %v4440
  %v5052 = vunpack.c.l.b16 %v4441
  %v5053 = vunpack.c.h.b16 %v4441
  %v5054 = vunpack.c.l.b16 %v4442
  %v5055 = vunpack.c.h.b16 %v4442
  %v5056 = vunpack.c.l.b16 %v4443
  %v5057 = vunpack.c.h.b16 %v4443
  %v5058 = vunpack.c.l.b16 %v4444
  %v5059 = vunpack.c.h.b16 %v4444
  %v5060 = vunpack.c.l.b16 %v4445
  %v5061 = vunpack.c.h.b16 %v4445
  %v5062 = vunpack.c.l.b16 %v4446
  %v5063 = vunpack.c.h.b16 %v4446
  %v5064 = vunpack.c.l.b16 %v4447
  %v5065 = vunpack.c.h.b16 %v4447
  %v5066 = vunpack.c.l.b16 %v4448
  %v5067 = vunpack.c.h.b16 %v4448
  %v5068 = vunpack.c.l.b16 %v4449
  %v5069 = vunpack.c.h.b16 %v4449
  %v5070 = vunpack.c.l.b16 %v4450
  %v5071 = vunpack.c.h.b16 %v4450
  %v5072 = vunpack.c.l.b16 %v4451
  %v5073 = vunpack.c.h.b16 %v4451
  %v5074 = vunpack.c.l.b16 %v4452
  %v5075 = vunpack.c.h.b16 %v4452
  %v5076 = vunpack.c.l.b16 %v4453
  %v5077 = vunpack.c.h.b16 %v4453
  %v5078 = vunpack.c.l.b16 %v4454
  %v5079 = vunpack.c.h.b16 %v4454
  %v5080 = vunpack.c.l.b16 %v4455
  %v5081 = vunpack.c.h.b16 %v4455
  %v5082 = vunpack.c.l.b16 %v4456
  %v5083 = vunpack.c.h.b16 %v4456
  %v5084 = vunpack.c.l.b16 %v4457
  %v5085 = vunpack.c.h.b16 %v4457
  %v5086 = vunpack.c.l.b16 %v4458
  %v5087 = vunpack.c.h.b16 %v4458
  %v5088 = vunpack.c.l.b16 %v4459
  %v5089 = vunpack.c.h.b16 %v4459
  %v5090 = vunpack.c.l.b16 %v4460
  %v5091 = vunpack.c.h.b16 %v4460
  %v5092 = vunpack.c.l.b16 %v4461
  %v5093 = vunpack.c.h.b16 %v4461
  %v5094 = vunpack.c.l.b16 %v4462
  %v5095 = vunpack.c.h.b16 %v4462
  %v5096 = vunpack.c.l.b16 %v4463
  %v5097 = vunpack.c.h.b16 %v4463
  %v5098 = vunpack.c.l.b16 %v4464
  %v5099 = vunpack.c.h.b16 %v4464
  %v5100 = vunpack.c.l.b16 %v4465
  %v5101 = vunpack.c.h.b16 %v4465
  %v5102 = vunpack.c.l.b16 %v4466
  %v5103 = vunpack.c.h.b16 %v4466
  %v5104 = vunpack.c.l.b16 %v4467
  %v5105 = vunpack.c.h.b16 %v4467
  %v5106 = vunpack.c.l.b16 %v4468
  %v5107 = vunpack.c.h.b16 %v4468
  %v5108 = vunpack.c.l.b16 %v4469
  %v5109 = vunpack.c.h.b16 %v4469
  %v5110 = vunpack.c.l.b16 %v4470
  %v5111 = vunpack.c.h.b16 %v4470
  %v5112 = vunpack.c.l.b16 %v4471
  %v5113 = vunpack.c.h.b16 %v4471
  %v5114 = vunpack.c.l.b16 %v4472
  %v5115 = vunpack.c.h.b16 %v4472
  %v5116 = vunpack.c.l.b16 %v4473
  %v5117 = vunpack.c.h.b16 %v4473
  %v5118 = vunpack.c.l.b16 %v4474
  %v5119 = vunpack.c.h.b16 %v4474
  %v5120 = vunpack.c.l.b16 %v4475
  %v5121 = vunpack.c.h.b16 %v4475
  %v5122 = vunpack.c.l.b16 %v4476
  %v5123 = vunpack.c.h.b16 %v4476
  %v5124 = vunpack.c.l.b16 %v4477
  %v5125 = vunpack.c.h.b16 %v4477
  %v5126 = vunpack.c.l.b16 %v4478
  %v5127 = vunpack.c.h.b16 %v4478
  %v5128 = vunpack.c.l.b16 %v4479
  %v5129 = vunpack.c.h.b16 %v4479
  %v5130 = vunpack.c.l.b16 %v4480
  %v5131 = vunpack.c.h.b16 %v4480
  %v5132 = vunpack.c.l.b16 %v4481
  %v5133 = vunpack.c.h.b16 %v4481
  %v5134 = vunpack.c.l.b16 %v4482
  %v5135 = vunpack.c.h.b16 %v4482
  %v5136 = vunpack.c.l.b16 %v4483
  %v5137 = vunpack.c.h.b16 %v4483
  %v5138 = vunpack.c.l.b16 %v4484
  %v5139 = vunpack.c.h.b16 %v4484
  %v5140 = vunpack.c.l.b16 %v4485
  %v5141 = vunpack.c.h.b16 %v4485
  %v5142 = vunpack.c.l.b16 %v4486
  %v5143 = vunpack.c.h.b16 %v4486
  %v5144 = vunpack.c.l.b16 %v4487
  %v5145 = vunpack.c.h.b16 %v4487
  %v5146 = vunpack.c.l.b16 %v4488
  %v5147 = vunpack.c.h.b16 %v4488
  %v5148 = vunpack.c.l.b16 %v4489
  %v5149 = vunpack.c.h.b16 %v4489
  %v5150 = vunpack.c.l.b16 %v4490
  %v5151 = vunpack.c.h.b16 %v4490
  %v5152 = vunpack.c.l.b16 %v4491
  %v5153 = vunpack.c.h.b16 %v4491
  %v5154 = vunpack.c.l.b16 %v4492
  %v5155 = vunpack.c.h.b16 %v4492
  %v5156 = vunpack.c.l.b16 %v4493
  %v5157 = vunpack.c.h.b16 %v4493
  %v5158 = vunpack.c.l.b16 %v4494
  %v5159 = vunpack.c.h.b16 %v4494
  %v5160 = vunpack.c.l.b16 %v4495
  %v5161 = vunpack.c.h.b16 %v4495
  %v5162 = vunpack.c.l.b16 %v4496
  %v5163 = vunpack.c.h.b16 %v4496
  %v5164 = vunpack.c.l.b16 %v4497
  %v5165 = vunpack.c.h.b16 %v4497
  %v5166 = vunpack.c.l.b16 %v4498
  %v5167 = vunpack.c.h.b16 %v4498
  %v5168 = vunpack.c.l.b16 %v4499
  %v5169 = vunpack.c.h.b16 %v4499
  %v5170 = vunpack.c.l.b16 %v4500
  %v5171 = vunpack.c.h.b16 %v4500
  %v5172 = vunpack.c.l.b16 %v4501
  %v5173 = vunpack.c.h.b16 %v4501
  %v5174 = vunpack.c.l.b16 %v4502
  %v5175 = vunpack.c.h.b16 %v4502
  %v5176 = vunpack.c.l.b16 %v4503
  %v5177 = vunpack.c.h.b16 %v4503
  %v5178 = vunpack.c.l.b16 %v4504
  %v5179 = vunpack.c.h.b16 %v4504
  %v5180 = vunpack.c.l.b16 %v4505
  %v5181 = vunpack.c.h.b16 %v4505
  %v5182 = vunpack.c.l.b16 %v4506
  %v5183 = vunpack.c.h.b16 %v4506
  %v5184 = vunpack.c.l.b16 %v4507
  %v5185 = vunpack.c.h.b16 %v4507
  %v5186 = vunpack.c.l.b16 %v4508
  %v5187 = vunpack.c.h.b16 %v4508
  %v5188 = vunpack.c.l.b16 %v4509
  %v5189 = vunpack.c.h.b16 %v4509
  %v5190 = vunpack.c.l.b16 %v4510
  %v5191 = vunpack.c.h.b16 %v4510
  %v5192 = vunpack.c.l.b16 %v4511
  %v5193 = vunpack.c.h.b16 %v4511
  %v5194 = vunpack.c.l.b16 %v4512
  %v5195 = vunpack.c.h.b16 %v4512
  %v5196 = vunpack.c.l.b16 %v4513
  %v5197 = vunpack.c.h.b16 %v4513
  %v5198 = vunpack.c.l.b16 %v4514
  %v5199 = vunpack.c.h.b16 %v4514
  %v5200 = vunpack.c.l.b16 %v4515
  %v5201 = vunpack.c.h.b16 %v4515
  %v5202 = vunpack.c.l.b16 %v4516
  %v5203 = vunpack.c.h.b16 %v4516
  %v5204 = vunpack.c.l.b16 %v4517
  %v5205 = vunpack.c.h.b16 %v4517
  %v5206 = vunpack.c.l.b16 %v4518
  %v5207 = vunpack.c.h.b16 %v4518
  %v5208 = vunpack.c.l.b16 %v4519
  %v5209 = vunpack.c.h.b16 %v4519
  %v5210 = vunpack.c.l.b16 %v4520
  %v5211 = vunpack.c.h.b16 %v4520
  %v5212 = vunpack.c.l.b16 %v4521
  %v5213 = vunpack.c.h.b16 %v4521
  %v5214 = vunpack.c.l.b16 %v4522
  %v5215 = vunpack.c.h.b16 %v4522
  %v5216 = vunpack.c.l.b16 %v4523
  %v5217 = vunpack.c.h.b16 %v4523
  %v5218 = vunpack.c.l.b16 %v4524
  %v5219 = vunpack.c.h.b16 %v4524
  %v5220 = vunpack.c.l.b16 %v4525
  %v5221 = vunpack.c.h.b16 %v4525
  %v5222 = vunpack.c.l.b16 %v4526
  %v5223 = vunpack.c.h.b16 %v4526
  %v5224 = vunpack.c.l.b16 %v4527
  %v5225 = vunpack.c.h.b16 %v4527
  %v5226 = vunpack.c.l.b16 %v4528
  %v5227 = vunpack.c.h.b16 %v4528
  %v5228 = vunpack.c.l.b16 %v4529
  %v5229 = vunpack.c.h.b16 %v4529
  %v5230 = vunpack.c.l.b16 %v4530
  %v5231 = vunpack.c.h.b16 %v4530
  %v5232 = vunpack.c.l.b16 %v4531
  %v5233 = vunpack.c.h.b16 %v4531
  %v5234 = vunpack.c.l.b16 %v4532
  %v5235 = vunpack.c.h.b16 %v4532
  %v5236 = vunpack.c.l.b16 %v4533
  %v5237 = vunpack.c.h.b16 %v4533
  %v5238 = vunpack.c.l.b16 %v4534
  %v5239 = vunpack.c.h.b16 %v4534
  %v5240 = vunpack.c.l.b16 %v4535
  %v5241 = vunpack.c.h.b16 %v4535
  %v5242 = vunpack.c.l.b16 %v4536
  %v5243 = vunpack.c.h.b16 %v4536
  %v5244 = vunpack.c.l.b16 %v4537
  %v5245 = vunpack.c.h.b16 %v4537
  %v5246 = vunpack.c.l.b16 %v4538
  %v5247 = vunpack.c.h.b16 %v4538
  %v5248 = vunpack.c.l.b16 %v4539
  %v5249 = vunpack.c.h.b16 %v4539
  %v5250 = vunpack.c.l.b16 %v4540
  %v5251 = vunpack.c.h.b16 %v4540
  %v5252 = vunpack.c.l.b16 %v4541
  %v5253 = vunpack.c.h.b16 %v4541
  %v5254 = vunpack.c.l.b16 %v4542
  %v5255 = vunpack.c.h.b16 %v4542
  %v5256 = vunpack.c.l.b16 %v4543
  %v5257 = vunpack.c.h.b16 %v4543
  %v5258 = vunpack.c.l.b16 %v4544
  %v5259 = vunpack.c.h.b16 %v4544
  %v5260 = vunpack.c.l.b16 %v4545
  %v5261 = vunpack.c.h.b16 %v4545
  %v5262 = vunpack.c.l.b16 %v4546
  %v5263 = vunpack.c.h.b16 %v4546
  %v5264 = vunpack.c.l.b16 %v4547
  %v5265 = vunpack.c.h.b16 %v4547
  %v5266 = vunpack.c.l.b16 %v4548
  %v5267 = vunpack.c.h.b16 %v4548
  %v5268 = vunpack.c.l.b16 %v4549
  %v5269 = vunpack.c.h.b16 %v4549
  %v5270 = vunpack.c.l.b16 %v4550
  %v5271 = vunpack.c.h.b16 %v4550
  %v5272 = vunpack.c.l.b16 %v4551
  %v5273 = vunpack.c.h.b16 %v4551
  %v5274 = vunpack.c.l.b16 %v4552
  %v5275 = vunpack.c.h.b16 %v4552
  %v5276 = vunpack.c.l.b16 %v4553
  %v5277 = vunpack.c.h.b16 %v4553
  %v5278 = vunpack.c.l.b16 %v4554
  %v5279 = vunpack.c.h.b16 %v4554
  %v5280 = vunpack.c.l.b16 %v4555
  %v5281 = vunpack.c.h.b16 %v4555
  %v5282 = vunpack.c.l.b16 %v4556
  %v5283 = vunpack.c.h.b16 %v4556
  %v5284 = vunpack.c.l.b16 %v4557
  %v5285 = vunpack.c.h.b16 %v4557
  %v5286 = vunpack.c.l.b16 %v4558
  %v5287 = vunpack.c.h.b16 %v4558
  %v5288 = vunpack.c.l.b16 %v4559
  %v5289 = vunpack.c.h.b16 %v4559
  %v5290 = vunpack.c.l.b16 %v4560
  %v5291 = vunpack.c.h.b16 %v4560
  %v5292 = vunpack.c.l.b16 %v4561
  %v5293 = vunpack.c.h.b16 %v4561
  %v5294 = vunpack.c.l.b16 %v4562
  %v5295 = vunpack.c.h.b16 %v4562
  %v5296 = vunpack.c.l.b16 %v4563
  %v5297 = vunpack.c.h.b16 %v4563
  %v5298 = vunpack.c.l.b16 %v4564
  %v5299 = vunpack.c.h.b16 %v4564
  %v5300 = vunpack.c.l.b16 %v4565
  %v5301 = vunpack.c.h.b16 %v4565
  %v5302 = vunpack.c.l.b16 %v4566
  %v5303 = vunpack.c.h.b16 %v4566
  %v5304 = vunpack.c.l.b16 %v4567
  %v5305 = vunpack.c.h.b16 %v4567
  %v5306 = vunpack.c.l.b16 %v4568
  %v5307 = vunpack.c.h.b16 %v4568
  %v5308 = vunpack.c.l.b16 %v4569
  %v5309 = vunpack.c.h.b16 %v4569
  %v5310 = vunpack.c.l.b16 %v4570
  %v5311 = vunpack.c.h.b16 %v4570
  %v5312 = vunpack.c.l.b16 %v4571
  %v5313 = vunpack.c.h.b16 %v4571
  %v5314 = vunpack.c.l.b16 %v4572
  %v5315 = vunpack.c.h.b16 %v4572
  %v5316 = vunpack.c.l.b16 %v4573
  %v5317 = vunpack.c.h.b16 %v4573
  %v5318 = vunpack.c.l.b16 %v4574
  %v5319 = vunpack.c.h.b16 %v4574
  %v5320 = vunpack.c.l.b16 %v4575
  %v5321 = vunpack.c.h.b16 %v4575
  %v5322 = vunpack.c.l.b16 %v4576
  %v5323 = vunpack.c.h.b16 %v4576
  %v5324 = vunpack.c.l.b16 %v4577
  %v5325 = vunpack.c.h.b16 %v4577
  %v5326 = vunpack.c.l.b16 %v4578
  %v5327 = vunpack.c.h.b16 %v4578
  %v5328 = vunpack.c.l.b16 %v4579
  %v5329 = vunpack.c.h.b16 %v4579
  %v5330 = vunpack.c.l.b16 %v4580
  %v5331 = vunpack.c.h.b16 %v4580
  %v5332 = vunpack.c.l.b16 %v4581
  %v5333 = vunpack.c.h.b16 %v4581
  %v5334 = vunpack.c.l.b16 %v4582
  %v5335 = vunpack.c.h.b16 %v4582
  %v5336 = vunpack.c.l.b16 %v4583
  %v5337 = vunpack.c.h.b16 %v4583
  %v5338 = vunpack.c.l.b16 %v4584
  %v5339 = vunpack.c.h.b16 %v4584
  %v5340 = vunpack.c.l.b16 %v4585
  %v5341 = vunpack.c.h.b16 %v4585
  %v5342 = vunpack.c.l.b16 %v4586
  %v5343 = vunpack.c.h.b16 %v4586
  %v5344 = vunpack.c.l.b16 %v4587
  %v5345 = vunpack.c.h.b16 %v4587
  %v5346 = vunpack.c.l.b16 %v4588
  %v5347 = vunpack.c.h.b16 %v4588
  %v5348 = vunpack.c.l.b16 %v4589
  %v5349 = vunpack.c.h.b16 %v4589
  %v5350 = vunpack.c.l.b16 %v4590
  %v5351 = vunpack.c.h.b16 %v4590
  %v5352 = vunpack.c.l.b16 %v4591
  %v5353 = vunpack.c.h.b16 %v4591
  %v5354 = vunpack.c.l.b16 %v4592
  %v5355 = vunpack.c.h.b16 %v4592
  %v5356 = vunpack.c.l.b16 %v4593
  %v5357 = vunpack.c.h.b16 %v4593
  %v5358 = vunpack.c.l.b16 %v4594
  %v5359 = vunpack.c.h.b16 %v4594
  %v5360 = vunpack.c.l.b16 %v4595
  %v5361 = vunpack.c.h.b16 %v4595
  %v5362 = vunpack.c.l.b16 %v4596
  %v5363 = vunpack.c.h.b16 %v4596
  %v5364 = vunpack.c.l.b16 %v4597
  %v5365 = vunpack.c.h.b16 %v4597
  %v5366 = vunpack.c.l.b16 %v4598
  %v5367 = vunpack.c.h.b16 %v4598
  %v5368 = vunpack.c.l.b16 %v4599
  %v5369 = vunpack.c.h.b16 %v4599
  %v5370 = vunpack.c.l.b16 %v4600
  %v5371 = vunpack.c.h.b16 %v4600
  %v5372 = vunpack.c.l.b16 %v4601
  %v5373 = vunpack.c.h.b16 %v4601
  %v5374 = vunpack.c.l.b16 %v4602
  %v5375 = vunpack.c.h.b16 %v4602
  %v5376 = vunpack.c.l.b16 %v4603
  %v5377 = vunpack.c.h.b16 %v4603
  %v5378 = vunpack.c.l.b16 %v4604
  %v5379 = vunpack.c.h.b16 %v4604
  %v5380 = vunpack.c.l.b16 %v4605
  %v5381 = vunpack.c.h.b16 %v4605
  %v5382 = vunpack.c.l.b16 %v4606
  %v5383 = vunpack.c.h.b16 %v4606
  %v5384 = vunpack.c.l.b16 %v4607
  %v5385 = vunpack.c.h.b16 %v4607
  %v5386 = vunpack.c.l.b16 %v4608
  %v5387 = vunpack.c.h.b16 %v4608
  %v5388 = vunpack.c.l.b16 %v4609
  %v5389 = vunpack.c.h.b16 %v4609
  %v5390 = vunpack.c.l.b16 %v4610
  %v5391 = vunpack.c.h.b16 %v4610
  %v5392 = vunpack.c.l.b16 %v4611
  %v5393 = vunpack.c.h.b16 %v4611
  %v5394 = vunpack.c.l.b16 %v4612
  %v5395 = vunpack.c.h.b16 %v4612
  %v5396 = vunpack.c.l.b16 %v4613
  %v5397 = vunpack.c.h.b16 %v4613
  %v5398 = vunpack.c.l.b16 %v4614
  %v5399 = vunpack.c.h.b16 %v4614
  %v5400 = vunpack.c.l.b16 %v4615
  %v5401 = vunpack.c.h.b16 %v4615
  %v5402 = vunpack.c.l.b16 %v4616
  %v5403 = vunpack.c.h.b16 %v4616
  %v5404 = vunpack.c.l.b16 %v4617
  %v5405 = vunpack.c.h.b16 %v4617
  %v5406 = vunpack.c.l.b16 %v4618
  %v5407 = vunpack.c.h.b16 %v4618
  %v5408 = vunpack.c.l.b16 %v4619
  %v5409 = vunpack.c.h.b16 %v4619
  %v5410 = vunpack.c.l.b16 %v4620
  %v5411 = vunpack.c.h.b16 %v4620
  %v5412 = vunpack.c.l.b16 %v4621
  %v5413 = vunpack.c.h.b16 %v4621
  %v5414 = vunpack.c.l.b16 %v4622
  %v5415 = vunpack.c.h.b16 %v4622
  %v5416 = vunpack.c.l.b16 %v4623
  %v5417 = vunpack.c.h.b16 %v4623
  %v5418 = vunpack.c.l.b16 %v4624
  %v5419 = vunpack.c.h.b16 %v4624
  %v5420 = vunpack.c.l.b16 %v4625
  %v5421 = vunpack.c.h.b16 %v4625
  %v5422 = vunpack.c.l.b16 %v4626
  %v5423 = vunpack.c.h.b16 %v4626
  %v5424 = vunpack.c.l.b16 %v4627
  %v5425 = vunpack.c.h.b16 %v4627
  %v5426 = vunpack.c.l.b16 %v4628
  %v5427 = vunpack.c.h.b16 %v4628
  %v5428 = vunpack.c.l.b16 %v4629
  %v5429 = vunpack.c.h.b16 %v4629
  %v5430 = vunpack.c.l.b16 %v4630
  %v5431 = vunpack.c.h.b16 %v4630
  %v5432 = vunpack.c.l.b16 %v4631
  %v5433 = vunpack.c.h.b16 %v4631
  %v5434 = vunpack.c.l.b16 %v4632
  %v5435 = vunpack.c.h.b16 %v4632
  %v5436 = vunpack.c.l.b16 %v4633
  %v5437 = vunpack.c.h.b16 %v4633
  %v5438 = vunpack.c.l.b16 %v4634
  %v5439 = vunpack.c.h.b16 %v4634
  %v5440 = vunpack.c.l.b16 %v4635
  %v5441 = vunpack.c.h.b16 %v4635
  %v5442 = vunpack.c.l.b16 %v4636
  %v5443 = vunpack.c.h.b16 %v4636
  %v5444 = vunpack.c.l.b16 %v4637
  %v5445 = vunpack.c.h.b16 %v4637
  %v5446 = vunpack.c.l.b16 %v4638
  %v5447 = vunpack.c.h.b16 %v4638
  %v5448 = vunpack.c.l.b16 %v4639
  %v5449 = vunpack.c.h.b16 %v4639
  %v5450 = vunpack.c.l.b16 %v4640
  %v5451 = vunpack.c.h.b16 %v4640
  %v5452 = vunpack.c.l.b16 %v4641
  %v5453 = vunpack.c.h.b16 %v4641
  %v5454 = vunpack.c.l.b16 %v4642
  %v5455 = vunpack.c.h.b16 %v4642
  %v5456 = vunpack.c.l.b16 %v4643
  %v5457 = vunpack.c.h.b16 %v4643
  %v5458 = vunpack.c.l.b16 %v4644
  %v5459 = vunpack.c.h.b16 %v4644
  %v5460 = vunpack.c.l.b16 %v4645
  %v5461 = vunpack.c.h.b16 %v4645
  %v5462 = vunpack.c.l.b16 %v4646
  %v5463 = vunpack.c.h.b16 %v4646
  %v5464 = vunpack.c.l.b16 %v4647
  %v5465 = vunpack.c.h.b16 %v4647
  %v5466 = vunpack.c.l.b16 %v4648
  %v5467 = vunpack.c.h.b16 %v4648
  %v5468 = vunpack.c.l.b16 %v4649
  %v5469 = vunpack.c.h.b16 %v4649
  %v5470 = vunpack.c.l.b16 %v4650
  %v5471 = vunpack.c.h.b16 %v4650
  %v5472 = vunpack.c.l.b16 %v4651
  %v5473 = vunpack.c.h.b16 %v4651
  %v5474 = vunpack.c.l.b16 %v4652
  %v5475 = vunpack.c.h.b16 %v4652
  %v5476 = vunpack.c.l.b16 %v4653
  %v5477 = vunpack.c.h.b16 %v4653
  %v5478 = vunpack.c.l.b16 %v4654
  %v5479 = vunpack.c.h.b16 %v4654
  %v5480 = vunpack.c.l.b16 %v4655
  %v5481 = vunpack.c.h.b16 %v4655
  %v5482 = vunpack.c.l.b16 %v4656
  %v5483 = vunpack.c.h.b16 %v4656
  %v5484 = vunpack.c.l.b16 %v4657
  %v5485 = vunpack.c.h.b16 %v4657
  %v5486 = vunpack.c.l.b16 %v4658
  %v5487 = vunpack.c.h.b16 %v4658
  %v5488 = vunpack.c.l.b16 %v4659
  %v5489 = vunpack.c.h.b16 %v4659
  %v5490 = vunpack.c.l.b16 %v4660
  %v5491 = vunpack.c.h.b16 %v4660
  %v5492 = vunpack.c.l.b16 %v4661
  %v5493 = vunpack.c.h.b16 %v4661
  %v5494 = vunpack.c.l.b16 %v4662
  %v5495 = vunpack.c.h.b16 %v4662
  %v5496 = vunpack.c.l.b16 %v4663
  %v5497 = vunpack.c.h.b16 %v4663
  %v5498 = vunpack.c.l.b16 %v4664
  %v5499 = vunpack.c.h.b16 %v4664
  %v5500 = vunpack.c.l.b16 %v4665
  %v5501 = vunpack.c.h.b16 %v4665
  %v5502 = vunpack.c.l.b16 %v4666
  %v5503 = vunpack.c.h.b16 %v4666
  %v5504 = vunpack.c.l.b16 %v4667
  %v5505 = vunpack.c.h.b16 %v4667
  %v5506 = vunpack.c.l.b16 %v4668
  %v5507 = vunpack.c.h.b16 %v4668
  %v5508 = vunpack.c.l.b16 %v4669
  %v5509 = vunpack.c.h.b16 %v4669
  %v5510 = vunpack.c.l.b16 %v4670
  %v5511 = vunpack.c.h.b16 %v4670
  %v5512 = vunpack.c.l.b16 %v4671
  %v5513 = vunpack.c.h.b16 %v4671
  %v5514 = vpack.c.b16 %v5010, %v5002
  %v5515 = vpack.c.b16 %v5011, %v5003
  %v5516 = vpack.c.b16 %v5012, %v5004
  %v5517 = vpack.c.b16 %v5013, %v5005
  %v5518 = vpack.c.b16 %v5014, %v5006
  %v5519 = vpack.c.b16 %v5015, %v5007
  %v5520 = vpack.c.b16 %v5016, %v5008
  %v5521 = vpack.c.b16 %v5017, %v5009
  %v5522 = vpack.c.b16 %v5026, %v5018
  %v5523 = vpack.c.b16 %v5027, %v5019
  %v5524 = vpack.c.b16 %v5028, %v5020
  %v5525 = vpack.c.b16 %v5029, %v5021
  %v5526 = vpack.c.b16 %v5030, %v5022
  %v5527 = vpack.c.b16 %v5031, %v5023
  %v5528 = vpack.c.b16 %v5032, %v5024
  %v5529 = vpack.c.b16 %v5033, %v5025
  %v5530 = vpack.c.b16 %v5042, %v5034
  %v5531 = vpack.c.b16 %v5043, %v5035
  %v5532 = vpack.c.b16 %v5044, %v5036
  %v5533 = vpack.c.b16 %v5045, %v5037
  %v5534 = vpack.c.b16 %v5046, %v5038
  %v5535 = vpack.c.b16 %v5047, %v5039
  %v5536 = vpack.c.b16 %v5048, %v5040
  %v5537 = vpack.c.b16 %v5049, %v5041
  %v5538 = vpack.c.b16 %v5058, %v5050
  %v5539 = vpack.c.b16 %v5059, %v5051
  %v5540 = vpack.c.b16 %v5060, %v5052
  %v5541 = vpack.c.b16 %v5061, %v5053
  %v5542 = vpack.c.b16 %v5062, %v5054
  %v5543 = vpack.c.b16 %v5063, %v5055
  %v5544 = vpack.c.b16 %v5064, %v5056
  %v5545 = vpack.c.b16 %v5065, %v5057
  %v5546 = vpack.c.b16 %v5074, %v5066
  %v5547 = vpack.c.b16 %v5075, %v5067
  %v5548 = vpack.c.b16 %v5076, %v5068
  %v5549 = vpack.c.b16 %v5077, %v5069
  %v5550 = vpack.c.b16 %v5078, %v5070
  %v5551 = vpack.c.b16 %v5079, %v5071
  %v5552 = vpack.c.b16 %v5080, %v5072
  %v5553 = vpack.c.b16 %v5081, %v5073
  %v5554 = vpack.c.b16 %v5090, %v5082
  %v5555 = vpack.c.b16 %v5091, %v5083
  %v5556 = vpack.c.b16 %v5092, %v5084
  %v5557 = vpack.c.b16 %v5093, %v5085
  %v5558 = vpack.c.b16 %v5094, %v5086
  %v5559 = vpack.c.b16 %v5095, %v5087
  %v5560 = vpack.c.b16 %v5096, %v5088
  %v5561 = vpack.c.b16 %v5097, %v5089
  %v5562 = vpack.c.b16 %v5106, %v5098
  %v5563 = vpack.c.b16 %v5107, %v5099
  %v5564 = vpack.c.b16 %v5108, %v5100
  %v5565 = vpack.c.b16 %v5109, %v5101
  %v5566 = vpack.c.b16 %v5110, %v5102
  %v5567 = vpack.c.b16 %v5111, %v5103
  %v5568 = vpack.c.b16 %v5112, %v5104
  %v5569 = vpack.c.b16 %v5113, %v5105
  %v5570 = vpack.c.b16 %v5122, %v5114
  %v5571 = vpack.c.b16 %v5123, %v5115
  %v5572 = vpack.c.b16 %v5124, %v5116
  %v5573 = vpack.c.b16 %v5125, %v5117
  %v5574 = vpack.c.b16 %v5126, %v5118
  %v5575 = vpack.c.b16 %v5127, %v5119
  %v5576 = vpack.c.b16 %v5128, %v5120
  %v5577 = vpack.c.b16 %v5129, %v5121
  %v5578 = vpack.c.b16 %v5138, %v5130
  %v5579 = vpack.c.b16 %v5139, %v5131
  %v5580 = vpack.c.b16 %v5140, %v5132
  %v5581 = vpack.c.b16 %v5141, %v5133
  %v5582 = vpack.c.b16 %v5142, %v5134
  %v5583 = vpack.c.b16 %v5143, %v5135
  %v5584 = vpack.c.b16 %v5144, %v5136
  %v5585 = vpack.c.b16 %v5145, %v5137
  %v5586 = vpack.c.b16 %v5154, %v5146
  %v5587 = vpack.c.b16 %v5155, %v5147
  %v5588 = vpack.c.b16 %v5156, %v5148
  %v5589 = vpack.c.b16 %v5157, %v5149
  %v5590 = vpack.c.b16 %v5158, %v5150
  %v5591 = vpack.c.b16 %v5159, %v5151
  %v5592 = vpack.c.b16 %v5160, %v5152
  %v5593 = vpack.c.b16 %v5161, %v5153
  %v5594 = vpack.c.b16 %v5170, %v5162
  %v5595 = vpack.c.b16 %v5171, %v5163
  %v5596 = vpack.c.b16 %v5172, %v5164
  %v5597 = vpack.c.b16 %v5173, %v5165
  %v5598 = vpack.c.b16 %v5174, %v5166
  %v5599 = vpack.c.b16 %v5175, %v5167
  %v5600 = vpack.c.b16 %v5176, %v5168
  %v5601 = vpack.c.b16 %v5177, %v5169
  %v5602 = vpack.c.b16 %v5186, %v5178
  %v5603 = vpack.c.b16 %v5187, %v5179
  %v5604 = vpack.c.b16 %v5188, %v5180
  %v5605 = vpack.c.b16 %v5189, %v5181
  %v5606 = vpack.c.b16 %v5190, %v5182
  %v5607 = vpack.c.b16 %v5191, %v5183
  %v5608 = vpack.c.b16 %v5192, %v5184
  %v5609 = vpack.c.b16 %v5193, %v5185
  %v5610 = vpack.c.b16 %v5202, %v5194
  %v5611 = vpack.c.b16 %v5203, %v5195
  %v5612 = vpack.c.b16 %v5204, %v5196
  %v5613 = vpack.c.b16 %v5205, %v5197
  %v5614 = vpack.c.b16 %v5206, %v5198
  %v5615 = vpack.c.b16 %v5207, %v5199
  %v5616 = vpack.c.b16 %v5208, %v5200
  %v5617 = vpack.c.b16 %v5209, %v5201
  %v5618 = vpack.c.b16 %v5218, %v5210
  %v5619 = vpack.c.b16 %v5219, %v5211
  %v5620 = vpack.c.b16 %v5220, %v5212
  %v5621 = vpack.c.b16 %v5221, %v5213
  %v5622 = vpack.c.b16 %v5222, %v5214
  %v5623 = vpack.c.b16 %v5223, %v5215
  %v5624 = vpack.c.b16 %v5224, %v5216
  %v5625 = vpack.c.b16 %v5225, %v5217
  %v5626 = vpack.c.b16 %v5234, %v5226
  %v5627 = vpack.c.b16 %v5235, %v5227
  %v5628 = vpack.c.b16 %v5236, %v5228
  %v5629 = vpack.c.b16 %v5237, %v5229
  %v5630 = vpack.c.b16 %v5238, %v5230
  %v5631 = vpack.c.b16 %v5239, %v5231
  %v5632 = vpack.c.b16 %v5240, %v5232
  %v5633 = vpack.c.b16 %v5241, %v5233
  %v5634 = vpack.c.b16 %v5250, %v5242
  %v5635 = vpack.c.b16 %v5251, %v5243
  %v5636 = vpack.c.b16 %v5252, %v5244
  %v5637 = vpack.c.b16 %v5253, %v5245
  %v5638 = vpack.c.b16 %v5254, %v5246
  %v5639 = vpack.c.b16 %v5255, %v5247
  %v5640 = vpack.c.b16 %v5256, %v5248
  %v5641 = vpack.c.b16 %v5257, %v5249
  %v5642 = vpack.c.b16 %v5266, %v5258
  %v5643 = vpack.c.b16 %v5267, %v5259
  %v5644 = vpack.c.b16 %v5268, %v5260
  %v5645 = vpack.c.b16 %v5269, %v5261
  %v5646 = vpack.c.b16 %v5270, %v5262
  %v5647 = vpack.c.b16 %v5271, %v5263
  %v5648 = vpack.c.b16 %v5272, %v5264
  %v5649 = vpack.c.b16 %v5273, %v5265
  %v5650 = vpack.c.b16 %v5282, %v5274
  %v5651 = vpack.c.b16 %v5283, %v5275
  %v5652 = vpack.c.b16 %v5284, %v5276
  %v5653 = vpack.c.b16 %v5285, %v5277
  %v5654 = vpack.c.b16 %v5286, %v5278
  %v5655 = vpack.c.b16 %v5287, %v5279
  %v5656 = vpack.c.b16 %v5288, %v5280
  %v5657 = vpack.c.b16 %v5289, %v5281
  %v5658 = vpack.c.b16 %v5298, %v5290
  %v5659 = vpack.c.b16 %v5299, %v5291
  %v5660 = vpack.c.b16 %v5300, %v5292
  %v5661 = vpack.c.b16 %v5301, %v5293
  %v5662 = vpack.c.b16 %v5302, %v5294
  %v5663 = vpack.c.b16 %v5303, %v5295
  %v5664 = vpack.c.b16 %v5304, %v5296
  %v5665 = vpack.c.b16 %v5305, %v5297
  %v5666 = vpack.c.b16 %v5314, %v5306
  %v5667 = vpack.c.b16 %v5315, %v5307
  %v5668 = vpack.c.b16 %v5316, %v5308
  %v5669 = vpack.c.b16 %v5317, %v5309
  %v5670 = vpack.c.b16 %v5318, %v5310
  %v5671 = vpack.c.b16 %v5319, %v5311
  %v5672 = vpack.c.b16 %v5320, %v5312
  %v5673 = vpack.c.b16 %v5321, %v5313
  %v5674 = vpack.c.b16 %v5330, %v5322
  %v5675 = vpack.c.b16 %v5331, %v5323
  %v5676 = vpack.c.b16 %v5332, %v5324
  %v5677 = vpack.c.b16 %v5333, %v5325
  %v5678 = vpack.c.b16 %v5334, %v5326
  %v5679 = vpack.c.b16 %v5335, %v5327
  %v5680 = vpack.c.b16 %v5336, %v5328
  %v5681 = vpack.c.b16 %v5337, %v5329
  %v5682 = vpack.c.b16 %v5346, %v5338
  %v5683 = vpack.c.b16 %v5347, %v5339
  %v5684 = vpack.c.b16 %v5348, %v5340
  %v5685 = vpack.c.b16 %v5349, %v5341
  %v5686 = vpack.c.b16 %v5350, %v5342
  %v5687 = vpack.c.b16 %v5351, %v5343
  %v5688 = vpack.c.b16 %v5352, %v5344
  %v5689 = vpack.c.b16 %v5353, %v5345
  %v5690 = vpack.c.b16 %v5362, %v5354
  %v5691 = vpack.c.b16 %v5363, %v5355
  %v5692 = vpack.c.b16 %v5364, %v5356
  %v5693 = vpack.c.b16 %v5365, %v5357
  %v5694 = vpack.c.b16 %v5366, %v5358
  %v5695 = vpack.c.b16 %v5367, %v5359
  %v5696 = vpack.c.b16 %v5368, %v5360
  %v5697 = vpack.c.b16 %v5369, %v5361
  %v5698 = vpack.c.b16 %v5378, %v5370
  %v5699 = vpack.c.b16 %v5379, %v5371
  %v5700 = vpack.c.b16 %v5380, %v5372
  %v5701 = vpack.c.b16 %v5381, %v5373
  %v5702 = vpack.c.b16 %v5382, %v5374
  %v5703 = vpack.c.b16 %v5383, %v5375
  %v5704 = vpack.c.b16 %v5384, %v5376
  %v5705 = vpack.c.b16 %v5385, %v5377
  %v5706 = vpack.c.b16 %v5394, %v5386
  %v5707 = vpack.c.b16 %v5395, %v5387
  %v5708 = vpack.c.b16 %v5396, %v5388
  %v5709 = vpack.c.b16 %v5397, %v5389
  %v5710 = vpack.c.b16 %v5398, %v5390
  %v5711 = vpack.c.b16 %v5399, %v5391
  %v5712 = vpack.c.b16 %v5400, %v5392
  %v5713 = vpack.c.b16 %v5401, %v5393
  %v5714 = vpack.c.b16 %v5410, %v5402
  %v5715 = vpack.c.b16 %v5411, %v5403
  %v5716 = vpack.c.b16 %v5412, %v5404
  %v5717 = vpack.c.b16 %v5413, %v5405
  %v5718 = vpack.c.b16 %v5414, %v5406
  %v5719 = vpack.c.b16 %v5415, %v5407
  %v5720 = vpack.c.b16 %v5416, %v5408
  %v5721 = vpack.c.b16 %v5417, %v5409
  %v5722 = vpack.c.b16 %v5426, %v5418
  %v5723 = vpack.c.b16 %v5427, %v5419
  %v5724 = vpack.c.b16 %v5428, %v5420
  %v5725 = vpack.c.b16 %v5429, %v5421
  %v5726 = vpack.c.b16 %v5430, %v5422
  %v5727 = vpack.c.b16 %v5431, %v5423
  %v5728 = vpack.c.b16 %v5432, %v5424
  %v5729 = vpack.c.b16 %v5433, %v5425
  %v5730 = vpack.c.b16 %v5442, %v5434
  %v5731 = vpack.c.b16 %v5443, %v5435
  %v5732 = vpack.c.b16 %v5444, %v5436
  %v5733 = vpack.c.b16 %v5445, %v5437
  %v5734 = vpack.c.b16 %v5446, %v5438
  %v5735 = vpack.c.b16 %v5447, %v5439
  %v5736 = vpack.c.b16 %v5448, %v5440
  %v5737 = vpack.c.b16 %v5449, %v5441
  %v5738 = vpack.c.b16 %v5458, %v5450
  %v5739 = vpack.c.b16 %v5459, %v5451
  %v5740 = vpack.c.b16 %v5460, %v5452
  %v5741 = vpack.c.b16 %v5461, %v5453
  %v5742 = vpack.c.b16 %v5462, %v5454
  %v5743 = vpack.c.b16 %v5463, %v5455
  %v5744 = vpack.c.b16 %v5464, %v5456
  %v5745 = vpack.c.b16 %v5465, %v5457
  %v5746 = vpack.c.b16 %v5474, %v5466
  %v5747 = vpack.c.b16 %v5475, %v5467
  %v5748 = vpack.c.b16 %v5476, %v5468
  %v5749 = vpack.c.b16 %v5477, %v5469
  %v5750 = vpack.c.b16 %v5478, %v5470
  %v5751 = vpack.c.b16 %v5479, %v5471
  %v5752 = vpack.c.b16 %v5480, %v5472
  %v5753 = vpack.c.b16 %v5481, %v5473
  %v5754 = vpack.c.b16 %v5490, %v5482
  %v5755 = vpack.c.b16 %v5491, %v5483
  %v5756 = vpack.c.b16 %v5492, %v5484
  %v5757 = vpack.c.b16 %v5493, %v5485
  %v5758 = vpack.c.b16 %v5494, %v5486
  %v5759 = vpack.c.b16 %v5495, %v5487
  %v5760 = vpack.c.b16 %v5496, %v5488
  %v5761 = vpack.c.b16 %v5497, %v5489
  %v5762 = vpack.c.b16 %v5506, %v5498
  %v5763 = vpack.c.b16 %v5507, %v5499
  %v5764 = vpack.c.b16 %v5508, %v5500
  %v5765 = vpack.c.b16 %v5509, %v5501
  %v5766 = vpack.c.b16 %v5510, %v5502
  %v5767 = vpack.c.b16 %v5511, %v5503
  %v5768 = vpack.c.b16 %v5512, %v5504
  %v5769 = vpack.c.b16 %v5513, %v5505
  %6026 = vmatprep.subr.bf16.mxu0 %v5515
  %6027 = vmatpush1.bf16.msra.mxu0 %v5514
  %6028 = vmatprep.subr.bf16.mxu0 %v5523
  %6029 = vmatpush1.bf16.msra.mxu0 %v5522
  %6030 = vmatprep.subr.bf16.mxu0 %v5531
  %6031 = vmatpush1.bf16.msra.mxu0 %v5530
  %6032 = vmatprep.subr.bf16.mxu0 %v5539
  %6033 = vmatpush1.bf16.msra.mxu0 %v5538
  %6034 = vmatprep.subr.bf16.mxu0 %v5547
  %6035 = vmatpush1.bf16.msra.mxu0 %v5546
  %6036 = vmatprep.subr.bf16.mxu0 %v5555
  %6037 = vmatpush1.bf16.msra.mxu0 %v5554
  %6038 = vmatprep.subr.bf16.mxu0 %v5563
  %6039 = vmatpush1.bf16.msra.mxu0 %v5562
  %6040 = vmatprep.subr.bf16.mxu0 %v5571
  %6041 = vmatpush1.bf16.msra.mxu0 %v5570
  %6042 = vmatprep.subr.bf16.mxu0 %v5579
  %6043 = vmatpush1.bf16.msra.mxu0 %v5578
  %6044 = vmatprep.subr.bf16.mxu0 %v5587
  %6045 = vmatpush1.bf16.msra.mxu0 %v5586
  %6046 = vmatprep.subr.bf16.mxu0 %v5595
  %6047 = vmatpush1.bf16.msra.mxu0 %v5594
  %6048 = vmatprep.subr.bf16.mxu0 %v5603
  %6049 = vmatpush1.bf16.msra.mxu0 %v5602
  %6050 = vmatprep.subr.bf16.mxu0 %v5611
  %6051 = vmatpush1.bf16.msra.mxu0 %v5610
  %6052 = vmatprep.subr.bf16.mxu0 %v5619
  %6053 = vmatpush1.bf16.msra.mxu0 %v5618
  %6054 = vmatprep.subr.bf16.mxu0 %v5627
  %6055 = vmatpush1.bf16.msra.mxu0 %v5626
  %6056 = vmatprep.subr.bf16.mxu0 %v5635
  %6057 = vmatpush1.bf16.msra.mxu0 %v5634
  %6058 = vmatprep.mubr.bf16.mxu0 %v4715
  %6059 = vmatmul.mubr.bf16.gmra.mrb[0].mxu0 %v4714
  %v6060 = vpop.f32.mrb[0].mxu0
  %v6061 = vadd.f32 0.0, %v6060
  %v6062 = vpop.f32.mrb[0].mxu0
  %v6063 = vadd.f32 0.0, %v6062
  %v6064 = vpop.f32.mrb[0].mxu0
  %v6065 = vadd.f32 0.0, %v6064
  %v6066 = vpop.f32.mrb[0].mxu0
  %v6067 = vadd.f32 0.0, %v6066
  %6068 = vmatprep.mubr.bf16.mxu0 %v4719
  %6069 = vmatmul.mubr.bf16.gmra.mrb[0].mxu0 %v4718
  %v6070 = vpop.f32.mrb[0].mxu0
  %v6071 = vadd.f32 0.0, %v6070
  %v6072 = vpop.f32.mrb[0].mxu0
  %v6073 = vadd.f32 0.0, %v6072
  %v6074 = vpop.f32.mrb[0].mxu0
  %v6075 = vadd.f32 0.0, %v6074
  %v6076 = vpop.f32.mrb[0].mxu0
  %v6077 = vadd.f32 0.0, %v6076
  %6078 = vmatprep.mubr.bf16.mxu0 %v4723
  %6079 = vmatmul.mubr.bf16.gmra.mrb[0].mxu0 %v4722
  %v6080 = vpop.f32.mrb[0].mxu0
  %v6081 = vadd.f32 0.0, %v6080
  %v6082 = vpop.f32.mrb[0].mxu0
  %v6083 = vadd.f32 0.0, %v6082
  %v6084 = vpop.f32.mrb[0].mxu0
  %v6085 = vadd.f32 0.0, %v6084
  %v6086 = vpop.f32.mrb[0].mxu0
  %v6087 = vadd.f32 0.0, %v6086
  %6088 = vmatprep.mubr.bf16.mxu0 %v4727
  %6089 = vmatmul.mubr.bf16.gmra.mrb[0].mxu0 %v4726
  %v6090 = vpop.f32.mrb[0].mxu0
  %v6091 = vadd.f32 0.0, %v6090
  %v6092 = vpop.f32.mrb[0].mxu0
  %v6093 = vadd.f32 0.0, %v6092
  %v6094 = vpop.f32.mrb[0].mxu0
  %v6095 = vpop.f32.mrb[0].mxu0
  %6096 = vdwg.mxu0
  %6097 = vmatprep.subr.bf16.mxu0 %v5643
  %6098 = vmatpush1.bf16.msra.mxu0 %v5642
  %6099 = vmatprep.subr.bf16.mxu0 %v5651
  %6100 = vmatpush1.bf16.msra.mxu0 %v5650
  %6101 = vmatprep.subr.bf16.mxu0 %v5659
  %6102 = vmatpush1.bf16.msra.mxu0 %v5658
  %6103 = vmatprep.subr.bf16.mxu0 %v5667
  %6104 = vmatpush1.bf16.msra.mxu0 %v5666
  %6105 = vmatprep.subr.bf16.mxu0 %v5675
  %6106 = vmatpush1.bf16.msra.mxu0 %v5674
  %6107 = vmatprep.subr.bf16.mxu0 %v5683
  %6108 = vmatpush1.bf16.msra.mxu0 %v5682
  %6109 = vmatprep.subr.bf16.mxu0 %v5691
  %6110 = vmatpush1.bf16.msra.mxu0 %v5690
  %6111 = vmatprep.subr.bf16.mxu0 %v5699
  %6112 = vmatpush1.bf16.msra.mxu0 %v5698
  %6113 = vmatprep.subr.bf16.mxu0 %v5707
  %6114 = vmatpush1.bf16.msra.mxu0 %v5706
  %6115 = vmatprep.subr.bf16.mxu0 %v5715
  %6116 = vmatpush1.bf16.msra.mxu0 %v5714
  %6117 = vmatprep.subr.bf16.mxu0 %v5723
  %6118 = vmatpush1.bf16.msra.mxu0 %v5722
  %6119 = vmatprep.subr.bf16.mxu0 %v5731
  %6120 = vmatpush1.bf16.msra.mxu0 %v5730
  %6121 = vmatprep.subr.bf16.mxu0 %v5739
  %6122 = vmatpush1.bf16.msra.mxu0 %v5738
  %6123 = vmatprep.subr.bf16.mxu0 %v5747
  %6124 = vmatpush1.bf16.msra.mxu0 %v5746
  %6125 = vmatprep.subr.bf16.mxu0 %v5755
  %6126 = vmatpush1.bf16.msra.mxu0 %v5754
  %6127 = vmatprep.subr.bf16.mxu0 %v5763
  %6128 = vmatpush1.bf16.msra.mxu0 %v5762
  %6129 = vmatprep.mubr.bf16.mxu0 %v4717
  %6130 = vmatmul.mubr.bf16.gmra.mrb[0].mxu0 %v4716
  %v6131 = vpop.f32.mrb[0].mxu0
  %v6132 = vadd.f32 %v6061, %v6131
  %v6133 = vpop.f32.mrb[0].mxu0
  %v6134 = vadd.f32 %v6063, %v6133
  %v6135 = vpop.f32.mrb[0].mxu0
  %v6136 = vadd.f32 %v6065, %v6135
  %v6137 = vpop.f32.mrb[0].mxu0
  %v6138 = vadd.f32 %v6067, %v6137
  %6139 = vmatprep.mubr.bf16.mxu0 %v4721
  %6140 = vmatmul.mubr.bf16.gmra.mrb[0].mxu0 %v4720
  %v6141 = vpop.f32.mrb[0].mxu0
  %v6142 = vadd.f32 %v6071, %v6141
  %v6143 = vpop.f32.mrb[0].mxu0
  %v6144 = vadd.f32 %v6073, %v6143
  %v6145 = vpop.f32.mrb[0].mxu0
  %v6146 = vadd.f32 %v6075, %v6145
  %v6147 = vpop.f32.mrb[0].mxu0
  %v6148 = vadd.f32 %v6077, %v6147
  %6149 = vmatprep.mubr.bf16.mxu0 %v4725
  %6150 = vmatmul.mubr.bf16.gmra.mrb[0].mxu0 %v4724
  %v6151 = vpop.f32.mrb[0].mxu0
  %v6152 = vadd.f32 %v6081, %v6151
  %v6153 = vpop.f32.mrb[0].mxu0
  %v6154 = vadd.f32 %v6083, %v6153
  %v6155 = vpop.f32.mrb[0].mxu0
  %v6156 = vadd.f32 %v6085, %v6155
  %v6157 = vpop.f32.mrb[0].mxu0
  %v6158 = vadd.f32 %v6087, %v6157
  %6159 = vmatprep.mubr.bf16.mxu0 %v4729
  %6160 = vmatmul.mubr.bf16.gmra.mrb[0].mxu0 %v4728
  %v6161 = vpop.f32.mrb[0].mxu0
  %v6162 = vadd.f32 %v6091, %v6161
  %v6163 = vpop.f32.mrb[0].mxu0
  %v6164 = vadd.f32 %v6093, %v6163
  %v6165 = vpop.f32.mrb[0].mxu0
  %v6166 = vpop.f32.mrb[0].mxu0
  %6167 = vdwg.mxu0
  %6168 = vmatprep.subr.bf16.mxu0 %v5517
  %6169 = vmatpush1.bf16.msra.mxu0 %v5516
  %6170 = vmatprep.subr.bf16.mxu0 %v5525
  %6171 = vmatpush1.bf16.msra.mxu0 %v5524
  %6172 = vmatprep.subr.bf16.mxu0 %v5533
  %6173 = vmatpush1.bf16.msra.mxu0 %v5532
  %6174 = vmatprep.subr.bf16.mxu0 %v5541
  %6175 = vmatpush1.bf16.msra.mxu0 %v5540
  %6176 = vmatprep.subr.bf16.mxu0 %v5549
  %6177 = vmatpush1.bf16.msra.mxu0 %v5548
  %6178 = vmatprep.subr.bf16.mxu0 %v5557
  %6179 = vmatpush1.bf16.msra.mxu0 %v5556
  %6180 = vmatprep.subr.bf16.mxu0 %v5565
  %6181 = vmatpush1.bf16.msra.mxu0 %v5564
  %6182 = vmatprep.subr.bf16.mxu0 %v5573
  %6183 = vmatpush1.bf16.msra.mxu0 %v5572
  %6184 = vmatprep.subr.bf16.mxu0 %v5581
  %6185 = vmatpush1.bf16.msra.mxu0 %v5580
  %6186 = vmatprep.subr.bf16.mxu0 %v5589
  %6187 = vmatpush1.bf16.msra.mxu0 %v5588
  %6188 = vmatprep.subr.bf16.mxu0 %v5597
  %6189 = vmatpush1.bf16.msra.mxu0 %v5596
  %6190 = vmatprep.subr.bf16.mxu0 %v5605
  %6191 = vmatpush1.bf16.msra.mxu0 %v5604
  %6192 = vmatprep.subr.bf16.mxu0 %v5613
  %6193 = vmatpush1.bf16.msra.mxu0 %v5612
  %6194 = vmatprep.subr.bf16.mxu0 %v5621
  %6195 = vmatpush1.bf16.msra.mxu0 %v5620
  %6196 = vmatprep.subr.bf16.mxu0 %v5629
  %6197 = vmatpush1.bf16.msra.mxu0 %v5628
  %6198 = vmatprep.subr.bf16.mxu0 %v5637
  %6199 = vmatpush1.bf16.msra.mxu0 %v5636
  %6200 = vmatprep.mubr.bf16.mxu0 %v4715
  %6201 = vmatmul.mubr.bf16.gmra.mrb[0].mxu0 %v4714
  %v6202 = vpop.f32.mrb[0].mxu0
  %v6203 = vadd.f32 0.0, %v6202
  %v6204 = vpop.f32.mrb[0].mxu0
  %v6205 = vadd.f32 0.0, %v6204
  %v6206 = vpop.f32.mrb[0].mxu0
  %v6207 = vadd.f32 0.0, %v6206
  %v6208 = vpop.f32.mrb[0].mxu0
  %v6209 = vadd.f32 0.0, %v6208
  %6210 = vmatprep.mubr.bf16.mxu0 %v4719
  %6211 = vmatmul.mubr.bf16.gmra.mrb[0].mxu0 %v4718
  %v6212 = vpop.f32.mrb[0].mxu0
  %v6213 = vadd.f32 0.0, %v6212
  %v6214 = vpop.f32.mrb[0].mxu0
  %v6215 = vadd.f32 0.0, %v6214
  %v6216 = vpop.f32.mrb[0].mxu0
  %v6217 = vadd.f32 0.0, %v6216
  %v6218 = vpop.f32.mrb[0].mxu0
  %v6219 = vadd.f32 0.0, %v6218
  %6220 = vmatprep.mubr.bf16.mxu0 %v4723
  %6221 = vmatmul.mubr.bf16.gmra.mrb[0].mxu0 %v4722
  %v6222 = vpop.f32.mrb[0].mxu0
  %v6223 = vadd.f32 0.0, %v6222
  %v6224 = vpop.f32.mrb[0].mxu0
  %v6225 = vadd.f32 0.0, %v6224
  %v6226 = vpop.f32.mrb[0].mxu0
  %v6227 = vadd.f32 0.0, %v6226
  %v6228 = vpop.f32.mrb[0].mxu0
  %v6229 = vadd.f32 0.0, %v6228
  %6230 = vmatprep.mubr.bf16.mxu0 %v4727
  %6231 = vmatmul.mubr.bf16.gmra.mrb[0].mxu0 %v4726
  %v6232 = vpop.f32.mrb[0].mxu0
  %v6233 = vadd.f32 0.0, %v6232
  %v6234 = vpop.f32.mrb[0].mxu0
  %v6235 = vadd.f32 0.0, %v6234
  %v6236 = vpop.f32.mrb[0].mxu0
  %v6237 = vpop.f32.mrb[0].mxu0
  %6238 = vdwg.mxu0
  %6239 = vmatprep.subr.bf16.mxu0 %v5645
  %6240 = vmatpush1.bf16.msra.mxu0 %v5644
  %6241 = vmatprep.subr.bf16.mxu0 %v5653
  %6242 = vmatpush1.bf16.msra.mxu0 %v5652
  %6243 = vmatprep.subr.bf16.mxu0 %v5661
  %6244 = vmatpush1.bf16.msra.mxu0 %v5660
  %6245 = vmatprep.subr.bf16.mxu0 %v5669
  %6246 = vmatpush1.bf16.msra.mxu0 %v5668
  %6247 = vmatprep.subr.bf16.mxu0 %v5677
  %6248 = vmatpush1.bf16.msra.mxu0 %v5676
  %6249 = vmatprep.subr.bf16.mxu0 %v5685
  %6250 = vmatpush1.bf16.msra.mxu0 %v5684
  %6251 = vmatprep.subr.bf16.mxu0 %v5693
  %6252 = vmatpush1.bf16.msra.mxu0 %v5692
  %6253 = vmatprep.subr.bf16.mxu0 %v5701
  %6254 = vmatpush1.bf16.msra.mxu0 %v5700
  %6255 = vmatprep.subr.bf16.mxu0 %v5709
  %6256 = vmatpush1.bf16.msra.mxu0 %v5708
  %6257 = vmatprep.subr.bf16.mxu0 %v5717
  %6258 = vmatpush1.bf16.msra.mxu0 %v5716
  %6259 = vmatprep.subr.bf16.mxu0 %v5725
  %6260 = vmatpush1.bf16.msra.mxu0 %v5724
  %6261 = vmatprep.subr.bf16.mxu0 %v5733
  %6262 = vmatpush1.bf16.msra.mxu0 %v5732
  %6263 = vmatprep.subr.bf16.mxu0 %v5741
  %6264 = vmatpush1.bf16.msra.mxu0 %v5740
  %6265 = vmatprep.subr.bf16.mxu0 %v5749
  %6266 = vmatpush1.bf16.msra.mxu0 %v5748
  %6267 = vmatprep.subr.bf16.mxu0 %v5757
  %6268 = vmatpush1.bf16.msra.mxu0 %v5756
  %6269 = vmatprep.subr.bf16.mxu0 %v5765
  %6270 = vmatpush1.bf16.msra.mxu0 %v5764
  %6271 = vmatprep.mubr.bf16.mxu0 %v4717
  %6272 = vmatmul.mubr.bf16.gmra.mrb[0].mxu0 %v4716
  %v6273 = vpop.f32.mrb[0].mxu0
  %v6274 = vadd.f32 %v6203, %v6273
  %v6275 = vpop.f32.mrb[0].mxu0
  %v6276 = vadd.f32 %v6205, %v6275
  %v6277 = vpop.f32.mrb[0].mxu0
  %v6278 = vadd.f32 %v6207, %v6277
  %v6279 = vpop.f32.mrb[0].mxu0
  %v6280 = vadd.f32 %v6209, %v6279
  %6281 = vmatprep.mubr.bf16.mxu0 %v4721
  %6282 = vmatmul.mubr.bf16.gmra.mrb[0].mxu0 %v4720
  %v6283 = vpop.f32.mrb[0].mxu0
  %v6284 = vadd.f32 %v6213, %v6283
  %v6285 = vpop.f32.mrb[0].mxu0
  %v6286 = vadd.f32 %v6215, %v6285
  %v6287 = vpop.f32.mrb[0].mxu0
  %v6288 = vadd.f32 %v6217, %v6287
  %v6289 = vpop.f32.mrb[0].mxu0
  %v6290 = vadd.f32 %v6219, %v6289
  %6291 = vmatprep.mubr.bf16.mxu0 %v4725
  %6292 = vmatmul.mubr.bf16.gmra.mrb[0].mxu0 %v4724
  %v6293 = vpop.f32.mrb[0].mxu0
  %v6294 = vadd.f32 %v6223, %v6293
  %v6295 = vpop.f32.mrb[0].mxu0
  %v6296 = vadd.f32 %v6225, %v6295
  %v6297 = vpop.f32.mrb[0].mxu0
  %v6298 = vadd.f32 %v6227, %v6297
  %v6299 = vpop.f32.mrb[0].mxu0
  %v6300 = vadd.f32 %v6229, %v6299
  %6301 = vmatprep.mubr.bf16.mxu0 %v4729
  %6302 = vmatmul.mubr.bf16.gmra.mrb[0].mxu0 %v4728
  %v6303 = vpop.f32.mrb[0].mxu0
  %v6304 = vadd.f32 %v6233, %v6303
  %v6305 = vpop.f32.mrb[0].mxu0
  %v6306 = vadd.f32 %v6235, %v6305
  %v6307 = vpop.f32.mrb[0].mxu0
  %v6308 = vpop.f32.mrb[0].mxu0
  %6309 = vdwg.mxu0
  %6310 = vmatprep.subr.bf16.mxu0 %v5519
  %6311 = vmatpush1.bf16.msra.mxu0 %v5518
  %6312 = vmatprep.subr.bf16.mxu0 %v5527
  %6313 = vmatpush1.bf16.msra.mxu0 %v5526
  %6314 = vmatprep.subr.bf16.mxu0 %v5535
  %6315 = vmatpush1.bf16.msra.mxu0 %v5534
  %6316 = vmatprep.subr.bf16.mxu0 %v5543
  %6317 = vmatpush1.bf16.msra.mxu0 %v5542
  %6318 = vmatprep.subr.bf16.mxu0 %v5551
  %6319 = vmatpush1.bf16.msra.mxu0 %v5550
  %6320 = vmatprep.subr.bf16.mxu0 %v5559
  %6321 = vmatpush1.bf16.msra.mxu0 %v5558
  %6322 = vmatprep.subr.bf16.mxu0 %v5567
  %6323 = vmatpush1.bf16.msra.mxu0 %v5566
  %6324 = vmatprep.subr.bf16.mxu0 %v5575
  %6325 = vmatpush1.bf16.msra.mxu0 %v5574
  %6326 = vmatprep.subr.bf16.mxu0 %v5583
  %6327 = vmatpush1.bf16.msra.mxu0 %v5582
  %6328 = vmatprep.subr.bf16.mxu0 %v5591
  %6329 = vmatpush1.bf16.msra.mxu0 %v5590
  %6330 = vmatprep.subr.bf16.mxu0 %v5599
  %6331 = vmatpush1.bf16.msra.mxu0 %v5598
  %6332 = vmatprep.subr.bf16.mxu0 %v5607
  %6333 = vmatpush1.bf16.msra.mxu0 %v5606
  %6334 = vmatprep.subr.bf16.mxu0 %v5615
  %6335 = vmatpush1.bf16.msra.mxu0 %v5614
  %6336 = vmatprep.subr.bf16.mxu0 %v5623
  %6337 = vmatpush1.bf16.msra.mxu0 %v5622
  %6338 = vmatprep.subr.bf16.mxu0 %v5631
  %6339 = vmatpush1.bf16.msra.mxu0 %v5630
  %6340 = vmatprep.subr.bf16.mxu0 %v5639
  %6341 = vmatpush1.bf16.msra.mxu0 %v5638
  %6342 = vmatprep.mubr.bf16.mxu0 %v4715
  %6343 = vmatmul.mubr.bf16.gmra.mrb[0].mxu0 %v4714
  %v6344 = vpop.f32.mrb[0].mxu0
  %v6345 = vadd.f32 0.0, %v6344
  %v6346 = vpop.f32.mrb[0].mxu0
  %v6347 = vadd.f32 0.0, %v6346
  %v6348 = vpop.f32.mrb[0].mxu0
  %v6349 = vadd.f32 0.0, %v6348
  %v6350 = vpop.f32.mrb[0].mxu0
  %v6351 = vadd.f32 0.0, %v6350
  %6352 = vmatprep.mubr.bf16.mxu0 %v4719
  %6353 = vmatmul.mubr.bf16.gmra.mrb[0].mxu0 %v4718
  %v6354 = vpop.f32.mrb[0].mxu0
  %v6355 = vadd.f32 0.0, %v6354
  %v6356 = vpop.f32.mrb[0].mxu0
  %v6357 = vadd.f32 0.0, %v6356
  %v6358 = vpop.f32.mrb[0].mxu0
  %v6359 = vadd.f32 0.0, %v6358
  %v6360 = vpop.f32.mrb[0].mxu0
  %v6361 = vadd.f32 0.0, %v6360
  %6362 = vmatprep.mubr.bf16.mxu0 %v4723
  %6363 = vmatmul.mubr.bf16.gmra.mrb[0].mxu0 %v4722
  %v6364 = vpop.f32.mrb[0].mxu0
  %v6365 = vadd.f32 0.0, %v6364
  %v6366 = vpop.f32.mrb[0].mxu0
  %v6367 = vadd.f32 0.0, %v6366
  %v6368 = vpop.f32.mrb[0].mxu0
  %v6369 = vadd.f32 0.0, %v6368
  %v6370 = vpop.f32.mrb[0].mxu0
  %v6371 = vadd.f32 0.0, %v6370
  %6372 = vmatprep.mubr.bf16.mxu0 %v4727
  %6373 = vmatmul.mubr.bf16.gmra.mrb[0].mxu0 %v4726
  %v6374 = vpop.f32.mrb[0].mxu0
  %v6375 = vadd.f32 0.0, %v6374
  %v6376 = vpop.f32.mrb[0].mxu0
  %v6377 = vadd.f32 0.0, %v6376
  %v6378 = vpop.f32.mrb[0].mxu0
  %v6379 = vpop.f32.mrb[0].mxu0
  %6380 = vdwg.mxu0
  %6381 = vmatprep.subr.bf16.mxu0 %v5647
  %6382 = vmatpush1.bf16.msra.mxu0 %v5646
  %6383 = vmatprep.subr.bf16.mxu0 %v5655
  %6384 = vmatpush1.bf16.msra.mxu0 %v5654
  %6385 = vmatprep.subr.bf16.mxu0 %v5663
  %6386 = vmatpush1.bf16.msra.mxu0 %v5662
  %6387 = vmatprep.subr.bf16.mxu0 %v5671
  %6388 = vmatpush1.bf16.msra.mxu0 %v5670
  %6389 = vmatprep.subr.bf16.mxu0 %v5679
  %6390 = vmatpush1.bf16.msra.mxu0 %v5678
  %6391 = vmatprep.subr.bf16.mxu0 %v5687
  %6392 = vmatpush1.bf16.msra.mxu0 %v5686
  %6393 = vmatprep.subr.bf16.mxu0 %v5695
  %6394 = vmatpush1.bf16.msra.mxu0 %v5694
  %6395 = vmatprep.subr.bf16.mxu0 %v5703
  %6396 = vmatpush1.bf16.msra.mxu0 %v5702
  %6397 = vmatprep.subr.bf16.mxu0 %v5711
  %6398 = vmatpush1.bf16.msra.mxu0 %v5710
  %6399 = vmatprep.subr.bf16.mxu0 %v5719
  %6400 = vmatpush1.bf16.msra.mxu0 %v5718
  %6401 = vmatprep.subr.bf16.mxu0 %v5727
  %6402 = vmatpush1.bf16.msra.mxu0 %v5726
  %6403 = vmatprep.subr.bf16.mxu0 %v5735
  %6404 = vmatpush1.bf16.msra.mxu0 %v5734
  %6405 = vmatprep.subr.bf16.mxu0 %v5743
  %6406 = vmatpush1.bf16.msra.mxu0 %v5742
  %6407 = vmatprep.subr.bf16.mxu0 %v5751
  %6408 = vmatpush1.bf16.msra.mxu0 %v5750
  %6409 = vmatprep.subr.bf16.mxu0 %v5759
  %6410 = vmatpush1.bf16.msra.mxu0 %v5758
  %6411 = vmatprep.subr.bf16.mxu0 %v5767
  %6412 = vmatpush1.bf16.msra.mxu0 %v5766
  %6413 = vmatprep.mubr.bf16.mxu0 %v4717
  %6414 = vmatmul.mubr.bf16.gmra.mrb[0].mxu0 %v4716
  %v6415 = vpop.f32.mrb[0].mxu0
  %v6416 = vadd.f32 %v6345, %v6415
  %v6417 = vpop.f32.mrb[0].mxu0
  %v6418 = vadd.f32 %v6347, %v6417
  %v6419 = vpop.f32.mrb[0].mxu0
  %v6420 = vadd.f32 %v6349, %v6419
  %v6421 = vpop.f32.mrb[0].mxu0
  %v6422 = vadd.f32 %v6351, %v6421
  %6423 = vmatprep.mubr.bf16.mxu0 %v4721
  %6424 = vmatmul.mubr.bf16.gmra.mrb[0].mxu0 %v4720
  %v6425 = vpop.f32.mrb[0].mxu0
  %v6426 = vadd.f32 %v6355, %v6425
  %v6427 = vpop.f32.mrb[0].mxu0
  %v6428 = vadd.f32 %v6357, %v6427
  %v6429 = vpop.f32.mrb[0].mxu0
  %v6430 = vadd.f32 %v6359, %v6429
  %v6431 = vpop.f32.mrb[0].mxu0
  %v6432 = vadd.f32 %v6361, %v6431
  %6433 = vmatprep.mubr.bf16.mxu0 %v4725
  %6434 = vmatmul.mubr.bf16.gmra.mrb[0].mxu0 %v4724
  %v6435 = vpop.f32.mrb[0].mxu0
  %v6436 = vadd.f32 %v6365, %v6435
  %v6437 = vpop.f32.mrb[0].mxu0
  %v6438 = vadd.f32 %v6367, %v6437
  %v6439 = vpop.f32.mrb[0].mxu0
  %v6440 = vadd.f32 %v6369, %v6439
  %v6441 = vpop.f32.mrb[0].mxu0
  %v6442 = vadd.f32 %v6371, %v6441
  %6443 = vmatprep.mubr.bf16.mxu0 %v4729
  %6444 = vmatmul.mubr.bf16.gmra.mrb[0].mxu0 %v4728
  %v6445 = vpop.f32.mrb[0].mxu0
  %v6446 = vadd.f32 %v6375, %v6445
  %v6447 = vpop.f32.mrb[0].mxu0
  %v6448 = vadd.f32 %v6377, %v6447
  %v6449 = vpop.f32.mrb[0].mxu0
  %v6450 = vpop.f32.mrb[0].mxu0
  %6451 = vdwg.mxu0
  %6452 = vmatprep.subr.bf16.mxu0 %v5521
  %6453 = vmatpush1.bf16.msra.mxu0 %v5520
  %6454 = vmatprep.subr.bf16.mxu0 %v5529
  %6455 = vmatpush1.bf16.msra.mxu0 %v5528
  %6456 = vmatprep.subr.bf16.mxu0 %v5537
  %6457 = vmatpush1.bf16.msra.mxu0 %v5536
  %6458 = vmatprep.subr.bf16.mxu0 %v5545
  %6459 = vmatpush1.bf16.msra.mxu0 %v5544
  %6460 = vmatprep.subr.bf16.mxu0 %v5553
  %6461 = vmatpush1.bf16.msra.mxu0 %v5552
  %6462 = vmatprep.subr.bf16.mxu0 %v5561
  %6463 = vmatpush1.bf16.msra.mxu0 %v5560
  %6464 = vmatprep.subr.bf16.mxu0 %v5569
  %6465 = vmatpush1.bf16.msra.mxu0 %v5568
  %6466 = vmatprep.subr.bf16.mxu0 %v5577
  %6467 = vmatpush1.bf16.msra.mxu0 %v5576
  %6468 = vmatprep.subr.bf16.mxu0 %v5585
  %6469 = vmatpush1.bf16.msra.mxu0 %v5584
  %6470 = vmatprep.subr.bf16.mxu0 %v5593
  %6471 = vmatpush1.bf16.msra.mxu0 %v5592
  %6472 = vmatprep.subr.bf16.mxu0 %v5601
  %6473 = vmatpush1.bf16.msra.mxu0 %v5600
  %6474 = vmatprep.subr.bf16.mxu0 %v5609
  %6475 = vmatpush1.bf16.msra.mxu0 %v5608
  %6476 = vmatprep.subr.bf16.mxu0 %v5617
  %6477 = vmatpush1.bf16.msra.mxu0 %v5616
  %6478 = vmatprep.subr.bf16.mxu0 %v5625
  %6479 = vmatpush1.bf16.msra.mxu0 %v5624
  %6480 = vmatprep.subr.bf16.mxu0 %v5633
  %6481 = vmatpush1.bf16.msra.mxu0 %v5632
  %6482 = vmatprep.subr.bf16.mxu0 %v5641
  %6483 = vmatpush1.bf16.msra.mxu0 %v5640
  %6484 = vmatprep.mubr.bf16.mxu0 %v4715
  %6485 = vmatmul.mubr.bf16.gmra.mrb[0].mxu0 %v4714
  %v6486 = vpop.f32.mrb[0].mxu0
  %v6487 = vadd.f32 0.0, %v6486
  %v6488 = vpop.f32.mrb[0].mxu0
  %v6489 = vadd.f32 0.0, %v6488
  %v6490 = vpop.f32.mrb[0].mxu0
  %v6491 = vadd.f32 0.0, %v6490
  %v6492 = vpop.f32.mrb[0].mxu0
  %v6493 = vadd.f32 0.0, %v6492
  %6494 = vmatprep.mubr.bf16.mxu0 %v4719
  %6495 = vmatmul.mubr.bf16.gmra.mrb[0].mxu0 %v4718
  %v6496 = vpop.f32.mrb[0].mxu0
  %v6497 = vadd.f32 0.0, %v6496
  %v6498 = vpop.f32.mrb[0].mxu0
  %v6499 = vadd.f32 0.0, %v6498
  %v6500 = vpop.f32.mrb[0].mxu0
  %v6501 = vadd.f32 0.0, %v6500
  %v6502 = vpop.f32.mrb[0].mxu0
  %v6503 = vadd.f32 0.0, %v6502
  %6504 = vmatprep.mubr.bf16.mxu0 %v4723
  %6505 = vmatmul.mubr.bf16.gmra.mrb[0].mxu0 %v4722
  %v6506 = vpop.f32.mrb[0].mxu0
  %v6507 = vadd.f32 0.0, %v6506
  %v6508 = vpop.f32.mrb[0].mxu0
  %v6509 = vadd.f32 0.0, %v6508
  %v6510 = vpop.f32.mrb[0].mxu0
  %v6511 = vadd.f32 0.0, %v6510
  %v6512 = vpop.f32.mrb[0].mxu0
  %v6513 = vadd.f32 0.0, %v6512
  %6514 = vmatprep.mubr.bf16.mxu0 %v4727
  %6515 = vmatmul.mubr.bf16.gmra.mrb[0].mxu0 %v4726
  %v6516 = vpop.f32.mrb[0].mxu0
  %v6517 = vadd.f32 0.0, %v6516
  %v6518 = vpop.f32.mrb[0].mxu0
  %v6519 = vadd.f32 0.0, %v6518
  %v6520 = vpop.f32.mrb[0].mxu0
  %v6521 = vpop.f32.mrb[0].mxu0
  %6522 = vdwg.mxu0
  %6523 = vmatprep.subr.bf16.mxu0 %v5649
  %6524 = vmatpush1.bf16.msra.mxu0 %v5648
  %6525 = vmatprep.subr.bf16.mxu0 %v5657
  %6526 = vmatpush1.bf16.msra.mxu0 %v5656
  %6527 = vmatprep.subr.bf16.mxu0 %v5665
  %6528 = vmatpush1.bf16.msra.mxu0 %v5664
  %6529 = vmatprep.subr.bf16.mxu0 %v5673
  %6530 = vmatpush1.bf16.msra.mxu0 %v5672
  %6531 = vmatprep.subr.bf16.mxu0 %v5681
  %6532 = vmatpush1.bf16.msra.mxu0 %v5680
  %6533 = vmatprep.subr.bf16.mxu0 %v5689
  %6534 = vmatpush1.bf16.msra.mxu0 %v5688
  %6535 = vmatprep.subr.bf16.mxu0 %v5697
  %6536 = vmatpush1.bf16.msra.mxu0 %v5696
  %6537 = vmatprep.subr.bf16.mxu0 %v5705
  %6538 = vmatpush1.bf16.msra.mxu0 %v5704
  %6539 = vmatprep.subr.bf16.mxu0 %v5713
  %6540 = vmatpush1.bf16.msra.mxu0 %v5712
  %6541 = vmatprep.subr.bf16.mxu0 %v5721
  %6542 = vmatpush1.bf16.msra.mxu0 %v5720
  %6543 = vmatprep.subr.bf16.mxu0 %v5729
  %6544 = vmatpush1.bf16.msra.mxu0 %v5728
  %6545 = vmatprep.subr.bf16.mxu0 %v5737
  %6546 = vmatpush1.bf16.msra.mxu0 %v5736
  %6547 = vmatprep.subr.bf16.mxu0 %v5745
  %6548 = vmatpush1.bf16.msra.mxu0 %v5744
  %6549 = vmatprep.subr.bf16.mxu0 %v5753
  %6550 = vmatpush1.bf16.msra.mxu0 %v5752
  %6551 = vmatprep.subr.bf16.mxu0 %v5761
  %6552 = vmatpush1.bf16.msra.mxu0 %v5760
  %6553 = vmatprep.subr.bf16.mxu0 %v5769
  %6554 = vmatpush1.bf16.msra.mxu0 %v5768
  %6555 = vmatprep.mubr.bf16.mxu0 %v4717
  %6556 = vmatmul.mubr.bf16.gmra.mrb[0].mxu0 %v4716
  %v6557 = vpop.f32.mrb[0].mxu0
  %v6558 = vadd.f32 %v6487, %v6557
  %v6559 = vpop.f32.mrb[0].mxu0
  %v6560 = vadd.f32 %v6489, %v6559
  %v6561 = vpop.f32.mrb[0].mxu0
  %v6562 = vadd.f32 %v6491, %v6561
  %v6563 = vpop.f32.mrb[0].mxu0
  %v6564 = vadd.f32 %v6493, %v6563
  %6565 = vmatprep.mubr.bf16.mxu0 %v4721
  %6566 = vmatmul.mubr.bf16.gmra.mrb[0].mxu0 %v4720
  %v6567 = vpop.f32.mrb[0].mxu0
  %v6568 = vadd.f32 %v6497, %v6567
  %v6569 = vpop.f32.mrb[0].mxu0
  %v6570 = vadd.f32 %v6499, %v6569
  %v6571 = vpop.f32.mrb[0].mxu0
  %v6572 = vadd.f32 %v6501, %v6571
  %v6573 = vpop.f32.mrb[0].mxu0
  %v6574 = vadd.f32 %v6503, %v6573
  %6575 = vmatprep.mubr.bf16.mxu0 %v4725
  %6576 = vmatmul.mubr.bf16.gmra.mrb[0].mxu0 %v4724
  %v6577 = vpop.f32.mrb[0].mxu0
  %v6578 = vadd.f32 %v6507, %v6577
  %v6579 = vpop.f32.mrb[0].mxu0
  %v6580 = vadd.f32 %v6509, %v6579
  %v6581 = vpop.f32.mrb[0].mxu0
  %v6582 = vadd.f32 %v6511, %v6581
  %v6583 = vpop.f32.mrb[0].mxu0
  %v6584 = vadd.f32 %v6513, %v6583
  %6585 = vmatprep.mubr.bf16.mxu0 %v4729
  %6586 = vmatmul.mubr.bf16.gmra.mrb[0].mxu0 %v4728
  %v6587 = vpop.f32.mrb[0].mxu0
  %v6588 = vadd.f32 %v6517, %v6587
  %v6589 = vpop.f32.mrb[0].mxu0
  %v6590 = vadd.f32 %v6519, %v6589
  %v6591 = vpop.f32.mrb[0].mxu0
  %v6592 = vpop.f32.mrb[0].mxu0
  %6593 = vdwg.mxu0
  %v6594 = vadd.f32 %v3938, %v6132
  %v6595 = vadd.f32 %v3940, %v6134
  %v6596 = vadd.f32 %v4080, %v6274
  %v6597 = vadd.f32 %v4082, %v6276
  %v6598 = vadd.f32 %v4222, %v6416
  %v6599 = vadd.f32 %v4224, %v6418
  %v6600 = vadd.f32 %v4364, %v6558
  %v6601 = vadd.f32 %v4366, %v6560
  %v6602 = vadd.f32 %v3942, %v6136
  %v6603 = vadd.f32 %v3944, %v6138
  %v6604 = vadd.f32 %v4084, %v6278
  %v6605 = vadd.f32 %v4086, %v6280
  %v6606 = vadd.f32 %v4226, %v6420
  %v6607 = vadd.f32 %v4228, %v6422
  %v6608 = vadd.f32 %v4368, %v6562
  %v6609 = vadd.f32 %v4370, %v6564
  %v6610 = vadd.f32 %v3948, %v6142
  %v6611 = vadd.f32 %v3950, %v6144
  %v6612 = vadd.f32 %v4090, %v6284
  %v6613 = vadd.f32 %v4092, %v6286
  %v6614 = vadd.f32 %v4232, %v6426
  %v6615 = vadd.f32 %v4234, %v6428
  %v6616 = vadd.f32 %v4374, %v6568
  %v6617 = vadd.f32 %v4376, %v6570
  %v6618 = vadd.f32 %v3952, %v6146
  %v6619 = vadd.f32 %v3954, %v6148
  %v6620 = vadd.f32 %v4094, %v6288
  %v6621 = vadd.f32 %v4096, %v6290
  %v6622 = vadd.f32 %v4236, %v6430
  %v6623 = vadd.f32 %v4238, %v6432
  %v6624 = vadd.f32 %v4378, %v6572
  %v6625 = vadd.f32 %v4380, %v6574
  %v6626 = vadd.f32 %v3958, %v6152
  %v6627 = vadd.f32 %v3960, %v6154
  %v6628 = vadd.f32 %v4100, %v6294
  %v6629 = vadd.f32 %v4102, %v6296
  %v6630 = vadd.f32 %v4242, %v6436
  %v6631 = vadd.f32 %v4244, %v6438
  %v6632 = vadd.f32 %v4384, %v6578
  %v6633 = vadd.f32 %v4386, %v6580
  %v6634 = vadd.f32 %v3962, %v6156
  %v6635 = vadd.f32 %v3964, %v6158
  %v6636 = vadd.f32 %v4104, %v6298
  %v6637 = vadd.f32 %v4106, %v6300
  %v6638 = vadd.f32 %v4246, %v6440
  %v6639 = vadd.f32 %v4248, %v6442
  %v6640 = vadd.f32 %v4388, %v6582
  %v6641 = vadd.f32 %v4390, %v6584
  %v6642 = vadd.f32 %v3968, %v6162
  %v6643 = vadd.f32 %v3970, %v6164
  %v6644 = vadd.f32 %v4110, %v6304
  %v6645 = vadd.f32 %v4112, %v6306
  %v6646 = vadd.f32 %v4252, %v6446
  %v6647 = vadd.f32 %v4254, %v6448
  %v6648 = vadd.f32 %v4394, %v6588
  %v6649 = vadd.f32 %v4396, %v6590
  %v6650 = vmax.f32 %v6594, %v6598
  %v6651 = vmax.f32 %v6595, %v6599
  %v6652 = vmax.f32 %v6596, %v6600
  %v6653 = vmax.f32 %v6597, %v6601
  %v6654 = vmax.f32 %v6602, %v6606
  %v6655 = vmax.f32 %v6603, %v6607
  %v6656 = vmax.f32 %v6604, %v6608
  %v6657 = vmax.f32 %v6605, %v6609
  %v6658 = vmax.f32 %v6610, %v6614
  %v6659 = vmax.f32 %v6611, %v6615
  %v6660 = vmax.f32 %v6612, %v6616
  %v6661 = vmax.f32 %v6613, %v6617
  %v6662 = vmax.f32 %v6618, %v6622
  %v6663 = vmax.f32 %v6619, %v6623
  %v6664 = vmax.f32 %v6620, %v6624
  %v6665 = vmax.f32 %v6621, %v6625
  %v6666 = vmax.f32 %v6626, %v6630
  %v6667 = vmax.f32 %v6627, %v6631
  %v6668 = vmax.f32 %v6628, %v6632
  %v6669 = vmax.f32 %v6629, %v6633
  %v6670 = vmax.f32 %v6634, %v6638
  %v6671 = vmax.f32 %v6635, %v6639
  %v6672 = vmax.f32 %v6636, %v6640
  %v6673 = vmax.f32 %v6637, %v6641
  %v6674 = vmax.f32 %v6642, %v6646
  %v6675 = vmax.f32 %v6643, %v6647
  %v6676 = vmax.f32 %v6644, %v6648
  %v6677 = vmax.f32 %v6645, %v6649
  %6678 = vmatprep.subr.bf16.mxu0 %v1399
  %6679 = vmatpush1.bf16.msra.mxu0 %v1398
  %6680 = vmatprep.subr.bf16.mxu0 %v1407
  %6681 = vmatpush1.bf16.msra.mxu0 %v1406
  %6682 = vmatprep.subr.bf16.mxu0 %v1415
  %6683 = vmatpush1.bf16.msra.mxu0 %v1414
  %6684 = vmatprep.subr.bf16.mxu0 %v1423
  %6685 = vmatpush1.bf16.msra.mxu0 %v1422
  %6686 = vmatprep.subr.bf16.mxu0 %v1431
  %6687 = vmatpush1.bf16.msra.mxu0 %v1430
  %6688 = vmatprep.subr.bf16.mxu0 %v1439
  %6689 = vmatpush1.bf16.msra.mxu0 %v1438
  %6690 = vmatprep.subr.bf16.mxu0 %v1447
  %6691 = vmatpush1.bf16.msra.mxu0 %v1446
  %6692 = vmatprep.subr.bf16.mxu0 %v1455
  %6693 = vmatpush1.bf16.msra.mxu0 %v1454
  %6694 = vmatprep.subr.bf16.mxu0 %v1463
  %6695 = vmatpush1.bf16.msra.mxu0 %v1462
  %6696 = vmatprep.subr.bf16.mxu0 %v1471
  %6697 = vmatpush1.bf16.msra.mxu0 %v1470
  %6698 = vmatprep.subr.bf16.mxu0 %v1479
  %6699 = vmatpush1.bf16.msra.mxu0 %v1478
  %6700 = vmatprep.subr.bf16.mxu0 %v1487
  %6701 = vmatpush1.bf16.msra.mxu0 %v1486
  %6702 = vmatprep.subr.bf16.mxu0 %v1495
  %6703 = vmatpush1.bf16.msra.mxu0 %v1494
  %6704 = vmatprep.subr.bf16.mxu0 %v1503
  %6705 = vmatpush1.bf16.msra.mxu0 %v1502
  %6706 = vmatprep.subr.bf16.mxu0 %v1511
  %6707 = vmatpush1.bf16.msra.mxu0 %v1510
  %6708 = vmatprep.subr.bf16.mxu0 %v1519
  %6709 = vmatpush1.bf16.msra.mxu0 %v1518
  %6710 = vmatprep.mubr.bf16.mxu0 %v4715
  %6711 = vmatmul.mubr.bf16.gmra.mrb[0].mxu0 %v4714
  %v6712 = vpop.f32.mrb[0].mxu0
  %v6713 = vadd.f32 0.0, %v6712
  %v6714 = vpop.f32.mrb[0].mxu0
  %v6715 = vadd.f32 0.0, %v6714
  %v6716 = vpop.f32.mrb[0].mxu0
  %v6717 = vadd.f32 0.0, %v6716
  %v6718 = vpop.f32.mrb[0].mxu0
  %v6719 = vadd.f32 0.0, %v6718
  %6720 = vmatprep.mubr.bf16.mxu0 %v4719
  %6721 = vmatmul.mubr.bf16.gmra.mrb[0].mxu0 %v4718
  %v6722 = vpop.f32.mrb[0].mxu0
  %v6723 = vadd.f32 0.0, %v6722
  %v6724 = vpop.f32.mrb[0].mxu0
  %v6725 = vadd.f32 0.0, %v6724
  %v6726 = vpop.f32.mrb[0].mxu0
  %v6727 = vadd.f32 0.0, %v6726
  %v6728 = vpop.f32.mrb[0].mxu0
  %v6729 = vadd.f32 0.0, %v6728
  %6730 = vmatprep.mubr.bf16.mxu0 %v4723
  %6731 = vmatmul.mubr.bf16.gmra.mrb[0].mxu0 %v4722
  %v6732 = vpop.f32.mrb[0].mxu0
  %v6733 = vadd.f32 0.0, %v6732
  %v6734 = vpop.f32.mrb[0].mxu0
  %v6735 = vadd.f32 0.0, %v6734
  %v6736 = vpop.f32.mrb[0].mxu0
  %v6737 = vadd.f32 0.0, %v6736
  %v6738 = vpop.f32.mrb[0].mxu0
  %v6739 = vadd.f32 0.0, %v6738
  %6740 = vmatprep.mubr.bf16.mxu0 %v4727
  %6741 = vmatmul.mubr.bf16.gmra.mrb[0].mxu0 %v4726
  %v6742 = vpop.f32.mrb[0].mxu0
  %v6743 = vadd.f32 0.0, %v6742
  %v6744 = vpop.f32.mrb[0].mxu0
  %v6745 = vadd.f32 0.0, %v6744
  %v6746 = vpop.f32.mrb[0].mxu0
  %v6747 = vpop.f32.mrb[0].mxu0
  %6748 = vdwg.mxu0
  %6749 = vmatprep.subr.bf16.mxu0 %v1527
  %6750 = vmatpush1.bf16.msra.mxu0 %v1526
  %6751 = vmatprep.subr.bf16.mxu0 %v1535
  %6752 = vmatpush1.bf16.msra.mxu0 %v1534
  %6753 = vmatprep.subr.bf16.mxu0 %v1543
  %6754 = vmatpush1.bf16.msra.mxu0 %v1542
  %6755 = vmatprep.subr.bf16.mxu0 %v1551
  %6756 = vmatpush1.bf16.msra.mxu0 %v1550
  %6757 = vmatprep.subr.bf16.mxu0 %v1559
  %6758 = vmatpush1.bf16.msra.mxu0 %v1558
  %6759 = vmatprep.subr.bf16.mxu0 %v1567
  %6760 = vmatpush1.bf16.msra.mxu0 %v1566
  %6761 = vmatprep.subr.bf16.mxu0 %v1575
  %6762 = vmatpush1.bf16.msra.mxu0 %v1574
  %6763 = vmatprep.subr.bf16.mxu0 %v1583
  %6764 = vmatpush1.bf16.msra.mxu0 %v1582
  %6765 = vmatprep.subr.bf16.mxu0 %v1591
  %6766 = vmatpush1.bf16.msra.mxu0 %v1590
  %6767 = vmatprep.subr.bf16.mxu0 %v1599
  %6768 = vmatpush1.bf16.msra.mxu0 %v1598
  %6769 = vmatprep.subr.bf16.mxu0 %v1607
  %6770 = vmatpush1.bf16.msra.mxu0 %v1606
  %6771 = vmatprep.subr.bf16.mxu0 %v1615
  %6772 = vmatpush1.bf16.msra.mxu0 %v1614
  %6773 = vmatprep.subr.bf16.mxu0 %v1623
  %6774 = vmatpush1.bf16.msra.mxu0 %v1622
  %6775 = vmatprep.subr.bf16.mxu0 %v1631
  %6776 = vmatpush1.bf16.msra.mxu0 %v1630
  %6777 = vmatprep.subr.bf16.mxu0 %v1639
  %6778 = vmatpush1.bf16.msra.mxu0 %v1638
  %6779 = vmatprep.subr.bf16.mxu0 %v1647
  %6780 = vmatpush1.bf16.msra.mxu0 %v1646
  %6781 = vmatprep.mubr.bf16.mxu0 %v4717
  %6782 = vmatmul.mubr.bf16.gmra.mrb[0].mxu0 %v4716
  %v6783 = vpop.f32.mrb[0].mxu0
  %v6784 = vadd.f32 %v6713, %v6783
  %v6785 = vpop.f32.mrb[0].mxu0
  %v6786 = vadd.f32 %v6715, %v6785
  %v6787 = vpop.f32.mrb[0].mxu0
  %v6788 = vadd.f32 %v6717, %v6787
  %v6789 = vpop.f32.mrb[0].mxu0
  %v6790 = vadd.f32 %v6719, %v6789
  %6791 = vmatprep.mubr.bf16.mxu0 %v4721
  %6792 = vmatmul.mubr.bf16.gmra.mrb[0].mxu0 %v4720
  %v6793 = vpop.f32.mrb[0].mxu0
  %v6794 = vadd.f32 %v6723, %v6793
  %v6795 = vpop.f32.mrb[0].mxu0
  %v6796 = vadd.f32 %v6725, %v6795
  %v6797 = vpop.f32.mrb[0].mxu0
  %v6798 = vadd.f32 %v6727, %v6797
  %v6799 = vpop.f32.mrb[0].mxu0
  %v6800 = vadd.f32 %v6729, %v6799
  %6801 = vmatprep.mubr.bf16.mxu0 %v4725
  %6802 = vmatmul.mubr.bf16.gmra.mrb[0].mxu0 %v4724
  %v6803 = vpop.f32.mrb[0].mxu0
  %v6804 = vadd.f32 %v6733, %v6803
  %v6805 = vpop.f32.mrb[0].mxu0
  %v6806 = vadd.f32 %v6735, %v6805
  %v6807 = vpop.f32.mrb[0].mxu0
  %v6808 = vadd.f32 %v6737, %v6807
  %v6809 = vpop.f32.mrb[0].mxu0
  %v6810 = vadd.f32 %v6739, %v6809
  %6811 = vmatprep.mubr.bf16.mxu0 %v4729
  %6812 = vmatmul.mubr.bf16.gmra.mrb[0].mxu0 %v4728
  %v6813 = vpop.f32.mrb[0].mxu0
  %v6814 = vadd.f32 %v6743, %v6813
  %v6815 = vpop.f32.mrb[0].mxu0
  %v6816 = vadd.f32 %v6745, %v6815
  %v6817 = vpop.f32.mrb[0].mxu0
  %v6818 = vpop.f32.mrb[0].mxu0
  %6819 = vdwg.mxu0
  %6820 = vmatprep.subr.bf16.mxu0 %v1401
  %6821 = vmatpush1.bf16.msra.mxu0 %v1400
  %6822 = vmatprep.subr.bf16.mxu0 %v1409
  %6823 = vmatpush1.bf16.msra.mxu0 %v1408
  %6824 = vmatprep.subr.bf16.mxu0 %v1417
  %6825 = vmatpush1.bf16.msra.mxu0 %v1416
  %6826 = vmatprep.subr.bf16.mxu0 %v1425
  %6827 = vmatpush1.bf16.msra.mxu0 %v1424
  %6828 = vmatprep.subr.bf16.mxu0 %v1433
  %6829 = vmatpush1.bf16.msra.mxu0 %v1432
  %6830 = vmatprep.subr.bf16.mxu0 %v1441
  %6831 = vmatpush1.bf16.msra.mxu0 %v1440
  %6832 = vmatprep.subr.bf16.mxu0 %v1449
  %6833 = vmatpush1.bf16.msra.mxu0 %v1448
  %6834 = vmatprep.subr.bf16.mxu0 %v1457
  %6835 = vmatpush1.bf16.msra.mxu0 %v1456
  %6836 = vmatprep.subr.bf16.mxu0 %v1465
  %6837 = vmatpush1.bf16.msra.mxu0 %v1464
  %6838 = vmatprep.subr.bf16.mxu0 %v1473
  %6839 = vmatpush1.bf16.msra.mxu0 %v1472
  %6840 = vmatprep.subr.bf16.mxu0 %v1481
  %6841 = vmatpush1.bf16.msra.mxu0 %v1480
  %6842 = vmatprep.subr.bf16.mxu0 %v1489
  %6843 = vmatpush1.bf16.msra.mxu0 %v1488
  %6844 = vmatprep.subr.bf16.mxu0 %v1497
  %6845 = vmatpush1.bf16.msra.mxu0 %v1496
  %6846 = vmatprep.subr.bf16.mxu0 %v1505
  %6847 = vmatpush1.bf16.msra.mxu0 %v1504
  %6848 = vmatprep.subr.bf16.mxu0 %v1513
  %6849 = vmatpush1.bf16.msra.mxu0 %v1512
  %6850 = vmatprep.subr.bf16.mxu0 %v1521
  %6851 = vmatpush1.bf16.msra.mxu0 %v1520
  %6852 = vmatprep.mubr.bf16.mxu0 %v4715
  %6853 = vmatmul.mubr.bf16.gmra.mrb[0].mxu0 %v4714
  %v6854 = vpop.f32.mrb[0].mxu0
  %v6855 = vadd.f32 0.0, %v6854
  %v6856 = vpop.f32.mrb[0].mxu0
  %v6857 = vadd.f32 0.0, %v6856
  %v6858 = vpop.f32.mrb[0].mxu0
  %v6859 = vadd.f32 0.0, %v6858
  %v6860 = vpop.f32.mrb[0].mxu0
  %v6861 = vadd.f32 0.0, %v6860
  %6862 = vmatprep.mubr.bf16.mxu0 %v4719
  %6863 = vmatmul.mubr.bf16.gmra.mrb[0].mxu0 %v4718
  %v6864 = vpop.f32.mrb[0].mxu0
  %v6865 = vadd.f32 0.0, %v6864
  %v6866 = vpop.f32.mrb[0].mxu0
  %v6867 = vadd.f32 0.0, %v6866
  %v6868 = vpop.f32.mrb[0].mxu0
  %v6869 = vadd.f32 0.0, %v6868
  %v6870 = vpop.f32.mrb[0].mxu0
  %v6871 = vadd.f32 0.0, %v6870
  %6872 = vmatprep.mubr.bf16.mxu0 %v4723
  %6873 = vmatmul.mubr.bf16.gmra.mrb[0].mxu0 %v4722
  %v6874 = vpop.f32.mrb[0].mxu0
  %v6875 = vadd.f32 0.0, %v6874
  %v6876 = vpop.f32.mrb[0].mxu0
  %v6877 = vadd.f32 0.0, %v6876
  %v6878 = vpop.f32.mrb[0].mxu0
  %v6879 = vadd.f32 0.0, %v6878
  %v6880 = vpop.f32.mrb[0].mxu0
  %v6881 = vadd.f32 0.0, %v6880
  %6882 = vmatprep.mubr.bf16.mxu0 %v4727
  %6883 = vmatmul.mubr.bf16.gmra.mrb[0].mxu0 %v4726
  %v6884 = vpop.f32.mrb[0].mxu0
  %v6885 = vadd.f32 0.0, %v6884
  %v6886 = vpop.f32.mrb[0].mxu0
  %v6887 = vadd.f32 0.0, %v6886
  %v6888 = vpop.f32.mrb[0].mxu0
  %v6889 = vpop.f32.mrb[0].mxu0
  %6890 = vdwg.mxu0
  %6891 = vmatprep.subr.bf16.mxu0 %v1529
  %6892 = vmatpush1.bf16.msra.mxu0 %v1528
  %6893 = vmatprep.subr.bf16.mxu0 %v1537
  %6894 = vmatpush1.bf16.msra.mxu0 %v1536
  %6895 = vmatprep.subr.bf16.mxu0 %v1545
  %6896 = vmatpush1.bf16.msra.mxu0 %v1544
  %6897 = vmatprep.subr.bf16.mxu0 %v1553
  %6898 = vmatpush1.bf16.msra.mxu0 %v1552
  %6899 = vmatprep.subr.bf16.mxu0 %v1561
  %6900 = vmatpush1.bf16.msra.mxu0 %v1560
  %6901 = vmatprep.subr.bf16.mxu0 %v1569
  %6902 = vmatpush1.bf16.msra.mxu0 %v1568
  %6903 = vmatprep.subr.bf16.mxu0 %v1577
  %6904 = vmatpush1.bf16.msra.mxu0 %v1576
  %6905 = vmatprep.subr.bf16.mxu0 %v1585
  %6906 = vmatpush1.bf16.msra.mxu0 %v1584
  %6907 = vmatprep.subr.bf16.mxu0 %v1593
  %6908 = vmatpush1.bf16.msra.mxu0 %v1592
  %6909 = vmatprep.subr.bf16.mxu0 %v1601
  %6910 = vmatpush1.bf16.msra.mxu0 %v1600
  %6911 = vmatprep.subr.bf16.mxu0 %v1609
  %6912 = vmatpush1.bf16.msra.mxu0 %v1608
  %6913 = vmatprep.subr.bf16.mxu0 %v1617
  %6914 = vmatpush1.bf16.msra.mxu0 %v1616
  %6915 = vmatprep.subr.bf16.mxu0 %v1625
  %6916 = vmatpush1.bf16.msra.mxu0 %v1624
  %6917 = vmatprep.subr.bf16.mxu0 %v1633
  %6918 = vmatpush1.bf16.msra.mxu0 %v1632
  %6919 = vmatprep.subr.bf16.mxu0 %v1641
  %6920 = vmatpush1.bf16.msra.mxu0 %v1640
  %6921 = vmatprep.subr.bf16.mxu0 %v1649
  %6922 = vmatpush1.bf16.msra.mxu0 %v1648
  %6923 = vmatprep.mubr.bf16.mxu0 %v4717
  %6924 = vmatmul.mubr.bf16.gmra.mrb[0].mxu0 %v4716
  %v6925 = vpop.f32.mrb[0].mxu0
  %v6926 = vadd.f32 %v6855, %v6925
  %v6927 = vpop.f32.mrb[0].mxu0
  %v6928 = vadd.f32 %v6857, %v6927
  %v6929 = vpop.f32.mrb[0].mxu0
  %v6930 = vadd.f32 %v6859, %v6929
  %v6931 = vpop.f32.mrb[0].mxu0
  %v6932 = vadd.f32 %v6861, %v6931
  %6933 = vmatprep.mubr.bf16.mxu0 %v4721
  %6934 = vmatmul.mubr.bf16.gmra.mrb[0].mxu0 %v4720
  %v6935 = vpop.f32.mrb[0].mxu0
  %v6936 = vadd.f32 %v6865, %v6935
  %v6937 = vpop.f32.mrb[0].mxu0
  %v6938 = vadd.f32 %v6867, %v6937
  %v6939 = vpop.f32.mrb[0].mxu0
  %v6940 = vadd.f32 %v6869, %v6939
  %v6941 = vpop.f32.mrb[0].mxu0
  %v6942 = vadd.f32 %v6871, %v6941
  %6943 = vmatprep.mubr.bf16.mxu0 %v4725
  %6944 = vmatmul.mubr.bf16.gmra.mrb[0].mxu0 %v4724
  %v6945 = vpop.f32.mrb[0].mxu0
  %v6946 = vadd.f32 %v6875, %v6945
  %v6947 = vpop.f32.mrb[0].mxu0
  %v6948 = vadd.f32 %v6877, %v6947
  %v6949 = vpop.f32.mrb[0].mxu0
  %v6950 = vadd.f32 %v6879, %v6949
  %v6951 = vpop.f32.mrb[0].mxu0
  %v6952 = vadd.f32 %v6881, %v6951
  %6953 = vmatprep.mubr.bf16.mxu0 %v4729
  %6954 = vmatmul.mubr.bf16.gmra.mrb[0].mxu0 %v4728
  %v6955 = vpop.f32.mrb[0].mxu0
  %v6956 = vadd.f32 %v6885, %v6955
  %v6957 = vpop.f32.mrb[0].mxu0
  %v6958 = vadd.f32 %v6887, %v6957
  %v6959 = vpop.f32.mrb[0].mxu0
  %v6960 = vpop.f32.mrb[0].mxu0
  %6961 = vdwg.mxu0
  %6962 = vmatprep.subr.bf16.mxu0 %v1403
  %6963 = vmatpush1.bf16.msra.mxu0 %v1402
  %6964 = vmatprep.subr.bf16.mxu0 %v1411
  %6965 = vmatpush1.bf16.msra.mxu0 %v1410
  %6966 = vmatprep.subr.bf16.mxu0 %v1419
  %6967 = vmatpush1.bf16.msra.mxu0 %v1418
  %6968 = vmatprep.subr.bf16.mxu0 %v1427
  %6969 = vmatpush1.bf16.msra.mxu0 %v1426
  %6970 = vmatprep.subr.bf16.mxu0 %v1435
  %6971 = vmatpush1.bf16.msra.mxu0 %v1434
  %6972 = vmatprep.subr.bf16.mxu0 %v1443
  %6973 = vmatpush1.bf16.msra.mxu0 %v1442
  %6974 = vmatprep.subr.bf16.mxu0 %v1451
  %6975 = vmatpush1.bf16.msra.mxu0 %v1450
  %6976 = vmatprep.subr.bf16.mxu0 %v1459
  %6977 = vmatpush1.bf16.msra.mxu0 %v1458
  %6978 = vmatprep.subr.bf16.mxu0 %v1467
  %6979 = vmatpush1.bf16.msra.mxu0 %v1466
  %6980 = vmatprep.subr.bf16.mxu0 %v1475
  %6981 = vmatpush1.bf16.msra.mxu0 %v1474
  %6982 = vmatprep.subr.bf16.mxu0 %v1483
  %6983 = vmatpush1.bf16.msra.mxu0 %v1482
  %6984 = vmatprep.subr.bf16.mxu0 %v1491
  %6985 = vmatpush1.bf16.msra.mxu0 %v1490
  %6986 = vmatprep.subr.bf16.mxu0 %v1499
  %6987 = vmatpush1.bf16.msra.mxu0 %v1498
  %6988 = vmatprep.subr.bf16.mxu0 %v1507
  %6989 = vmatpush1.bf16.msra.mxu0 %v1506
  %6990 = vmatprep.subr.bf16.mxu0 %v1515
  %6991 = vmatpush1.bf16.msra.mxu0 %v1514
  %6992 = vmatprep.subr.bf16.mxu0 %v1523
  %6993 = vmatpush1.bf16.msra.mxu0 %v1522
  %6994 = vmatprep.mubr.bf16.mxu0 %v4715
  %6995 = vmatmul.mubr.bf16.gmra.mrb[0].mxu0 %v4714
  %v6996 = vpop.f32.mrb[0].mxu0
  %v6997 = vadd.f32 0.0, %v6996
  %v6998 = vpop.f32.mrb[0].mxu0
  %v6999 = vadd.f32 0.0, %v6998
  %v7000 = vpop.f32.mrb[0].mxu0
  %v7001 = vadd.f32 0.0, %v7000
  %v7002 = vpop.f32.mrb[0].mxu0
  %v7003 = vadd.f32 0.0, %v7002
  %7004 = vmatprep.mubr.bf16.mxu0 %v4719
  %7005 = vmatmul.mubr.bf16.gmra.mrb[0].mxu0 %v4718
  %v7006 = vpop.f32.mrb[0].mxu0
  %v7007 = vadd.f32 0.0, %v7006
  %v7008 = vpop.f32.mrb[0].mxu0
  %v7009 = vadd.f32 0.0, %v7008
  %v7010 = vpop.f32.mrb[0].mxu0
  %v7011 = vadd.f32 0.0, %v7010
  %v7012 = vpop.f32.mrb[0].mxu0
  %v7013 = vadd.f32 0.0, %v7012
  %7014 = vmatprep.mubr.bf16.mxu0 %v4723
  %7015 = vmatmul.mubr.bf16.gmra.mrb[0].mxu0 %v4722
  %v7016 = vpop.f32.mrb[0].mxu0
  %v7017 = vadd.f32 0.0, %v7016
  %v7018 = vpop.f32.mrb[0].mxu0
  %v7019 = vadd.f32 0.0, %v7018
  %v7020 = vpop.f32.mrb[0].mxu0
  %v7021 = vadd.f32 0.0, %v7020
  %v7022 = vpop.f32.mrb[0].mxu0
  %v7023 = vadd.f32 0.0, %v7022
  %7024 = vmatprep.mubr.bf16.mxu0 %v4727
  %7025 = vmatmul.mubr.bf16.gmra.mrb[0].mxu0 %v4726
  %v7026 = vpop.f32.mrb[0].mxu0
  %v7027 = vadd.f32 0.0, %v7026
  %v7028 = vpop.f32.mrb[0].mxu0
  %v7029 = vadd.f32 0.0, %v7028
  %v7030 = vpop.f32.mrb[0].mxu0
  %v7031 = vpop.f32.mrb[0].mxu0
  %7032 = vdwg.mxu0
  %7033 = vmatprep.subr.bf16.mxu0 %v1531
  %7034 = vmatpush1.bf16.msra.mxu0 %v1530
  %7035 = vmatprep.subr.bf16.mxu0 %v1539
  %7036 = vmatpush1.bf16.msra.mxu0 %v1538
  %7037 = vmatprep.subr.bf16.mxu0 %v1547
  %7038 = vmatpush1.bf16.msra.mxu0 %v1546
  %7039 = vmatprep.subr.bf16.mxu0 %v1555
  %7040 = vmatpush1.bf16.msra.mxu0 %v1554
  %7041 = vmatprep.subr.bf16.mxu0 %v1563
  %7042 = vmatpush1.bf16.msra.mxu0 %v1562
  %7043 = vmatprep.subr.bf16.mxu0 %v1571
  %7044 = vmatpush1.bf16.msra.mxu0 %v1570
  %7045 = vmatprep.subr.bf16.mxu0 %v1579
  %7046 = vmatpush1.bf16.msra.mxu0 %v1578
  %7047 = vmatprep.subr.bf16.mxu0 %v1587
  %7048 = vmatpush1.bf16.msra.mxu0 %v1586
  %7049 = vmatprep.subr.bf16.mxu0 %v1595
  %7050 = vmatpush1.bf16.msra.mxu0 %v1594
  %7051 = vmatprep.subr.bf16.mxu0 %v1603
  %7052 = vmatpush1.bf16.msra.mxu0 %v1602
  %7053 = vmatprep.subr.bf16.mxu0 %v1611
  %7054 = vmatpush1.bf16.msra.mxu0 %v1610
  %7055 = vmatprep.subr.bf16.mxu0 %v1619
  %7056 = vmatpush1.bf16.msra.mxu0 %v1618
  %7057 = vmatprep.subr.bf16.mxu0 %v1627
  %7058 = vmatpush1.bf16.msra.mxu0 %v1626
  %7059 = vmatprep.subr.bf16.mxu0 %v1635
  %7060 = vmatpush1.bf16.msra.mxu0 %v1634
  %7061 = vmatprep.subr.bf16.mxu0 %v1643
  %7062 = vmatpush1.bf16.msra.mxu0 %v1642
  %7063 = vmatprep.subr.bf16.mxu0 %v1651
  %7064 = vmatpush1.bf16.msra.mxu0 %v1650
  %7065 = vmatprep.mubr.bf16.mxu0 %v4717
  %7066 = vmatmul.mubr.bf16.gmra.mrb[0].mxu0 %v4716
  %v7067 = vpop.f32.mrb[0].mxu0
  %v7068 = vadd.f32 %v6997, %v7067
  %v7069 = vpop.f32.mrb[0].mxu0
  %v7070 = vadd.f32 %v6999, %v7069
  %v7071 = vpop.f32.mrb[0].mxu0
  %v7072 = vadd.f32 %v7001, %v7071
  %v7073 = vpop.f32.mrb[0].mxu0
  %v7074 = vadd.f32 %v7003, %v7073
  %7075 = vmatprep.mubr.bf16.mxu0 %v4721
  %7076 = vmatmul.mubr.bf16.gmra.mrb[0].mxu0 %v4720
  %v7077 = vpop.f32.mrb[0].mxu0
  %v7078 = vadd.f32 %v7007, %v7077
  %v7079 = vpop.f32.mrb[0].mxu0
  %v7080 = vadd.f32 %v7009, %v7079
  %v7081 = vpop.f32.mrb[0].mxu0
  %v7082 = vadd.f32 %v7011, %v7081
  %v7083 = vpop.f32.mrb[0].mxu0
  %v7084 = vadd.f32 %v7013, %v7083
  %7085 = vmatprep.mubr.bf16.mxu0 %v4725
  %7086 = vmatmul.mubr.bf16.gmra.mrb[0].mxu0 %v4724
  %v7087 = vpop.f32.mrb[0].mxu0
  %v7088 = vadd.f32 %v7017, %v7087
  %v7089 = vpop.f32.mrb[0].mxu0
  %v7090 = vadd.f32 %v7019, %v7089
  %v7091 = vpop.f32.mrb[0].mxu0
  %v7092 = vadd.f32 %v7021, %v7091
  %v7093 = vpop.f32.mrb[0].mxu0
  %v7094 = vadd.f32 %v7023, %v7093
  %7095 = vmatprep.mubr.bf16.mxu0 %v4729
  %7096 = vmatmul.mubr.bf16.gmra.mrb[0].mxu0 %v4728
  %v7097 = vpop.f32.mrb[0].mxu0
  %v7098 = vadd.f32 %v7027, %v7097
  %v7099 = vpop.f32.mrb[0].mxu0
  %v7100 = vadd.f32 %v7029, %v7099
  %v7101 = vpop.f32.mrb[0].mxu0
  %v7102 = vpop.f32.mrb[0].mxu0
  %7103 = vdwg.mxu0
  %7104 = vmatprep.subr.bf16.mxu0 %v1405
  %7105 = vmatpush1.bf16.msra.mxu0 %v1404
  %7106 = vmatprep.subr.bf16.mxu0 %v1413
  %7107 = vmatpush1.bf16.msra.mxu0 %v1412
  %7108 = vmatprep.subr.bf16.mxu0 %v1421
  %7109 = vmatpush1.bf16.msra.mxu0 %v1420
  %7110 = vmatprep.subr.bf16.mxu0 %v1429
  %7111 = vmatpush1.bf16.msra.mxu0 %v1428
  %7112 = vmatprep.subr.bf16.mxu0 %v1437
  %7113 = vmatpush1.bf16.msra.mxu0 %v1436
  %7114 = vmatprep.subr.bf16.mxu0 %v1445
  %7115 = vmatpush1.bf16.msra.mxu0 %v1444
  %7116 = vmatprep.subr.bf16.mxu0 %v1453
  %7117 = vmatpush1.bf16.msra.mxu0 %v1452
  %7118 = vmatprep.subr.bf16.mxu0 %v1461
  %7119 = vmatpush1.bf16.msra.mxu0 %v1460
  %7120 = vmatprep.subr.bf16.mxu0 %v1469
  %7121 = vmatpush1.bf16.msra.mxu0 %v1468
  %7122 = vmatprep.subr.bf16.mxu0 %v1477
  %7123 = vmatpush1.bf16.msra.mxu0 %v1476
  %7124 = vmatprep.subr.bf16.mxu0 %v1485
  %7125 = vmatpush1.bf16.msra.mxu0 %v1484
  %7126 = vmatprep.subr.bf16.mxu0 %v1493
  %7127 = vmatpush1.bf16.msra.mxu0 %v1492
  %7128 = vmatprep.subr.bf16.mxu0 %v1501
  %7129 = vmatpush1.bf16.msra.mxu0 %v1500
  %7130 = vmatprep.subr.bf16.mxu0 %v1509
  %7131 = vmatpush1.bf16.msra.mxu0 %v1508
  %7132 = vmatprep.subr.bf16.mxu0 %v1517
  %7133 = vmatpush1.bf16.msra.mxu0 %v1516
  %7134 = vmatprep.subr.bf16.mxu0 %v1525
  %7135 = vmatpush1.bf16.msra.mxu0 %v1524
  %7136 = vmatprep.mubr.bf16.mxu0 %v4715
  %7137 = vmatmul.mubr.bf16.gmra.mrb[0].mxu0 %v4714
  %v7138 = vpop.f32.mrb[0].mxu0
  %v7139 = vadd.f32 0.0, %v7138
  %v7140 = vpop.f32.mrb[0].mxu0
  %v7141 = vadd.f32 0.0, %v7140
  %v7142 = vpop.f32.mrb[0].mxu0
  %v7143 = vadd.f32 0.0, %v7142
  %v7144 = vpop.f32.mrb[0].mxu0
  %v7145 = vadd.f32 0.0, %v7144
  %7146 = vmatprep.mubr.bf16.mxu0 %v4719
  %7147 = vmatmul.mubr.bf16.gmra.mrb[0].mxu0 %v4718
  %v7148 = vpop.f32.mrb[0].mxu0
  %v7149 = vadd.f32 0.0, %v7148
  %v7150 = vpop.f32.mrb[0].mxu0
  %v7151 = vadd.f32 0.0, %v7150
  %v7152 = vpop.f32.mrb[0].mxu0
  %v7153 = vadd.f32 0.0, %v7152
  %v7154 = vpop.f32.mrb[0].mxu0
  %v7155 = vadd.f32 0.0, %v7154
  %7156 = vmatprep.mubr.bf16.mxu0 %v4723
  %7157 = vmatmul.mubr.bf16.gmra.mrb[0].mxu0 %v4722
  %v7158 = vpop.f32.mrb[0].mxu0
  %v7159 = vadd.f32 0.0, %v7158
  %v7160 = vpop.f32.mrb[0].mxu0
  %v7161 = vadd.f32 0.0, %v7160
  %v7162 = vpop.f32.mrb[0].mxu0
  %v7163 = vadd.f32 0.0, %v7162
  %v7164 = vpop.f32.mrb[0].mxu0
  %v7165 = vadd.f32 0.0, %v7164
  %7166 = vmatprep.mubr.bf16.mxu0 %v4727
  %7167 = vmatmul.mubr.bf16.gmra.mrb[0].mxu0 %v4726
  %v7168 = vpop.f32.mrb[0].mxu0
  %v7169 = vadd.f32 0.0, %v7168
  %v7170 = vpop.f32.mrb[0].mxu0
  %v7171 = vadd.f32 0.0, %v7170
  %v7172 = vpop.f32.mrb[0].mxu0
  %v7173 = vpop.f32.mrb[0].mxu0
  %7174 = vdwg.mxu0
  %7175 = vmatprep.subr.bf16.mxu0 %v1533
  %7176 = vmatpush1.bf16.msra.mxu0 %v1532
  %7177 = vmatprep.subr.bf16.mxu0 %v1541
  %7178 = vmatpush1.bf16.msra.mxu0 %v1540
  %7179 = vmatprep.subr.bf16.mxu0 %v1549
  %7180 = vmatpush1.bf16.msra.mxu0 %v1548
  %7181 = vmatprep.subr.bf16.mxu0 %v1557
  %7182 = vmatpush1.bf16.msra.mxu0 %v1556
  %7183 = vmatprep.subr.bf16.mxu0 %v1565
  %7184 = vmatpush1.bf16.msra.mxu0 %v1564
  %7185 = vmatprep.subr.bf16.mxu0 %v1573
  %7186 = vmatpush1.bf16.msra.mxu0 %v1572
  %7187 = vmatprep.subr.bf16.mxu0 %v1581
  %7188 = vmatpush1.bf16.msra.mxu0 %v1580
  %7189 = vmatprep.subr.bf16.mxu0 %v1589
  %7190 = vmatpush1.bf16.msra.mxu0 %v1588
  %7191 = vmatprep.subr.bf16.mxu0 %v1597
  %7192 = vmatpush1.bf16.msra.mxu0 %v1596
  %7193 = vmatprep.subr.bf16.mxu0 %v1605
  %7194 = vmatpush1.bf16.msra.mxu0 %v1604
  %7195 = vmatprep.subr.bf16.mxu0 %v1613
  %7196 = vmatpush1.bf16.msra.mxu0 %v1612
  %7197 = vmatprep.subr.bf16.mxu0 %v1621
  %7198 = vmatpush1.bf16.msra.mxu0 %v1620
  %7199 = vmatprep.subr.bf16.mxu0 %v1629
  %7200 = vmatpush1.bf16.msra.mxu0 %v1628
  %7201 = vmatprep.subr.bf16.mxu0 %v1637
  %7202 = vmatpush1.bf16.msra.mxu0 %v1636
  %7203 = vmatprep.subr.bf16.mxu0 %v1645
  %7204 = vmatpush1.bf16.msra.mxu0 %v1644
  %7205 = vmatprep.subr.bf16.mxu0 %v1653
  %7206 = vmatpush1.bf16.msra.mxu0 %v1652
  %7207 = vmatprep.mubr.bf16.mxu0 %v4717
  %7208 = vmatmul.mubr.bf16.gmra.mrb[0].mxu0 %v4716
  %v7209 = vpop.f32.mrb[0].mxu0
  %v7210 = vadd.f32 %v7139, %v7209
  %v7211 = vpop.f32.mrb[0].mxu0
  %v7212 = vadd.f32 %v7141, %v7211
  %v7213 = vpop.f32.mrb[0].mxu0
  %v7214 = vadd.f32 %v7143, %v7213
  %v7215 = vpop.f32.mrb[0].mxu0
  %v7216 = vadd.f32 %v7145, %v7215
  %7217 = vmatprep.mubr.bf16.mxu0 %v4721
  %7218 = vmatmul.mubr.bf16.gmra.mrb[0].mxu0 %v4720
  %v7219 = vpop.f32.mrb[0].mxu0
  %v7220 = vadd.f32 %v7149, %v7219
  %v7221 = vpop.f32.mrb[0].mxu0
  %v7222 = vadd.f32 %v7151, %v7221
  %v7223 = vpop.f32.mrb[0].mxu0
  %v7224 = vadd.f32 %v7153, %v7223
  %v7225 = vpop.f32.mrb[0].mxu0
  %v7226 = vadd.f32 %v7155, %v7225
  %7227 = vmatprep.mubr.bf16.mxu0 %v4725
  %7228 = vmatmul.mubr.bf16.gmra.mrb[0].mxu0 %v4724
  %v7229 = vpop.f32.mrb[0].mxu0
  %v7230 = vadd.f32 %v7159, %v7229
  %v7231 = vpop.f32.mrb[0].mxu0
  %v7232 = vadd.f32 %v7161, %v7231
  %v7233 = vpop.f32.mrb[0].mxu0
  %v7234 = vadd.f32 %v7163, %v7233
  %v7235 = vpop.f32.mrb[0].mxu0
  %v7236 = vadd.f32 %v7165, %v7235
  %7237 = vmatprep.mubr.bf16.mxu0 %v4729
  %7238 = vmatmul.mubr.bf16.gmra.mrb[0].mxu0 %v4728
  %v7239 = vpop.f32.mrb[0].mxu0
  %v7240 = vadd.f32 %v7169, %v7239
  %v7241 = vpop.f32.mrb[0].mxu0
  %v7242 = vadd.f32 %v7171, %v7241
  %v7243 = vpop.f32.mrb[0].mxu0
  %v7244 = vpop.f32.mrb[0].mxu0
  %7245 = vdwg.mxu0
  %7246 = vmatprep.subr.bf16.mxu0 %v3321
  %7247 = vmatpush1.bf16.msra.mxu0 %v3320
  %7248 = vmatprep.subr.bf16.mxu0 %v3329
  %7249 = vmatpush1.bf16.msra.mxu0 %v3328
  %7250 = vmatprep.subr.bf16.mxu0 %v3337
  %7251 = vmatpush1.bf16.msra.mxu0 %v3336
  %7252 = vmatprep.subr.bf16.mxu0 %v3345
  %7253 = vmatpush1.bf16.msra.mxu0 %v3344
  %7254 = vmatprep.subr.bf16.mxu0 %v3353
  %7255 = vmatpush1.bf16.msra.mxu0 %v3352
  %7256 = vmatprep.subr.bf16.mxu0 %v3361
  %7257 = vmatpush1.bf16.msra.mxu0 %v3360
  %7258 = vmatprep.subr.bf16.mxu0 %v3369
  %7259 = vmatpush1.bf16.msra.mxu0 %v3368
  %7260 = vmatprep.subr.bf16.mxu0 %v3377
  %7261 = vmatpush1.bf16.msra.mxu0 %v3376
  %7262 = vmatprep.subr.bf16.mxu0 %v3385
  %7263 = vmatpush1.bf16.msra.mxu0 %v3384
  %7264 = vmatprep.subr.bf16.mxu0 %v3393
  %7265 = vmatpush1.bf16.msra.mxu0 %v3392
  %7266 = vmatprep.subr.bf16.mxu0 %v3401
  %7267 = vmatpush1.bf16.msra.mxu0 %v3400
  %7268 = vmatprep.subr.bf16.mxu0 %v3409
  %7269 = vmatpush1.bf16.msra.mxu0 %v3408
  %7270 = vmatprep.subr.bf16.mxu0 %v3417
  %7271 = vmatpush1.bf16.msra.mxu0 %v3416
  %7272 = vmatprep.subr.bf16.mxu0 %v3425
  %7273 = vmatpush1.bf16.msra.mxu0 %v3424
  %7274 = vmatprep.subr.bf16.mxu0 %v3433
  %7275 = vmatpush1.bf16.msra.mxu0 %v3432
  %7276 = vmatprep.subr.bf16.mxu0 %v3441
  %7277 = vmatpush1.bf16.msra.mxu0 %v3440
  %7278 = vmatprep.mubr.bf16.mxu0 %v599
  %7279 = vmatmul.mubr.bf16.gmra.mrb[0].mxu0 %v598
  %v7280 = vpop.f32.mrb[0].mxu0
  %v7281 = vadd.f32 %v6784, %v7280
  %v7282 = vpop.f32.mrb[0].mxu0
  %v7283 = vadd.f32 %v6786, %v7282
  %v7284 = vpop.f32.mrb[0].mxu0
  %v7285 = vadd.f32 %v6788, %v7284
  %v7286 = vpop.f32.mrb[0].mxu0
  %v7287 = vadd.f32 %v6790, %v7286
  %7288 = vmatprep.mubr.bf16.mxu0 %v603
  %7289 = vmatmul.mubr.bf16.gmra.mrb[0].mxu0 %v602
  %v7290 = vpop.f32.mrb[0].mxu0
  %v7291 = vadd.f32 %v6794, %v7290
  %v7292 = vpop.f32.mrb[0].mxu0
  %v7293 = vadd.f32 %v6796, %v7292
  %v7294 = vpop.f32.mrb[0].mxu0
  %v7295 = vadd.f32 %v6798, %v7294
  %v7296 = vpop.f32.mrb[0].mxu0
  %v7297 = vadd.f32 %v6800, %v7296
  %7298 = vmatprep.mubr.bf16.mxu0 %v607
  %7299 = vmatmul.mubr.bf16.gmra.mrb[0].mxu0 %v606
  %v7300 = vpop.f32.mrb[0].mxu0
  %v7301 = vadd.f32 %v6804, %v7300
  %v7302 = vpop.f32.mrb[0].mxu0
  %v7303 = vadd.f32 %v6806, %v7302
  %v7304 = vpop.f32.mrb[0].mxu0
  %v7305 = vadd.f32 %v6808, %v7304
  %v7306 = vpop.f32.mrb[0].mxu0
  %v7307 = vadd.f32 %v6810, %v7306
  %7308 = vmatprep.mubr.bf16.mxu0 %v611
  %7309 = vmatmul.mubr.bf16.gmra.mrb[0].mxu0 %v610
  %v7310 = vpop.f32.mrb[0].mxu0
  %v7311 = vadd.f32 %v6814, %v7310
  %v7312 = vpop.f32.mrb[0].mxu0
  %v7313 = vadd.f32 %v6816, %v7312
  %v7314 = vpop.f32.mrb[0].mxu0
  %v7315 = vpop.f32.mrb[0].mxu0
  %7316 = vdwg.mxu0
  %7317 = vmatprep.subr.bf16.mxu0 %v3449
  %7318 = vmatpush1.bf16.msra.mxu0 %v3448
  %7319 = vmatprep.subr.bf16.mxu0 %v3457
  %7320 = vmatpush1.bf16.msra.mxu0 %v3456
  %7321 = vmatprep.subr.bf16.mxu0 %v3465
  %7322 = vmatpush1.bf16.msra.mxu0 %v3464
  %7323 = vmatprep.subr.bf16.mxu0 %v3473
  %7324 = vmatpush1.bf16.msra.mxu0 %v3472
  %7325 = vmatprep.subr.bf16.mxu0 %v3481
  %7326 = vmatpush1.bf16.msra.mxu0 %v3480
  %7327 = vmatprep.subr.bf16.mxu0 %v3489
  %7328 = vmatpush1.bf16.msra.mxu0 %v3488
  %7329 = vmatprep.subr.bf16.mxu0 %v3497
  %7330 = vmatpush1.bf16.msra.mxu0 %v3496
  %7331 = vmatprep.subr.bf16.mxu0 %v3505
  %7332 = vmatpush1.bf16.msra.mxu0 %v3504
  %7333 = vmatprep.subr.bf16.mxu0 %v3513
  %7334 = vmatpush1.bf16.msra.mxu0 %v3512
  %7335 = vmatprep.subr.bf16.mxu0 %v3521
  %7336 = vmatpush1.bf16.msra.mxu0 %v3520
  %7337 = vmatprep.subr.bf16.mxu0 %v3529
  %7338 = vmatpush1.bf16.msra.mxu0 %v3528
  %7339 = vmatprep.subr.bf16.mxu0 %v3537
  %7340 = vmatpush1.bf16.msra.mxu0 %v3536
  %7341 = vmatprep.subr.bf16.mxu0 %v3545
  %7342 = vmatpush1.bf16.msra.mxu0 %v3544
  %7343 = vmatprep.subr.bf16.mxu0 %v3553
  %7344 = vmatpush1.bf16.msra.mxu0 %v3552
  %7345 = vmatprep.subr.bf16.mxu0 %v3561
  %7346 = vmatpush1.bf16.msra.mxu0 %v3560
  %7347 = vmatprep.subr.bf16.mxu0 %v3569
  %7348 = vmatpush1.bf16.msra.mxu0 %v3568
  %7349 = vmatprep.mubr.bf16.mxu0 %v601
  %7350 = vmatmul.mubr.bf16.gmra.mrb[0].mxu0 %v600
  %v7351 = vpop.f32.mrb[0].mxu0
  %v7352 = vadd.f32 %v7281, %v7351
  %v7353 = vpop.f32.mrb[0].mxu0
  %v7354 = vadd.f32 %v7283, %v7353
  %v7355 = vpop.f32.mrb[0].mxu0
  %v7356 = vadd.f32 %v7285, %v7355
  %v7357 = vpop.f32.mrb[0].mxu0
  %v7358 = vadd.f32 %v7287, %v7357
  %7359 = vmatprep.mubr.bf16.mxu0 %v605
  %7360 = vmatmul.mubr.bf16.gmra.mrb[0].mxu0 %v604
  %v7361 = vpop.f32.mrb[0].mxu0
  %v7362 = vadd.f32 %v7291, %v7361
  %v7363 = vpop.f32.mrb[0].mxu0
  %v7364 = vadd.f32 %v7293, %v7363
  %v7365 = vpop.f32.mrb[0].mxu0
  %v7366 = vadd.f32 %v7295, %v7365
  %v7367 = vpop.f32.mrb[0].mxu0
  %v7368 = vadd.f32 %v7297, %v7367
  %7369 = vmatprep.mubr.bf16.mxu0 %v609
  %7370 = vmatmul.mubr.bf16.gmra.mrb[0].mxu0 %v608
  %v7371 = vpop.f32.mrb[0].mxu0
  %v7372 = vadd.f32 %v7301, %v7371
  %v7373 = vpop.f32.mrb[0].mxu0
  %v7374 = vadd.f32 %v7303, %v7373
  %v7375 = vpop.f32.mrb[0].mxu0
  %v7376 = vadd.f32 %v7305, %v7375
  %v7377 = vpop.f32.mrb[0].mxu0
  %v7378 = vadd.f32 %v7307, %v7377
  %7379 = vmatprep.mubr.bf16.mxu0 %v613
  %7380 = vmatmul.mubr.bf16.gmra.mrb[0].mxu0 %v612
  %v7381 = vpop.f32.mrb[0].mxu0
  %v7382 = vadd.f32 %v7311, %v7381
  %v7383 = vpop.f32.mrb[0].mxu0
  %v7384 = vadd.f32 %v7313, %v7383
  %v7385 = vpop.f32.mrb[0].mxu0
  %v7386 = vpop.f32.mrb[0].mxu0
  %7387 = vdwg.mxu0
  %7388 = vmatprep.subr.bf16.mxu0 %v3323
  %7389 = vmatpush1.bf16.msra.mxu0 %v3322
  %7390 = vmatprep.subr.bf16.mxu0 %v3331
  %7391 = vmatpush1.bf16.msra.mxu0 %v3330
  %7392 = vmatprep.subr.bf16.mxu0 %v3339
  %7393 = vmatpush1.bf16.msra.mxu0 %v3338
  %7394 = vmatprep.subr.bf16.mxu0 %v3347
  %7395 = vmatpush1.bf16.msra.mxu0 %v3346
  %7396 = vmatprep.subr.bf16.mxu0 %v3355
  %7397 = vmatpush1.bf16.msra.mxu0 %v3354
  %7398 = vmatprep.subr.bf16.mxu0 %v3363
  %7399 = vmatpush1.bf16.msra.mxu0 %v3362
  %7400 = vmatprep.subr.bf16.mxu0 %v3371
  %7401 = vmatpush1.bf16.msra.mxu0 %v3370
  %7402 = vmatprep.subr.bf16.mxu0 %v3379
  %7403 = vmatpush1.bf16.msra.mxu0 %v3378
  %7404 = vmatprep.subr.bf16.mxu0 %v3387
  %7405 = vmatpush1.bf16.msra.mxu0 %v3386
  %7406 = vmatprep.subr.bf16.mxu0 %v3395
  %7407 = vmatpush1.bf16.msra.mxu0 %v3394
  %7408 = vmatprep.subr.bf16.mxu0 %v3403
  %7409 = vmatpush1.bf16.msra.mxu0 %v3402
  %7410 = vmatprep.subr.bf16.mxu0 %v3411
  %7411 = vmatpush1.bf16.msra.mxu0 %v3410
  %7412 = vmatprep.subr.bf16.mxu0 %v3419
  %7413 = vmatpush1.bf16.msra.mxu0 %v3418
  %7414 = vmatprep.subr.bf16.mxu0 %v3427
  %7415 = vmatpush1.bf16.msra.mxu0 %v3426
  %7416 = vmatprep.subr.bf16.mxu0 %v3435
  %7417 = vmatpush1.bf16.msra.mxu0 %v3434
  %7418 = vmatprep.subr.bf16.mxu0 %v3443
  %7419 = vmatpush1.bf16.msra.mxu0 %v3442
  %7420 = vmatprep.mubr.bf16.mxu0 %v599
  %7421 = vmatmul.mubr.bf16.gmra.mrb[0].mxu0 %v598
  %v7422 = vpop.f32.mrb[0].mxu0
  %v7423 = vadd.f32 %v6926, %v7422
  %v7424 = vpop.f32.mrb[0].mxu0
  %v7425 = vadd.f32 %v6928, %v7424
  %v7426 = vpop.f32.mrb[0].mxu0
  %v7427 = vadd.f32 %v6930, %v7426
  %v7428 = vpop.f32.mrb[0].mxu0
  %v7429 = vadd.f32 %v6932, %v7428
  %7430 = vmatprep.mubr.bf16.mxu0 %v603
  %7431 = vmatmul.mubr.bf16.gmra.mrb[0].mxu0 %v602
  %v7432 = vpop.f32.mrb[0].mxu0
  %v7433 = vadd.f32 %v6936, %v7432
  %v7434 = vpop.f32.mrb[0].mxu0
  %v7435 = vadd.f32 %v6938, %v7434
  %v7436 = vpop.f32.mrb[0].mxu0
  %v7437 = vadd.f32 %v6940, %v7436
  %v7438 = vpop.f32.mrb[0].mxu0
  %v7439 = vadd.f32 %v6942, %v7438
  %7440 = vmatprep.mubr.bf16.mxu0 %v607
  %7441 = vmatmul.mubr.bf16.gmra.mrb[0].mxu0 %v606
  %v7442 = vpop.f32.mrb[0].mxu0
  %v7443 = vadd.f32 %v6946, %v7442
  %v7444 = vpop.f32.mrb[0].mxu0
  %v7445 = vadd.f32 %v6948, %v7444
  %v7446 = vpop.f32.mrb[0].mxu0
  %v7447 = vadd.f32 %v6950, %v7446
  %v7448 = vpop.f32.mrb[0].mxu0
  %v7449 = vadd.f32 %v6952, %v7448
  %7450 = vmatprep.mubr.bf16.mxu0 %v611
  %7451 = vmatmul.mubr.bf16.gmra.mrb[0].mxu0 %v610
  %v7452 = vpop.f32.mrb[0].mxu0
  %v7453 = vadd.f32 %v6956, %v7452
  %v7454 = vpop.f32.mrb[0].mxu0
  %v7455 = vadd.f32 %v6958, %v7454
  %v7456 = vpop.f32.mrb[0].mxu0
  %v7457 = vpop.f32.mrb[0].mxu0
  %7458 = vdwg.mxu0
  %7459 = vmatprep.subr.bf16.mxu0 %v3451
  %7460 = vmatpush1.bf16.msra.mxu0 %v3450
  %7461 = vmatprep.subr.bf16.mxu0 %v3459
  %7462 = vmatpush1.bf16.msra.mxu0 %v3458
  %7463 = vmatprep.subr.bf16.mxu0 %v3467
  %7464 = vmatpush1.bf16.msra.mxu0 %v3466
  %7465 = vmatprep.subr.bf16.mxu0 %v3475
  %7466 = vmatpush1.bf16.msra.mxu0 %v3474
  %7467 = vmatprep.subr.bf16.mxu0 %v3483
  %7468 = vmatpush1.bf16.msra.mxu0 %v3482
  %7469 = vmatprep.subr.bf16.mxu0 %v3491
  %7470 = vmatpush1.bf16.msra.mxu0 %v3490
  %7471 = vmatprep.subr.bf16.mxu0 %v3499
  %7472 = vmatpush1.bf16.msra.mxu0 %v3498
  %7473 = vmatprep.subr.bf16.mxu0 %v3507
  %7474 = vmatpush1.bf16.msra.mxu0 %v3506
  %7475 = vmatprep.subr.bf16.mxu0 %v3515
  %7476 = vmatpush1.bf16.msra.mxu0 %v3514
  %7477 = vmatprep.subr.bf16.mxu0 %v3523
  %7478 = vmatpush1.bf16.msra.mxu0 %v3522
  %7479 = vmatprep.subr.bf16.mxu0 %v3531
  %7480 = vmatpush1.bf16.msra.mxu0 %v3530
  %7481 = vmatprep.subr.bf16.mxu0 %v3539
  %7482 = vmatpush1.bf16.msra.mxu0 %v3538
  %7483 = vmatprep.subr.bf16.mxu0 %v3547
  %7484 = vmatpush1.bf16.msra.mxu0 %v3546
  %7485 = vmatprep.subr.bf16.mxu0 %v3555
  %7486 = vmatpush1.bf16.msra.mxu0 %v3554
  %7487 = vmatprep.subr.bf16.mxu0 %v3563
  %7488 = vmatpush1.bf16.msra.mxu0 %v3562
  %7489 = vmatprep.subr.bf16.mxu0 %v3571
  %7490 = vmatpush1.bf16.msra.mxu0 %v3570
  %7491 = vmatprep.mubr.bf16.mxu0 %v601
  %7492 = vmatmul.mubr.bf16.gmra.mrb[0].mxu0 %v600
  %v7493 = vpop.f32.mrb[0].mxu0
  %v7494 = vadd.f32 %v7423, %v7493
  %v7495 = vpop.f32.mrb[0].mxu0
  %v7496 = vadd.f32 %v7425, %v7495
  %v7497 = vpop.f32.mrb[0].mxu0
  %v7498 = vadd.f32 %v7427, %v7497
  %v7499 = vpop.f32.mrb[0].mxu0
  %v7500 = vadd.f32 %v7429, %v7499
  %7501 = vmatprep.mubr.bf16.mxu0 %v605
  %7502 = vmatmul.mubr.bf16.gmra.mrb[0].mxu0 %v604
  %v7503 = vpop.f32.mrb[0].mxu0
  %v7504 = vadd.f32 %v7433, %v7503
  %v7505 = vpop.f32.mrb[0].mxu0
  %v7506 = vadd.f32 %v7435, %v7505
  %v7507 = vpop.f32.mrb[0].mxu0
  %v7508 = vadd.f32 %v7437, %v7507
  %v7509 = vpop.f32.mrb[0].mxu0
  %v7510 = vadd.f32 %v7439, %v7509
  %7511 = vmatprep.mubr.bf16.mxu0 %v609
  %7512 = vmatmul.mubr.bf16.gmra.mrb[0].mxu0 %v608
  %v7513 = vpop.f32.mrb[0].mxu0
  %v7514 = vadd.f32 %v7443, %v7513
  %v7515 = vpop.f32.mrb[0].mxu0
  %v7516 = vadd.f32 %v7445, %v7515
  %v7517 = vpop.f32.mrb[0].mxu0
  %v7518 = vadd.f32 %v7447, %v7517
  %v7519 = vpop.f32.mrb[0].mxu0
  %v7520 = vadd.f32 %v7449, %v7519
  %7521 = vmatprep.mubr.bf16.mxu0 %v613
  %7522 = vmatmul.mubr.bf16.gmra.mrb[0].mxu0 %v612
  %v7523 = vpop.f32.mrb[0].mxu0
  %v7524 = vadd.f32 %v7453, %v7523
  %v7525 = vpop.f32.mrb[0].mxu0
  %v7526 = vadd.f32 %v7455, %v7525
  %v7527 = vpop.f32.mrb[0].mxu0
  %v7528 = vpop.f32.mrb[0].mxu0
  %7529 = vdwg.mxu0
  %7530 = vmatprep.subr.bf16.mxu0 %v3325
  %7531 = vmatpush1.bf16.msra.mxu0 %v3324
  %7532 = vmatprep.subr.bf16.mxu0 %v3333
  %7533 = vmatpush1.bf16.msra.mxu0 %v3332
  %7534 = vmatprep.subr.bf16.mxu0 %v3341
  %7535 = vmatpush1.bf16.msra.mxu0 %v3340
  %7536 = vmatprep.subr.bf16.mxu0 %v3349
  %7537 = vmatpush1.bf16.msra.mxu0 %v3348
  %7538 = vmatprep.subr.bf16.mxu0 %v3357
  %7539 = vmatpush1.bf16.msra.mxu0 %v3356
  %7540 = vmatprep.subr.bf16.mxu0 %v3365
  %7541 = vmatpush1.bf16.msra.mxu0 %v3364
  %7542 = vmatprep.subr.bf16.mxu0 %v3373
  %7543 = vmatpush1.bf16.msra.mxu0 %v3372
  %7544 = vmatprep.subr.bf16.mxu0 %v3381
  %7545 = vmatpush1.bf16.msra.mxu0 %v3380
  %7546 = vmatprep.subr.bf16.mxu0 %v3389
  %7547 = vmatpush1.bf16.msra.mxu0 %v3388
  %7548 = vmatprep.subr.bf16.mxu0 %v3397
  %7549 = vmatpush1.bf16.msra.mxu0 %v3396
  %7550 = vmatprep.subr.bf16.mxu0 %v3405
  %7551 = vmatpush1.bf16.msra.mxu0 %v3404
  %7552 = vmatprep.subr.bf16.mxu0 %v3413
  %7553 = vmatpush1.bf16.msra.mxu0 %v3412
  %7554 = vmatprep.subr.bf16.mxu0 %v3421
  %7555 = vmatpush1.bf16.msra.mxu0 %v3420
  %7556 = vmatprep.subr.bf16.mxu0 %v3429
  %7557 = vmatpush1.bf16.msra.mxu0 %v3428
  %7558 = vmatprep.subr.bf16.mxu0 %v3437
  %7559 = vmatpush1.bf16.msra.mxu0 %v3436
  %7560 = vmatprep.subr.bf16.mxu0 %v3445
  %7561 = vmatpush1.bf16.msra.mxu0 %v3444
  %7562 = vmatprep.mubr.bf16.mxu0 %v599
  %7563 = vmatmul.mubr.bf16.gmra.mrb[0].mxu0 %v598
  %v7564 = vpop.f32.mrb[0].mxu0
  %v7565 = vadd.f32 %v7068, %v7564
  %v7566 = vpop.f32.mrb[0].mxu0
  %v7567 = vadd.f32 %v7070, %v7566
  %v7568 = vpop.f32.mrb[0].mxu0
  %v7569 = vadd.f32 %v7072, %v7568
  %v7570 = vpop.f32.mrb[0].mxu0
  %v7571 = vadd.f32 %v7074, %v7570
  %7572 = vmatprep.mubr.bf16.mxu0 %v603
  %7573 = vmatmul.mubr.bf16.gmra.mrb[0].mxu0 %v602
  %v7574 = vpop.f32.mrb[0].mxu0
  %v7575 = vadd.f32 %v7078, %v7574
  %v7576 = vpop.f32.mrb[0].mxu0
  %v7577 = vadd.f32 %v7080, %v7576
  %v7578 = vpop.f32.mrb[0].mxu0
  %v7579 = vadd.f32 %v7082, %v7578
  %v7580 = vpop.f32.mrb[0].mxu0
  %v7581 = vadd.f32 %v7084, %v7580
  %7582 = vmatprep.mubr.bf16.mxu0 %v607
  %7583 = vmatmul.mubr.bf16.gmra.mrb[0].mxu0 %v606
  %v7584 = vpop.f32.mrb[0].mxu0
  %v7585 = vadd.f32 %v7088, %v7584
  %v7586 = vpop.f32.mrb[0].mxu0
  %v7587 = vadd.f32 %v7090, %v7586
  %v7588 = vpop.f32.mrb[0].mxu0
  %v7589 = vadd.f32 %v7092, %v7588
  %v7590 = vpop.f32.mrb[0].mxu0
  %v7591 = vadd.f32 %v7094, %v7590
  %7592 = vmatprep.mubr.bf16.mxu0 %v611
  %7593 = vmatmul.mubr.bf16.gmra.mrb[0].mxu0 %v610
  %v7594 = vpop.f32.mrb[0].mxu0
  %v7595 = vadd.f32 %v7098, %v7594
  %v7596 = vpop.f32.mrb[0].mxu0
  %v7597 = vadd.f32 %v7100, %v7596
  %v7598 = vpop.f32.mrb[0].mxu0
  %v7599 = vpop.f32.mrb[0].mxu0
  %7600 = vdwg.mxu0
  %7601 = vmatprep.subr.bf16.mxu0 %v3453
  %7602 = vmatpush1.bf16.msra.mxu0 %v3452
  %7603 = vmatprep.subr.bf16.mxu0 %v3461
  %7604 = vmatpush1.bf16.msra.mxu0 %v3460
  %7605 = vmatprep.subr.bf16.mxu0 %v3469
  %7606 = vmatpush1.bf16.msra.mxu0 %v3468
  %7607 = vmatprep.subr.bf16.mxu0 %v3477
  %7608 = vmatpush1.bf16.msra.mxu0 %v3476
  %7609 = vmatprep.subr.bf16.mxu0 %v3485
  %7610 = vmatpush1.bf16.msra.mxu0 %v3484
  %7611 = vmatprep.subr.bf16.mxu0 %v3493
  %7612 = vmatpush1.bf16.msra.mxu0 %v3492
  %7613 = vmatprep.subr.bf16.mxu0 %v3501
  %7614 = vmatpush1.bf16.msra.mxu0 %v3500
  %7615 = vmatprep.subr.bf16.mxu0 %v3509
  %7616 = vmatpush1.bf16.msra.mxu0 %v3508
  %7617 = vmatprep.subr.bf16.mxu0 %v3517
  %7618 = vmatpush1.bf16.msra.mxu0 %v3516
  %7619 = vmatprep.subr.bf16.mxu0 %v3525
  %7620 = vmatpush1.bf16.msra.mxu0 %v3524
  %7621 = vmatprep.subr.bf16.mxu0 %v3533
  %7622 = vmatpush1.bf16.msra.mxu0 %v3532
  %7623 = vmatprep.subr.bf16.mxu0 %v3541
  %7624 = vmatpush1.bf16.msra.mxu0 %v3540
  %7625 = vmatprep.subr.bf16.mxu0 %v3549
  %7626 = vmatpush1.bf16.msra.mxu0 %v3548
  %7627 = vmatprep.subr.bf16.mxu0 %v3557
  %7628 = vmatpush1.bf16.msra.mxu0 %v3556
  %7629 = vmatprep.subr.bf16.mxu0 %v3565
  %7630 = vmatpush1.bf16.msra.mxu0 %v3564
  %7631 = vmatprep.subr.bf16.mxu0 %v3573
  %7632 = vmatpush1.bf16.msra.mxu0 %v3572
  %7633 = vmatprep.mubr.bf16.mxu0 %v601
  %7634 = vmatmul.mubr.bf16.gmra.mrb[0].mxu0 %v600
  %v7635 = vpop.f32.mrb[0].mxu0
  %v7636 = vadd.f32 %v7565, %v7635
  %v7637 = vpop.f32.mrb[0].mxu0
  %v7638 = vadd.f32 %v7567, %v7637
  %v7639 = vpop.f32.mrb[0].mxu0
  %v7640 = vadd.f32 %v7569, %v7639
  %v7641 = vpop.f32.mrb[0].mxu0
  %v7642 = vadd.f32 %v7571, %v7641
  %7643 = vmatprep.mubr.bf16.mxu0 %v605
  %7644 = vmatmul.mubr.bf16.gmra.mrb[0].mxu0 %v604
  %v7645 = vpop.f32.mrb[0].mxu0
  %v7646 = vadd.f32 %v7575, %v7645
  %v7647 = vpop.f32.mrb[0].mxu0
  %v7648 = vadd.f32 %v7577, %v7647
  %v7649 = vpop.f32.mrb[0].mxu0
  %v7650 = vadd.f32 %v7579, %v7649
  %v7651 = vpop.f32.mrb[0].mxu0
  %v7652 = vadd.f32 %v7581, %v7651
  %7653 = vmatprep.mubr.bf16.mxu0 %v609
  %7654 = vmatmul.mubr.bf16.gmra.mrb[0].mxu0 %v608
  %v7655 = vpop.f32.mrb[0].mxu0
  %v7656 = vadd.f32 %v7585, %v7655
  %v7657 = vpop.f32.mrb[0].mxu0
  %v7658 = vadd.f32 %v7587, %v7657
  %v7659 = vpop.f32.mrb[0].mxu0
  %v7660 = vadd.f32 %v7589, %v7659
  %v7661 = vpop.f32.mrb[0].mxu0
  %v7662 = vadd.f32 %v7591, %v7661
  %7663 = vmatprep.mubr.bf16.mxu0 %v613
  %7664 = vmatmul.mubr.bf16.gmra.mrb[0].mxu0 %v612
  %v7665 = vpop.f32.mrb[0].mxu0
  %v7666 = vadd.f32 %v7595, %v7665
  %v7667 = vpop.f32.mrb[0].mxu0
  %v7668 = vadd.f32 %v7597, %v7667
  %v7669 = vpop.f32.mrb[0].mxu0
  %v7670 = vpop.f32.mrb[0].mxu0
  %7671 = vdwg.mxu0
  %7672 = vmatprep.subr.bf16.mxu0 %v3327
  %7673 = vmatpush1.bf16.msra.mxu0 %v3326
  %7674 = vmatprep.subr.bf16.mxu0 %v3335
  %7675 = vmatpush1.bf16.msra.mxu0 %v3334
  %7676 = vmatprep.subr.bf16.mxu0 %v3343
  %7677 = vmatpush1.bf16.msra.mxu0 %v3342
  %7678 = vmatprep.subr.bf16.mxu0 %v3351
  %7679 = vmatpush1.bf16.msra.mxu0 %v3350
  %7680 = vmatprep.subr.bf16.mxu0 %v3359
  %7681 = vmatpush1.bf16.msra.mxu0 %v3358
  %7682 = vmatprep.subr.bf16.mxu0 %v3367
  %7683 = vmatpush1.bf16.msra.mxu0 %v3366
  %7684 = vmatprep.subr.bf16.mxu0 %v3375
  %7685 = vmatpush1.bf16.msra.mxu0 %v3374
  %7686 = vmatprep.subr.bf16.mxu0 %v3383
  %7687 = vmatpush1.bf16.msra.mxu0 %v3382
  %7688 = vmatprep.subr.bf16.mxu0 %v3391
  %7689 = vmatpush1.bf16.msra.mxu0 %v3390
  %7690 = vmatprep.subr.bf16.mxu0 %v3399
  %7691 = vmatpush1.bf16.msra.mxu0 %v3398
  %7692 = vmatprep.subr.bf16.mxu0 %v3407
  %7693 = vmatpush1.bf16.msra.mxu0 %v3406
  %7694 = vmatprep.subr.bf16.mxu0 %v3415
  %7695 = vmatpush1.bf16.msra.mxu0 %v3414
  %7696 = vmatprep.subr.bf16.mxu0 %v3423
  %7697 = vmatpush1.bf16.msra.mxu0 %v3422
  %7698 = vmatprep.subr.bf16.mxu0 %v3431
  %7699 = vmatpush1.bf16.msra.mxu0 %v3430
  %7700 = vmatprep.subr.bf16.mxu0 %v3439
  %7701 = vmatpush1.bf16.msra.mxu0 %v3438
  %7702 = vmatprep.subr.bf16.mxu0 %v3447
  %7703 = vmatpush1.bf16.msra.mxu0 %v3446
  %7704 = vmatprep.mubr.bf16.mxu0 %v599
  %7705 = vmatmul.mubr.bf16.gmra.mrb[0].mxu0 %v598
  %v7706 = vpop.f32.mrb[0].mxu0
  %v7707 = vadd.f32 %v7210, %v7706
  %v7708 = vpop.f32.mrb[0].mxu0
  %v7709 = vadd.f32 %v7212, %v7708
  %v7710 = vpop.f32.mrb[0].mxu0
  %v7711 = vadd.f32 %v7214, %v7710
  %v7712 = vpop.f32.mrb[0].mxu0
  %v7713 = vadd.f32 %v7216, %v7712
  %7714 = vmatprep.mubr.bf16.mxu0 %v603
  %7715 = vmatmul.mubr.bf16.gmra.mrb[0].mxu0 %v602
  %v7716 = vpop.f32.mrb[0].mxu0
  %v7717 = vadd.f32 %v7220, %v7716
  %v7718 = vpop.f32.mrb[0].mxu0
  %v7719 = vadd.f32 %v7222, %v7718
  %v7720 = vpop.f32.mrb[0].mxu0
  %v7721 = vadd.f32 %v7224, %v7720
  %v7722 = vpop.f32.mrb[0].mxu0
  %v7723 = vadd.f32 %v7226, %v7722
  %7724 = vmatprep.mubr.bf16.mxu0 %v607
  %7725 = vmatmul.mubr.bf16.gmra.mrb[0].mxu0 %v606
  %v7726 = vpop.f32.mrb[0].mxu0
  %v7727 = vadd.f32 %v7230, %v7726
  %v7728 = vpop.f32.mrb[0].mxu0
  %v7729 = vadd.f32 %v7232, %v7728
  %v7730 = vpop.f32.mrb[0].mxu0
  %v7731 = vadd.f32 %v7234, %v7730
  %v7732 = vpop.f32.mrb[0].mxu0
  %v7733 = vadd.f32 %v7236, %v7732
  %7734 = vmatprep.mubr.bf16.mxu0 %v611
  %7735 = vmatmul.mubr.bf16.gmra.mrb[0].mxu0 %v610
  %v7736 = vpop.f32.mrb[0].mxu0
  %v7737 = vadd.f32 %v7240, %v7736
  %v7738 = vpop.f32.mrb[0].mxu0
  %v7739 = vadd.f32 %v7242, %v7738
  %v7740 = vpop.f32.mrb[0].mxu0
  %v7741 = vpop.f32.mrb[0].mxu0
  %7742 = vdwg.mxu0
  %7743 = vmatprep.subr.bf16.mxu0 %v3455
  %7744 = vmatpush1.bf16.msra.mxu0 %v3454
  %7745 = vmatprep.subr.bf16.mxu0 %v3463
  %7746 = vmatpush1.bf16.msra.mxu0 %v3462
  %7747 = vmatprep.subr.bf16.mxu0 %v3471
  %7748 = vmatpush1.bf16.msra.mxu0 %v3470
  %7749 = vmatprep.subr.bf16.mxu0 %v3479
  %7750 = vmatpush1.bf16.msra.mxu0 %v3478
  %7751 = vmatprep.subr.bf16.mxu0 %v3487
  %7752 = vmatpush1.bf16.msra.mxu0 %v3486
  %7753 = vmatprep.subr.bf16.mxu0 %v3495
  %7754 = vmatpush1.bf16.msra.mxu0 %v3494
  %7755 = vmatprep.subr.bf16.mxu0 %v3503
  %7756 = vmatpush1.bf16.msra.mxu0 %v3502
  %7757 = vmatprep.subr.bf16.mxu0 %v3511
  %7758 = vmatpush1.bf16.msra.mxu0 %v3510
  %7759 = vmatprep.subr.bf16.mxu0 %v3519
  %7760 = vmatpush1.bf16.msra.mxu0 %v3518
  %7761 = vmatprep.subr.bf16.mxu0 %v3527
  %7762 = vmatpush1.bf16.msra.mxu0 %v3526
  %7763 = vmatprep.subr.bf16.mxu0 %v3535
  %7764 = vmatpush1.bf16.msra.mxu0 %v3534
  %7765 = vmatprep.subr.bf16.mxu0 %v3543
  %7766 = vmatpush1.bf16.msra.mxu0 %v3542
  %7767 = vmatprep.subr.bf16.mxu0 %v3551
  %7768 = vmatpush1.bf16.msra.mxu0 %v3550
  %7769 = vmatprep.subr.bf16.mxu0 %v3559
  %7770 = vmatpush1.bf16.msra.mxu0 %v3558
  %7771 = vmatprep.subr.bf16.mxu0 %v3567
  %7772 = vmatpush1.bf16.msra.mxu0 %v3566
  %7773 = vmatprep.subr.bf16.mxu0 %v3575
  %7774 = vmatpush1.bf16.msra.mxu0 %v3574
  %7775 = vmatprep.mubr.bf16.mxu0 %v601
  %7776 = vmatmul.mubr.bf16.gmra.mrb[0].mxu0 %v600
  %v7777 = vpop.f32.mrb[0].mxu0
  %v7778 = vadd.f32 %v7707, %v7777
  %v7779 = vpop.f32.mrb[0].mxu0
  %v7780 = vadd.f32 %v7709, %v7779
  %v7781 = vpop.f32.mrb[0].mxu0
  %v7782 = vadd.f32 %v7711, %v7781
  %v7783 = vpop.f32.mrb[0].mxu0
  %v7784 = vadd.f32 %v7713, %v7783
  %7785 = vmatprep.mubr.bf16.mxu0 %v605
  %7786 = vmatmul.mubr.bf16.gmra.mrb[0].mxu0 %v604
  %v7787 = vpop.f32.mrb[0].mxu0
  %v7788 = vadd.f32 %v7717, %v7787
  %v7789 = vpop.f32.mrb[0].mxu0
  %v7790 = vadd.f32 %v7719, %v7789
  %v7791 = vpop.f32.mrb[0].mxu0
  %v7792 = vadd.f32 %v7721, %v7791
  %v7793 = vpop.f32.mrb[0].mxu0
  %v7794 = vadd.f32 %v7723, %v7793
  %7795 = vmatprep.mubr.bf16.mxu0 %v609
  %7796 = vmatmul.mubr.bf16.gmra.mrb[0].mxu0 %v608
  %v7797 = vpop.f32.mrb[0].mxu0
  %v7798 = vadd.f32 %v7727, %v7797
  %v7799 = vpop.f32.mrb[0].mxu0
  %v7800 = vadd.f32 %v7729, %v7799
  %v7801 = vpop.f32.mrb[0].mxu0
  %v7802 = vadd.f32 %v7731, %v7801
  %v7803 = vpop.f32.mrb[0].mxu0
  %v7804 = vadd.f32 %v7733, %v7803
  %7805 = vmatprep.mubr.bf16.mxu0 %v613
  %7806 = vmatmul.mubr.bf16.gmra.mrb[0].mxu0 %v612
  %v7807 = vpop.f32.mrb[0].mxu0
  %v7808 = vadd.f32 %v7737, %v7807
  %v7809 = vpop.f32.mrb[0].mxu0
  %v7810 = vadd.f32 %v7739, %v7809
  %v7811 = vpop.f32.mrb[0].mxu0
  %v7812 = vpop.f32.mrb[0].mxu0
  %7813 = vdwg.mxu0
  %s7814 = scalar_lea.vmem %s0, 144
  %v7815 = vld [vmem:[%s7814] sm:$0xff]
  %v7816 = vld [vmem:[%s7814 + $0x8] sm:$0xff]
  %v7817 = vld [vmem:[%s7814 + $0x10] sm:$0xff]
  %v7818 = vld [vmem:[%s7814 + $0x18] sm:$0xff]
  %v7819 = vld [vmem:[%s7814 + $0x20] sm:$0xff]
  %v7820 = vld [vmem:[%s7814 + $0x28] sm:$0xff]
  %v7821 = vld [vmem:[%s7814 + $0x30] sm:$0xff]
  %v7822 = vld [vmem:[%s7814 + $0x38] sm:$0xff]
  %v7823 = vld [vmem:[%s7814 + $0x40] sm:$0xff]
  %v7824 = vld [vmem:[%s7814 + $0x48] sm:$0xff]
  %v7825 = vld [vmem:[%s7814 + $0x50] sm:$0xff]
  %v7826 = vld [vmem:[%s7814 + $0x58] sm:$0xff]
  %v7827 = vld [vmem:[%s7814 + $0x60] sm:$0xff]
  %v7828 = vld [vmem:[%s7814 + $0x68] sm:$0xff]
  %v7843 = vunpack.c.l.b16 %v7815
  %v7844 = vunpack.c.h.b16 %v7815
  %v7845 = vunpack.c.l.b16 %v7816
  %v7846 = vunpack.c.h.b16 %v7816
  %v7847 = vunpack.c.l.b16 %v7817
  %v7848 = vunpack.c.h.b16 %v7817
  %v7849 = vunpack.c.l.b16 %v7818
  %v7850 = vunpack.c.h.b16 %v7818
  %v7851 = vunpack.c.l.b16 %v7819
  %v7852 = vunpack.c.h.b16 %v7819
  %v7853 = vunpack.c.l.b16 %v7820
  %v7854 = vunpack.c.h.b16 %v7820
  %v7855 = vunpack.c.l.b16 %v7821
  %v7856 = vunpack.c.h.b16 %v7821
  %v7857 = vunpack.c.l.b16 %v7822
  %v7858 = vunpack.c.h.b16 %v7822
  %v7859 = vunpack.c.l.b16 %v7823
  %v7860 = vunpack.c.h.b16 %v7823
  %v7861 = vunpack.c.l.b16 %v7824
  %v7862 = vunpack.c.h.b16 %v7824
  %v7863 = vunpack.c.l.b16 %v7825
  %v7864 = vunpack.c.h.b16 %v7825
  %v7865 = vunpack.c.l.b16 %v7826
  %v7866 = vunpack.c.h.b16 %v7826
  %v7867 = vunpack.c.l.b16 %v7827
  %v7868 = vunpack.c.h.b16 %v7827
  %v7869 = vunpack.c.l.b16 %v7828
  %v7870 = vunpack.c.h.b16 %v7828
  %v7871 = vpack.c.b16 %v7847, %v7843
  %v7872 = vpack.c.b16 %v7848, %v7844
  %v7873 = vpack.c.b16 %v7849, %v7845
  %v7874 = vpack.c.b16 %v7850, %v7846
  %v7875 = vpack.c.b16 %v7855, %v7851
  %v7876 = vpack.c.b16 %v7856, %v7852
  %v7877 = vpack.c.b16 %v7857, %v7853
  %v7878 = vpack.c.b16 %v7858, %v7854
  %v7879 = vpack.c.b16 %v7863, %v7859
  %v7880 = vpack.c.b16 %v7864, %v7860
  %v7881 = vpack.c.b16 %v7865, %v7861
  %v7882 = vpack.c.b16 %v7866, %v7862
  %v7883 = vpack.c.b16 %v7867, %v7867
  %v7884 = vpack.c.b16 %v7868, %v7868
  %v7885 = vpack.c.b16 %v7869, %v7869
  %v7886 = vpack.c.b16 %v7870, %v7870
  %7903 = vmatprep.subr.bf16.mxu0 %v5515
  %7904 = vmatpush1.bf16.msra.mxu0 %v5514
  %7905 = vmatprep.subr.bf16.mxu0 %v5523
  %7906 = vmatpush1.bf16.msra.mxu0 %v5522
  %7907 = vmatprep.subr.bf16.mxu0 %v5531
  %7908 = vmatpush1.bf16.msra.mxu0 %v5530
  %7909 = vmatprep.subr.bf16.mxu0 %v5539
  %7910 = vmatpush1.bf16.msra.mxu0 %v5538
  %7911 = vmatprep.subr.bf16.mxu0 %v5547
  %7912 = vmatpush1.bf16.msra.mxu0 %v5546
  %7913 = vmatprep.subr.bf16.mxu0 %v5555
  %7914 = vmatpush1.bf16.msra.mxu0 %v5554
  %7915 = vmatprep.subr.bf16.mxu0 %v5563
  %7916 = vmatpush1.bf16.msra.mxu0 %v5562
  %7917 = vmatprep.subr.bf16.mxu0 %v5571
  %7918 = vmatpush1.bf16.msra.mxu0 %v5570
  %7919 = vmatprep.subr.bf16.mxu0 %v5579
  %7920 = vmatpush1.bf16.msra.mxu0 %v5578
  %7921 = vmatprep.subr.bf16.mxu0 %v5587
  %7922 = vmatpush1.bf16.msra.mxu0 %v5586
  %7923 = vmatprep.subr.bf16.mxu0 %v5595
  %7924 = vmatpush1.bf16.msra.mxu0 %v5594
  %7925 = vmatprep.subr.bf16.mxu0 %v5603
  %7926 = vmatpush1.bf16.msra.mxu0 %v5602
  %7927 = vmatprep.subr.bf16.mxu0 %v5611
  %7928 = vmatpush1.bf16.msra.mxu0 %v5610
  %7929 = vmatprep.subr.bf16.mxu0 %v5619
  %7930 = vmatpush1.bf16.msra.mxu0 %v5618
  %7931 = vmatprep.subr.bf16.mxu0 %v5627
  %7932 = vmatpush1.bf16.msra.mxu0 %v5626
  %7933 = vmatprep.subr.bf16.mxu0 %v5635
  %7934 = vmatpush1.bf16.msra.mxu0 %v5634
  %7935 = vmatprep.mubr.bf16.mxu0 %v7872
  %7936 = vmatmul.mubr.bf16.gmra.mrb[0].mxu0 %v7871
  %v7937 = vpop.f32.mrb[0].mxu0
  %v7938 = vadd.f32 0.0, %v7937
  %v7939 = vpop.f32.mrb[0].mxu0
  %v7940 = vadd.f32 0.0, %v7939
  %v7941 = vpop.f32.mrb[0].mxu0
  %v7942 = vadd.f32 0.0, %v7941
  %v7943 = vpop.f32.mrb[0].mxu0
  %v7944 = vadd.f32 0.0, %v7943
  %7945 = vmatprep.mubr.bf16.mxu0 %v7876
  %7946 = vmatmul.mubr.bf16.gmra.mrb[0].mxu0 %v7875
  %v7947 = vpop.f32.mrb[0].mxu0
  %v7948 = vadd.f32 0.0, %v7947
  %v7949 = vpop.f32.mrb[0].mxu0
  %v7950 = vadd.f32 0.0, %v7949
  %v7951 = vpop.f32.mrb[0].mxu0
  %v7952 = vadd.f32 0.0, %v7951
  %v7953 = vpop.f32.mrb[0].mxu0
  %v7954 = vadd.f32 0.0, %v7953
  %7955 = vmatprep.mubr.bf16.mxu0 %v7880
  %7956 = vmatmul.mubr.bf16.gmra.mrb[0].mxu0 %v7879
  %v7957 = vpop.f32.mrb[0].mxu0
  %v7958 = vadd.f32 0.0, %v7957
  %v7959 = vpop.f32.mrb[0].mxu0
  %v7960 = vadd.f32 0.0, %v7959
  %v7961 = vpop.f32.mrb[0].mxu0
  %v7962 = vadd.f32 0.0, %v7961
  %v7963 = vpop.f32.mrb[0].mxu0
  %v7964 = vadd.f32 0.0, %v7963
  %7965 = vmatprep.mubr.bf16.mxu0 %v7884
  %7966 = vmatmul.mubr.bf16.gmra.mrb[0].mxu0 %v7883
  %v7967 = vpop.f32.mrb[0].mxu0
  %v7968 = vadd.f32 0.0, %v7967
  %v7969 = vpop.f32.mrb[0].mxu0
  %v7970 = vadd.f32 0.0, %v7969
  %v7971 = vpop.f32.mrb[0].mxu0
  %v7972 = vpop.f32.mrb[0].mxu0
  %7973 = vdwg.mxu0
  %7974 = vmatprep.subr.bf16.mxu0 %v5643
  %7975 = vmatpush1.bf16.msra.mxu0 %v5642
  %7976 = vmatprep.subr.bf16.mxu0 %v5651
  %7977 = vmatpush1.bf16.msra.mxu0 %v5650
  %7978 = vmatprep.subr.bf16.mxu0 %v5659
  %7979 = vmatpush1.bf16.msra.mxu0 %v5658
  %7980 = vmatprep.subr.bf16.mxu0 %v5667
  %7981 = vmatpush1.bf16.msra.mxu0 %v5666
  %7982 = vmatprep.subr.bf16.mxu0 %v5675
  %7983 = vmatpush1.bf16.msra.mxu0 %v5674
  %7984 = vmatprep.subr.bf16.mxu0 %v5683
  %7985 = vmatpush1.bf16.msra.mxu0 %v5682
  %7986 = vmatprep.subr.bf16.mxu0 %v5691
  %7987 = vmatpush1.bf16.msra.mxu0 %v5690
  %7988 = vmatprep.subr.bf16.mxu0 %v5699
  %7989 = vmatpush1.bf16.msra.mxu0 %v5698
  %7990 = vmatprep.subr.bf16.mxu0 %v5707
  %7991 = vmatpush1.bf16.msra.mxu0 %v5706
  %7992 = vmatprep.subr.bf16.mxu0 %v5715
  %7993 = vmatpush1.bf16.msra.mxu0 %v5714
  %7994 = vmatprep.subr.bf16.mxu0 %v5723
  %7995 = vmatpush1.bf16.msra.mxu0 %v5722
  %7996 = vmatprep.subr.bf16.mxu0 %v5731
  %7997 = vmatpush1.bf16.msra.mxu0 %v5730
  %7998 = vmatprep.subr.bf16.mxu0 %v5739
  %7999 = vmatpush1.bf16.msra.mxu0 %v5738
  %8000 = vmatprep.subr.bf16.mxu0 %v5747
  %8001 = vmatpush1.bf16.msra.mxu0 %v5746
  %8002 = vmatprep.subr.bf16.mxu0 %v5755
  %8003 = vmatpush1.bf16.msra.mxu0 %v5754
  %8004 = vmatprep.subr.bf16.mxu0 %v5763
  %8005 = vmatpush1.bf16.msra.mxu0 %v5762
  %8006 = vmatprep.mubr.bf16.mxu0 %v7874
  %8007 = vmatmul.mubr.bf16.gmra.mrb[0].mxu0 %v7873
  %v8008 = vpop.f32.mrb[0].mxu0
  %v8009 = vadd.f32 %v7938, %v8008
  %v8010 = vpop.f32.mrb[0].mxu0
  %v8011 = vadd.f32 %v7940, %v8010
  %v8012 = vpop.f32.mrb[0].mxu0
  %v8013 = vadd.f32 %v7942, %v8012
  %v8014 = vpop.f32.mrb[0].mxu0
  %v8015 = vadd.f32 %v7944, %v8014
  %8016 = vmatprep.mubr.bf16.mxu0 %v7878
  %8017 = vmatmul.mubr.bf16.gmra.mrb[0].mxu0 %v7877
  %v8018 = vpop.f32.mrb[0].mxu0
  %v8019 = vadd.f32 %v7948, %v8018
  %v8020 = vpop.f32.mrb[0].mxu0
  %v8021 = vadd.f32 %v7950, %v8020
  %v8022 = vpop.f32.mrb[0].mxu0
  %v8023 = vadd.f32 %v7952, %v8022
  %v8024 = vpop.f32.mrb[0].mxu0
  %v8025 = vadd.f32 %v7954, %v8024
  %8026 = vmatprep.mubr.bf16.mxu0 %v7882
  %8027 = vmatmul.mubr.bf16.gmra.mrb[0].mxu0 %v7881
  %v8028 = vpop.f32.mrb[0].mxu0
  %v8029 = vadd.f32 %v7958, %v8028
  %v8030 = vpop.f32.mrb[0].mxu0
  %v8031 = vadd.f32 %v7960, %v8030
  %v8032 = vpop.f32.mrb[0].mxu0
  %v8033 = vadd.f32 %v7962, %v8032
  %v8034 = vpop.f32.mrb[0].mxu0
  %v8035 = vadd.f32 %v7964, %v8034
  %8036 = vmatprep.mubr.bf16.mxu0 %v7886
  %8037 = vmatmul.mubr.bf16.gmra.mrb[0].mxu0 %v7885
  %v8038 = vpop.f32.mrb[0].mxu0
  %v8039 = vadd.f32 %v7968, %v8038
  %v8040 = vpop.f32.mrb[0].mxu0
  %v8041 = vadd.f32 %v7970, %v8040
  %v8042 = vpop.f32.mrb[0].mxu0
  %v8043 = vpop.f32.mrb[0].mxu0
  %8044 = vdwg.mxu0
  %8045 = vmatprep.subr.bf16.mxu0 %v5517
  %8046 = vmatpush1.bf16.msra.mxu0 %v5516
  %8047 = vmatprep.subr.bf16.mxu0 %v5525
  %8048 = vmatpush1.bf16.msra.mxu0 %v5524
  %8049 = vmatprep.subr.bf16.mxu0 %v5533
  %8050 = vmatpush1.bf16.msra.mxu0 %v5532
  %8051 = vmatprep.subr.bf16.mxu0 %v5541
  %8052 = vmatpush1.bf16.msra.mxu0 %v5540
  %8053 = vmatprep.subr.bf16.mxu0 %v5549
  %8054 = vmatpush1.bf16.msra.mxu0 %v5548
  %8055 = vmatprep.subr.bf16.mxu0 %v5557
  %8056 = vmatpush1.bf16.msra.mxu0 %v5556
  %8057 = vmatprep.subr.bf16.mxu0 %v5565
  %8058 = vmatpush1.bf16.msra.mxu0 %v5564
  %8059 = vmatprep.subr.bf16.mxu0 %v5573
  %8060 = vmatpush1.bf16.msra.mxu0 %v5572
  %8061 = vmatprep.subr.bf16.mxu0 %v5581
  %8062 = vmatpush1.bf16.msra.mxu0 %v5580
  %8063 = vmatprep.subr.bf16.mxu0 %v5589
  %8064 = vmatpush1.bf16.msra.mxu0 %v5588
  %8065 = vmatprep.subr.bf16.mxu0 %v5597
  %8066 = vmatpush1.bf16.msra.mxu0 %v5596
  %8067 = vmatprep.subr.bf16.mxu0 %v5605
  %8068 = vmatpush1.bf16.msra.mxu0 %v5604
  %8069 = vmatprep.subr.bf16.mxu0 %v5613
  %8070 = vmatpush1.bf16.msra.mxu0 %v5612
  %8071 = vmatprep.subr.bf16.mxu0 %v5621
  %8072 = vmatpush1.bf16.msra.mxu0 %v5620
  %8073 = vmatprep.subr.bf16.mxu0 %v5629
  %8074 = vmatpush1.bf16.msra.mxu0 %v5628
  %8075 = vmatprep.subr.bf16.mxu0 %v5637
  %8076 = vmatpush1.bf16.msra.mxu0 %v5636
  %8077 = vmatprep.mubr.bf16.mxu0 %v7872
  %8078 = vmatmul.mubr.bf16.gmra.mrb[0].mxu0 %v7871
  %v8079 = vpop.f32.mrb[0].mxu0
  %v8080 = vadd.f32 0.0, %v8079
  %v8081 = vpop.f32.mrb[0].mxu0
  %v8082 = vadd.f32 0.0, %v8081
  %v8083 = vpop.f32.mrb[0].mxu0
  %v8084 = vadd.f32 0.0, %v8083
  %v8085 = vpop.f32.mrb[0].mxu0
  %v8086 = vadd.f32 0.0, %v8085
  %8087 = vmatprep.mubr.bf16.mxu0 %v7876
  %8088 = vmatmul.mubr.bf16.gmra.mrb[0].mxu0 %v7875
  %v8089 = vpop.f32.mrb[0].mxu0
  %v8090 = vadd.f32 0.0, %v8089
  %v8091 = vpop.f32.mrb[0].mxu0
  %v8092 = vadd.f32 0.0, %v8091
  %v8093 = vpop.f32.mrb[0].mxu0
  %v8094 = vadd.f32 0.0, %v8093
  %v8095 = vpop.f32.mrb[0].mxu0
  %v8096 = vadd.f32 0.0, %v8095
  %8097 = vmatprep.mubr.bf16.mxu0 %v7880
  %8098 = vmatmul.mubr.bf16.gmra.mrb[0].mxu0 %v7879
  %v8099 = vpop.f32.mrb[0].mxu0
  %v8100 = vadd.f32 0.0, %v8099
  %v8101 = vpop.f32.mrb[0].mxu0
  %v8102 = vadd.f32 0.0, %v8101
  %v8103 = vpop.f32.mrb[0].mxu0
  %v8104 = vadd.f32 0.0, %v8103
  %v8105 = vpop.f32.mrb[0].mxu0
  %v8106 = vadd.f32 0.0, %v8105
  %8107 = vmatprep.mubr.bf16.mxu0 %v7884
  %8108 = vmatmul.mubr.bf16.gmra.mrb[0].mxu0 %v7883
  %v8109 = vpop.f32.mrb[0].mxu0
  %v8110 = vadd.f32 0.0, %v8109
  %v8111 = vpop.f32.mrb[0].mxu0
  %v8112 = vadd.f32 0.0, %v8111
  %v8113 = vpop.f32.mrb[0].mxu0
  %v8114 = vpop.f32.mrb[0].mxu0
  %8115 = vdwg.mxu0
  %8116 = vmatprep.subr.bf16.mxu0 %v5645
  %8117 = vmatpush1.bf16.msra.mxu0 %v5644
  %8118 = vmatprep.subr.bf16.mxu0 %v5653
  %8119 = vmatpush1.bf16.msra.mxu0 %v5652
  %8120 = vmatprep.subr.bf16.mxu0 %v5661
  %8121 = vmatpush1.bf16.msra.mxu0 %v5660
  %8122 = vmatprep.subr.bf16.mxu0 %v5669
  %8123 = vmatpush1.bf16.msra.mxu0 %v5668
  %8124 = vmatprep.subr.bf16.mxu0 %v5677
  %8125 = vmatpush1.bf16.msra.mxu0 %v5676
  %8126 = vmatprep.subr.bf16.mxu0 %v5685
  %8127 = vmatpush1.bf16.msra.mxu0 %v5684
  %8128 = vmatprep.subr.bf16.mxu0 %v5693
  %8129 = vmatpush1.bf16.msra.mxu0 %v5692
  %8130 = vmatprep.subr.bf16.mxu0 %v5701
  %8131 = vmatpush1.bf16.msra.mxu0 %v5700
  %8132 = vmatprep.subr.bf16.mxu0 %v5709
  %8133 = vmatpush1.bf16.msra.mxu0 %v5708
  %8134 = vmatprep.subr.bf16.mxu0 %v5717
  %8135 = vmatpush1.bf16.msra.mxu0 %v5716
  %8136 = vmatprep.subr.bf16.mxu0 %v5725
  %8137 = vmatpush1.bf16.msra.mxu0 %v5724
  %8138 = vmatprep.subr.bf16.mxu0 %v5733
  %8139 = vmatpush1.bf16.msra.mxu0 %v5732
  %8140 = vmatprep.subr.bf16.mxu0 %v5741
  %8141 = vmatpush1.bf16.msra.mxu0 %v5740
  %8142 = vmatprep.subr.bf16.mxu0 %v5749
  %8143 = vmatpush1.bf16.msra.mxu0 %v5748
  %8144 = vmatprep.subr.bf16.mxu0 %v5757
  %8145 = vmatpush1.bf16.msra.mxu0 %v5756
  %8146 = vmatprep.subr.bf16.mxu0 %v5765
  %8147 = vmatpush1.bf16.msra.mxu0 %v5764
  %8148 = vmatprep.mubr.bf16.mxu0 %v7874
  %8149 = vmatmul.mubr.bf16.gmra.mrb[0].mxu0 %v7873
  %v8150 = vpop.f32.mrb[0].mxu0
  %v8151 = vadd.f32 %v8080, %v8150
  %v8152 = vpop.f32.mrb[0].mxu0
  %v8153 = vadd.f32 %v8082, %v8152
  %v8154 = vpop.f32.mrb[0].mxu0
  %v8155 = vadd.f32 %v8084, %v8154
  %v8156 = vpop.f32.mrb[0].mxu0
  %v8157 = vadd.f32 %v8086, %v8156
  %8158 = vmatprep.mubr.bf16.mxu0 %v7878
  %8159 = vmatmul.mubr.bf16.gmra.mrb[0].mxu0 %v7877
  %v8160 = vpop.f32.mrb[0].mxu0
  %v8161 = vadd.f32 %v8090, %v8160
  %v8162 = vpop.f32.mrb[0].mxu0
  %v8163 = vadd.f32 %v8092, %v8162
  %v8164 = vpop.f32.mrb[0].mxu0
  %v8165 = vadd.f32 %v8094, %v8164
  %v8166 = vpop.f32.mrb[0].mxu0
  %v8167 = vadd.f32 %v8096, %v8166
  %8168 = vmatprep.mubr.bf16.mxu0 %v7882
  %8169 = vmatmul.mubr.bf16.gmra.mrb[0].mxu0 %v7881
  %v8170 = vpop.f32.mrb[0].mxu0
  %v8171 = vadd.f32 %v8100, %v8170
  %v8172 = vpop.f32.mrb[0].mxu0
  %v8173 = vadd.f32 %v8102, %v8172
  %v8174 = vpop.f32.mrb[0].mxu0
  %v8175 = vadd.f32 %v8104, %v8174
  %v8176 = vpop.f32.mrb[0].mxu0
  %v8177 = vadd.f32 %v8106, %v8176
  %8178 = vmatprep.mubr.bf16.mxu0 %v7886
  %8179 = vmatmul.mubr.bf16.gmra.mrb[0].mxu0 %v7885
  %v8180 = vpop.f32.mrb[0].mxu0
  %v8181 = vadd.f32 %v8110, %v8180
  %v8182 = vpop.f32.mrb[0].mxu0
  %v8183 = vadd.f32 %v8112, %v8182
  %v8184 = vpop.f32.mrb[0].mxu0
  %v8185 = vpop.f32.mrb[0].mxu0
  %8186 = vdwg.mxu0
  %8187 = vmatprep.subr.bf16.mxu0 %v5519
  %8188 = vmatpush1.bf16.msra.mxu0 %v5518
  %8189 = vmatprep.subr.bf16.mxu0 %v5527
  %8190 = vmatpush1.bf16.msra.mxu0 %v5526
  %8191 = vmatprep.subr.bf16.mxu0 %v5535
  %8192 = vmatpush1.bf16.msra.mxu0 %v5534
  %8193 = vmatprep.subr.bf16.mxu0 %v5543
  %8194 = vmatpush1.bf16.msra.mxu0 %v5542
  %8195 = vmatprep.subr.bf16.mxu0 %v5551
  %8196 = vmatpush1.bf16.msra.mxu0 %v5550
  %8197 = vmatprep.subr.bf16.mxu0 %v5559
  %8198 = vmatpush1.bf16.msra.mxu0 %v5558
  %8199 = vmatprep.subr.bf16.mxu0 %v5567
  %8200 = vmatpush1.bf16.msra.mxu0 %v5566
  %8201 = vmatprep.subr.bf16.mxu0 %v5575
  %8202 = vmatpush1.bf16.msra.mxu0 %v5574
  %8203 = vmatprep.subr.bf16.mxu0 %v5583
  %8204 = vmatpush1.bf16.msra.mxu0 %v5582
  %8205 = vmatprep.subr.bf16.mxu0 %v5591
  %8206 = vmatpush1.bf16.msra.mxu0 %v5590
  %8207 = vmatprep.subr.bf16.mxu0 %v5599
  %8208 = vmatpush1.bf16.msra.mxu0 %v5598
  %8209 = vmatprep.subr.bf16.mxu0 %v5607
  %8210 = vmatpush1.bf16.msra.mxu0 %v5606
  %8211 = vmatprep.subr.bf16.mxu0 %v5615
  %8212 = vmatpush1.bf16.msra.mxu0 %v5614
  %8213 = vmatprep.subr.bf16.mxu0 %v5623
  %8214 = vmatpush1.bf16.msra.mxu0 %v5622
  %8215 = vmatprep.subr.bf16.mxu0 %v5631
  %8216 = vmatpush1.bf16.msra.mxu0 %v5630
  %8217 = vmatprep.subr.bf16.mxu0 %v5639
  %8218 = vmatpush1.bf16.msra.mxu0 %v5638
  %8219 = vmatprep.mubr.bf16.mxu0 %v7872
  %8220 = vmatmul.mubr.bf16.gmra.mrb[0].mxu0 %v7871
  %v8221 = vpop.f32.mrb[0].mxu0
  %v8222 = vadd.f32 0.0, %v8221
  %v8223 = vpop.f32.mrb[0].mxu0
  %v8224 = vadd.f32 0.0, %v8223
  %v8225 = vpop.f32.mrb[0].mxu0
  %v8226 = vadd.f32 0.0, %v8225
  %v8227 = vpop.f32.mrb[0].mxu0
  %v8228 = vadd.f32 0.0, %v8227
  %8229 = vmatprep.mubr.bf16.mxu0 %v7876
  %8230 = vmatmul.mubr.bf16.gmra.mrb[0].mxu0 %v7875
  %v8231 = vpop.f32.mrb[0].mxu0
  %v8232 = vadd.f32 0.0, %v8231
  %v8233 = vpop.f32.mrb[0].mxu0
  %v8234 = vadd.f32 0.0, %v8233
  %v8235 = vpop.f32.mrb[0].mxu0
  %v8236 = vadd.f32 0.0, %v8235
  %v8237 = vpop.f32.mrb[0].mxu0
  %v8238 = vadd.f32 0.0, %v8237
  %8239 = vmatprep.mubr.bf16.mxu0 %v7880
  %8240 = vmatmul.mubr.bf16.gmra.mrb[0].mxu0 %v7879
  %v8241 = vpop.f32.mrb[0].mxu0
  %v8242 = vadd.f32 0.0, %v8241
  %v8243 = vpop.f32.mrb[0].mxu0
  %v8244 = vadd.f32 0.0, %v8243
  %v8245 = vpop.f32.mrb[0].mxu0
  %v8246 = vadd.f32 0.0, %v8245
  %v8247 = vpop.f32.mrb[0].mxu0
  %v8248 = vadd.f32 0.0, %v8247
  %8249 = vmatprep.mubr.bf16.mxu0 %v7884
  %8250 = vmatmul.mubr.bf16.gmra.mrb[0].mxu0 %v7883
  %v8251 = vpop.f32.mrb[0].mxu0
  %v8252 = vadd.f32 0.0, %v8251
  %v8253 = vpop.f32.mrb[0].mxu0
  %v8254 = vadd.f32 0.0, %v8253
  %v8255 = vpop.f32.mrb[0].mxu0
  %v8256 = vpop.f32.mrb[0].mxu0
  %8257 = vdwg.mxu0
  %8258 = vmatprep.subr.bf16.mxu0 %v5647
  %8259 = vmatpush1.bf16.msra.mxu0 %v5646
  %8260 = vmatprep.subr.bf16.mxu0 %v5655
  %8261 = vmatpush1.bf16.msra.mxu0 %v5654
  %8262 = vmatprep.subr.bf16.mxu0 %v5663
  %8263 = vmatpush1.bf16.msra.mxu0 %v5662
  %8264 = vmatprep.subr.bf16.mxu0 %v5671
  %8265 = vmatpush1.bf16.msra.mxu0 %v5670
  %8266 = vmatprep.subr.bf16.mxu0 %v5679
  %8267 = vmatpush1.bf16.msra.mxu0 %v5678
  %8268 = vmatprep.subr.bf16.mxu0 %v5687
  %8269 = vmatpush1.bf16.msra.mxu0 %v5686
  %8270 = vmatprep.subr.bf16.mxu0 %v5695
  %8271 = vmatpush1.bf16.msra.mxu0 %v5694
  %8272 = vmatprep.subr.bf16.mxu0 %v5703
  %8273 = vmatpush1.bf16.msra.mxu0 %v5702
  %8274 = vmatprep.subr.bf16.mxu0 %v5711
  %8275 = vmatpush1.bf16.msra.mxu0 %v5710
  %8276 = vmatprep.subr.bf16.mxu0 %v5719
  %8277 = vmatpush1.bf16.msra.mxu0 %v5718
  %8278 = vmatprep.subr.bf16.mxu0 %v5727
  %8279 = vmatpush1.bf16.msra.mxu0 %v5726
  %8280 = vmatprep.subr.bf16.mxu0 %v5735
  %8281 = vmatpush1.bf16.msra.mxu0 %v5734
  %8282 = vmatprep.subr.bf16.mxu0 %v5743
  %8283 = vmatpush1.bf16.msra.mxu0 %v5742
  %8284 = vmatprep.subr.bf16.mxu0 %v5751
  %8285 = vmatpush1.bf16.msra.mxu0 %v5750
  %8286 = vmatprep.subr.bf16.mxu0 %v5759
  %8287 = vmatpush1.bf16.msra.mxu0 %v5758
  %8288 = vmatprep.subr.bf16.mxu0 %v5767
  %8289 = vmatpush1.bf16.msra.mxu0 %v5766
  %8290 = vmatprep.mubr.bf16.mxu0 %v7874
  %8291 = vmatmul.mubr.bf16.gmra.mrb[0].mxu0 %v7873
  %v8292 = vpop.f32.mrb[0].mxu0
  %v8293 = vadd.f32 %v8222, %v8292
  %v8294 = vpop.f32.mrb[0].mxu0
  %v8295 = vadd.f32 %v8224, %v8294
  %v8296 = vpop.f32.mrb[0].mxu0
  %v8297 = vadd.f32 %v8226, %v8296
  %v8298 = vpop.f32.mrb[0].mxu0
  %v8299 = vadd.f32 %v8228, %v8298
  %8300 = vmatprep.mubr.bf16.mxu0 %v7878
  %8301 = vmatmul.mubr.bf16.gmra.mrb[0].mxu0 %v7877
  %v8302 = vpop.f32.mrb[0].mxu0
  %v8303 = vadd.f32 %v8232, %v8302
  %v8304 = vpop.f32.mrb[0].mxu0
  %v8305 = vadd.f32 %v8234, %v8304
  %v8306 = vpop.f32.mrb[0].mxu0
  %v8307 = vadd.f32 %v8236, %v8306
  %v8308 = vpop.f32.mrb[0].mxu0
  %v8309 = vadd.f32 %v8238, %v8308
  %8310 = vmatprep.mubr.bf16.mxu0 %v7882
  %8311 = vmatmul.mubr.bf16.gmra.mrb[0].mxu0 %v7881
  %v8312 = vpop.f32.mrb[0].mxu0
  %v8313 = vadd.f32 %v8242, %v8312
  %v8314 = vpop.f32.mrb[0].mxu0
  %v8315 = vadd.f32 %v8244, %v8314
  %v8316 = vpop.f32.mrb[0].mxu0
  %v8317 = vadd.f32 %v8246, %v8316
  %v8318 = vpop.f32.mrb[0].mxu0
  %v8319 = vadd.f32 %v8248, %v8318
  %8320 = vmatprep.mubr.bf16.mxu0 %v7886
  %8321 = vmatmul.mubr.bf16.gmra.mrb[0].mxu0 %v7885
  %v8322 = vpop.f32.mrb[0].mxu0
  %v8323 = vadd.f32 %v8252, %v8322
  %v8324 = vpop.f32.mrb[0].mxu0
  %v8325 = vadd.f32 %v8254, %v8324
  %v8326 = vpop.f32.mrb[0].mxu0
  %v8327 = vpop.f32.mrb[0].mxu0
  %8328 = vdwg.mxu0
  %8329 = vmatprep.subr.bf16.mxu0 %v5521
  %8330 = vmatpush1.bf16.msra.mxu0 %v5520
  %8331 = vmatprep.subr.bf16.mxu0 %v5529
  %8332 = vmatpush1.bf16.msra.mxu0 %v5528
  %8333 = vmatprep.subr.bf16.mxu0 %v5537
  %8334 = vmatpush1.bf16.msra.mxu0 %v5536
  %8335 = vmatprep.subr.bf16.mxu0 %v5545
  %8336 = vmatpush1.bf16.msra.mxu0 %v5544
  %8337 = vmatprep.subr.bf16.mxu0 %v5553
  %8338 = vmatpush1.bf16.msra.mxu0 %v5552
  %8339 = vmatprep.subr.bf16.mxu0 %v5561
  %8340 = vmatpush1.bf16.msra.mxu0 %v5560
  %8341 = vmatprep.subr.bf16.mxu0 %v5569
  %8342 = vmatpush1.bf16.msra.mxu0 %v5568
  %8343 = vmatprep.subr.bf16.mxu0 %v5577
  %8344 = vmatpush1.bf16.msra.mxu0 %v5576
  %8345 = vmatprep.subr.bf16.mxu0 %v5585
  %8346 = vmatpush1.bf16.msra.mxu0 %v5584
  %8347 = vmatprep.subr.bf16.mxu0 %v5593
  %8348 = vmatpush1.bf16.msra.mxu0 %v5592
  %8349 = vmatprep.subr.bf16.mxu0 %v5601
  %8350 = vmatpush1.bf16.msra.mxu0 %v5600
  %8351 = vmatprep.subr.bf16.mxu0 %v5609
  %8352 = vmatpush1.bf16.msra.mxu0 %v5608
  %8353 = vmatprep.subr.bf16.mxu0 %v5617
  %8354 = vmatpush1.bf16.msra.mxu0 %v5616
  %8355 = vmatprep.subr.bf16.mxu0 %v5625
  %8356 = vmatpush1.bf16.msra.mxu0 %v5624
  %8357 = vmatprep.subr.bf16.mxu0 %v5633
  %8358 = vmatpush1.bf16.msra.mxu0 %v5632
  %8359 = vmatprep.subr.bf16.mxu0 %v5641
  %8360 = vmatpush1.bf16.msra.mxu0 %v5640
  %8361 = vmatprep.mubr.bf16.mxu0 %v7872
  %8362 = vmatmul.mubr.bf16.gmra.mrb[0].mxu0 %v7871
  %v8363 = vpop.f32.mrb[0].mxu0
  %v8364 = vadd.f32 0.0, %v8363
  %v8365 = vpop.f32.mrb[0].mxu0
  %v8366 = vadd.f32 0.0, %v8365
  %v8367 = vpop.f32.mrb[0].mxu0
  %v8368 = vadd.f32 0.0, %v8367
  %v8369 = vpop.f32.mrb[0].mxu0
  %v8370 = vadd.f32 0.0, %v8369
  %8371 = vmatprep.mubr.bf16.mxu0 %v7876
  %8372 = vmatmul.mubr.bf16.gmra.mrb[0].mxu0 %v7875
  %v8373 = vpop.f32.mrb[0].mxu0
  %v8374 = vadd.f32 0.0, %v8373
  %v8375 = vpop.f32.mrb[0].mxu0
  %v8376 = vadd.f32 0.0, %v8375
  %v8377 = vpop.f32.mrb[0].mxu0
  %v8378 = vadd.f32 0.0, %v8377
  %v8379 = vpop.f32.mrb[0].mxu0
  %v8380 = vadd.f32 0.0, %v8379
  %8381 = vmatprep.mubr.bf16.mxu0 %v7880
  %8382 = vmatmul.mubr.bf16.gmra.mrb[0].mxu0 %v7879
  %v8383 = vpop.f32.mrb[0].mxu0
  %v8384 = vadd.f32 0.0, %v8383
  %v8385 = vpop.f32.mrb[0].mxu0
  %v8386 = vadd.f32 0.0, %v8385
  %v8387 = vpop.f32.mrb[0].mxu0
  %v8388 = vadd.f32 0.0, %v8387
  %v8389 = vpop.f32.mrb[0].mxu0
  %v8390 = vadd.f32 0.0, %v8389
  %8391 = vmatprep.mubr.bf16.mxu0 %v7884
  %8392 = vmatmul.mubr.bf16.gmra.mrb[0].mxu0 %v7883
  %v8393 = vpop.f32.mrb[0].mxu0
  %v8394 = vadd.f32 0.0, %v8393
  %v8395 = vpop.f32.mrb[0].mxu0
  %v8396 = vadd.f32 0.0, %v8395
  %v8397 = vpop.f32.mrb[0].mxu0
  %v8398 = vpop.f32.mrb[0].mxu0
  %8399 = vdwg.mxu0
  %8400 = vmatprep.subr.bf16.mxu0 %v5649
  %8401 = vmatpush1.bf16.msra.mxu0 %v5648
  %8402 = vmatprep.subr.bf16.mxu0 %v5657
  %8403 = vmatpush1.bf16.msra.mxu0 %v5656
  %8404 = vmatprep.subr.bf16.mxu0 %v5665
  %8405 = vmatpush1.bf16.msra.mxu0 %v5664
  %8406 = vmatprep.subr.bf16.mxu0 %v5673
  %8407 = vmatpush1.bf16.msra.mxu0 %v5672
  %8408 = vmatprep.subr.bf16.mxu0 %v5681
  %8409 = vmatpush1.bf16.msra.mxu0 %v5680
  %8410 = vmatprep.subr.bf16.mxu0 %v5689
  %8411 = vmatpush1.bf16.msra.mxu0 %v5688
  %8412 = vmatprep.subr.bf16.mxu0 %v5697
  %8413 = vmatpush1.bf16.msra.mxu0 %v5696
  %8414 = vmatprep.subr.bf16.mxu0 %v5705
  %8415 = vmatpush1.bf16.msra.mxu0 %v5704
  %8416 = vmatprep.subr.bf16.mxu0 %v5713
  %8417 = vmatpush1.bf16.msra.mxu0 %v5712
  %8418 = vmatprep.subr.bf16.mxu0 %v5721
  %8419 = vmatpush1.bf16.msra.mxu0 %v5720
  %8420 = vmatprep.subr.bf16.mxu0 %v5729
  %8421 = vmatpush1.bf16.msra.mxu0 %v5728
  %8422 = vmatprep.subr.bf16.mxu0 %v5737
  %8423 = vmatpush1.bf16.msra.mxu0 %v5736
  %8424 = vmatprep.subr.bf16.mxu0 %v5745
  %8425 = vmatpush1.bf16.msra.mxu0 %v5744
  %8426 = vmatprep.subr.bf16.mxu0 %v5753
  %8427 = vmatpush1.bf16.msra.mxu0 %v5752
  %8428 = vmatprep.subr.bf16.mxu0 %v5761
  %8429 = vmatpush1.bf16.msra.mxu0 %v5760
  %8430 = vmatprep.subr.bf16.mxu0 %v5769
  %8431 = vmatpush1.bf16.msra.mxu0 %v5768
  %8432 = vmatprep.mubr.bf16.mxu0 %v7874
  %8433 = vmatmul.mubr.bf16.gmra.mrb[0].mxu0 %v7873
  %v8434 = vpop.f32.mrb[0].mxu0
  %v8435 = vadd.f32 %v8364, %v8434
  %v8436 = vpop.f32.mrb[0].mxu0
  %v8437 = vadd.f32 %v8366, %v8436
  %v8438 = vpop.f32.mrb[0].mxu0
  %v8439 = vadd.f32 %v8368, %v8438
  %v8440 = vpop.f32.mrb[0].mxu0
  %v8441 = vadd.f32 %v8370, %v8440
  %8442 = vmatprep.mubr.bf16.mxu0 %v7878
  %8443 = vmatmul.mubr.bf16.gmra.mrb[0].mxu0 %v7877
  %v8444 = vpop.f32.mrb[0].mxu0
  %v8445 = vadd.f32 %v8374, %v8444
  %v8446 = vpop.f32.mrb[0].mxu0
  %v8447 = vadd.f32 %v8376, %v8446
  %v8448 = vpop.f32.mrb[0].mxu0
  %v8449 = vadd.f32 %v8378, %v8448
  %v8450 = vpop.f32.mrb[0].mxu0
  %v8451 = vadd.f32 %v8380, %v8450
  %8452 = vmatprep.mubr.bf16.mxu0 %v7882
  %8453 = vmatmul.mubr.bf16.gmra.mrb[0].mxu0 %v7881
  %v8454 = vpop.f32.mrb[0].mxu0
  %v8455 = vadd.f32 %v8384, %v8454
  %v8456 = vpop.f32.mrb[0].mxu0
  %v8457 = vadd.f32 %v8386, %v8456
  %v8458 = vpop.f32.mrb[0].mxu0
  %v8459 = vadd.f32 %v8388, %v8458
  %v8460 = vpop.f32.mrb[0].mxu0
  %v8461 = vadd.f32 %v8390, %v8460
  %8462 = vmatprep.mubr.bf16.mxu0 %v7886
  %8463 = vmatmul.mubr.bf16.gmra.mrb[0].mxu0 %v7885
  %v8464 = vpop.f32.mrb[0].mxu0
  %v8465 = vadd.f32 %v8394, %v8464
  %v8466 = vpop.f32.mrb[0].mxu0
  %v8467 = vadd.f32 %v8396, %v8466
  %v8468 = vpop.f32.mrb[0].mxu0
  %v8469 = vpop.f32.mrb[0].mxu0
  %8470 = vdwg.mxu0
  %v8471 = vadd.f32 %v7352, %v8009
  %v8472 = vadd.f32 %v7354, %v8011
  %v8473 = vadd.f32 %v7494, %v8151
  %v8474 = vadd.f32 %v7496, %v8153
  %v8475 = vadd.f32 %v7636, %v8293
  %v8476 = vadd.f32 %v7638, %v8295
  %v8477 = vadd.f32 %v7778, %v8435
  %v8478 = vadd.f32 %v7780, %v8437
  %v8479 = vadd.f32 %v7356, %v8013
  %v8480 = vadd.f32 %v7358, %v8015
  %v8481 = vadd.f32 %v7498, %v8155
  %v8482 = vadd.f32 %v7500, %v8157
  %v8483 = vadd.f32 %v7640, %v8297
  %v8484 = vadd.f32 %v7642, %v8299
  %v8485 = vadd.f32 %v7782, %v8439
  %v8486 = vadd.f32 %v7784, %v8441
  %v8487 = vadd.f32 %v7362, %v8019
  %v8488 = vadd.f32 %v7364, %v8021
  %v8489 = vadd.f32 %v7504, %v8161
  %v8490 = vadd.f32 %v7506, %v8163
  %v8491 = vadd.f32 %v7646, %v8303
  %v8492 = vadd.f32 %v7648, %v8305
  %v8493 = vadd.f32 %v7788, %v8445
  %v8494 = vadd.f32 %v7790, %v8447
  %v8495 = vadd.f32 %v7366, %v8023
  %v8496 = vadd.f32 %v7368, %v8025
  %v8497 = vadd.f32 %v7508, %v8165
  %v8498 = vadd.f32 %v7510, %v8167
  %v8499 = vadd.f32 %v7650, %v8307
  %v8500 = vadd.f32 %v7652, %v8309
  %v8501 = vadd.f32 %v7792, %v8449
  %v8502 = vadd.f32 %v7794, %v8451
  %v8503 = vadd.f32 %v7372, %v8029
  %v8504 = vadd.f32 %v7374, %v8031
  %v8505 = vadd.f32 %v7514, %v8171
  %v8506 = vadd.f32 %v7516, %v8173
  %v8507 = vadd.f32 %v7656, %v8313
  %v8508 = vadd.f32 %v7658, %v8315
  %v8509 = vadd.f32 %v7798, %v8455
  %v8510 = vadd.f32 %v7800, %v8457
  %v8511 = vadd.f32 %v7376, %v8033
  %v8512 = vadd.f32 %v7378, %v8035
  %v8513 = vadd.f32 %v7518, %v8175
  %v8514 = vadd.f32 %v7520, %v8177
  %v8515 = vadd.f32 %v7660, %v8317
  %v8516 = vadd.f32 %v7662, %v8319
  %v8517 = vadd.f32 %v7802, %v8459
  %v8518 = vadd.f32 %v7804, %v8461
  %v8519 = vadd.f32 %v7382, %v8039
  %v8520 = vadd.f32 %v7384, %v8041
  %v8521 = vadd.f32 %v7524, %v8181
  %v8522 = vadd.f32 %v7526, %v8183
  %v8523 = vadd.f32 %v7666, %v8323
  %v8524 = vadd.f32 %v7668, %v8325
  %v8525 = vadd.f32 %v7808, %v8465
  %v8526 = vadd.f32 %v7810, %v8467
  %v8527 = vmax.f32 %v8471, %v8475
  %v8528 = vmax.f32 %v8472, %v8476
  %v8529 = vmax.f32 %v8473, %v8477
  %v8530 = vmax.f32 %v8474, %v8478
  %v8531 = vmax.f32 %v8479, %v8483
  %v8532 = vmax.f32 %v8480, %v8484
  %v8533 = vmax.f32 %v8481, %v8485
  %v8534 = vmax.f32 %v8482, %v8486
  %v8535 = vmax.f32 %v8487, %v8491
  %v8536 = vmax.f32 %v8488, %v8492
  %v8537 = vmax.f32 %v8489, %v8493
  %v8538 = vmax.f32 %v8490, %v8494
  %v8539 = vmax.f32 %v8495, %v8499
  %v8540 = vmax.f32 %v8496, %v8500
  %v8541 = vmax.f32 %v8497, %v8501
  %v8542 = vmax.f32 %v8498, %v8502
  %v8543 = vmax.f32 %v8503, %v8507
  %v8544 = vmax.f32 %v8504, %v8508
  %v8545 = vmax.f32 %v8505, %v8509
  %v8546 = vmax.f32 %v8506, %v8510
  %v8547 = vmax.f32 %v8511, %v8515
  %v8548 = vmax.f32 %v8512, %v8516
  %v8549 = vmax.f32 %v8513, %v8517
  %v8550 = vmax.f32 %v8514, %v8518
  %v8551 = vmax.f32 %v8519, %v8523
  %v8552 = vmax.f32 %v8520, %v8524
  %v8553 = vmax.f32 %v8521, %v8525
  %v8554 = vmax.f32 %v8522, %v8526
  %v8555 = vmax.f32 %v6650, %v8527
  %v8556 = vmax.f32 %v6651, %v8528
  %v8557 = vmax.f32 %v6652, %v8529
  %v8558 = vmax.f32 %v6653, %v8530
  %v8559 = vmax.f32 %v6654, %v8531
  %v8560 = vmax.f32 %v6655, %v8532
  %v8561 = vmax.f32 %v6656, %v8533
  %v8562 = vmax.f32 %v6657, %v8534
  %v8563 = vmax.f32 %v6658, %v8535
  %v8564 = vmax.f32 %v6659, %v8536
  %v8565 = vmax.f32 %v6660, %v8537
  %v8566 = vmax.f32 %v6661, %v8538
  %v8567 = vmax.f32 %v6662, %v8539
  %v8568 = vmax.f32 %v6663, %v8540
  %v8569 = vmax.f32 %v6664, %v8541
  %v8570 = vmax.f32 %v6665, %v8542
  %v8571 = vmax.f32 %v6666, %v8543
  %v8572 = vmax.f32 %v6667, %v8544
  %v8573 = vmax.f32 %v6668, %v8545
  %v8574 = vmax.f32 %v6669, %v8546
  %v8575 = vmax.f32 %v6670, %v8547
  %v8576 = vmax.f32 %v6671, %v8548
  %v8577 = vmax.f32 %v6672, %v8549
  %v8578 = vmax.f32 %v6673, %v8550
  %v8579 = vmax.f32 %v6674, %v8551
  %v8580 = vmax.f32 %v6675, %v8552
  %v8581 = vmax.f32 %v6676, %v8553
  %v8582 = vmax.f32 %v6677, %v8554
  %v8583 = vld [vmem:[%s2] sm:$0xf]
  %v8585 = vlaneseq
  %v8586 = vshrl.u32 %v8585, 7
  %v8587 = vsub.s32 0, %v8586
  %v8588 = vrot.slane %v8583, %v8587
  %v8589 = vlaneseq
  %v8590 = vshrl.u32 %v8589, 7
  %v8591 = vsub.s32 1, %v8590
  %v8592 = vrot.slane %v8583, %v8591
  %v8593 = vlaneseq
  %v8594 = vshrl.u32 %v8593, 7
  %v8595 = vsub.s32 2, %v8594
  %v8596 = vrot.slane %v8583, %v8595
  %v8597 = vlaneseq
  %v8598 = vshrl.u32 %v8597, 7
  %v8599 = vsub.s32 3, %v8598
  %v8600 = vrot.slane %v8583, %v8599
  %v8605 = vadd.f32 %v8555, %v8588
  %v8606 = vadd.f32 %v8556, %v8592
  %v8607 = vadd.f32 %v8557, %v8596
  %v8608 = vadd.f32 %v8558, %v8600
  %v8609 = vadd.f32 %v8559, %v8588
  %v8610 = vadd.f32 %v8560, %v8592
  %v8611 = vadd.f32 %v8561, %v8596
  %v8612 = vadd.f32 %v8562, %v8600
  %v8613 = vadd.f32 %v8563, %v8588
  %v8614 = vadd.f32 %v8564, %v8592
  %v8615 = vadd.f32 %v8565, %v8596
  %v8616 = vadd.f32 %v8566, %v8600
  %v8617 = vadd.f32 %v8567, %v8588
  %v8618 = vadd.f32 %v8568, %v8592
  %v8619 = vadd.f32 %v8569, %v8596
  %v8620 = vadd.f32 %v8570, %v8600
  %v8621 = vadd.f32 %v8571, %v8588
  %v8622 = vadd.f32 %v8572, %v8592
  %v8623 = vadd.f32 %v8573, %v8596
  %v8624 = vadd.f32 %v8574, %v8600
  %v8625 = vadd.f32 %v8575, %v8588
  %v8626 = vadd.f32 %v8576, %v8592
  %v8627 = vadd.f32 %v8577, %v8596
  %v8628 = vadd.f32 %v8578, %v8600
  %v8629 = vadd.f32 %v8579, %v8588
  %v8630 = vadd.f32 %v8580, %v8592
  %v8631 = vadd.f32 %v8581, %v8596
  %v8632 = vadd.f32 %v8582, %v8600
  %v8633 = vmax.f32 %v8605, 0.0
  %v8634 = vmax.f32 %v8606, 0.0
  %v8635 = vmax.f32 %v8607, 0.0
  %v8636 = vmax.f32 %v8608, 0.0
  %v8637 = vmax.f32 %v8609, 0.0
  %v8638 = vmax.f32 %v8610, 0.0
  %v8639 = vmax.f32 %v8611, 0.0
  %v8640 = vmax.f32 %v8612, 0.0
  %v8641 = vmax.f32 %v8613, 0.0
  %v8642 = vmax.f32 %v8614, 0.0
  %v8643 = vmax.f32 %v8615, 0.0
  %v8644 = vmax.f32 %v8616, 0.0
  %v8645 = vmax.f32 %v8617, 0.0
  %v8646 = vmax.f32 %v8618, 0.0
  %v8647 = vmax.f32 %v8619, 0.0
  %v8648 = vmax.f32 %v8620, 0.0
  %v8649 = vmax.f32 %v8621, 0.0
  %v8650 = vmax.f32 %v8622, 0.0
  %v8651 = vmax.f32 %v8623, 0.0
  %v8652 = vmax.f32 %v8624, 0.0
  %v8653 = vmax.f32 %v8625, 0.0
  %v8654 = vmax.f32 %v8626, 0.0
  %v8655 = vmax.f32 %v8627, 0.0
  %v8656 = vmax.f32 %v8628, 0.0
  %v8657 = vmax.f32 %v8629, 0.0
  %v8658 = vmax.f32 %v8630, 0.0
  %v8659 = vmax.f32 %v8631, 0.0
  %v8660 = vmax.f32 %v8632, 0.0
  %v8661 = vpack.c.bf16 %v8633, %v8633
  %v8662 = vpack.c.bf16 %v8634, %v8634
  %v8663 = vpack.c.bf16 %v8635, %v8635
  %v8664 = vpack.c.bf16 %v8636, %v8636
  %v8665 = vpack.c.bf16 %v8637, %v8637
  %v8666 = vpack.c.bf16 %v8638, %v8638
  %v8667 = vpack.c.bf16 %v8639, %v8639
  %v8668 = vpack.c.bf16 %v8640, %v8640
  %v8669 = vpack.c.bf16 %v8641, %v8641
  %v8670 = vpack.c.bf16 %v8642, %v8642
  %v8671 = vpack.c.bf16 %v8643, %v8643
  %v8672 = vpack.c.bf16 %v8644, %v8644
  %v8673 = vpack.c.bf16 %v8645, %v8645
  %v8674 = vpack.c.bf16 %v8646, %v8646
  %v8675 = vpack.c.bf16 %v8647, %v8647
  %v8676 = vpack.c.bf16 %v8648, %v8648
  %v8677 = vpack.c.bf16 %v8649, %v8649
  %v8678 = vpack.c.bf16 %v8650, %v8650
  %v8679 = vpack.c.bf16 %v8651, %v8651
  %v8680 = vpack.c.bf16 %v8652, %v8652
  %v8681 = vpack.c.bf16 %v8653, %v8653
  %v8682 = vpack.c.bf16 %v8654, %v8654
  %v8683 = vpack.c.bf16 %v8655, %v8655
  %v8684 = vpack.c.bf16 %v8656, %v8656
  %v8685 = vpack.c.bf16 %v8657, %v8657
  %v8686 = vpack.c.bf16 %v8658, %v8658
  %v8687 = vpack.c.bf16 %v8659, %v8659
  %v8688 = vpack.c.bf16 %v8660, %v8660
  %v8717 = vunpack.c.l.b16 %v8661
  %v8718 = vunpack.c.l.b16 %v8662
  %v8719 = vunpack.c.l.b16 %v8663
  %v8720 = vunpack.c.l.b16 %v8664
  %v8721 = vunpack.c.l.b16 %v8665
  %v8722 = vunpack.c.l.b16 %v8666
  %v8723 = vunpack.c.l.b16 %v8667
  %v8724 = vunpack.c.l.b16 %v8668
  %v8725 = vunpack.c.l.b16 %v8669
  %v8726 = vunpack.c.l.b16 %v8670
  %v8727 = vunpack.c.l.b16 %v8671
  %v8728 = vunpack.c.l.b16 %v8672
  %v8729 = vunpack.c.l.b16 %v8673
  %v8730 = vunpack.c.l.b16 %v8674
  %v8731 = vunpack.c.l.b16 %v8675
  %v8732 = vunpack.c.l.b16 %v8676
  %v8733 = vunpack.c.l.b16 %v8677
  %v8734 = vunpack.c.l.b16 %v8678
  %v8735 = vunpack.c.l.b16 %v8679
  %v8736 = vunpack.c.l.b16 %v8680
  %v8737 = vunpack.c.l.b16 %v8681
  %v8738 = vunpack.c.l.b16 %v8682
  %v8739 = vunpack.c.l.b16 %v8683
  %v8740 = vunpack.c.l.b16 %v8684
  %v8741 = vunpack.c.l.b16 %v8685
  %v8742 = vunpack.c.l.b16 %v8686
  %v8743 = vunpack.c.l.b16 %v8687
  %v8744 = vunpack.c.l.b16 %v8688
  %v8745 = vpack.c.b16 %v8718, %v8717
  %v8746 = vpack.c.b16 %v8720, %v8719
  %v8747 = vpack.c.b16 %v8722, %v8721
  %v8748 = vpack.c.b16 %v8724, %v8723
  %v8749 = vpack.c.b16 %v8726, %v8725
  %v8750 = vpack.c.b16 %v8728, %v8727
  %v8751 = vpack.c.b16 %v8730, %v8729
  %v8752 = vpack.c.b16 %v8732, %v8731
  %v8753 = vpack.c.b16 %v8734, %v8733
  %v8754 = vpack.c.b16 %v8736, %v8735
  %v8755 = vpack.c.b16 %v8738, %v8737
  %v8756 = vpack.c.b16 %v8740, %v8739
  %v8757 = vpack.c.b16 %v8742, %v8741
  %v8758 = vpack.c.b16 %v8744, %v8743
  %8773 = vst [vmem:[%s3] sm:$0xff] %v8745
  %8774 = vst [vmem:[%s3 + $0x8] sm:$0xff] %v8746
  %8775 = vst [vmem:[%s3 + $0x10] sm:$0xff] %v8747
  %8776 = vst [vmem:[%s3 + $0x18] sm:$0xff] %v8748
  %8777 = vst [vmem:[%s3 + $0x20] sm:$0xff] %v8749
  %8778 = vst [vmem:[%s3 + $0x28] sm:$0xff] %v8750
  %8779 = vst [vmem:[%s3 + $0x30] sm:$0xff] %v8751
  %8780 = vst [vmem:[%s3 + $0x38] sm:$0xff] %v8752
  %8781 = vst [vmem:[%s3 + $0x40] sm:$0xff] %v8753
  %8782 = vst [vmem:[%s3 + $0x48] sm:$0xff] %v8754
  %8783 = vst [vmem:[%s3 + $0x50] sm:$0xff] %v8755
  %8784 = vst [vmem:[%s3 + $0x58] sm:$0xff] %v8756
  %8785 = vst [vmem:[%s3 + $0x60] sm:$0xff] %v8757
  %8786 = vst [vmem:[%s3 + $0x68] sm:$0xff] %v8758
  // Predicated region
  $region14: #{cnn_forward.4} parent=0 // pred_check
    _
  $region15: #{cnn_forward.4} parent=0 // pred_check_branch
    %8788 = sbr.rel (0) target = $region17
  $region16: #{cnn_forward.4} parent=0 // pred_region
    _
  $region17: #{cnn_forward.4} parent=0 // pred_fallthru
    _
  // Predicated region
  $region18: #{cnn_forward.4} parent=0 // pred_check
    _
  $region19: #{cnn_forward.4} parent=0 // pred_check_branch
    %8790 = sbr.rel (0) target = $region21
  $region20: #{cnn_forward.4} parent=0 // pred_region
    _
  $region21: #{cnn_forward.4} parent=0 // pred_fallthru
    _

// kernel: cnn_forward.5
$region0: #{cnn_forward.5}
  #allocation0 [shape = 'u32[]', space=smem, size = 0x4, offset = 0x4, fixed_abs, tag = 'smem constant byte address 0x4 - core index']
  #allocation1 [shape = 'u32[144,128]{1,0:T(1,128)}', space=vmem, size = 0x12000, scoped, tag = 'internal scratch']
  %s0 = inlined_call_operand.vmem [shape: bf16[7,8,512], index: 0, kind: input, shape index: {}]
  %s1 = inlined_call_operand.vmem [shape: bf16[7,512,128], index: 1, kind: input, shape index: {}]
  %s2 = inlined_call_operand.vmem [shape: f32[1,128], index: 2, kind: input, shape index: {}]
  %s3 = inlined_call_operand.vmem [shape: bf16[128,128], index: 3, kind: input, shape index: {}]
  %s4 = inlined_call_operand.vmem [shape: f32[1,128], index: 4, kind: input, shape index: {}]
  %s5 = inlined_call_operand.vmem [shape: f32[8,128], index: 5, kind: output, shape index: {0}]
  %s6 = inlined_call_operand.vmem [shape: f32[8,128], index: 6, kind: output, shape index: {1}]
  %7 = xla_tuple %s5, %s6
  %s8 = sld [smem:[#allocation0]]
  $region38: #{cnn_forward.5} parent=0
    _
  %s10 = ssub.s32 1, %s8
  %s11 = scalar_select 0, %s10, %s8
  // Predicated region
  $region2: #{cnn_forward.5} parent=0 // pred_check
    _
  $region3: #{cnn_forward.5} parent=0 // pred_check_branch
    %13 = sbr.rel (0) target = $region5
  $region4: #{cnn_forward.5} parent=0 // pred_region
    _
  $region5: #{cnn_forward.5} parent=0 // pred_fallthru
    _
  // Predicated region
  $region6: #{cnn_forward.5} parent=0 // pred_check
    _
  $region7: #{cnn_forward.5} parent=0 // pred_check_branch
    %15 = sbr.rel (0) target = $region9
  $region8: #{cnn_forward.5} parent=0 // pred_region
    _
  $region9: #{cnn_forward.5} parent=0 // pred_fallthru
    _
  // Predicated region
  $region10: #{cnn_forward.5} parent=0 // pred_check
    _
  $region11: #{cnn_forward.5} parent=0 // pred_check_branch
    %17 = sbr.rel (0) target = $region13
  $region12: #{cnn_forward.5} parent=0 // pred_region
    _
  $region13: #{cnn_forward.5} parent=0 // pred_fallthru
    _
  // Predicated region
  $region14: #{cnn_forward.5} parent=0 // pred_check
    _
  $region15: #{cnn_forward.5} parent=0 // pred_check_branch
    %19 = sbr.rel (0) target = $region17
  $region16: #{cnn_forward.5} parent=0 // pred_region
    _
  $region17: #{cnn_forward.5} parent=0 // pred_fallthru
    _
  // Predicated region
  $region18: #{cnn_forward.5} parent=0 // pred_check
    _
  $region19: #{cnn_forward.5} parent=0 // pred_check_branch
    %21 = sbr.rel (0) target = $region21
  $region20: #{cnn_forward.5} parent=0 // pred_region
    _
  $region21: #{cnn_forward.5} parent=0 // pred_fallthru
    _
  %v23 = vld [vmem:[%s0] sm:$0xff]
  %v24 = vld [vmem:[%s0 + $0x8] sm:$0xff]
  %v25 = vld [vmem:[%s1] sm:$0xf]
  %v26 = vld [vmem:[%s1 + $0x4] sm:$0xf]
  %v27 = vld [vmem:[%s1 + $0x8] sm:$0xf]
  %v28 = vld [vmem:[%s1 + $0xc] sm:$0xf]
  %v29 = vld [vmem:[%s1 + $0x10] sm:$0xf]
  %v30 = vld [vmem:[%s1 + $0x14] sm:$0xf]
  %v31 = vld [vmem:[%s1 + $0x18] sm:$0xf]
  %v32 = vld [vmem:[%s1 + $0x1c] sm:$0xf]
  %v33 = vld [vmem:[%s1 + $0x20] sm:$0xf]
  %v34 = vld [vmem:[%s1 + $0x24] sm:$0xf]
  %v35 = vld [vmem:[%s1 + $0x28] sm:$0xf]
  %v36 = vld [vmem:[%s1 + $0x2c] sm:$0xf]
  %v37 = vld [vmem:[%s1 + $0x30] sm:$0xf]
  %v38 = vld [vmem:[%s1 + $0x34] sm:$0xf]
  %v39 = vld [vmem:[%s1 + $0x38] sm:$0xf]
  %v40 = vld [vmem:[%s1 + $0x3c] sm:$0xf]
  %v41 = vld [vmem:[%s1 + $0x40] sm:$0xf]
  %v42 = vld [vmem:[%s1 + $0x44] sm:$0xf]
  %v43 = vld [vmem:[%s1 + $0x48] sm:$0xf]
  %v44 = vld [vmem:[%s1 + $0x4c] sm:$0xf]
  %v45 = vld [vmem:[%s1 + $0x50] sm:$0xf]
  %v46 = vld [vmem:[%s1 + $0x54] sm:$0xf]
  %v47 = vld [vmem:[%s1 + $0x58] sm:$0xf]
  %v48 = vld [vmem:[%s1 + $0x5c] sm:$0xf]
  %v49 = vld [vmem:[%s1 + $0x60] sm:$0xf]
  %v50 = vld [vmem:[%s1 + $0x64] sm:$0xf]
  %v51 = vld [vmem:[%s1 + $0x68] sm:$0xf]
  %v52 = vld [vmem:[%s1 + $0x6c] sm:$0xf]
  %v53 = vld [vmem:[%s1 + $0x70] sm:$0xf]
  %v54 = vld [vmem:[%s1 + $0x74] sm:$0xf]
  %v55 = vld [vmem:[%s1 + $0x78] sm:$0xf]
  %v56 = vld [vmem:[%s1 + $0x7c] sm:$0xf]
  %v57 = vld [vmem:[%s1 + $0x80] sm:$0xf]
  %v58 = vld [vmem:[%s1 + $0x84] sm:$0xf]
  %v59 = vld [vmem:[%s1 + $0x88] sm:$0xf]
  %v60 = vld [vmem:[%s1 + $0x8c] sm:$0xf]
  %v61 = vld [vmem:[%s1 + $0x90] sm:$0xf]
  %v62 = vld [vmem:[%s1 + $0x94] sm:$0xf]
  %v63 = vld [vmem:[%s1 + $0x98] sm:$0xf]
  %v64 = vld [vmem:[%s1 + $0x9c] sm:$0xf]
  %v65 = vld [vmem:[%s1 + $0xa0] sm:$0xf]
  %v66 = vld [vmem:[%s1 + $0xa4] sm:$0xf]
  %v67 = vld [vmem:[%s1 + $0xa8] sm:$0xf]
  %v68 = vld [vmem:[%s1 + $0xac] sm:$0xf]
  %v69 = vld [vmem:[%s1 + $0xb0] sm:$0xf]
  %v70 = vld [vmem:[%s1 + $0xb4] sm:$0xf]
  %v71 = vld [vmem:[%s1 + $0xb8] sm:$0xf]
  %v72 = vld [vmem:[%s1 + $0xbc] sm:$0xf]
  %v73 = vld [vmem:[%s1 + $0xc0] sm:$0xf]
  %v74 = vld [vmem:[%s1 + $0xc4] sm:$0xf]
  %v75 = vld [vmem:[%s1 + $0xc8] sm:$0xf]
  %v76 = vld [vmem:[%s1 + $0xcc] sm:$0xf]
  %v77 = vld [vmem:[%s1 + $0xd0] sm:$0xf]
  %v78 = vld [vmem:[%s1 + $0xd4] sm:$0xf]
  %v79 = vld [vmem:[%s1 + $0xd8] sm:$0xf]
  %v80 = vld [vmem:[%s1 + $0xdc] sm:$0xf]
  %v81 = vld [vmem:[%s1 + $0xe0] sm:$0xf]
  %v82 = vld [vmem:[%s1 + $0xe4] sm:$0xf]
  %v83 = vld [vmem:[%s1 + $0xe8] sm:$0xf]
  %v84 = vld [vmem:[%s1 + $0xec] sm:$0xf]
  %v85 = vld [vmem:[%s1 + $0xf0] sm:$0xf]
  %v86 = vld [vmem:[%s1 + $0xf4] sm:$0xf]
  %v87 = vld [vmem:[%s1 + $0xf8] sm:$0xf]
  %v88 = vld [vmem:[%s1 + $0xfc] sm:$0xf]
  %s89 = scalar_lea.vmem %s0, 16
  %v90 = vld [vmem:[%s89] sm:$0xff]
  %v91 = vld [vmem:[%s89 + $0x8] sm:$0xff]
  %s92 = scalar_lea.vmem %s1, 256
  %v93 = vld [vmem:[%s92] sm:$0xf]
  %v94 = vld [vmem:[%s92 + $0x4] sm:$0xf]
  %v95 = vld [vmem:[%s92 + $0x8] sm:$0xf]
  %v96 = vld [vmem:[%s92 + $0xc] sm:$0xf]
  %v97 = vld [vmem:[%s92 + $0x10] sm:$0xf]
  %v98 = vld [vmem:[%s92 + $0x14] sm:$0xf]
  %v99 = vld [vmem:[%s92 + $0x18] sm:$0xf]
  %v100 = vld [vmem:[%s92 + $0x1c] sm:$0xf]
  %v101 = vld [vmem:[%s92 + $0x20] sm:$0xf]
  %v102 = vld [vmem:[%s92 + $0x24] sm:$0xf]
  %v103 = vld [vmem:[%s92 + $0x28] sm:$0xf]
  %v104 = vld [vmem:[%s92 + $0x2c] sm:$0xf]
  %v105 = vld [vmem:[%s92 + $0x30] sm:$0xf]
  %v106 = vld [vmem:[%s92 + $0x34] sm:$0xf]
  %v107 = vld [vmem:[%s92 + $0x38] sm:$0xf]
  %v108 = vld [vmem:[%s92 + $0x3c] sm:$0xf]
  %v109 = vld [vmem:[%s92 + $0x40] sm:$0xf]
  %v110 = vld [vmem:[%s92 + $0x44] sm:$0xf]
  %v111 = vld [vmem:[%s92 + $0x48] sm:$0xf]
  %v112 = vld [vmem:[%s92 + $0x4c] sm:$0xf]
  %v113 = vld [vmem:[%s92 + $0x50] sm:$0xf]
  %v114 = vld [vmem:[%s92 + $0x54] sm:$0xf]
  %v115 = vld [vmem:[%s92 + $0x58] sm:$0xf]
  %v116 = vld [vmem:[%s92 + $0x5c] sm:$0xf]
  %v117 = vld [vmem:[%s92 + $0x60] sm:$0xf]
  %v118 = vld [vmem:[%s92 + $0x64] sm:$0xf]
  %v119 = vld [vmem:[%s92 + $0x68] sm:$0xf]
  %v120 = vld [vmem:[%s92 + $0x6c] sm:$0xf]
  %v121 = vld [vmem:[%s92 + $0x70] sm:$0xf]
  %v122 = vld [vmem:[%s92 + $0x74] sm:$0xf]
  %v123 = vld [vmem:[%s92 + $0x78] sm:$0xf]
  %v124 = vld [vmem:[%s92 + $0x7c] sm:$0xf]
  %v125 = vld [vmem:[%s92 + $0x80] sm:$0xf]
  %v126 = vld [vmem:[%s92 + $0x84] sm:$0xf]
  %v127 = vld [vmem:[%s92 + $0x88] sm:$0xf]
  %v128 = vld [vmem:[%s92 + $0x8c] sm:$0xf]
  %v129 = vld [vmem:[%s92 + $0x90] sm:$0xf]
  %v130 = vld [vmem:[%s92 + $0x94] sm:$0xf]
  %v131 = vld [vmem:[%s92 + $0x98] sm:$0xf]
  %v132 = vld [vmem:[%s92 + $0x9c] sm:$0xf]
  %v133 = vld [vmem:[%s92 + $0xa0] sm:$0xf]
  %v134 = vld [vmem:[%s92 + $0xa4] sm:$0xf]
  %v135 = vld [vmem:[%s92 + $0xa8] sm:$0xf]
  %v136 = vld [vmem:[%s92 + $0xac] sm:$0xf]
  %v137 = vld [vmem:[%s92 + $0xb0] sm:$0xf]
  %v138 = vld [vmem:[%s92 + $0xb4] sm:$0xf]
  %v139 = vld [vmem:[%s92 + $0xb8] sm:$0xf]
  %v140 = vld [vmem:[%s92 + $0xbc] sm:$0xf]
  %v141 = vld [vmem:[%s92 + $0xc0] sm:$0xf]
  %v142 = vld [vmem:[%s92 + $0xc4] sm:$0xf]
  %v143 = vld [vmem:[%s92 + $0xc8] sm:$0xf]
  %v144 = vld [vmem:[%s92 + $0xcc] sm:$0xf]
  %v145 = vld [vmem:[%s92 + $0xd0] sm:$0xf]
  %v146 = vld [vmem:[%s92 + $0xd4] sm:$0xf]
  %v147 = vld [vmem:[%s92 + $0xd8] sm:$0xf]
  %v148 = vld [vmem:[%s92 + $0xdc] sm:$0xf]
  %v149 = vld [vmem:[%s92 + $0xe0] sm:$0xf]
  %v150 = vld [vmem:[%s92 + $0xe4] sm:$0xf]
  %v151 = vld [vmem:[%s92 + $0xe8] sm:$0xf]
  %v152 = vld [vmem:[%s92 + $0xec] sm:$0xf]
  %v153 = vld [vmem:[%s92 + $0xf0] sm:$0xf]
  %v154 = vld [vmem:[%s92 + $0xf4] sm:$0xf]
  %v155 = vld [vmem:[%s92 + $0xf8] sm:$0xf]
  %v156 = vld [vmem:[%s92 + $0xfc] sm:$0xf]
  %v159 = vunpack.c.l.b16 %v90
  %v160 = vunpack.c.h.b16 %v90
  %v161 = vunpack.c.l.b16 %v91
  %v162 = vunpack.c.h.b16 %v91
  %v163 = vpack.c.b16 %v159, %v159
  %v164 = vpack.c.b16 %v160, %v160
  %v165 = vpack.c.b16 %v161, %v161
  %v166 = vpack.c.b16 %v162, %v162
  %v235 = vunpack.c.l.b16 %v93
  %v236 = vunpack.c.l.b16 %v94
  %v237 = vunpack.c.l.b16 %v95
  %v238 = vunpack.c.l.b16 %v96
  %v239 = vunpack.c.l.b16 %v97
  %v240 = vunpack.c.l.b16 %v98
  %v241 = vunpack.c.l.b16 %v99
  %v242 = vunpack.c.l.b16 %v100
  %v243 = vunpack.c.l.b16 %v101
  %v244 = vunpack.c.l.b16 %v102
  %v245 = vunpack.c.l.b16 %v103
  %v246 = vunpack.c.l.b16 %v104
  %v247 = vunpack.c.l.b16 %v105
  %v248 = vunpack.c.l.b16 %v106
  %v249 = vunpack.c.l.b16 %v107
  %v250 = vunpack.c.l.b16 %v108
  %v251 = vunpack.c.l.b16 %v109
  %v252 = vunpack.c.l.b16 %v110
  %v253 = vunpack.c.l.b16 %v111
  %v254 = vunpack.c.l.b16 %v112
  %v255 = vunpack.c.l.b16 %v113
  %v256 = vunpack.c.l.b16 %v114
  %v257 = vunpack.c.l.b16 %v115
  %v258 = vunpack.c.l.b16 %v116
  %v259 = vunpack.c.l.b16 %v117
  %v260 = vunpack.c.l.b16 %v118
  %v261 = vunpack.c.l.b16 %v119
  %v262 = vunpack.c.l.b16 %v120
  %v263 = vunpack.c.l.b16 %v121
  %v264 = vunpack.c.l.b16 %v122
  %v265 = vunpack.c.l.b16 %v123
  %v266 = vunpack.c.l.b16 %v124
  %v267 = vunpack.c.l.b16 %v125
  %v268 = vunpack.c.l.b16 %v126
  %v269 = vunpack.c.l.b16 %v127
  %v270 = vunpack.c.l.b16 %v128
  %v271 = vunpack.c.l.b16 %v129
  %v272 = vunpack.c.l.b16 %v130
  %v273 = vunpack.c.l.b16 %v131
  %v274 = vunpack.c.l.b16 %v132
  %v275 = vunpack.c.l.b16 %v133
  %v276 = vunpack.c.l.b16 %v134
  %v277 = vunpack.c.l.b16 %v135
  %v278 = vunpack.c.l.b16 %v136
  %v279 = vunpack.c.l.b16 %v137
  %v280 = vunpack.c.l.b16 %v138
  %v281 = vunpack.c.l.b16 %v139
  %v282 = vunpack.c.l.b16 %v140
  %v283 = vunpack.c.l.b16 %v141
  %v284 = vunpack.c.l.b16 %v142
  %v285 = vunpack.c.l.b16 %v143
  %v286 = vunpack.c.l.b16 %v144
  %v287 = vunpack.c.l.b16 %v145
  %v288 = vunpack.c.l.b16 %v146
  %v289 = vunpack.c.l.b16 %v147
  %v290 = vunpack.c.l.b16 %v148
  %v291 = vunpack.c.l.b16 %v149
  %v292 = vunpack.c.l.b16 %v150
  %v293 = vunpack.c.l.b16 %v151
  %v294 = vunpack.c.l.b16 %v152
  %v295 = vunpack.c.l.b16 %v153
  %v296 = vunpack.c.l.b16 %v154
  %v297 = vunpack.c.l.b16 %v155
  %v298 = vunpack.c.l.b16 %v156
  %v299 = vpack.c.b16 %v236, %v235
  %v300 = vpack.c.b16 %v238, %v237
  %v301 = vpack.c.b16 %v240, %v239
  %v302 = vpack.c.b16 %v242, %v241
  %v303 = vpack.c.b16 %v244, %v243
  %v304 = vpack.c.b16 %v246, %v245
  %v305 = vpack.c.b16 %v248, %v247
  %v306 = vpack.c.b16 %v250, %v249
  %v307 = vpack.c.b16 %v252, %v251
  %v308 = vpack.c.b16 %v254, %v253
  %v309 = vpack.c.b16 %v256, %v255
  %v310 = vpack.c.b16 %v258, %v257
  %v311 = vpack.c.b16 %v260, %v259
  %v312 = vpack.c.b16 %v262, %v261
  %v313 = vpack.c.b16 %v264, %v263
  %v314 = vpack.c.b16 %v266, %v265
  %v315 = vpack.c.b16 %v268, %v267
  %v316 = vpack.c.b16 %v270, %v269
  %v317 = vpack.c.b16 %v272, %v271
  %v318 = vpack.c.b16 %v274, %v273
  %v319 = vpack.c.b16 %v276, %v275
  %v320 = vpack.c.b16 %v278, %v277
  %v321 = vpack.c.b16 %v280, %v279
  %v322 = vpack.c.b16 %v282, %v281
  %v323 = vpack.c.b16 %v284, %v283
  %v324 = vpack.c.b16 %v286, %v285
  %v325 = vpack.c.b16 %v288, %v287
  %v326 = vpack.c.b16 %v290, %v289
  %v327 = vpack.c.b16 %v292, %v291
  %v328 = vpack.c.b16 %v294, %v293
  %v329 = vpack.c.b16 %v296, %v295
  %v330 = vpack.c.b16 %v298, %v297
  %363 = vmatprep.subr.bf16.mxu0 0
  %364 = vmatpush1.bf16.msra.mxu0 %v299
  %365 = vmatprep.subr.bf16.mxu0 0
  %366 = vmatpush1.bf16.msra.mxu0 %v300
  %367 = vmatprep.subr.bf16.mxu0 0
  %368 = vmatpush1.bf16.msra.mxu0 %v301
  %369 = vmatprep.subr.bf16.mxu0 0
  %370 = vmatpush1.bf16.msra.mxu0 %v302
  %371 = vmatprep.subr.bf16.mxu0 0
  %372 = vmatpush1.bf16.msra.mxu0 %v303
  %373 = vmatprep.subr.bf16.mxu0 0
  %374 = vmatpush1.bf16.msra.mxu0 %v304
  %375 = vmatprep.subr.bf16.mxu0 0
  %376 = vmatpush1.bf16.msra.mxu0 %v305
  %377 = vmatprep.subr.bf16.mxu0 0
  %378 = vmatpush1.bf16.msra.mxu0 %v306
  %379 = vmatprep.subr.bf16.mxu0 0
  %380 = vmatpush1.bf16.msra.mxu0 %v307
  %381 = vmatprep.subr.bf16.mxu0 0
  %382 = vmatpush1.bf16.msra.mxu0 %v308
  %383 = vmatprep.subr.bf16.mxu0 0
  %384 = vmatpush1.bf16.msra.mxu0 %v309
  %385 = vmatprep.subr.bf16.mxu0 0
  %386 = vmatpush1.bf16.msra.mxu0 %v310
  %387 = vmatprep.subr.bf16.mxu0 0
  %388 = vmatpush1.bf16.msra.mxu0 %v311
  %389 = vmatprep.subr.bf16.mxu0 0
  %390 = vmatpush1.bf16.msra.mxu0 %v312
  %391 = vmatprep.subr.bf16.mxu0 0
  %392 = vmatpush1.bf16.msra.mxu0 %v313
  %393 = vmatprep.subr.bf16.mxu0 0
  %394 = vmatpush1.bf16.msra.mxu0 %v314
  %395 = vmatprep.mubr.bf16.mxu0 %v164
  %396 = vmatmul.mubr.bf16.gmra.mrb[0].mxu0 %v163
  %v397 = vpop.f32.mrb[0].mxu0
  %v398 = vadd.f32 0.0, %v397
  %v399 = vpop.f32.mrb[0].mxu0
  %v400 = vpop.f32.mrb[0].mxu0
  %v401 = vpop.f32.mrb[0].mxu0
  %402 = vdwg.mxu0
  %403 = vmatprep.subr.bf16.mxu0 0
  %404 = vmatpush1.bf16.msra.mxu0 %v315
  %405 = vmatprep.subr.bf16.mxu0 0
  %406 = vmatpush1.bf16.msra.mxu0 %v316
  %407 = vmatprep.subr.bf16.mxu0 0
  %408 = vmatpush1.bf16.msra.mxu0 %v317
  %409 = vmatprep.subr.bf16.mxu0 0
  %410 = vmatpush1.bf16.msra.mxu0 %v318
  %411 = vmatprep.subr.bf16.mxu0 0
  %412 = vmatpush1.bf16.msra.mxu0 %v319
  %413 = vmatprep.subr.bf16.mxu0 0
  %414 = vmatpush1.bf16.msra.mxu0 %v320
  %415 = vmatprep.subr.bf16.mxu0 0
  %416 = vmatpush1.bf16.msra.mxu0 %v321
  %417 = vmatprep.subr.bf16.mxu0 0
  %418 = vmatpush1.bf16.msra.mxu0 %v322
  %419 = vmatprep.subr.bf16.mxu0 0
  %420 = vmatpush1.bf16.msra.mxu0 %v323
  %421 = vmatprep.subr.bf16.mxu0 0
  %422 = vmatpush1.bf16.msra.mxu0 %v324
  %423 = vmatprep.subr.bf16.mxu0 0
  %424 = vmatpush1.bf16.msra.mxu0 %v325
  %425 = vmatprep.subr.bf16.mxu0 0
  %426 = vmatpush1.bf16.msra.mxu0 %v326
  %427 = vmatprep.subr.bf16.mxu0 0
  %428 = vmatpush1.bf16.msra.mxu0 %v327
  %429 = vmatprep.subr.bf16.mxu0 0
  %430 = vmatpush1.bf16.msra.mxu0 %v328
  %431 = vmatprep.subr.bf16.mxu0 0
  %432 = vmatpush1.bf16.msra.mxu0 %v329
  %433 = vmatprep.subr.bf16.mxu0 0
  %434 = vmatpush1.bf16.msra.mxu0 %v330
  %435 = vmatprep.mubr.bf16.mxu0 %v166
  %436 = vmatmul.mubr.bf16.gmra.mrb[0].mxu0 %v165
  %v437 = vpop.f32.mrb[0].mxu0
  %v438 = vadd.f32 %v398, %v437
  %v439 = vpop.f32.mrb[0].mxu0
  %v440 = vpop.f32.mrb[0].mxu0
  %v441 = vpop.f32.mrb[0].mxu0
  %442 = vdwg.mxu0
  %v445 = vunpack.c.l.b16 %v23
  %v446 = vunpack.c.h.b16 %v23
  %v447 = vunpack.c.l.b16 %v24
  %v448 = vunpack.c.h.b16 %v24
  %v449 = vpack.c.b16 %v445, %v445
  %v450 = vpack.c.b16 %v446, %v446
  %v451 = vpack.c.b16 %v447, %v447
  %v452 = vpack.c.b16 %v448, %v448
  %v521 = vunpack.c.l.b16 %v25
  %v522 = vunpack.c.l.b16 %v26
  %v523 = vunpack.c.l.b16 %v27
  %v524 = vunpack.c.l.b16 %v28
  %v525 = vunpack.c.l.b16 %v29
  %v526 = vunpack.c.l.b16 %v30
  %v527 = vunpack.c.l.b16 %v31
  %v528 = vunpack.c.l.b16 %v32
  %v529 = vunpack.c.l.b16 %v33
  %v530 = vunpack.c.l.b16 %v34
  %v531 = vunpack.c.l.b16 %v35
  %v532 = vunpack.c.l.b16 %v36
  %v533 = vunpack.c.l.b16 %v37
  %v534 = vunpack.c.l.b16 %v38
  %v535 = vunpack.c.l.b16 %v39
  %v536 = vunpack.c.l.b16 %v40
  %v537 = vunpack.c.l.b16 %v41
  %v538 = vunpack.c.l.b16 %v42
  %v539 = vunpack.c.l.b16 %v43
  %v540 = vunpack.c.l.b16 %v44
  %v541 = vunpack.c.l.b16 %v45
  %v542 = vunpack.c.l.b16 %v46
  %v543 = vunpack.c.l.b16 %v47
  %v544 = vunpack.c.l.b16 %v48
  %v545 = vunpack.c.l.b16 %v49
  %v546 = vunpack.c.l.b16 %v50
  %v547 = vunpack.c.l.b16 %v51
  %v548 = vunpack.c.l.b16 %v52
  %v549 = vunpack.c.l.b16 %v53
  %v550 = vunpack.c.l.b16 %v54
  %v551 = vunpack.c.l.b16 %v55
  %v552 = vunpack.c.l.b16 %v56
  %v553 = vunpack.c.l.b16 %v57
  %v554 = vunpack.c.l.b16 %v58
  %v555 = vunpack.c.l.b16 %v59
  %v556 = vunpack.c.l.b16 %v60
  %v557 = vunpack.c.l.b16 %v61
  %v558 = vunpack.c.l.b16 %v62
  %v559 = vunpack.c.l.b16 %v63
  %v560 = vunpack.c.l.b16 %v64
  %v561 = vunpack.c.l.b16 %v65
  %v562 = vunpack.c.l.b16 %v66
  %v563 = vunpack.c.l.b16 %v67
  %v564 = vunpack.c.l.b16 %v68
  %v565 = vunpack.c.l.b16 %v69
  %v566 = vunpack.c.l.b16 %v70
  %v567 = vunpack.c.l.b16 %v71
  %v568 = vunpack.c.l.b16 %v72
  %v569 = vunpack.c.l.b16 %v73
  %v570 = vunpack.c.l.b16 %v74
  %v571 = vunpack.c.l.b16 %v75
  %v572 = vunpack.c.l.b16 %v76
  %v573 = vunpack.c.l.b16 %v77
  %v574 = vunpack.c.l.b16 %v78
  %v575 = vunpack.c.l.b16 %v79
  %v576 = vunpack.c.l.b16 %v80
  %v577 = vunpack.c.l.b16 %v81
  %v578 = vunpack.c.l.b16 %v82
  %v579 = vunpack.c.l.b16 %v83
  %v580 = vunpack.c.l.b16 %v84
  %v581 = vunpack.c.l.b16 %v85
  %v582 = vunpack.c.l.b16 %v86
  %v583 = vunpack.c.l.b16 %v87
  %v584 = vunpack.c.l.b16 %v88
  %v585 = vpack.c.b16 %v522, %v521
  %v586 = vpack.c.b16 %v524, %v523
  %v587 = vpack.c.b16 %v526, %v525
  %v588 = vpack.c.b16 %v528, %v527
  %v589 = vpack.c.b16 %v530, %v529
  %v590 = vpack.c.b16 %v532, %v531
  %v591 = vpack.c.b16 %v534, %v533
  %v592 = vpack.c.b16 %v536, %v535
  %v593 = vpack.c.b16 %v538, %v537
  %v594 = vpack.c.b16 %v540, %v539
  %v595 = vpack.c.b16 %v542, %v541
  %v596 = vpack.c.b16 %v544, %v543
  %v597 = vpack.c.b16 %v546, %v545
  %v598 = vpack.c.b16 %v548, %v547
  %v599 = vpack.c.b16 %v550, %v549
  %v600 = vpack.c.b16 %v552, %v551
  %v601 = vpack.c.b16 %v554, %v553
  %v602 = vpack.c.b16 %v556, %v555
  %v603 = vpack.c.b16 %v558, %v557
  %v604 = vpack.c.b16 %v560, %v559
  %v605 = vpack.c.b16 %v562, %v561
  %v606 = vpack.c.b16 %v564, %v563
  %v607 = vpack.c.b16 %v566, %v565
  %v608 = vpack.c.b16 %v568, %v567
  %v609 = vpack.c.b16 %v570, %v569
  %v610 = vpack.c.b16 %v572, %v571
  %v611 = vpack.c.b16 %v574, %v573
  %v612 = vpack.c.b16 %v576, %v575
  %v613 = vpack.c.b16 %v578, %v577
  %v614 = vpack.c.b16 %v580, %v579
  %v615 = vpack.c.b16 %v582, %v581
  %v616 = vpack.c.b16 %v584, %v583
  %649 = vmatprep.subr.bf16.mxu0 0
  %650 = vmatpush1.bf16.msra.mxu0 %v585
  %651 = vmatprep.subr.bf16.mxu0 0
  %652 = vmatpush1.bf16.msra.mxu0 %v586
  %653 = vmatprep.subr.bf16.mxu0 0
  %654 = vmatpush1.bf16.msra.mxu0 %v587
  %655 = vmatprep.subr.bf16.mxu0 0
  %656 = vmatpush1.bf16.msra.mxu0 %v588
  %657 = vmatprep.subr.bf16.mxu0 0
  %658 = vmatpush1.bf16.msra.mxu0 %v589
  %659 = vmatprep.subr.bf16.mxu0 0
  %660 = vmatpush1.bf16.msra.mxu0 %v590
  %661 = vmatprep.subr.bf16.mxu0 0
  %662 = vmatpush1.bf16.msra.mxu0 %v591
  %663 = vmatprep.subr.bf16.mxu0 0
  %664 = vmatpush1.bf16.msra.mxu0 %v592
  %665 = vmatprep.subr.bf16.mxu0 0
  %666 = vmatpush1.bf16.msra.mxu0 %v593
  %667 = vmatprep.subr.bf16.mxu0 0
  %668 = vmatpush1.bf16.msra.mxu0 %v594
  %669 = vmatprep.subr.bf16.mxu0 0
  %670 = vmatpush1.bf16.msra.mxu0 %v595
  %671 = vmatprep.subr.bf16.mxu0 0
  %672 = vmatpush1.bf16.msra.mxu0 %v596
  %673 = vmatprep.subr.bf16.mxu0 0
  %674 = vmatpush1.bf16.msra.mxu0 %v597
  %675 = vmatprep.subr.bf16.mxu0 0
  %676 = vmatpush1.bf16.msra.mxu0 %v598
  %677 = vmatprep.subr.bf16.mxu0 0
  %678 = vmatpush1.bf16.msra.mxu0 %v599
  %679 = vmatprep.subr.bf16.mxu0 0
  %680 = vmatpush1.bf16.msra.mxu0 %v600
  %681 = vmatprep.mubr.bf16.mxu0 %v450
  %682 = vmatmul.mubr.bf16.gmra.mrb[0].mxu0 %v449
  %v683 = vpop.f32.mrb[0].mxu0
  %v684 = vadd.f32 %v438, %v683
  %v685 = vpop.f32.mrb[0].mxu0
  %v686 = vpop.f32.mrb[0].mxu0
  %v687 = vpop.f32.mrb[0].mxu0
  %688 = vdwg.mxu0
  %689 = vmatprep.subr.bf16.mxu0 0
  %690 = vmatpush1.bf16.msra.mxu0 %v601
  %691 = vmatprep.subr.bf16.mxu0 0
  %692 = vmatpush1.bf16.msra.mxu0 %v602
  %693 = vmatprep.subr.bf16.mxu0 0
  %694 = vmatpush1.bf16.msra.mxu0 %v603
  %695 = vmatprep.subr.bf16.mxu0 0
  %696 = vmatpush1.bf16.msra.mxu0 %v604
  %697 = vmatprep.subr.bf16.mxu0 0
  %698 = vmatpush1.bf16.msra.mxu0 %v605
  %699 = vmatprep.subr.bf16.mxu0 0
  %700 = vmatpush1.bf16.msra.mxu0 %v606
  %701 = vmatprep.subr.bf16.mxu0 0
  %702 = vmatpush1.bf16.msra.mxu0 %v607
  %703 = vmatprep.subr.bf16.mxu0 0
  %704 = vmatpush1.bf16.msra.mxu0 %v608
  %705 = vmatprep.subr.bf16.mxu0 0
  %706 = vmatpush1.bf16.msra.mxu0 %v609
  %707 = vmatprep.subr.bf16.mxu0 0
  %708 = vmatpush1.bf16.msra.mxu0 %v610
  %709 = vmatprep.subr.bf16.mxu0 0
  %710 = vmatpush1.bf16.msra.mxu0 %v611
  %711 = vmatprep.subr.bf16.mxu0 0
  %712 = vmatpush1.bf16.msra.mxu0 %v612
  %713 = vmatprep.subr.bf16.mxu0 0
  %714 = vmatpush1.bf16.msra.mxu0 %v613
  %715 = vmatprep.subr.bf16.mxu0 0
  %716 = vmatpush1.bf16.msra.mxu0 %v614
  %717 = vmatprep.subr.bf16.mxu0 0
  %718 = vmatpush1.bf16.msra.mxu0 %v615
  %719 = vmatprep.subr.bf16.mxu0 0
  %720 = vmatpush1.bf16.msra.mxu0 %v616
  %721 = vmatprep.mubr.bf16.mxu0 %v452
  %722 = vmatmul.mubr.bf16.gmra.mrb[0].mxu0 %v451
  %v723 = vpop.f32.mrb[0].mxu0
  %v724 = vadd.f32 %v684, %v723
  %v725 = vpop.f32.mrb[0].mxu0
  %v726 = vpop.f32.mrb[0].mxu0
  %v727 = vpop.f32.mrb[0].mxu0
  %728 = vdwg.mxu0
  %s729 = scalar_lea.vmem %s0, 32
  %v730 = vld [vmem:[%s729] sm:$0xff]
  %v731 = vld [vmem:[%s729 + $0x8] sm:$0xff]
  %s732 = scalar_lea.vmem %s1, 512
  %v733 = vld [vmem:[%s732] sm:$0xf]
  %v734 = vld [vmem:[%s732 + $0x4] sm:$0xf]
  %v735 = vld [vmem:[%s732 + $0x8] sm:$0xf]
  %v736 = vld [vmem:[%s732 + $0xc] sm:$0xf]
  %v737 = vld [vmem:[%s732 + $0x10] sm:$0xf]
  %v738 = vld [vmem:[%s732 + $0x14] sm:$0xf]
  %v739 = vld [vmem:[%s732 + $0x18] sm:$0xf]
  %v740 = vld [vmem:[%s732 + $0x1c] sm:$0xf]
  %v741 = vld [vmem:[%s732 + $0x20] sm:$0xf]
  %v742 = vld [vmem:[%s732 + $0x24] sm:$0xf]
  %v743 = vld [vmem:[%s732 + $0x28] sm:$0xf]
  %v744 = vld [vmem:[%s732 + $0x2c] sm:$0xf]
  %v745 = vld [vmem:[%s732 + $0x30] sm:$0xf]
  %v746 = vld [vmem:[%s732 + $0x34] sm:$0xf]
  %v747 = vld [vmem:[%s732 + $0x38] sm:$0xf]
  %v748 = vld [vmem:[%s732 + $0x3c] sm:$0xf]
  %v749 = vld [vmem:[%s732 + $0x40] sm:$0xf]
  %v750 = vld [vmem:[%s732 + $0x44] sm:$0xf]
  %v751 = vld [vmem:[%s732 + $0x48] sm:$0xf]
  %v752 = vld [vmem:[%s732 + $0x4c] sm:$0xf]
  %v753 = vld [vmem:[%s732 + $0x50] sm:$0xf]
  %v754 = vld [vmem:[%s732 + $0x54] sm:$0xf]
  %v755 = vld [vmem:[%s732 + $0x58] sm:$0xf]
  %v756 = vld [vmem:[%s732 + $0x5c] sm:$0xf]
  %v757 = vld [vmem:[%s732 + $0x60] sm:$0xf]
  %v758 = vld [vmem:[%s732 + $0x64] sm:$0xf]
  %v759 = vld [vmem:[%s732 + $0x68] sm:$0xf]
  %v760 = vld [vmem:[%s732 + $0x6c] sm:$0xf]
  %v761 = vld [vmem:[%s732 + $0x70] sm:$0xf]
  %v762 = vld [vmem:[%s732 + $0x74] sm:$0xf]
  %v763 = vld [vmem:[%s732 + $0x78] sm:$0xf]
  %v764 = vld [vmem:[%s732 + $0x7c] sm:$0xf]
  %v765 = vld [vmem:[%s732 + $0x80] sm:$0xf]
  %v766 = vld [vmem:[%s732 + $0x84] sm:$0xf]
  %v767 = vld [vmem:[%s732 + $0x88] sm:$0xf]
  %v768 = vld [vmem:[%s732 + $0x8c] sm:$0xf]
  %v769 = vld [vmem:[%s732 + $0x90] sm:$0xf]
  %v770 = vld [vmem:[%s732 + $0x94] sm:$0xf]
  %v771 = vld [vmem:[%s732 + $0x98] sm:$0xf]
  %v772 = vld [vmem:[%s732 + $0x9c] sm:$0xf]
  %v773 = vld [vmem:[%s732 + $0xa0] sm:$0xf]
  %v774 = vld [vmem:[%s732 + $0xa4] sm:$0xf]
  %v775 = vld [vmem:[%s732 + $0xa8] sm:$0xf]
  %v776 = vld [vmem:[%s732 + $0xac] sm:$0xf]
  %v777 = vld [vmem:[%s732 + $0xb0] sm:$0xf]
  %v778 = vld [vmem:[%s732 + $0xb4] sm:$0xf]
  %v779 = vld [vmem:[%s732 + $0xb8] sm:$0xf]
  %v780 = vld [vmem:[%s732 + $0xbc] sm:$0xf]
  %v781 = vld [vmem:[%s732 + $0xc0] sm:$0xf]
  %v782 = vld [vmem:[%s732 + $0xc4] sm:$0xf]
  %v783 = vld [vmem:[%s732 + $0xc8] sm:$0xf]
  %v784 = vld [vmem:[%s732 + $0xcc] sm:$0xf]
  %v785 = vld [vmem:[%s732 + $0xd0] sm:$0xf]
  %v786 = vld [vmem:[%s732 + $0xd4] sm:$0xf]
  %v787 = vld [vmem:[%s732 + $0xd8] sm:$0xf]
  %v788 = vld [vmem:[%s732 + $0xdc] sm:$0xf]
  %v789 = vld [vmem:[%s732 + $0xe0] sm:$0xf]
  %v790 = vld [vmem:[%s732 + $0xe4] sm:$0xf]
  %v791 = vld [vmem:[%s732 + $0xe8] sm:$0xf]
  %v792 = vld [vmem:[%s732 + $0xec] sm:$0xf]
  %v793 = vld [vmem:[%s732 + $0xf0] sm:$0xf]
  %v794 = vld [vmem:[%s732 + $0xf4] sm:$0xf]
  %v795 = vld [vmem:[%s732 + $0xf8] sm:$0xf]
  %v796 = vld [vmem:[%s732 + $0xfc] sm:$0xf]
  %v799 = vunpack.c.l.b16 %v730
  %v800 = vunpack.c.h.b16 %v730
  %v801 = vunpack.c.l.b16 %v731
  %v802 = vunpack.c.h.b16 %v731
  %v803 = vpack.c.b16 %v799, %v799
  %v804 = vpack.c.b16 %v800, %v800
  %v805 = vpack.c.b16 %v801, %v801
  %v806 = vpack.c.b16 %v802, %v802
  %v875 = vunpack.c.l.b16 %v733
  %v876 = vunpack.c.l.b16 %v734
  %v877 = vunpack.c.l.b16 %v735
  %v878 = vunpack.c.l.b16 %v736
  %v879 = vunpack.c.l.b16 %v737
  %v880 = vunpack.c.l.b16 %v738
  %v881 = vunpack.c.l.b16 %v739
  %v882 = vunpack.c.l.b16 %v740
  %v883 = vunpack.c.l.b16 %v741
  %v884 = vunpack.c.l.b16 %v742
  %v885 = vunpack.c.l.b16 %v743
  %v886 = vunpack.c.l.b16 %v744
  %v887 = vunpack.c.l.b16 %v745
  %v888 = vunpack.c.l.b16 %v746
  %v889 = vunpack.c.l.b16 %v747
  %v890 = vunpack.c.l.b16 %v748
  %v891 = vunpack.c.l.b16 %v749
  %v892 = vunpack.c.l.b16 %v750
  %v893 = vunpack.c.l.b16 %v751
  %v894 = vunpack.c.l.b16 %v752
  %v895 = vunpack.c.l.b16 %v753
  %v896 = vunpack.c.l.b16 %v754
  %v897 = vunpack.c.l.b16 %v755
  %v898 = vunpack.c.l.b16 %v756
  %v899 = vunpack.c.l.b16 %v757
  %v900 = vunpack.c.l.b16 %v758
  %v901 = vunpack.c.l.b16 %v759
  %v902 = vunpack.c.l.b16 %v760
  %v903 = vunpack.c.l.b16 %v761
  %v904 = vunpack.c.l.b16 %v762
  %v905 = vunpack.c.l.b16 %v763
  %v906 = vunpack.c.l.b16 %v764
  %v907 = vunpack.c.l.b16 %v765
  %v908 = vunpack.c.l.b16 %v766
  %v909 = vunpack.c.l.b16 %v767
  %v910 = vunpack.c.l.b16 %v768
  %v911 = vunpack.c.l.b16 %v769
  %v912 = vunpack.c.l.b16 %v770
  %v913 = vunpack.c.l.b16 %v771
  %v914 = vunpack.c.l.b16 %v772
  %v915 = vunpack.c.l.b16 %v773
  %v916 = vunpack.c.l.b16 %v774
  %v917 = vunpack.c.l.b16 %v775
  %v918 = vunpack.c.l.b16 %v776
  %v919 = vunpack.c.l.b16 %v777
  %v920 = vunpack.c.l.b16 %v778
  %v921 = vunpack.c.l.b16 %v779
  %v922 = vunpack.c.l.b16 %v780
  %v923 = vunpack.c.l.b16 %v781
  %v924 = vunpack.c.l.b16 %v782
  %v925 = vunpack.c.l.b16 %v783
  %v926 = vunpack.c.l.b16 %v784
  %v927 = vunpack.c.l.b16 %v785
  %v928 = vunpack.c.l.b16 %v786
  %v929 = vunpack.c.l.b16 %v787
  %v930 = vunpack.c.l.b16 %v788
  %v931 = vunpack.c.l.b16 %v789
  %v932 = vunpack.c.l.b16 %v790
  %v933 = vunpack.c.l.b16 %v791
  %v934 = vunpack.c.l.b16 %v792
  %v935 = vunpack.c.l.b16 %v793
  %v936 = vunpack.c.l.b16 %v794
  %v937 = vunpack.c.l.b16 %v795
  %v938 = vunpack.c.l.b16 %v796
  %v939 = vpack.c.b16 %v876, %v875
  %v940 = vpack.c.b16 %v878, %v877
  %v941 = vpack.c.b16 %v880, %v879
  %v942 = vpack.c.b16 %v882, %v881
  %v943 = vpack.c.b16 %v884, %v883
  %v944 = vpack.c.b16 %v886, %v885
  %v945 = vpack.c.b16 %v888, %v887
  %v946 = vpack.c.b16 %v890, %v889
  %v947 = vpack.c.b16 %v892, %v891
  %v948 = vpack.c.b16 %v894, %v893
  %v949 = vpack.c.b16 %v896, %v895
  %v950 = vpack.c.b16 %v898, %v897
  %v951 = vpack.c.b16 %v900, %v899
  %v952 = vpack.c.b16 %v902, %v901
  %v953 = vpack.c.b16 %v904, %v903
  %v954 = vpack.c.b16 %v906, %v905
  %v955 = vpack.c.b16 %v908, %v907
  %v956 = vpack.c.b16 %v910, %v909
  %v957 = vpack.c.b16 %v912, %v911
  %v958 = vpack.c.b16 %v914, %v913
  %v959 = vpack.c.b16 %v916, %v915
  %v960 = vpack.c.b16 %v918, %v917
  %v961 = vpack.c.b16 %v920, %v919
  %v962 = vpack.c.b16 %v922, %v921
  %v963 = vpack.c.b16 %v924, %v923
  %v964 = vpack.c.b16 %v926, %v925
  %v965 = vpack.c.b16 %v928, %v927
  %v966 = vpack.c.b16 %v930, %v929
  %v967 = vpack.c.b16 %v932, %v931
  %v968 = vpack.c.b16 %v934, %v933
  %v969 = vpack.c.b16 %v936, %v935
  %v970 = vpack.c.b16 %v938, %v937
  %1003 = vmatprep.subr.bf16.mxu0 0
  %1004 = vmatpush1.bf16.msra.mxu0 %v939
  %1005 = vmatprep.subr.bf16.mxu0 0
  %1006 = vmatpush1.bf16.msra.mxu0 %v940
  %1007 = vmatprep.subr.bf16.mxu0 0
  %1008 = vmatpush1.bf16.msra.mxu0 %v941
  %1009 = vmatprep.subr.bf16.mxu0 0
  %1010 = vmatpush1.bf16.msra.mxu0 %v942
  %1011 = vmatprep.subr.bf16.mxu0 0
  %1012 = vmatpush1.bf16.msra.mxu0 %v943
  %1013 = vmatprep.subr.bf16.mxu0 0
  %1014 = vmatpush1.bf16.msra.mxu0 %v944
  %1015 = vmatprep.subr.bf16.mxu0 0
  %1016 = vmatpush1.bf16.msra.mxu0 %v945
  %1017 = vmatprep.subr.bf16.mxu0 0
  %1018 = vmatpush1.bf16.msra.mxu0 %v946
  %1019 = vmatprep.subr.bf16.mxu0 0
  %1020 = vmatpush1.bf16.msra.mxu0 %v947
  %1021 = vmatprep.subr.bf16.mxu0 0
  %1022 = vmatpush1.bf16.msra.mxu0 %v948
  %1023 = vmatprep.subr.bf16.mxu0 0
  %1024 = vmatpush1.bf16.msra.mxu0 %v949
  %1025 = vmatprep.subr.bf16.mxu0 0
  %1026 = vmatpush1.bf16.msra.mxu0 %v950
  %1027 = vmatprep.subr.bf16.mxu0 0
  %1028 = vmatpush1.bf16.msra.mxu0 %v951
  %1029 = vmatprep.subr.bf16.mxu0 0
  %1030 = vmatpush1.bf16.msra.mxu0 %v952
  %1031 = vmatprep.subr.bf16.mxu0 0
  %1032 = vmatpush1.bf16.msra.mxu0 %v953
  %1033 = vmatprep.subr.bf16.mxu0 0
  %1034 = vmatpush1.bf16.msra.mxu0 %v954
  %1035 = vmatprep.mubr.bf16.mxu0 %v804
  %1036 = vmatmul.mubr.bf16.gmra.mrb[0].mxu0 %v803
  %v1037 = vpop.f32.mrb[0].mxu0
  %v1038 = vadd.f32 0.0, %v1037
  %v1039 = vpop.f32.mrb[0].mxu0
  %v1040 = vpop.f32.mrb[0].mxu0
  %v1041 = vpop.f32.mrb[0].mxu0
  %1042 = vdwg.mxu0
  %1043 = vmatprep.subr.bf16.mxu0 0
  %1044 = vmatpush1.bf16.msra.mxu0 %v955
  %1045 = vmatprep.subr.bf16.mxu0 0
  %1046 = vmatpush1.bf16.msra.mxu0 %v956
  %1047 = vmatprep.subr.bf16.mxu0 0
  %1048 = vmatpush1.bf16.msra.mxu0 %v957
  %1049 = vmatprep.subr.bf16.mxu0 0
  %1050 = vmatpush1.bf16.msra.mxu0 %v958
  %1051 = vmatprep.subr.bf16.mxu0 0
  %1052 = vmatpush1.bf16.msra.mxu0 %v959
  %1053 = vmatprep.subr.bf16.mxu0 0
  %1054 = vmatpush1.bf16.msra.mxu0 %v960
  %1055 = vmatprep.subr.bf16.mxu0 0
  %1056 = vmatpush1.bf16.msra.mxu0 %v961
  %1057 = vmatprep.subr.bf16.mxu0 0
  %1058 = vmatpush1.bf16.msra.mxu0 %v962
  %1059 = vmatprep.subr.bf16.mxu0 0
  %1060 = vmatpush1.bf16.msra.mxu0 %v963
  %1061 = vmatprep.subr.bf16.mxu0 0
  %1062 = vmatpush1.bf16.msra.mxu0 %v964
  %1063 = vmatprep.subr.bf16.mxu0 0
  %1064 = vmatpush1.bf16.msra.mxu0 %v965
  %1065 = vmatprep.subr.bf16.mxu0 0
  %1066 = vmatpush1.bf16.msra.mxu0 %v966
  %1067 = vmatprep.subr.bf16.mxu0 0
  %1068 = vmatpush1.bf16.msra.mxu0 %v967
  %1069 = vmatprep.subr.bf16.mxu0 0
  %1070 = vmatpush1.bf16.msra.mxu0 %v968
  %1071 = vmatprep.subr.bf16.mxu0 0
  %1072 = vmatpush1.bf16.msra.mxu0 %v969
  %1073 = vmatprep.subr.bf16.mxu0 0
  %1074 = vmatpush1.bf16.msra.mxu0 %v970
  %1075 = vmatprep.mubr.bf16.mxu0 %v806
  %1076 = vmatmul.mubr.bf16.gmra.mrb[0].mxu0 %v805
  %v1077 = vpop.f32.mrb[0].mxu0
  %v1078 = vadd.f32 %v1038, %v1077
  %v1079 = vpop.f32.mrb[0].mxu0
  %v1080 = vpop.f32.mrb[0].mxu0
  %v1081 = vpop.f32.mrb[0].mxu0
  %1082 = vdwg.mxu0
  %v1083 = vadd.f32 %v724, %v1078
  %s1084 = scalar_lea.vmem %s0, 48
  %v1085 = vld [vmem:[%s1084] sm:$0xff]
  %v1086 = vld [vmem:[%s1084 + $0x8] sm:$0xff]
  %s1087 = scalar_lea.vmem %s1, 768
  %v1088 = vld [vmem:[%s1087] sm:$0xf]
  %v1089 = vld [vmem:[%s1087 + $0x4] sm:$0xf]
  %v1090 = vld [vmem:[%s1087 + $0x8] sm:$0xf]
  %v1091 = vld [vmem:[%s1087 + $0xc] sm:$0xf]
  %v1092 = vld [vmem:[%s1087 + $0x10] sm:$0xf]
  %v1093 = vld [vmem:[%s1087 + $0x14] sm:$0xf]
  %v1094 = vld [vmem:[%s1087 + $0x18] sm:$0xf]
  %v1095 = vld [vmem:[%s1087 + $0x1c] sm:$0xf]
  %v1096 = vld [vmem:[%s1087 + $0x20] sm:$0xf]
  %v1097 = vld [vmem:[%s1087 + $0x24] sm:$0xf]
  %v1098 = vld [vmem:[%s1087 + $0x28] sm:$0xf]
  %v1099 = vld [vmem:[%s1087 + $0x2c] sm:$0xf]
  %v1100 = vld [vmem:[%s1087 + $0x30] sm:$0xf]
  %v1101 = vld [vmem:[%s1087 + $0x34] sm:$0xf]
  %v1102 = vld [vmem:[%s1087 + $0x38] sm:$0xf]
  %v1103 = vld [vmem:[%s1087 + $0x3c] sm:$0xf]
  %v1104 = vld [vmem:[%s1087 + $0x40] sm:$0xf]
  %v1105 = vld [vmem:[%s1087 + $0x44] sm:$0xf]
  %v1106 = vld [vmem:[%s1087 + $0x48] sm:$0xf]
  %v1107 = vld [vmem:[%s1087 + $0x4c] sm:$0xf]
  %v1108 = vld [vmem:[%s1087 + $0x50] sm:$0xf]
  %v1109 = vld [vmem:[%s1087 + $0x54] sm:$0xf]
  %v1110 = vld [vmem:[%s1087 + $0x58] sm:$0xf]
  %v1111 = vld [vmem:[%s1087 + $0x5c] sm:$0xf]
  %v1112 = vld [vmem:[%s1087 + $0x60] sm:$0xf]
  %v1113 = vld [vmem:[%s1087 + $0x64] sm:$0xf]
  %v1114 = vld [vmem:[%s1087 + $0x68] sm:$0xf]
  %v1115 = vld [vmem:[%s1087 + $0x6c] sm:$0xf]
  %v1116 = vld [vmem:[%s1087 + $0x70] sm:$0xf]
  %v1117 = vld [vmem:[%s1087 + $0x74] sm:$0xf]
  %v1118 = vld [vmem:[%s1087 + $0x78] sm:$0xf]
  %v1119 = vld [vmem:[%s1087 + $0x7c] sm:$0xf]
  %v1120 = vld [vmem:[%s1087 + $0x80] sm:$0xf]
  %v1121 = vld [vmem:[%s1087 + $0x84] sm:$0xf]
  %v1122 = vld [vmem:[%s1087 + $0x88] sm:$0xf]
  %v1123 = vld [vmem:[%s1087 + $0x8c] sm:$0xf]
  %v1124 = vld [vmem:[%s1087 + $0x90] sm:$0xf]
  %v1125 = vld [vmem:[%s1087 + $0x94] sm:$0xf]
  %v1126 = vld [vmem:[%s1087 + $0x98] sm:$0xf]
  %v1127 = vld [vmem:[%s1087 + $0x9c] sm:$0xf]
  %v1128 = vld [vmem:[%s1087 + $0xa0] sm:$0xf]
  %v1129 = vld [vmem:[%s1087 + $0xa4] sm:$0xf]
  %v1130 = vld [vmem:[%s1087 + $0xa8] sm:$0xf]
  %v1131 = vld [vmem:[%s1087 + $0xac] sm:$0xf]
  %v1132 = vld [vmem:[%s1087 + $0xb0] sm:$0xf]
  %v1133 = vld [vmem:[%s1087 + $0xb4] sm:$0xf]
  %v1134 = vld [vmem:[%s1087 + $0xb8] sm:$0xf]
  %v1135 = vld [vmem:[%s1087 + $0xbc] sm:$0xf]
  %v1136 = vld [vmem:[%s1087 + $0xc0] sm:$0xf]
  %v1137 = vld [vmem:[%s1087 + $0xc4] sm:$0xf]
  %v1138 = vld [vmem:[%s1087 + $0xc8] sm:$0xf]
  %v1139 = vld [vmem:[%s1087 + $0xcc] sm:$0xf]
  %v1140 = vld [vmem:[%s1087 + $0xd0] sm:$0xf]
  %v1141 = vld [vmem:[%s1087 + $0xd4] sm:$0xf]
  %v1142 = vld [vmem:[%s1087 + $0xd8] sm:$0xf]
  %v1143 = vld [vmem:[%s1087 + $0xdc] sm:$0xf]
  %v1144 = vld [vmem:[%s1087 + $0xe0] sm:$0xf]
  %v1145 = vld [vmem:[%s1087 + $0xe4] sm:$0xf]
  %v1146 = vld [vmem:[%s1087 + $0xe8] sm:$0xf]
  %v1147 = vld [vmem:[%s1087 + $0xec] sm:$0xf]
  %v1148 = vld [vmem:[%s1087 + $0xf0] sm:$0xf]
  %v1149 = vld [vmem:[%s1087 + $0xf4] sm:$0xf]
  %v1150 = vld [vmem:[%s1087 + $0xf8] sm:$0xf]
  %v1151 = vld [vmem:[%s1087 + $0xfc] sm:$0xf]
  %v1154 = vunpack.c.l.b16 %v1085
  %v1155 = vunpack.c.h.b16 %v1085
  %v1156 = vunpack.c.l.b16 %v1086
  %v1157 = vunpack.c.h.b16 %v1086
  %v1158 = vpack.c.b16 %v1154, %v1154
  %v1159 = vpack.c.b16 %v1155, %v1155
  %v1160 = vpack.c.b16 %v1156, %v1156
  %v1161 = vpack.c.b16 %v1157, %v1157
  %v1230 = vunpack.c.l.b16 %v1088
  %v1231 = vunpack.c.l.b16 %v1089
  %v1232 = vunpack.c.l.b16 %v1090
  %v1233 = vunpack.c.l.b16 %v1091
  %v1234 = vunpack.c.l.b16 %v1092
  %v1235 = vunpack.c.l.b16 %v1093
  %v1236 = vunpack.c.l.b16 %v1094
  %v1237 = vunpack.c.l.b16 %v1095
  %v1238 = vunpack.c.l.b16 %v1096
  %v1239 = vunpack.c.l.b16 %v1097
  %v1240 = vunpack.c.l.b16 %v1098
  %v1241 = vunpack.c.l.b16 %v1099
  %v1242 = vunpack.c.l.b16 %v1100
  %v1243 = vunpack.c.l.b16 %v1101
  %v1244 = vunpack.c.l.b16 %v1102
  %v1245 = vunpack.c.l.b16 %v1103
  %v1246 = vunpack.c.l.b16 %v1104
  %v1247 = vunpack.c.l.b16 %v1105
  %v1248 = vunpack.c.l.b16 %v1106
  %v1249 = vunpack.c.l.b16 %v1107
  %v1250 = vunpack.c.l.b16 %v1108
  %v1251 = vunpack.c.l.b16 %v1109
  %v1252 = vunpack.c.l.b16 %v1110
  %v1253 = vunpack.c.l.b16 %v1111
  %v1254 = vunpack.c.l.b16 %v1112
  %v1255 = vunpack.c.l.b16 %v1113
  %v1256 = vunpack.c.l.b16 %v1114
  %v1257 = vunpack.c.l.b16 %v1115
  %v1258 = vunpack.c.l.b16 %v1116
  %v1259 = vunpack.c.l.b16 %v1117
  %v1260 = vunpack.c.l.b16 %v1118
  %v1261 = vunpack.c.l.b16 %v1119
  %v1262 = vunpack.c.l.b16 %v1120
  %v1263 = vunpack.c.l.b16 %v1121
  %v1264 = vunpack.c.l.b16 %v1122
  %v1265 = vunpack.c.l.b16 %v1123
  %v1266 = vunpack.c.l.b16 %v1124
  %v1267 = vunpack.c.l.b16 %v1125
  %v1268 = vunpack.c.l.b16 %v1126
  %v1269 = vunpack.c.l.b16 %v1127
  %v1270 = vunpack.c.l.b16 %v1128
  %v1271 = vunpack.c.l.b16 %v1129
  %v1272 = vunpack.c.l.b16 %v1130
  %v1273 = vunpack.c.l.b16 %v1131
  %v1274 = vunpack.c.l.b16 %v1132
  %v1275 = vunpack.c.l.b16 %v1133
  %v1276 = vunpack.c.l.b16 %v1134
  %v1277 = vunpack.c.l.b16 %v1135
  %v1278 = vunpack.c.l.b16 %v1136
  %v1279 = vunpack.c.l.b16 %v1137
  %v1280 = vunpack.c.l.b16 %v1138
  %v1281 = vunpack.c.l.b16 %v1139
  %v1282 = vunpack.c.l.b16 %v1140
  %v1283 = vunpack.c.l.b16 %v1141
  %v1284 = vunpack.c.l.b16 %v1142
  %v1285 = vunpack.c.l.b16 %v1143
  %v1286 = vunpack.c.l.b16 %v1144
  %v1287 = vunpack.c.l.b16 %v1145
  %v1288 = vunpack.c.l.b16 %v1146
  %v1289 = vunpack.c.l.b16 %v1147
  %v1290 = vunpack.c.l.b16 %v1148
  %v1291 = vunpack.c.l.b16 %v1149
  %v1292 = vunpack.c.l.b16 %v1150
  %v1293 = vunpack.c.l.b16 %v1151
  %v1294 = vpack.c.b16 %v1231, %v1230
  %v1295 = vpack.c.b16 %v1233, %v1232
  %v1296 = vpack.c.b16 %v1235, %v1234
  %v1297 = vpack.c.b16 %v1237, %v1236
  %v1298 = vpack.c.b16 %v1239, %v1238
  %v1299 = vpack.c.b16 %v1241, %v1240
  %v1300 = vpack.c.b16 %v1243, %v1242
  %v1301 = vpack.c.b16 %v1245, %v1244
  %v1302 = vpack.c.b16 %v1247, %v1246
  %v1303 = vpack.c.b16 %v1249, %v1248
  %v1304 = vpack.c.b16 %v1251, %v1250
  %v1305 = vpack.c.b16 %v1253, %v1252
  %v1306 = vpack.c.b16 %v1255, %v1254
  %v1307 = vpack.c.b16 %v1257, %v1256
  %v1308 = vpack.c.b16 %v1259, %v1258
  %v1309 = vpack.c.b16 %v1261, %v1260
  %v1310 = vpack.c.b16 %v1263, %v1262
  %v1311 = vpack.c.b16 %v1265, %v1264
  %v1312 = vpack.c.b16 %v1267, %v1266
  %v1313 = vpack.c.b16 %v1269, %v1268
  %v1314 = vpack.c.b16 %v1271, %v1270
  %v1315 = vpack.c.b16 %v1273, %v1272
  %v1316 = vpack.c.b16 %v1275, %v1274
  %v1317 = vpack.c.b16 %v1277, %v1276
  %v1318 = vpack.c.b16 %v1279, %v1278
  %v1319 = vpack.c.b16 %v1281, %v1280
  %v1320 = vpack.c.b16 %v1283, %v1282
  %v1321 = vpack.c.b16 %v1285, %v1284
  %v1322 = vpack.c.b16 %v1287, %v1286
  %v1323 = vpack.c.b16 %v1289, %v1288
  %v1324 = vpack.c.b16 %v1291, %v1290
  %v1325 = vpack.c.b16 %v1293, %v1292
  %1358 = vmatprep.subr.bf16.mxu0 0
  %1359 = vmatpush1.bf16.msra.mxu0 %v1294
  %1360 = vmatprep.subr.bf16.mxu0 0
  %1361 = vmatpush1.bf16.msra.mxu0 %v1295
  %1362 = vmatprep.subr.bf16.mxu0 0
  %1363 = vmatpush1.bf16.msra.mxu0 %v1296
  %1364 = vmatprep.subr.bf16.mxu0 0
  %1365 = vmatpush1.bf16.msra.mxu0 %v1297
  %1366 = vmatprep.subr.bf16.mxu0 0
  %1367 = vmatpush1.bf16.msra.mxu0 %v1298
  %1368 = vmatprep.subr.bf16.mxu0 0
  %1369 = vmatpush1.bf16.msra.mxu0 %v1299
  %1370 = vmatprep.subr.bf16.mxu0 0
  %1371 = vmatpush1.bf16.msra.mxu0 %v1300
  %1372 = vmatprep.subr.bf16.mxu0 0
  %1373 = vmatpush1.bf16.msra.mxu0 %v1301
  %1374 = vmatprep.subr.bf16.mxu0 0
  %1375 = vmatpush1.bf16.msra.mxu0 %v1302
  %1376 = vmatprep.subr.bf16.mxu0 0
  %1377 = vmatpush1.bf16.msra.mxu0 %v1303
  %1378 = vmatprep.subr.bf16.mxu0 0
  %1379 = vmatpush1.bf16.msra.mxu0 %v1304
  %1380 = vmatprep.subr.bf16.mxu0 0
  %1381 = vmatpush1.bf16.msra.mxu0 %v1305
  %1382 = vmatprep.subr.bf16.mxu0 0
  %1383 = vmatpush1.bf16.msra.mxu0 %v1306
  %1384 = vmatprep.subr.bf16.mxu0 0
  %1385 = vmatpush1.bf16.msra.mxu0 %v1307
  %1386 = vmatprep.subr.bf16.mxu0 0
  %1387 = vmatpush1.bf16.msra.mxu0 %v1308
  %1388 = vmatprep.subr.bf16.mxu0 0
  %1389 = vmatpush1.bf16.msra.mxu0 %v1309
  %1390 = vmatprep.mubr.bf16.mxu0 %v1159
  %1391 = vmatmul.mubr.bf16.gmra.mrb[0].mxu0 %v1158
  %v1392 = vpop.f32.mrb[0].mxu0
  %v1393 = vadd.f32 0.0, %v1392
  %v1394 = vpop.f32.mrb[0].mxu0
  %v1395 = vpop.f32.mrb[0].mxu0
  %v1396 = vpop.f32.mrb[0].mxu0
  %1397 = vdwg.mxu0
  %1398 = vmatprep.subr.bf16.mxu0 0
  %1399 = vmatpush1.bf16.msra.mxu0 %v1310
  %1400 = vmatprep.subr.bf16.mxu0 0
  %1401 = vmatpush1.bf16.msra.mxu0 %v1311
  %1402 = vmatprep.subr.bf16.mxu0 0
  %1403 = vmatpush1.bf16.msra.mxu0 %v1312
  %1404 = vmatprep.subr.bf16.mxu0 0
  %1405 = vmatpush1.bf16.msra.mxu0 %v1313
  %1406 = vmatprep.subr.bf16.mxu0 0
  %1407 = vmatpush1.bf16.msra.mxu0 %v1314
  %1408 = vmatprep.subr.bf16.mxu0 0
  %1409 = vmatpush1.bf16.msra.mxu0 %v1315
  %1410 = vmatprep.subr.bf16.mxu0 0
  %1411 = vmatpush1.bf16.msra.mxu0 %v1316
  %1412 = vmatprep.subr.bf16.mxu0 0
  %1413 = vmatpush1.bf16.msra.mxu0 %v1317
  %1414 = vmatprep.subr.bf16.mxu0 0
  %1415 = vmatpush1.bf16.msra.mxu0 %v1318
  %1416 = vmatprep.subr.bf16.mxu0 0
  %1417 = vmatpush1.bf16.msra.mxu0 %v1319
  %1418 = vmatprep.subr.bf16.mxu0 0
  %1419 = vmatpush1.bf16.msra.mxu0 %v1320
  %1420 = vmatprep.subr.bf16.mxu0 0
  %1421 = vmatpush1.bf16.msra.mxu0 %v1321
  %1422 = vmatprep.subr.bf16.mxu0 0
  %1423 = vmatpush1.bf16.msra.mxu0 %v1322
  %1424 = vmatprep.subr.bf16.mxu0 0
  %1425 = vmatpush1.bf16.msra.mxu0 %v1323
  %1426 = vmatprep.subr.bf16.mxu0 0
  %1427 = vmatpush1.bf16.msra.mxu0 %v1324
  %1428 = vmatprep.subr.bf16.mxu0 0
  %1429 = vmatpush1.bf16.msra.mxu0 %v1325
  %1430 = vmatprep.mubr.bf16.mxu0 %v1161
  %1431 = vmatmul.mubr.bf16.gmra.mrb[0].mxu0 %v1160
  %v1432 = vpop.f32.mrb[0].mxu0
  %v1433 = vadd.f32 %v1393, %v1432
  %v1434 = vpop.f32.mrb[0].mxu0
  %v1435 = vpop.f32.mrb[0].mxu0
  %v1436 = vpop.f32.mrb[0].mxu0
  %1437 = vdwg.mxu0
  %v1438 = vadd.f32 %v1083, %v1433
  %s1439 = scalar_lea.vmem %s0, 64
  %v1440 = vld [vmem:[%s1439] sm:$0xff]
  %v1441 = vld [vmem:[%s1439 + $0x8] sm:$0xff]
  %s1442 = scalar_lea.vmem %s1, 1024
  %v1443 = vld [vmem:[%s1442] sm:$0xf]
  %v1444 = vld [vmem:[%s1442 + $0x4] sm:$0xf]
  %v1445 = vld [vmem:[%s1442 + $0x8] sm:$0xf]
  %v1446 = vld [vmem:[%s1442 + $0xc] sm:$0xf]
  %v1447 = vld [vmem:[%s1442 + $0x10] sm:$0xf]
  %v1448 = vld [vmem:[%s1442 + $0x14] sm:$0xf]
  %v1449 = vld [vmem:[%s1442 + $0x18] sm:$0xf]
  %v1450 = vld [vmem:[%s1442 + $0x1c] sm:$0xf]
  %v1451 = vld [vmem:[%s1442 + $0x20] sm:$0xf]
  %v1452 = vld [vmem:[%s1442 + $0x24] sm:$0xf]
  %v1453 = vld [vmem:[%s1442 + $0x28] sm:$0xf]
  %v1454 = vld [vmem:[%s1442 + $0x2c] sm:$0xf]
  %v1455 = vld [vmem:[%s1442 + $0x30] sm:$0xf]
  %v1456 = vld [vmem:[%s1442 + $0x34] sm:$0xf]
  %v1457 = vld [vmem:[%s1442 + $0x38] sm:$0xf]
  %v1458 = vld [vmem:[%s1442 + $0x3c] sm:$0xf]
  %v1459 = vld [vmem:[%s1442 + $0x40] sm:$0xf]
  %v1460 = vld [vmem:[%s1442 + $0x44] sm:$0xf]
  %v1461 = vld [vmem:[%s1442 + $0x48] sm:$0xf]
  %v1462 = vld [vmem:[%s1442 + $0x4c] sm:$0xf]
  %v1463 = vld [vmem:[%s1442 + $0x50] sm:$0xf]
  %v1464 = vld [vmem:[%s1442 + $0x54] sm:$0xf]
  %v1465 = vld [vmem:[%s1442 + $0x58] sm:$0xf]
  %v1466 = vld [vmem:[%s1442 + $0x5c] sm:$0xf]
  %v1467 = vld [vmem:[%s1442 + $0x60] sm:$0xf]
  %v1468 = vld [vmem:[%s1442 + $0x64] sm:$0xf]
  %v1469 = vld [vmem:[%s1442 + $0x68] sm:$0xf]
  %v1470 = vld [vmem:[%s1442 + $0x6c] sm:$0xf]
  %v1471 = vld [vmem:[%s1442 + $0x70] sm:$0xf]
  %v1472 = vld [vmem:[%s1442 + $0x74] sm:$0xf]
  %v1473 = vld [vmem:[%s1442 + $0x78] sm:$0xf]
  %v1474 = vld [vmem:[%s1442 + $0x7c] sm:$0xf]
  %v1475 = vld [vmem:[%s1442 + $0x80] sm:$0xf]
  %v1476 = vld [vmem:[%s1442 + $0x84] sm:$0xf]
  %v1477 = vld [vmem:[%s1442 + $0x88] sm:$0xf]
  %v1478 = vld [vmem:[%s1442 + $0x8c] sm:$0xf]
  %v1479 = vld [vmem:[%s1442 + $0x90] sm:$0xf]
  %v1480 = vld [vmem:[%s1442 + $0x94] sm:$0xf]
  %v1481 = vld [vmem:[%s1442 + $0x98] sm:$0xf]
  %v1482 = vld [vmem:[%s1442 + $0x9c] sm:$0xf]
  %v1483 = vld [vmem:[%s1442 + $0xa0] sm:$0xf]
  %v1484 = vld [vmem:[%s1442 + $0xa4] sm:$0xf]
  %v1485 = vld [vmem:[%s1442 + $0xa8] sm:$0xf]
  %v1486 = vld [vmem:[%s1442 + $0xac] sm:$0xf]
  %v1487 = vld [vmem:[%s1442 + $0xb0] sm:$0xf]
  %v1488 = vld [vmem:[%s1442 + $0xb4] sm:$0xf]
  %v1489 = vld [vmem:[%s1442 + $0xb8] sm:$0xf]
  %v1490 = vld [vmem:[%s1442 + $0xbc] sm:$0xf]
  %v1491 = vld [vmem:[%s1442 + $0xc0] sm:$0xf]
  %v1492 = vld [vmem:[%s1442 + $0xc4] sm:$0xf]
  %v1493 = vld [vmem:[%s1442 + $0xc8] sm:$0xf]
  %v1494 = vld [vmem:[%s1442 + $0xcc] sm:$0xf]
  %v1495 = vld [vmem:[%s1442 + $0xd0] sm:$0xf]
  %v1496 = vld [vmem:[%s1442 + $0xd4] sm:$0xf]
  %v1497 = vld [vmem:[%s1442 + $0xd8] sm:$0xf]
  %v1498 = vld [vmem:[%s1442 + $0xdc] sm:$0xf]
  %v1499 = vld [vmem:[%s1442 + $0xe0] sm:$0xf]
  %v1500 = vld [vmem:[%s1442 + $0xe4] sm:$0xf]
  %v1501 = vld [vmem:[%s1442 + $0xe8] sm:$0xf]
  %v1502 = vld [vmem:[%s1442 + $0xec] sm:$0xf]
  %v1503 = vld [vmem:[%s1442 + $0xf0] sm:$0xf]
  %v1504 = vld [vmem:[%s1442 + $0xf4] sm:$0xf]
  %v1505 = vld [vmem:[%s1442 + $0xf8] sm:$0xf]
  %v1506 = vld [vmem:[%s1442 + $0xfc] sm:$0xf]
  %v1509 = vunpack.c.l.b16 %v1440
  %v1510 = vunpack.c.h.b16 %v1440
  %v1511 = vunpack.c.l.b16 %v1441
  %v1512 = vunpack.c.h.b16 %v1441
  %v1513 = vpack.c.b16 %v1509, %v1509
  %v1514 = vpack.c.b16 %v1510, %v1510
  %v1515 = vpack.c.b16 %v1511, %v1511
  %v1516 = vpack.c.b16 %v1512, %v1512
  %v1585 = vunpack.c.l.b16 %v1443
  %v1586 = vunpack.c.l.b16 %v1444
  %v1587 = vunpack.c.l.b16 %v1445
  %v1588 = vunpack.c.l.b16 %v1446
  %v1589 = vunpack.c.l.b16 %v1447
  %v1590 = vunpack.c.l.b16 %v1448
  %v1591 = vunpack.c.l.b16 %v1449
  %v1592 = vunpack.c.l.b16 %v1450
  %v1593 = vunpack.c.l.b16 %v1451
  %v1594 = vunpack.c.l.b16 %v1452
  %v1595 = vunpack.c.l.b16 %v1453
  %v1596 = vunpack.c.l.b16 %v1454
  %v1597 = vunpack.c.l.b16 %v1455
  %v1598 = vunpack.c.l.b16 %v1456
  %v1599 = vunpack.c.l.b16 %v1457
  %v1600 = vunpack.c.l.b16 %v1458
  %v1601 = vunpack.c.l.b16 %v1459
  %v1602 = vunpack.c.l.b16 %v1460
  %v1603 = vunpack.c.l.b16 %v1461
  %v1604 = vunpack.c.l.b16 %v1462
  %v1605 = vunpack.c.l.b16 %v1463
  %v1606 = vunpack.c.l.b16 %v1464
  %v1607 = vunpack.c.l.b16 %v1465
  %v1608 = vunpack.c.l.b16 %v1466
  %v1609 = vunpack.c.l.b16 %v1467
  %v1610 = vunpack.c.l.b16 %v1468
  %v1611 = vunpack.c.l.b16 %v1469
  %v1612 = vunpack.c.l.b16 %v1470
  %v1613 = vunpack.c.l.b16 %v1471
  %v1614 = vunpack.c.l.b16 %v1472
  %v1615 = vunpack.c.l.b16 %v1473
  %v1616 = vunpack.c.l.b16 %v1474
  %v1617 = vunpack.c.l.b16 %v1475
  %v1618 = vunpack.c.l.b16 %v1476
  %v1619 = vunpack.c.l.b16 %v1477
  %v1620 = vunpack.c.l.b16 %v1478
  %v1621 = vunpack.c.l.b16 %v1479
  %v1622 = vunpack.c.l.b16 %v1480
  %v1623 = vunpack.c.l.b16 %v1481
  %v1624 = vunpack.c.l.b16 %v1482
  %v1625 = vunpack.c.l.b16 %v1483
  %v1626 = vunpack.c.l.b16 %v1484
  %v1627 = vunpack.c.l.b16 %v1485
  %v1628 = vunpack.c.l.b16 %v1486
  %v1629 = vunpack.c.l.b16 %v1487
  %v1630 = vunpack.c.l.b16 %v1488
  %v1631 = vunpack.c.l.b16 %v1489
  %v1632 = vunpack.c.l.b16 %v1490
  %v1633 = vunpack.c.l.b16 %v1491
  %v1634 = vunpack.c.l.b16 %v1492
  %v1635 = vunpack.c.l.b16 %v1493
  %v1636 = vunpack.c.l.b16 %v1494
  %v1637 = vunpack.c.l.b16 %v1495
  %v1638 = vunpack.c.l.b16 %v1496
  %v1639 = vunpack.c.l.b16 %v1497
  %v1640 = vunpack.c.l.b16 %v1498
  %v1641 = vunpack.c.l.b16 %v1499
  %v1642 = vunpack.c.l.b16 %v1500
  %v1643 = vunpack.c.l.b16 %v1501
  %v1644 = vunpack.c.l.b16 %v1502
  %v1645 = vunpack.c.l.b16 %v1503
  %v1646 = vunpack.c.l.b16 %v1504
  %v1647 = vunpack.c.l.b16 %v1505
  %v1648 = vunpack.c.l.b16 %v1506
  %v1649 = vpack.c.b16 %v1586, %v1585
  %v1650 = vpack.c.b16 %v1588, %v1587
  %v1651 = vpack.c.b16 %v1590, %v1589
  %v1652 = vpack.c.b16 %v1592, %v1591
  %v1653 = vpack.c.b16 %v1594, %v1593
  %v1654 = vpack.c.b16 %v1596, %v1595
  %v1655 = vpack.c.b16 %v1598, %v1597
  %v1656 = vpack.c.b16 %v1600, %v1599
  %v1657 = vpack.c.b16 %v1602, %v1601
  %v1658 = vpack.c.b16 %v1604, %v1603
  %v1659 = vpack.c.b16 %v1606, %v1605
  %v1660 = vpack.c.b16 %v1608, %v1607
  %v1661 = vpack.c.b16 %v1610, %v1609
  %v1662 = vpack.c.b16 %v1612, %v1611
  %v1663 = vpack.c.b16 %v1614, %v1613
  %v1664 = vpack.c.b16 %v1616, %v1615
  %v1665 = vpack.c.b16 %v1618, %v1617
  %v1666 = vpack.c.b16 %v1620, %v1619
  %v1667 = vpack.c.b16 %v1622, %v1621
  %v1668 = vpack.c.b16 %v1624, %v1623
  %v1669 = vpack.c.b16 %v1626, %v1625
  %v1670 = vpack.c.b16 %v1628, %v1627
  %v1671 = vpack.c.b16 %v1630, %v1629
  %v1672 = vpack.c.b16 %v1632, %v1631
  %v1673 = vpack.c.b16 %v1634, %v1633
  %v1674 = vpack.c.b16 %v1636, %v1635
  %v1675 = vpack.c.b16 %v1638, %v1637
  %v1676 = vpack.c.b16 %v1640, %v1639
  %v1677 = vpack.c.b16 %v1642, %v1641
  %v1678 = vpack.c.b16 %v1644, %v1643
  %v1679 = vpack.c.b16 %v1646, %v1645
  %v1680 = vpack.c.b16 %v1648, %v1647
  %1713 = vmatprep.subr.bf16.mxu0 0
  %1714 = vmatpush1.bf16.msra.mxu0 %v1649
  %1715 = vmatprep.subr.bf16.mxu0 0
  %1716 = vmatpush1.bf16.msra.mxu0 %v1650
  %1717 = vmatprep.subr.bf16.mxu0 0
  %1718 = vmatpush1.bf16.msra.mxu0 %v1651
  %1719 = vmatprep.subr.bf16.mxu0 0
  %1720 = vmatpush1.bf16.msra.mxu0 %v1652
  %1721 = vmatprep.subr.bf16.mxu0 0
  %1722 = vmatpush1.bf16.msra.mxu0 %v1653
  %1723 = vmatprep.subr.bf16.mxu0 0
  %1724 = vmatpush1.bf16.msra.mxu0 %v1654
  %1725 = vmatprep.subr.bf16.mxu0 0
  %1726 = vmatpush1.bf16.msra.mxu0 %v1655
  %1727 = vmatprep.subr.bf16.mxu0 0
  %1728 = vmatpush1.bf16.msra.mxu0 %v1656
  %1729 = vmatprep.subr.bf16.mxu0 0
  %1730 = vmatpush1.bf16.msra.mxu0 %v1657
  %1731 = vmatprep.subr.bf16.mxu0 0
  %1732 = vmatpush1.bf16.msra.mxu0 %v1658
  %1733 = vmatprep.subr.bf16.mxu0 0
  %1734 = vmatpush1.bf16.msra.mxu0 %v1659
  %1735 = vmatprep.subr.bf16.mxu0 0
  %1736 = vmatpush1.bf16.msra.mxu0 %v1660
  %1737 = vmatprep.subr.bf16.mxu0 0
  %1738 = vmatpush1.bf16.msra.mxu0 %v1661
  %1739 = vmatprep.subr.bf16.mxu0 0
  %1740 = vmatpush1.bf16.msra.mxu0 %v1662
  %1741 = vmatprep.subr.bf16.mxu0 0
  %1742 = vmatpush1.bf16.msra.mxu0 %v1663
  %1743 = vmatprep.subr.bf16.mxu0 0
  %1744 = vmatpush1.bf16.msra.mxu0 %v1664
  %1745 = vmatprep.mubr.bf16.mxu0 %v1514
  %1746 = vmatmul.mubr.bf16.gmra.mrb[0].mxu0 %v1513
  %v1747 = vpop.f32.mrb[0].mxu0
  %v1748 = vadd.f32 0.0, %v1747
  %v1749 = vpop.f32.mrb[0].mxu0
  %v1750 = vpop.f32.mrb[0].mxu0
  %v1751 = vpop.f32.mrb[0].mxu0
  %1752 = vdwg.mxu0
  %1753 = vmatprep.subr.bf16.mxu0 0
  %1754 = vmatpush1.bf16.msra.mxu0 %v1665
  %1755 = vmatprep.subr.bf16.mxu0 0
  %1756 = vmatpush1.bf16.msra.mxu0 %v1666
  %1757 = vmatprep.subr.bf16.mxu0 0
  %1758 = vmatpush1.bf16.msra.mxu0 %v1667
  %1759 = vmatprep.subr.bf16.mxu0 0
  %1760 = vmatpush1.bf16.msra.mxu0 %v1668
  %1761 = vmatprep.subr.bf16.mxu0 0
  %1762 = vmatpush1.bf16.msra.mxu0 %v1669
  %1763 = vmatprep.subr.bf16.mxu0 0
  %1764 = vmatpush1.bf16.msra.mxu0 %v1670
  %1765 = vmatprep.subr.bf16.mxu0 0
  %1766 = vmatpush1.bf16.msra.mxu0 %v1671
  %1767 = vmatprep.subr.bf16.mxu0 0
  %1768 = vmatpush1.bf16.msra.mxu0 %v1672
  %1769 = vmatprep.subr.bf16.mxu0 0
  %1770 = vmatpush1.bf16.msra.mxu0 %v1673
  %1771 = vmatprep.subr.bf16.mxu0 0
  %1772 = vmatpush1.bf16.msra.mxu0 %v1674
  %1773 = vmatprep.subr.bf16.mxu0 0
  %1774 = vmatpush1.bf16.msra.mxu0 %v1675
  %1775 = vmatprep.subr.bf16.mxu0 0
  %1776 = vmatpush1.bf16.msra.mxu0 %v1676
  %1777 = vmatprep.subr.bf16.mxu0 0
  %1778 = vmatpush1.bf16.msra.mxu0 %v1677
  %1779 = vmatprep.subr.bf16.mxu0 0
  %1780 = vmatpush1.bf16.msra.mxu0 %v1678
  %1781 = vmatprep.subr.bf16.mxu0 0
  %1782 = vmatpush1.bf16.msra.mxu0 %v1679
  %1783 = vmatprep.subr.bf16.mxu0 0
  %1784 = vmatpush1.bf16.msra.mxu0 %v1680
  %1785 = vmatprep.mubr.bf16.mxu0 %v1516
  %1786 = vmatmul.mubr.bf16.gmra.mrb[0].mxu0 %v1515
  %v1787 = vpop.f32.mrb[0].mxu0
  %v1788 = vadd.f32 %v1748, %v1787
  %v1789 = vpop.f32.mrb[0].mxu0
  %v1790 = vpop.f32.mrb[0].mxu0
  %v1791 = vpop.f32.mrb[0].mxu0
  %1792 = vdwg.mxu0
  %v1793 = vadd.f32 %v1438, %v1788
  %s1794 = scalar_lea.vmem %s0, 80
  %v1795 = vld [vmem:[%s1794] sm:$0xff]
  %v1796 = vld [vmem:[%s1794 + $0x8] sm:$0xff]
  %s1797 = scalar_lea.vmem %s1, 1280
  %v1798 = vld [vmem:[%s1797] sm:$0xf]
  %v1799 = vld [vmem:[%s1797 + $0x4] sm:$0xf]
  %v1800 = vld [vmem:[%s1797 + $0x8] sm:$0xf]
  %v1801 = vld [vmem:[%s1797 + $0xc] sm:$0xf]
  %v1802 = vld [vmem:[%s1797 + $0x10] sm:$0xf]
  %v1803 = vld [vmem:[%s1797 + $0x14] sm:$0xf]
  %v1804 = vld [vmem:[%s1797 + $0x18] sm:$0xf]
  %v1805 = vld [vmem:[%s1797 + $0x1c] sm:$0xf]
  %v1806 = vld [vmem:[%s1797 + $0x20] sm:$0xf]
  %v1807 = vld [vmem:[%s1797 + $0x24] sm:$0xf]
  %v1808 = vld [vmem:[%s1797 + $0x28] sm:$0xf]
  %v1809 = vld [vmem:[%s1797 + $0x2c] sm:$0xf]
  %v1810 = vld [vmem:[%s1797 + $0x30] sm:$0xf]
  %v1811 = vld [vmem:[%s1797 + $0x34] sm:$0xf]
  %v1812 = vld [vmem:[%s1797 + $0x38] sm:$0xf]
  %v1813 = vld [vmem:[%s1797 + $0x3c] sm:$0xf]
  %v1814 = vld [vmem:[%s1797 + $0x40] sm:$0xf]
  %v1815 = vld [vmem:[%s1797 + $0x44] sm:$0xf]
  %v1816 = vld [vmem:[%s1797 + $0x48] sm:$0xf]
  %v1817 = vld [vmem:[%s1797 + $0x4c] sm:$0xf]
  %v1818 = vld [vmem:[%s1797 + $0x50] sm:$0xf]
  %v1819 = vld [vmem:[%s1797 + $0x54] sm:$0xf]
  %v1820 = vld [vmem:[%s1797 + $0x58] sm:$0xf]
  %v1821 = vld [vmem:[%s1797 + $0x5c] sm:$0xf]
  %v1822 = vld [vmem:[%s1797 + $0x60] sm:$0xf]
  %v1823 = vld [vmem:[%s1797 + $0x64] sm:$0xf]
  %v1824 = vld [vmem:[%s1797 + $0x68] sm:$0xf]
  %v1825 = vld [vmem:[%s1797 + $0x6c] sm:$0xf]
  %v1826 = vld [vmem:[%s1797 + $0x70] sm:$0xf]
  %v1827 = vld [vmem:[%s1797 + $0x74] sm:$0xf]
  %v1828 = vld [vmem:[%s1797 + $0x78] sm:$0xf]
  %v1829 = vld [vmem:[%s1797 + $0x7c] sm:$0xf]
  %v1830 = vld [vmem:[%s1797 + $0x80] sm:$0xf]
  %v1831 = vld [vmem:[%s1797 + $0x84] sm:$0xf]
  %v1832 = vld [vmem:[%s1797 + $0x88] sm:$0xf]
  %v1833 = vld [vmem:[%s1797 + $0x8c] sm:$0xf]
  %v1834 = vld [vmem:[%s1797 + $0x90] sm:$0xf]
  %v1835 = vld [vmem:[%s1797 + $0x94] sm:$0xf]
  %v1836 = vld [vmem:[%s1797 + $0x98] sm:$0xf]
  %v1837 = vld [vmem:[%s1797 + $0x9c] sm:$0xf]
  %v1838 = vld [vmem:[%s1797 + $0xa0] sm:$0xf]
  %v1839 = vld [vmem:[%s1797 + $0xa4] sm:$0xf]
  %v1840 = vld [vmem:[%s1797 + $0xa8] sm:$0xf]
  %v1841 = vld [vmem:[%s1797 + $0xac] sm:$0xf]
  %v1842 = vld [vmem:[%s1797 + $0xb0] sm:$0xf]
  %v1843 = vld [vmem:[%s1797 + $0xb4] sm:$0xf]
  %v1844 = vld [vmem:[%s1797 + $0xb8] sm:$0xf]
  %v1845 = vld [vmem:[%s1797 + $0xbc] sm:$0xf]
  %v1846 = vld [vmem:[%s1797 + $0xc0] sm:$0xf]
  %v1847 = vld [vmem:[%s1797 + $0xc4] sm:$0xf]
  %v1848 = vld [vmem:[%s1797 + $0xc8] sm:$0xf]
  %v1849 = vld [vmem:[%s1797 + $0xcc] sm:$0xf]
  %v1850 = vld [vmem:[%s1797 + $0xd0] sm:$0xf]
  %v1851 = vld [vmem:[%s1797 + $0xd4] sm:$0xf]
  %v1852 = vld [vmem:[%s1797 + $0xd8] sm:$0xf]
  %v1853 = vld [vmem:[%s1797 + $0xdc] sm:$0xf]
  %v1854 = vld [vmem:[%s1797 + $0xe0] sm:$0xf]
  %v1855 = vld [vmem:[%s1797 + $0xe4] sm:$0xf]
  %v1856 = vld [vmem:[%s1797 + $0xe8] sm:$0xf]
  %v1857 = vld [vmem:[%s1797 + $0xec] sm:$0xf]
  %v1858 = vld [vmem:[%s1797 + $0xf0] sm:$0xf]
  %v1859 = vld [vmem:[%s1797 + $0xf4] sm:$0xf]
  %v1860 = vld [vmem:[%s1797 + $0xf8] sm:$0xf]
  %v1861 = vld [vmem:[%s1797 + $0xfc] sm:$0xf]
  %v1864 = vunpack.c.l.b16 %v1795
  %v1865 = vunpack.c.h.b16 %v1795
  %v1866 = vunpack.c.l.b16 %v1796
  %v1867 = vunpack.c.h.b16 %v1796
  %v1868 = vpack.c.b16 %v1864, %v1864
  %v1869 = vpack.c.b16 %v1865, %v1865
  %v1870 = vpack.c.b16 %v1866, %v1866
  %v1871 = vpack.c.b16 %v1867, %v1867
  %v1940 = vunpack.c.l.b16 %v1798
  %v1941 = vunpack.c.l.b16 %v1799
  %v1942 = vunpack.c.l.b16 %v1800
  %v1943 = vunpack.c.l.b16 %v1801
  %v1944 = vunpack.c.l.b16 %v1802
  %v1945 = vunpack.c.l.b16 %v1803
  %v1946 = vunpack.c.l.b16 %v1804
  %v1947 = vunpack.c.l.b16 %v1805
  %v1948 = vunpack.c.l.b16 %v1806
  %v1949 = vunpack.c.l.b16 %v1807
  %v1950 = vunpack.c.l.b16 %v1808
  %v1951 = vunpack.c.l.b16 %v1809
  %v1952 = vunpack.c.l.b16 %v1810
  %v1953 = vunpack.c.l.b16 %v1811
  %v1954 = vunpack.c.l.b16 %v1812
  %v1955 = vunpack.c.l.b16 %v1813
  %v1956 = vunpack.c.l.b16 %v1814
  %v1957 = vunpack.c.l.b16 %v1815
  %v1958 = vunpack.c.l.b16 %v1816
  %v1959 = vunpack.c.l.b16 %v1817
  %v1960 = vunpack.c.l.b16 %v1818
  %v1961 = vunpack.c.l.b16 %v1819
  %v1962 = vunpack.c.l.b16 %v1820
  %v1963 = vunpack.c.l.b16 %v1821
  %v1964 = vunpack.c.l.b16 %v1822
  %v1965 = vunpack.c.l.b16 %v1823
  %v1966 = vunpack.c.l.b16 %v1824
  %v1967 = vunpack.c.l.b16 %v1825
  %v1968 = vunpack.c.l.b16 %v1826
  %v1969 = vunpack.c.l.b16 %v1827
  %v1970 = vunpack.c.l.b16 %v1828
  %v1971 = vunpack.c.l.b16 %v1829
  %v1972 = vunpack.c.l.b16 %v1830
  %v1973 = vunpack.c.l.b16 %v1831
  %v1974 = vunpack.c.l.b16 %v1832
  %v1975 = vunpack.c.l.b16 %v1833
  %v1976 = vunpack.c.l.b16 %v1834
  %v1977 = vunpack.c.l.b16 %v1835
  %v1978 = vunpack.c.l.b16 %v1836
  %v1979 = vunpack.c.l.b16 %v1837
  %v1980 = vunpack.c.l.b16 %v1838
  %v1981 = vunpack.c.l.b16 %v1839
  %v1982 = vunpack.c.l.b16 %v1840
  %v1983 = vunpack.c.l.b16 %v1841
  %v1984 = vunpack.c.l.b16 %v1842
  %v1985 = vunpack.c.l.b16 %v1843
  %v1986 = vunpack.c.l.b16 %v1844
  %v1987 = vunpack.c.l.b16 %v1845
  %v1988 = vunpack.c.l.b16 %v1846
  %v1989 = vunpack.c.l.b16 %v1847
  %v1990 = vunpack.c.l.b16 %v1848
  %v1991 = vunpack.c.l.b16 %v1849
  %v1992 = vunpack.c.l.b16 %v1850
  %v1993 = vunpack.c.l.b16 %v1851
  %v1994 = vunpack.c.l.b16 %v1852
  %v1995 = vunpack.c.l.b16 %v1853
  %v1996 = vunpack.c.l.b16 %v1854
  %v1997 = vunpack.c.l.b16 %v1855
  %v1998 = vunpack.c.l.b16 %v1856
  %v1999 = vunpack.c.l.b16 %v1857
  %v2000 = vunpack.c.l.b16 %v1858
  %v2001 = vunpack.c.l.b16 %v1859
  %v2002 = vunpack.c.l.b16 %v1860
  %v2003 = vunpack.c.l.b16 %v1861
  %v2004 = vpack.c.b16 %v1941, %v1940
  %v2005 = vpack.c.b16 %v1943, %v1942
  %v2006 = vpack.c.b16 %v1945, %v1944
  %v2007 = vpack.c.b16 %v1947, %v1946
  %v2008 = vpack.c.b16 %v1949, %v1948
  %v2009 = vpack.c.b16 %v1951, %v1950
  %v2010 = vpack.c.b16 %v1953, %v1952
  %v2011 = vpack.c.b16 %v1955, %v1954
  %v2012 = vpack.c.b16 %v1957, %v1956
  %v2013 = vpack.c.b16 %v1959, %v1958
  %v2014 = vpack.c.b16 %v1961, %v1960
  %v2015 = vpack.c.b16 %v1963, %v1962
  %v2016 = vpack.c.b16 %v1965, %v1964
  %v2017 = vpack.c.b16 %v1967, %v1966
  %v2018 = vpack.c.b16 %v1969, %v1968
  %v2019 = vpack.c.b16 %v1971, %v1970
  %v2020 = vpack.c.b16 %v1973, %v1972
  %v2021 = vpack.c.b16 %v1975, %v1974
  %v2022 = vpack.c.b16 %v1977, %v1976
  %v2023 = vpack.c.b16 %v1979, %v1978
  %v2024 = vpack.c.b16 %v1981, %v1980
  %v2025 = vpack.c.b16 %v1983, %v1982
  %v2026 = vpack.c.b16 %v1985, %v1984
  %v2027 = vpack.c.b16 %v1987, %v1986
  %v2028 = vpack.c.b16 %v1989, %v1988
  %v2029 = vpack.c.b16 %v1991, %v1990
  %v2030 = vpack.c.b16 %v1993, %v1992
  %v2031 = vpack.c.b16 %v1995, %v1994
  %v2032 = vpack.c.b16 %v1997, %v1996
  %v2033 = vpack.c.b16 %v1999, %v1998
  %v2034 = vpack.c.b16 %v2001, %v2000
  %v2035 = vpack.c.b16 %v2003, %v2002
  %2068 = vmatprep.subr.bf16.mxu0 0
  %2069 = vmatpush1.bf16.msra.mxu0 %v2004
  %2070 = vmatprep.subr.bf16.mxu0 0
  %2071 = vmatpush1.bf16.msra.mxu0 %v2005
  %2072 = vmatprep.subr.bf16.mxu0 0
  %2073 = vmatpush1.bf16.msra.mxu0 %v2006
  %2074 = vmatprep.subr.bf16.mxu0 0
  %2075 = vmatpush1.bf16.msra.mxu0 %v2007
  %2076 = vmatprep.subr.bf16.mxu0 0
  %2077 = vmatpush1.bf16.msra.mxu0 %v2008
  %2078 = vmatprep.subr.bf16.mxu0 0
  %2079 = vmatpush1.bf16.msra.mxu0 %v2009
  %2080 = vmatprep.subr.bf16.mxu0 0
  %2081 = vmatpush1.bf16.msra.mxu0 %v2010
  %2082 = vmatprep.subr.bf16.mxu0 0
  %2083 = vmatpush1.bf16.msra.mxu0 %v2011
  %2084 = vmatprep.subr.bf16.mxu0 0
  %2085 = vmatpush1.bf16.msra.mxu0 %v2012
  %2086 = vmatprep.subr.bf16.mxu0 0
  %2087 = vmatpush1.bf16.msra.mxu0 %v2013
  %2088 = vmatprep.subr.bf16.mxu0 0
  %2089 = vmatpush1.bf16.msra.mxu0 %v2014
  %2090 = vmatprep.subr.bf16.mxu0 0
  %2091 = vmatpush1.bf16.msra.mxu0 %v2015
  %2092 = vmatprep.subr.bf16.mxu0 0
  %2093 = vmatpush1.bf16.msra.mxu0 %v2016
  %2094 = vmatprep.subr.bf16.mxu0 0
  %2095 = vmatpush1.bf16.msra.mxu0 %v2017
  %2096 = vmatprep.subr.bf16.mxu0 0
  %2097 = vmatpush1.bf16.msra.mxu0 %v2018
  %2098 = vmatprep.subr.bf16.mxu0 0
  %2099 = vmatpush1.bf16.msra.mxu0 %v2019
  %2100 = vmatprep.mubr.bf16.mxu0 %v1869
  %2101 = vmatmul.mubr.bf16.gmra.mrb[0].mxu0 %v1868
  %v2102 = vpop.f32.mrb[0].mxu0
  %v2103 = vadd.f32 0.0, %v2102
  %v2104 = vpop.f32.mrb[0].mxu0
  %v2105 = vpop.f32.mrb[0].mxu0
  %v2106 = vpop.f32.mrb[0].mxu0
  %2107 = vdwg.mxu0
  %2108 = vmatprep.subr.bf16.mxu0 0
  %2109 = vmatpush1.bf16.msra.mxu0 %v2020
  %2110 = vmatprep.subr.bf16.mxu0 0
  %2111 = vmatpush1.bf16.msra.mxu0 %v2021
  %2112 = vmatprep.subr.bf16.mxu0 0
  %2113 = vmatpush1.bf16.msra.mxu0 %v2022
  %2114 = vmatprep.subr.bf16.mxu0 0
  %2115 = vmatpush1.bf16.msra.mxu0 %v2023
  %2116 = vmatprep.subr.bf16.mxu0 0
  %2117 = vmatpush1.bf16.msra.mxu0 %v2024
  %2118 = vmatprep.subr.bf16.mxu0 0
  %2119 = vmatpush1.bf16.msra.mxu0 %v2025
  %2120 = vmatprep.subr.bf16.mxu0 0
  %2121 = vmatpush1.bf16.msra.mxu0 %v2026
  %2122 = vmatprep.subr.bf16.mxu0 0
  %2123 = vmatpush1.bf16.msra.mxu0 %v2027
  %2124 = vmatprep.subr.bf16.mxu0 0
  %2125 = vmatpush1.bf16.msra.mxu0 %v2028
  %2126 = vmatprep.subr.bf16.mxu0 0
  %2127 = vmatpush1.bf16.msra.mxu0 %v2029
  %2128 = vmatprep.subr.bf16.mxu0 0
  %2129 = vmatpush1.bf16.msra.mxu0 %v2030
  %2130 = vmatprep.subr.bf16.mxu0 0
  %2131 = vmatpush1.bf16.msra.mxu0 %v2031
  %2132 = vmatprep.subr.bf16.mxu0 0
  %2133 = vmatpush1.bf16.msra.mxu0 %v2032
  %2134 = vmatprep.subr.bf16.mxu0 0
  %2135 = vmatpush1.bf16.msra.mxu0 %v2033
  %2136 = vmatprep.subr.bf16.mxu0 0
  %2137 = vmatpush1.bf16.msra.mxu0 %v2034
  %2138 = vmatprep.subr.bf16.mxu0 0
  %2139 = vmatpush1.bf16.msra.mxu0 %v2035
  %2140 = vmatprep.mubr.bf16.mxu0 %v1871
  %2141 = vmatmul.mubr.bf16.gmra.mrb[0].mxu0 %v1870
  %v2142 = vpop.f32.mrb[0].mxu0
  %v2143 = vadd.f32 %v2103, %v2142
  %v2144 = vpop.f32.mrb[0].mxu0
  %v2145 = vpop.f32.mrb[0].mxu0
  %v2146 = vpop.f32.mrb[0].mxu0
  %2147 = vdwg.mxu0
  %v2148 = vadd.f32 %v1793, %v2143
  %s2149 = scalar_lea.vmem %s0, 96
  %v2150 = vld [vmem:[%s2149] sm:$0xff]
  %v2151 = vld [vmem:[%s2149 + $0x8] sm:$0xff]
  %s2152 = scalar_lea.vmem %s1, 1536
  %v2153 = vld [vmem:[%s2152] sm:$0xf]
  %v2154 = vld [vmem:[%s2152 + $0x4] sm:$0xf]
  %v2155 = vld [vmem:[%s2152 + $0x8] sm:$0xf]
  %v2156 = vld [vmem:[%s2152 + $0xc] sm:$0xf]
  %v2157 = vld [vmem:[%s2152 + $0x10] sm:$0xf]
  %v2158 = vld [vmem:[%s2152 + $0x14] sm:$0xf]
  %v2159 = vld [vmem:[%s2152 + $0x18] sm:$0xf]
  %v2160 = vld [vmem:[%s2152 + $0x1c] sm:$0xf]
  %v2161 = vld [vmem:[%s2152 + $0x20] sm:$0xf]
  %v2162 = vld [vmem:[%s2152 + $0x24] sm:$0xf]
  %v2163 = vld [vmem:[%s2152 + $0x28] sm:$0xf]
  %v2164 = vld [vmem:[%s2152 + $0x2c] sm:$0xf]
  %v2165 = vld [vmem:[%s2152 + $0x30] sm:$0xf]
  %v2166 = vld [vmem:[%s2152 + $0x34] sm:$0xf]
  %v2167 = vld [vmem:[%s2152 + $0x38] sm:$0xf]
  %v2168 = vld [vmem:[%s2152 + $0x3c] sm:$0xf]
  %v2169 = vld [vmem:[%s2152 + $0x40] sm:$0xf]
  %v2170 = vld [vmem:[%s2152 + $0x44] sm:$0xf]
  %v2171 = vld [vmem:[%s2152 + $0x48] sm:$0xf]
  %v2172 = vld [vmem:[%s2152 + $0x4c] sm:$0xf]
  %v2173 = vld [vmem:[%s2152 + $0x50] sm:$0xf]
  %v2174 = vld [vmem:[%s2152 + $0x54] sm:$0xf]
  %v2175 = vld [vmem:[%s2152 + $0x58] sm:$0xf]
  %v2176 = vld [vmem:[%s2152 + $0x5c] sm:$0xf]
  %v2177 = vld [vmem:[%s2152 + $0x60] sm:$0xf]
  %v2178 = vld [vmem:[%s2152 + $0x64] sm:$0xf]
  %v2179 = vld [vmem:[%s2152 + $0x68] sm:$0xf]
  %v2180 = vld [vmem:[%s2152 + $0x6c] sm:$0xf]
  %v2181 = vld [vmem:[%s2152 + $0x70] sm:$0xf]
  %v2182 = vld [vmem:[%s2152 + $0x74] sm:$0xf]
  %v2183 = vld [vmem:[%s2152 + $0x78] sm:$0xf]
  %v2184 = vld [vmem:[%s2152 + $0x7c] sm:$0xf]
  %v2185 = vld [vmem:[%s2152 + $0x80] sm:$0xf]
  %v2186 = vld [vmem:[%s2152 + $0x84] sm:$0xf]
  %v2187 = vld [vmem:[%s2152 + $0x88] sm:$0xf]
  %v2188 = vld [vmem:[%s2152 + $0x8c] sm:$0xf]
  %v2189 = vld [vmem:[%s2152 + $0x90] sm:$0xf]
  %v2190 = vld [vmem:[%s2152 + $0x94] sm:$0xf]
  %v2191 = vld [vmem:[%s2152 + $0x98] sm:$0xf]
  %v2192 = vld [vmem:[%s2152 + $0x9c] sm:$0xf]
  %v2193 = vld [vmem:[%s2152 + $0xa0] sm:$0xf]
  %v2194 = vld [vmem:[%s2152 + $0xa4] sm:$0xf]
  %v2195 = vld [vmem:[%s2152 + $0xa8] sm:$0xf]
  %v2196 = vld [vmem:[%s2152 + $0xac] sm:$0xf]
  %v2197 = vld [vmem:[%s2152 + $0xb0] sm:$0xf]
  %v2198 = vld [vmem:[%s2152 + $0xb4] sm:$0xf]
  %v2199 = vld [vmem:[%s2152 + $0xb8] sm:$0xf]
  %v2200 = vld [vmem:[%s2152 + $0xbc] sm:$0xf]
  %v2201 = vld [vmem:[%s2152 + $0xc0] sm:$0xf]
  %v2202 = vld [vmem:[%s2152 + $0xc4] sm:$0xf]
  %v2203 = vld [vmem:[%s2152 + $0xc8] sm:$0xf]
  %v2204 = vld [vmem:[%s2152 + $0xcc] sm:$0xf]
  %v2205 = vld [vmem:[%s2152 + $0xd0] sm:$0xf]
  %v2206 = vld [vmem:[%s2152 + $0xd4] sm:$0xf]
  %v2207 = vld [vmem:[%s2152 + $0xd8] sm:$0xf]
  %v2208 = vld [vmem:[%s2152 + $0xdc] sm:$0xf]
  %v2209 = vld [vmem:[%s2152 + $0xe0] sm:$0xf]
  %v2210 = vld [vmem:[%s2152 + $0xe4] sm:$0xf]
  %v2211 = vld [vmem:[%s2152 + $0xe8] sm:$0xf]
  %v2212 = vld [vmem:[%s2152 + $0xec] sm:$0xf]
  %v2213 = vld [vmem:[%s2152 + $0xf0] sm:$0xf]
  %v2214 = vld [vmem:[%s2152 + $0xf4] sm:$0xf]
  %v2215 = vld [vmem:[%s2152 + $0xf8] sm:$0xf]
  %v2216 = vld [vmem:[%s2152 + $0xfc] sm:$0xf]
  %v2219 = vunpack.c.l.b16 %v2150
  %v2220 = vunpack.c.h.b16 %v2150
  %v2221 = vunpack.c.l.b16 %v2151
  %v2222 = vunpack.c.h.b16 %v2151
  %v2223 = vpack.c.b16 %v2219, %v2219
  %v2224 = vpack.c.b16 %v2220, %v2220
  %v2225 = vpack.c.b16 %v2221, %v2221
  %v2226 = vpack.c.b16 %v2222, %v2222
  %v2295 = vunpack.c.l.b16 %v2153
  %v2296 = vunpack.c.l.b16 %v2154
  %v2297 = vunpack.c.l.b16 %v2155
  %v2298 = vunpack.c.l.b16 %v2156
  %v2299 = vunpack.c.l.b16 %v2157
  %v2300 = vunpack.c.l.b16 %v2158
  %v2301 = vunpack.c.l.b16 %v2159
  %v2302 = vunpack.c.l.b16 %v2160
  %v2303 = vunpack.c.l.b16 %v2161
  %v2304 = vunpack.c.l.b16 %v2162
  %v2305 = vunpack.c.l.b16 %v2163
  %v2306 = vunpack.c.l.b16 %v2164
  %v2307 = vunpack.c.l.b16 %v2165
  %v2308 = vunpack.c.l.b16 %v2166
  %v2309 = vunpack.c.l.b16 %v2167
  %v2310 = vunpack.c.l.b16 %v2168
  %v2311 = vunpack.c.l.b16 %v2169
  %v2312 = vunpack.c.l.b16 %v2170
  %v2313 = vunpack.c.l.b16 %v2171
  %v2314 = vunpack.c.l.b16 %v2172
  %v2315 = vunpack.c.l.b16 %v2173
  %v2316 = vunpack.c.l.b16 %v2174
  %v2317 = vunpack.c.l.b16 %v2175
  %v2318 = vunpack.c.l.b16 %v2176
  %v2319 = vunpack.c.l.b16 %v2177
  %v2320 = vunpack.c.l.b16 %v2178
  %v2321 = vunpack.c.l.b16 %v2179
  %v2322 = vunpack.c.l.b16 %v2180
  %v2323 = vunpack.c.l.b16 %v2181
  %v2324 = vunpack.c.l.b16 %v2182
  %v2325 = vunpack.c.l.b16 %v2183
  %v2326 = vunpack.c.l.b16 %v2184
  %v2327 = vunpack.c.l.b16 %v2185
  %v2328 = vunpack.c.l.b16 %v2186
  %v2329 = vunpack.c.l.b16 %v2187
  %v2330 = vunpack.c.l.b16 %v2188
  %v2331 = vunpack.c.l.b16 %v2189
  %v2332 = vunpack.c.l.b16 %v2190
  %v2333 = vunpack.c.l.b16 %v2191
  %v2334 = vunpack.c.l.b16 %v2192
  %v2335 = vunpack.c.l.b16 %v2193
  %v2336 = vunpack.c.l.b16 %v2194
  %v2337 = vunpack.c.l.b16 %v2195
  %v2338 = vunpack.c.l.b16 %v2196
  %v2339 = vunpack.c.l.b16 %v2197
  %v2340 = vunpack.c.l.b16 %v2198
  %v2341 = vunpack.c.l.b16 %v2199
  %v2342 = vunpack.c.l.b16 %v2200
  %v2343 = vunpack.c.l.b16 %v2201
  %v2344 = vunpack.c.l.b16 %v2202
  %v2345 = vunpack.c.l.b16 %v2203
  %v2346 = vunpack.c.l.b16 %v2204
  %v2347 = vunpack.c.l.b16 %v2205
  %v2348 = vunpack.c.l.b16 %v2206
  %v2349 = vunpack.c.l.b16 %v2207
  %v2350 = vunpack.c.l.b16 %v2208
  %v2351 = vunpack.c.l.b16 %v2209
  %v2352 = vunpack.c.l.b16 %v2210
  %v2353 = vunpack.c.l.b16 %v2211
  %v2354 = vunpack.c.l.b16 %v2212
  %v2355 = vunpack.c.l.b16 %v2213
  %v2356 = vunpack.c.l.b16 %v2214
  %v2357 = vunpack.c.l.b16 %v2215
  %v2358 = vunpack.c.l.b16 %v2216
  %v2359 = vpack.c.b16 %v2296, %v2295
  %v2360 = vpack.c.b16 %v2298, %v2297
  %v2361 = vpack.c.b16 %v2300, %v2299
  %v2362 = vpack.c.b16 %v2302, %v2301
  %v2363 = vpack.c.b16 %v2304, %v2303
  %v2364 = vpack.c.b16 %v2306, %v2305
  %v2365 = vpack.c.b16 %v2308, %v2307
  %v2366 = vpack.c.b16 %v2310, %v2309
  %v2367 = vpack.c.b16 %v2312, %v2311
  %v2368 = vpack.c.b16 %v2314, %v2313
  %v2369 = vpack.c.b16 %v2316, %v2315
  %v2370 = vpack.c.b16 %v2318, %v2317
  %v2371 = vpack.c.b16 %v2320, %v2319
  %v2372 = vpack.c.b16 %v2322, %v2321
  %v2373 = vpack.c.b16 %v2324, %v2323
  %v2374 = vpack.c.b16 %v2326, %v2325
  %v2375 = vpack.c.b16 %v2328, %v2327
  %v2376 = vpack.c.b16 %v2330, %v2329
  %v2377 = vpack.c.b16 %v2332, %v2331
  %v2378 = vpack.c.b16 %v2334, %v2333
  %v2379 = vpack.c.b16 %v2336, %v2335
  %v2380 = vpack.c.b16 %v2338, %v2337
  %v2381 = vpack.c.b16 %v2340, %v2339
  %v2382 = vpack.c.b16 %v2342, %v2341
  %v2383 = vpack.c.b16 %v2344, %v2343
  %v2384 = vpack.c.b16 %v2346, %v2345
  %v2385 = vpack.c.b16 %v2348, %v2347
  %v2386 = vpack.c.b16 %v2350, %v2349
  %v2387 = vpack.c.b16 %v2352, %v2351
  %v2388 = vpack.c.b16 %v2354, %v2353
  %v2389 = vpack.c.b16 %v2356, %v2355
  %v2390 = vpack.c.b16 %v2358, %v2357
  %2423 = vmatprep.subr.bf16.mxu0 0
  %2424 = vmatpush1.bf16.msra.mxu0 %v2359
  %2425 = vmatprep.subr.bf16.mxu0 0
  %2426 = vmatpush1.bf16.msra.mxu0 %v2360
  %2427 = vmatprep.subr.bf16.mxu0 0
  %2428 = vmatpush1.bf16.msra.mxu0 %v2361
  %2429 = vmatprep.subr.bf16.mxu0 0
  %2430 = vmatpush1.bf16.msra.mxu0 %v2362
  %2431 = vmatprep.subr.bf16.mxu0 0
  %2432 = vmatpush1.bf16.msra.mxu0 %v2363
  %2433 = vmatprep.subr.bf16.mxu0 0
  %2434 = vmatpush1.bf16.msra.mxu0 %v2364
  %2435 = vmatprep.subr.bf16.mxu0 0
  %2436 = vmatpush1.bf16.msra.mxu0 %v2365
  %2437 = vmatprep.subr.bf16.mxu0 0
  %2438 = vmatpush1.bf16.msra.mxu0 %v2366
  %2439 = vmatprep.subr.bf16.mxu0 0
  %2440 = vmatpush1.bf16.msra.mxu0 %v2367
  %2441 = vmatprep.subr.bf16.mxu0 0
  %2442 = vmatpush1.bf16.msra.mxu0 %v2368
  %2443 = vmatprep.subr.bf16.mxu0 0
  %2444 = vmatpush1.bf16.msra.mxu0 %v2369
  %2445 = vmatprep.subr.bf16.mxu0 0
  %2446 = vmatpush1.bf16.msra.mxu0 %v2370
  %2447 = vmatprep.subr.bf16.mxu0 0
  %2448 = vmatpush1.bf16.msra.mxu0 %v2371
  %2449 = vmatprep.subr.bf16.mxu0 0
  %2450 = vmatpush1.bf16.msra.mxu0 %v2372
  %2451 = vmatprep.subr.bf16.mxu0 0
  %2452 = vmatpush1.bf16.msra.mxu0 %v2373
  %2453 = vmatprep.subr.bf16.mxu0 0
  %2454 = vmatpush1.bf16.msra.mxu0 %v2374
  %2455 = vmatprep.mubr.bf16.mxu0 %v2224
  %2456 = vmatmul.mubr.bf16.gmra.mrb[0].mxu0 %v2223
  %v2457 = vpop.f32.mrb[0].mxu0
  %v2458 = vadd.f32 0.0, %v2457
  %v2459 = vpop.f32.mrb[0].mxu0
  %v2460 = vpop.f32.mrb[0].mxu0
  %v2461 = vpop.f32.mrb[0].mxu0
  %2462 = vdwg.mxu0
  %2463 = vmatprep.subr.bf16.mxu0 0
  %2464 = vmatpush1.bf16.msra.mxu0 %v2375
  %2465 = vmatprep.subr.bf16.mxu0 0
  %2466 = vmatpush1.bf16.msra.mxu0 %v2376
  %2467 = vmatprep.subr.bf16.mxu0 0
  %2468 = vmatpush1.bf16.msra.mxu0 %v2377
  %2469 = vmatprep.subr.bf16.mxu0 0
  %2470 = vmatpush1.bf16.msra.mxu0 %v2378
  %2471 = vmatprep.subr.bf16.mxu0 0
  %2472 = vmatpush1.bf16.msra.mxu0 %v2379
  %2473 = vmatprep.subr.bf16.mxu0 0
  %2474 = vmatpush1.bf16.msra.mxu0 %v2380
  %2475 = vmatprep.subr.bf16.mxu0 0
  %2476 = vmatpush1.bf16.msra.mxu0 %v2381
  %2477 = vmatprep.subr.bf16.mxu0 0
  %2478 = vmatpush1.bf16.msra.mxu0 %v2382
  %2479 = vmatprep.subr.bf16.mxu0 0
  %2480 = vmatpush1.bf16.msra.mxu0 %v2383
  %2481 = vmatprep.subr.bf16.mxu0 0
  %2482 = vmatpush1.bf16.msra.mxu0 %v2384
  %2483 = vmatprep.subr.bf16.mxu0 0
  %2484 = vmatpush1.bf16.msra.mxu0 %v2385
  %2485 = vmatprep.subr.bf16.mxu0 0
  %2486 = vmatpush1.bf16.msra.mxu0 %v2386
  %2487 = vmatprep.subr.bf16.mxu0 0
  %2488 = vmatpush1.bf16.msra.mxu0 %v2387
  %2489 = vmatprep.subr.bf16.mxu0 0
  %2490 = vmatpush1.bf16.msra.mxu0 %v2388
  %2491 = vmatprep.subr.bf16.mxu0 0
  %2492 = vmatpush1.bf16.msra.mxu0 %v2389
  %2493 = vmatprep.subr.bf16.mxu0 0
  %2494 = vmatpush1.bf16.msra.mxu0 %v2390
  %2495 = vmatprep.mubr.bf16.mxu0 %v2226
  %2496 = vmatmul.mubr.bf16.gmra.mrb[0].mxu0 %v2225
  %v2497 = vpop.f32.mrb[0].mxu0
  %v2498 = vadd.f32 %v2458, %v2497
  %v2499 = vpop.f32.mrb[0].mxu0
  %v2500 = vpop.f32.mrb[0].mxu0
  %v2501 = vpop.f32.mrb[0].mxu0
  %2502 = vdwg.mxu0
  %v2503 = vadd.f32 %v2148, %v2498
  %v2504 = vld [vmem:[%s2] sm:$0x1]
  %v2506 = vlaneseq
  %v2507 = vshrl.u32 %v2506, 7
  %v2508 = vsub.s32 0, %v2507
  %v2509 = vrot.slane %v2504, %v2508
  %v2511 = vadd.f32 %v2503, %v2509
  %2512 = vst [vmem:[%s5] sm:$0xff] %v2511
  %v2513 = vpack.c.bf16 %v2511, %v2511
  %v2514 = vld [vmem:[%s3] sm:$0xf]
  %v2515 = vld [vmem:[%s3 + $0x4] sm:$0xf]
  %v2516 = vld [vmem:[%s3 + $0x8] sm:$0xf]
  %v2517 = vld [vmem:[%s3 + $0xc] sm:$0xf]
  %v2518 = vld [vmem:[%s3 + $0x10] sm:$0xf]
  %v2519 = vld [vmem:[%s3 + $0x14] sm:$0xf]
  %v2520 = vld [vmem:[%s3 + $0x18] sm:$0xf]
  %v2521 = vld [vmem:[%s3 + $0x1c] sm:$0xf]
  %v2522 = vld [vmem:[%s3 + $0x20] sm:$0xf]
  %v2523 = vld [vmem:[%s3 + $0x24] sm:$0xf]
  %v2524 = vld [vmem:[%s3 + $0x28] sm:$0xf]
  %v2525 = vld [vmem:[%s3 + $0x2c] sm:$0xf]
  %v2526 = vld [vmem:[%s3 + $0x30] sm:$0xf]
  %v2527 = vld [vmem:[%s3 + $0x34] sm:$0xf]
  %v2528 = vld [vmem:[%s3 + $0x38] sm:$0xf]
  %v2529 = vld [vmem:[%s3 + $0x3c] sm:$0xf]
  %v2530 = vld [vmem:[%s4] sm:$0x1]
  %v2532 = vlaneseq
  %v2533 = vshrl.u32 %v2532, 7
  %v2534 = vsub.s32 0, %v2533
  %v2535 = vrot.slane %v2530, %v2534
  %v2553 = vunpack.c.l.b16 %v2514
  %v2554 = vunpack.c.l.b16 %v2515
  %v2555 = vunpack.c.l.b16 %v2516
  %v2556 = vunpack.c.l.b16 %v2517
  %v2557 = vunpack.c.l.b16 %v2518
  %v2558 = vunpack.c.l.b16 %v2519
  %v2559 = vunpack.c.l.b16 %v2520
  %v2560 = vunpack.c.l.b16 %v2521
  %v2561 = vunpack.c.l.b16 %v2522
  %v2562 = vunpack.c.l.b16 %v2523
  %v2563 = vunpack.c.l.b16 %v2524
  %v2564 = vunpack.c.l.b16 %v2525
  %v2565 = vunpack.c.l.b16 %v2526
  %v2566 = vunpack.c.l.b16 %v2527
  %v2567 = vunpack.c.l.b16 %v2528
  %v2568 = vunpack.c.l.b16 %v2529
  %v2569 = vpack.c.b16 %v2554, %v2553
  %v2570 = vpack.c.b16 %v2556, %v2555
  %v2571 = vpack.c.b16 %v2558, %v2557
  %v2572 = vpack.c.b16 %v2560, %v2559
  %v2573 = vpack.c.b16 %v2562, %v2561
  %v2574 = vpack.c.b16 %v2564, %v2563
  %v2575 = vpack.c.b16 %v2566, %v2565
  %v2576 = vpack.c.b16 %v2568, %v2567
  %2585 = vmatprep.subr.bf16.mxu0 0
  %2586 = vmatpush1.bf16.msra.mxu0 %v2569
  %2587 = vmatprep.subr.bf16.mxu0 0
  %2588 = vmatpush1.bf16.msra.mxu0 %v2570
  %2589 = vmatprep.subr.bf16.mxu0 0
  %2590 = vmatpush1.bf16.msra.mxu0 %v2571
  %2591 = vmatprep.subr.bf16.mxu0 0
  %2592 = vmatpush1.bf16.msra.mxu0 %v2572
  %2593 = vmatprep.subr.bf16.mxu0 0
  %2594 = vmatpush1.bf16.msra.mxu0 %v2573
  %2595 = vmatprep.subr.bf16.mxu0 0
  %2596 = vmatpush1.bf16.msra.mxu0 %v2574
  %2597 = vmatprep.subr.bf16.mxu0 0
  %2598 = vmatpush1.bf16.msra.mxu0 %v2575
  %2599 = vmatprep.subr.bf16.mxu0 0
  %2600 = vmatpush1.bf16.msra.mxu0 %v2576
  %2601 = vmatprep.subr.bf16.mxu0 0
  %2602 = vmatpush1.bf16.msra.mxu0 0
  %2603 = vmatprep.subr.bf16.mxu0 0
  %2604 = vmatpush1.bf16.msra.mxu0 0
  %2605 = vmatprep.subr.bf16.mxu0 0
  %2606 = vmatpush1.bf16.msra.mxu0 0
  %2607 = vmatprep.subr.bf16.mxu0 0
  %2608 = vmatpush1.bf16.msra.mxu0 0
  %2609 = vmatprep.subr.bf16.mxu0 0
  %2610 = vmatpush1.bf16.msra.mxu0 0
  %2611 = vmatprep.subr.bf16.mxu0 0
  %2612 = vmatpush1.bf16.msra.mxu0 0
  %2613 = vmatprep.subr.bf16.mxu0 0
  %2614 = vmatpush1.bf16.msra.mxu0 0
  %2615 = vmatprep.subr.bf16.mxu0 0
  %2616 = vmatpush1.bf16.msra.mxu0 0
  %2617 = vmatprep.mubr.bf16.mxu0 0
  %2618 = vmatmul.mubr.bf16.gmra.mrb[0].mxu0 %v2513
  %v2619 = vpop.f32.mrb[0].mxu0
  %v2620 = vadd.f32 %v2535, %v2619
  %v2621 = vpop.f32.mrb[0].mxu0
  %v2622 = vpop.f32.mrb[0].mxu0
  %v2623 = vpop.f32.mrb[0].mxu0
  %2624 = vdwg.mxu0
  %2625 = vst [vmem:[%s6] sm:$0xff] %v2620
  // Predicated region
  $region22: #{cnn_forward.5} parent=0 // pred_check
    _
  $region23: #{cnn_forward.5} parent=0 // pred_check_branch
    %2627 = sbr.rel (0) target = $region25
  $region24: #{cnn_forward.5} parent=0 // pred_region
    _
  $region25: #{cnn_forward.5} parent=0 // pred_fallthru
    _
  // Predicated region
  $region26: #{cnn_forward.5} parent=0 // pred_check
    _
  $region27: #{cnn_forward.5} parent=0 // pred_check_branch
    %2629 = sbr.rel (0) target = $region29
  $region28: #{cnn_forward.5} parent=0 // pred_region
    _
  $region29: #{cnn_forward.5} parent=0 // pred_fallthru
    _
  // Predicated region
  $region30: #{cnn_forward.5} parent=0 // pred_check
    _
  $region31: #{cnn_forward.5} parent=0 // pred_check_branch
    %2631 = sbr.rel (0) target = $region33
  $region32: #{cnn_forward.5} parent=0 // pred_region
    _
  $region33: #{cnn_forward.5} parent=0 // pred_fallthru
    _
  // Predicated region
  $region34: #{cnn_forward.5} parent=0 // pred_check
    _
  $region35: #{cnn_forward.5} parent=0 // pred_check_branch
    %2633 = sbr.rel (0) target = $region37
  $region36: #{cnn_forward.5} parent=0 // pred_region
    _
  $region37: #{cnn_forward.5} parent=0 // pred_fallthru
    _

</llo_original>
